<compile_context>
chip_gen: v6e
topology: v6e:2x2x1
jax: 0.10.0
libtpu: 0.0.40
codegen_flags: <defaults>
</compile_context>

<pallas_src>
import jax
import jax.numpy as jnp
from jax.experimental import pallas as pl
from jax.experimental.pallas import tpu as pltpu

# Model dimensions (from ActorNetwork.__init__)
RECURRENT_STATE_DIM = 1024
PATCH_LENGTH = 4
FLAT_INPUT_DIMS = RECURRENT_STATE_DIM * PATCH_LENGTH  # 4096
HIDDEN_DIM = 512
FC1_DIMS = 256
FC2_DIMS = 128
N_ACTIONS = 8
LN_EPS = 1e-5  # torch.nn.LayerNorm default

# Kernel layout constants
OUT_PAD = 128          # lane-dense padded action axis
NEG_BIG = -1e9         # f32 bias for padded action lanes (exp underflows to exactly 0)
P_ROWS = 16            # rows of the packed bias/LN-param slab (10 used, padded to sublane mult.)

# Row indices inside the packed (P_ROWS, HIDDEN_DIM) f32 param slab.
R_B1, R_G1, R_BE1 = 0, 1, 2
R_B2, R_G2, R_BE2 = 3, 4, 5
R_B3, R_G3, R_BE3 = 6, 7, 8
R_B4 = 9


def _ln_elu(h, g, beta):
    """LayerNorm (biased variance, eps=1e-5) -> ELU(alpha=1), all in f32."""
    mu = jnp.mean(h, axis=-1, keepdims=True)
    var = jnp.mean((h - mu) * (h - mu), axis=-1, keepdims=True)
    hn = (h - mu) * jax.lax.rsqrt(var + LN_EPS)
    hn = hn * g + beta
    return jnp.where(hn > 0, hn, jnp.exp(hn) - 1.0)


def actor_kernel(state_ref, w1_ref, w2_ref, w3_ref, w4_ref, p_ref, out_ref):
    # Layer 1: (B, 4096) bf16 x (4096, 512) bf16 -> f32 on the MXU (w1 fully resident).
    h1 = jnp.dot(state_ref[...], w1_ref[...], preferred_element_type=jnp.float32)
    h1 = h1 + p_ref[R_B1:R_B1 + 1, :]
    x = _ln_elu(h1, p_ref[R_G1:R_G1 + 1, :], p_ref[R_BE1:R_BE1 + 1, :])           # (B, 512)

    h2 = jnp.dot(x.astype(jnp.bfloat16), w2_ref[...],
                 preferred_element_type=jnp.float32) + p_ref[R_B2:R_B2 + 1, :FC1_DIMS]
    x = _ln_elu(h2, p_ref[R_G2:R_G2 + 1, :FC1_DIMS], p_ref[R_BE2:R_BE2 + 1, :FC1_DIMS])  # (B, 256)

    h3 = jnp.dot(x.astype(jnp.bfloat16), w3_ref[...],
                 preferred_element_type=jnp.float32) + p_ref[R_B3:R_B3 + 1, :FC2_DIMS]
    x = _ln_elu(h3, p_ref[R_G3:R_G3 + 1, :FC2_DIMS], p_ref[R_BE3:R_BE3 + 1, :FC2_DIMS])  # (B, 128)

    logits = jnp.dot(x.astype(jnp.bfloat16), w4_ref[...],
                     preferred_element_type=jnp.float32) + p_ref[R_B4:R_B4 + 1, :OUT_PAD]  # (B, 128)

    # Softmax over the lane-dense padded action axis (dim=1).  Padded lanes carry a f32
    # -1e9 bias, so exp() there is exactly 0 and does not perturb the normalization.
    m = jnp.max(logits, axis=-1, keepdims=True)
    e = jnp.exp(logits - m)
    inv = pl.reciprocal(jnp.sum(e, axis=-1, keepdims=True), approx=True)  # EUP slot, ~free
    out_ref[...] = (e * inv).astype(out_ref.dtype)


def _choose_b_block(batch):
    """bf16-native batch tile: 16 rows minimum, up to 128 for large batches."""
    if batch <= 16:
        return 16
    if batch <= 32:
        return 32
    if batch <= 64:
        return 64
    return 128


def _dimension_semantics():
    """Batch axis: core-parallel on v7x (2 TensorCores/chip), plain parallel elsewhere."""
    try:
        kind = jax.devices()[0].device_kind.lower()
    except Exception:
        kind = ""
    if "v7" in kind:
        return (pltpu.CORE_PARALLEL,)
    return ("parallel",)


@jax.jit
def actor_forward(transformer_state, obs, params):
    """Pallas-backed ActorNetwork.forward. `obs` is accepted but unused (as in PyTorch)."""
    del obs  # unused by the reference forward pass

    # Keep the state narrow (bf16) going into the kernel; no wrapper-side f32 upcast.
    state = transformer_state.reshape(-1, FLAT_INPUT_DIMS).astype(jnp.bfloat16)
    b = state.shape[0]
    bb = _choose_b_block(b)
    nb = (b + bb - 1) // bb
    bp = nb * bb
    if bp != b:
        state = jnp.pad(state, ((0, bp - b), (0, 0)))  # pad batch to tile multiple

    # Pad the tiny action head to a lane-dense 128-wide tile (bf16 weights, f32 bias).
    w4p = jnp.zeros((FC2_DIMS, OUT_PAD), jnp.bfloat16).at[:, :N_ACTIONS].set(params["w4"])

    # Pack all biases / LayerNorm gammas+betas (+ padded b4) into one f32 slab -> one DMA.
    slab = jnp.zeros((P_ROWS, HIDDEN_DIM), jnp.float32)
    slab = slab.at[R_B1, :].set(params["b1"][0])
    slab = slab.at[R_G1, :].set(params["g1"][0])
    slab = slab.at[R_BE1, :].set(params["be1"][0])
    slab = slab.at[R_B2, :FC1_DIMS].set(params["b2"][0])
    slab = slab.at[R_G2, :FC1_DIMS].set(params["g2"][0])
    slab = slab.at[R_BE2, :FC1_DIMS].set(params["be2"][0])
    slab = slab.at[R_B3, :FC2_DIMS].set(params["b3"][0])
    slab = slab.at[R_G3, :FC2_DIMS].set(params["g3"][0])
    slab = slab.at[R_BE3, :FC2_DIMS].set(params["be3"][0])
    b4_row = jnp.full((OUT_PAD,), NEG_BIG, jnp.float32).at[:N_ACTIONS].set(params["b4"][0])
    slab = slab.at[R_B4, :OUT_PAD].set(b4_row)

    # Resident (constant index_map) blocks: fetched once per call, single-buffered.
    def resident(shape):
        return pl.BlockSpec(shape, lambda i: (0, 0), pipeline_mode=pl.Buffered(1))

    in_specs = [
        pl.BlockSpec((bb, FLAT_INPUT_DIMS), lambda i: (i, 0)),   # state (streamed over batch)
        resident((FLAT_INPUT_DIMS, HIDDEN_DIM)),                 # w1 (resident, ~4 MiB bf16)
        resident((HIDDEN_DIM, FC1_DIMS)),                        # w2
        resident((FC1_DIMS, FC2_DIMS)),                          # w3
        resident((FC2_DIMS, OUT_PAD)),                           # w4 (padded)
        resident((P_ROWS, HIDDEN_DIM)),                          # packed biases / LN params
    ]

    # Advisory cost estimate (weights counted once -- matches actual resident-weight traffic).
    flops = 2 * bp * (FLAT_INPUT_DIMS * HIDDEN_DIM + HIDDEN_DIM * FC1_DIMS
                      + FC1_DIMS * FC2_DIMS + FC2_DIMS * OUT_PAD)
    transcendentals = bp * (HIDDEN_DIM + FC1_DIMS + FC2_DIMS + OUT_PAD)
    weight_bytes = 2 * (FLAT_INPUT_DIMS * HIDDEN_DIM + HIDDEN_DIM * FC1_DIMS
                        + FC1_DIMS * FC2_DIMS + FC2_DIMS * OUT_PAD)
    slab_bytes = 4 * P_ROWS * HIDDEN_DIM
    io_bytes = 2 * bp * FLAT_INPUT_DIMS + 4 * bp * OUT_PAD

    out = pl.pallas_call(
        actor_kernel,
        out_shape=jax.ShapeDtypeStruct((bp, OUT_PAD), jnp.float32),
        grid_spec=pltpu.PrefetchScalarGridSpec(
            num_scalar_prefetch=0,
            grid=(nb,),                                          # batch tiles only
            in_specs=in_specs,
            out_specs=pl.BlockSpec((bb, OUT_PAD), lambda i: (i, 0)),
        ),
        compiler_params=pltpu.CompilerParams(
            dimension_semantics=_dimension_semantics(),
            vmem_limit_bytes=16 << 20,  # resident set is ~5-7 MiB; well under all scoped limits
        ),
        cost_estimate=pl.CostEstimate(
            flops=flops,
            transcendentals=transcendentals,
            bytes_accessed=weight_bytes + slab_bytes + io_bytes,
        ),
    )(state, params["w1"], params["w2"], params["w3"], w4p, slab)

    return out[:b, :N_ACTIONS]


def init_params(key):
    """PyTorch-default-like init; weights kept in bf16 (MXU operands), biases/LN params in f32."""
    ks = jax.random.split(key, 8)

    def linear(kw, kb, fan_in, fan_out):
        bound = 1.0 / jnp.sqrt(fan_in)
        w = jax.random.uniform(kw, (fan_in, fan_out), jnp.float32, -bound, bound)
        b = jax.random.uniform(kb, (1, fan_out), jnp.float32, -bound, bound)
        return w.astype(jnp.bfloat16), b

    w1, b1 = linear(ks[0], ks[1], FLAT_INPUT_DIMS, HIDDEN_DIM)
    w2, b2 = linear(ks[2], ks[3], HIDDEN_DIM, FC1_DIMS)
    w3, b3 = linear(ks[4], ks[5], FC1_DIMS, FC2_DIMS)
    w4, b4 = linear(ks[6], ks[7], FC2_DIMS, N_ACTIONS)

    return {
        "w1": w1, "b1": b1,
        "g1": jnp.ones((1, HIDDEN_DIM), jnp.float32), "be1": jnp.zeros((1, HIDDEN_DIM), jnp.float32),
        "w2": w2, "b2": b2,
        "g2": jnp.ones((1, FC1_DIMS), jnp.float32), "be2": jnp.zeros((1, FC1_DIMS), jnp.float32),
        "w3": w3, "b3": b3,
        "g3": jnp.ones((1, FC2_DIMS), jnp.float32), "be3": jnp.zeros((1, FC2_DIMS), jnp.float32),
        "w4": w4, "b4": b4,
    }


def reference_forward(transformer_state, params):
    """Pure-JAX reference mirroring the PyTorch forward (bf16 weights, f32 accumulation)."""
    x = transformer_state.reshape(-1, FLAT_INPUT_DIMS).astype(jnp.bfloat16)

    def layer(x, w, b, g, be):
        h = jnp.dot(x.astype(jnp.bfloat16), w, preferred_element_type=jnp.float32) + b
        mu = jnp.mean(h, axis=-1, keepdims=True)
        var = jnp.mean((h - mu) ** 2, axis=-1, keepdims=True)
        hn = (h - mu) / jnp.sqrt(var + LN_EPS) * g + be
        return jnp.where(hn > 0, hn, jnp.exp(hn) - 1.0)

    x = layer(x, params["w1"], params["b1"], params["g1"], params["be1"])
    x = layer(x, params["w2"], params["b2"], params["g2"], params["be2"])
    x = layer(x, params["w3"], params["b3"], params["g3"], params["be3"])
    logits = jnp.dot(x.astype(jnp.bfloat16), params["w4"],
                     preferred_element_type=jnp.float32) + params["b4"]
    return jax.nn.softmax(logits, axis=1)


if __name__ == "__main__":
    key = jax.random.PRNGKey(0)
    k_state, k_obs, k_params = jax.random.split(key, 3)

    batch = 2
    # transformer_state: (batch, patch_length, recurrent_state_dim) -> view(-1, 4096)
    transformer_state = jax.random.normal(
        k_state, (batch, PATCH_LENGTH, RECURRENT_STATE_DIM), jnp.float32)
    obs = jax.random.normal(k_obs, (batch, 16), jnp.float32)  # unused by forward()

    params = init_params(k_params)

    action_probs = actor_forward(transformer_state, obs, params)
    action_probs = jax.block_until_ready(action_probs)

    # sanity checks against the pure-JAX reference (same bf16 weights, f32 accumulation)
    ref = reference_forward(transformer_state, params)
    assert action_probs.shape == (batch, N_ACTIONS)
    # approx EUP reciprocal in the softmax -> rows sum to 1 within ~1e-4 relative
    assert jnp.allclose(jnp.sum(action_probs, axis=1), 1.0, atol=5e-3)
    assert jnp.allclose(action_probs, ref, atol=2e-2, rtol=2e-2)

    print("KERNEL_OK")
</pallas_src>

<mosaic_0001>
module attributes {stable_mosaic.version = 11 : i64} {
  func.func @actor_kernel(%arg0: i32, %arg1: memref<16x4096xbf16, #tpu.memory_space<vmem>>, %arg2: memref<4096x512xbf16, #tpu.memory_space<vmem>>, %arg3: memref<512x256xbf16, #tpu.memory_space<vmem>>, %arg4: memref<256x128xbf16, #tpu.memory_space<vmem>>, %arg5: memref<128x128xbf16, #tpu.memory_space<vmem>>, %arg6: memref<16x512xf32, #tpu.memory_space<vmem>>, %arg7: memref<16x128xf32, #tpu.memory_space<vmem>>) attributes {dimension_semantics = [#tpu.dimension_semantics<parallel>], iteration_bounds = array<i64: 1>, scalar_prefetch = 0 : i64, scratch_operands = 0 : i64, tpu.core_type = #tpu.core_type<tc>, window_params = [{transform_indices = @transform_0, window_bounds = array<i64: 16, 4096>}, {pipeline_mode = #tpu.pipeline_mode<synchronous>, transform_indices = @transform_1, window_bounds = array<i64: 4096, 512>}, {pipeline_mode = #tpu.pipeline_mode<synchronous>, transform_indices = @transform_2, window_bounds = array<i64: 512, 256>}, {pipeline_mode = #tpu.pipeline_mode<synchronous>, transform_indices = @transform_3, window_bounds = array<i64: 256, 128>}, {pipeline_mode = #tpu.pipeline_mode<synchronous>, transform_indices = @transform_4, window_bounds = array<i64: 128, 128>}, {pipeline_mode = #tpu.pipeline_mode<synchronous>, transform_indices = @transform_5, window_bounds = array<i64: 16, 512>}, {transform_indices = @transform_6, window_bounds = array<i64: 16, 128>}]} {
    %c0 = arith.constant 0 : index
    %c0_0 = arith.constant 0 : index
    %0 = vector.load %arg1[%c0, %c0_0] : memref<16x4096xbf16, #tpu.memory_space<vmem>>, vector<16x4096xbf16>
    %c0_1 = arith.constant 0 : index
    %c0_2 = arith.constant 0 : index
    %1 = vector.load %arg2[%c0_1, %c0_2] : memref<4096x512xbf16, #tpu.memory_space<vmem>>, vector<4096x512xbf16>
    %cst = arith.constant dense<0.000000e+00> : vector<16x512xf32>
    %2 = tpu.matmul %0, %1, %cst {dimension_numbers = #tpu.dot_dimension_numbers<[1], [0], [0], [1], [0, 0, 1, 1], [], []>} : vector<16x4096xbf16>, vector<4096x512xbf16>, vector<16x512xf32> -> vector<16x512xf32>
    %c0_3 = arith.constant 0 : index
    %c0_4 = arith.constant 0 : index
    %3 = vector.load %arg6[%c0_3, %c0_4] : memref<16x512xf32, #tpu.memory_space<vmem>>, vector<1x512xf32>
    %4 = vector.broadcast %3 : vector<1x512xf32> to vector<16x512xf32>
    %5 = arith.addf %2, %4 : vector<16x512xf32>
    %c1 = arith.constant 1 : index
    %c0_5 = arith.constant 0 : index
    %6 = vector.load %arg6[%c1, %c0_5] : memref<16x512xf32, #tpu.memory_space<vmem>>, vector<1x512xf32>
    %c2 = arith.constant 2 : index
    %c0_6 = arith.constant 0 : index
    %7 = vector.load %arg6[%c2, %c0_6] : memref<16x512xf32, #tpu.memory_space<vmem>>, vector<1x512xf32>
    %cst_7 = arith.constant dense<0.000000e+00> : vector<16xf32>
    %8 = vector.multi_reduction <add>, %5, %cst_7 [1] : vector<16x512xf32> to vector<16xf32>
    %9 = vector.shape_cast %8 : vector<16xf32> to vector<16x1xf32>
    %cst_8 = arith.constant 5.120000e+02 : f32
    %10 = vector.broadcast %cst_8 : f32 to vector<16x1xf32>
    %11 = arith.divf %9, %10 : vector<16x1xf32>
    %12 = vector.broadcast %11 : vector<16x1xf32> to vector<16x512xf32>
    %13 = arith.subf %5, %12 : vector<16x512xf32>
    %14 = vector.broadcast %11 : vector<16x1xf32> to vector<16x512xf32>
    %15 = arith.subf %5, %14 : vector<16x512xf32>
    %16 = arith.mulf %13, %15 : vector<16x512xf32>
    %cst_9 = arith.constant dense<0.000000e+00> : vector<16xf32>
    %17 = vector.multi_reduction <add>, %16, %cst_9 [1] : vector<16x512xf32> to vector<16xf32>
    %18 = vector.shape_cast %17 : vector<16xf32> to vector<16x1xf32>
    %cst_10 = arith.constant 5.120000e+02 : f32
    %19 = vector.broadcast %cst_10 : f32 to vector<16x1xf32>
    %20 = arith.divf %18, %19 : vector<16x1xf32>
    %21 = vector.broadcast %11 : vector<16x1xf32> to vector<16x512xf32>
    %22 = arith.subf %5, %21 : vector<16x512xf32>
    %cst_11 = arith.constant 9.99999974E-6 : f32
    %23 = vector.broadcast %cst_11 : f32 to vector<16x1xf32>
    %24 = arith.addf %20, %23 : vector<16x1xf32>
    %25 = math.rsqrt %24 : vector<16x1xf32>
    %26 = vector.broadcast %25 : vector<16x1xf32> to vector<16x512xf32>
    %27 = arith.mulf %22, %26 : vector<16x512xf32>
    %28 = vector.broadcast %6 : vector<1x512xf32> to vector<16x512xf32>
    %29 = arith.mulf %27, %28 : vector<16x512xf32>
    %30 = vector.broadcast %7 : vector<1x512xf32> to vector<16x512xf32>
    %31 = arith.addf %29, %30 : vector<16x512xf32>
    %cst_12 = arith.constant 0.000000e+00 : f32
    %32 = vector.broadcast %cst_12 : f32 to vector<16x512xf32>
    %33 = arith.cmpf ogt, %31, %32 : vector<16x512xf32>
    %34 = math.exp %31 : vector<16x512xf32>
    %cst_13 = arith.constant 1.000000e+00 : f32
    %35 = vector.broadcast %cst_13 : f32 to vector<16x512xf32>
    %36 = arith.subf %34, %35 : vector<16x512xf32>
    %37 = arith.select %33, %31, %36 : vector<16x512xi1>, vector<16x512xf32>
    %38 = arith.truncf %37 : vector<16x512xf32> to vector<16x512xbf16>
    %c0_14 = arith.constant 0 : index
    %c0_15 = arith.constant 0 : index
    %39 = vector.load %arg3[%c0_14, %c0_15] : memref<512x256xbf16, #tpu.memory_space<vmem>>, vector<512x256xbf16>
    %cst_16 = arith.constant dense<0.000000e+00> : vector<16x256xf32>
    %40 = tpu.matmul %38, %39, %cst_16 {dimension_numbers = #tpu.dot_dimension_numbers<[1], [0], [0], [1], [0, 0, 1, 1], [], []>} : vector<16x512xbf16>, vector<512x256xbf16>, vector<16x256xf32> -> vector<16x256xf32>
    %c3 = arith.constant 3 : index
    %c0_17 = arith.constant 0 : index
    %41 = vector.load %arg6[%c3, %c0_17] : memref<16x512xf32, #tpu.memory_space<vmem>>, vector<1x256xf32>
    %42 = vector.broadcast %41 : vector<1x256xf32> to vector<16x256xf32>
    %43 = arith.addf %40, %42 : vector<16x256xf32>
    %c4 = arith.constant 4 : index
    %c0_18 = arith.constant 0 : index
    %44 = vector.load %arg6[%c4, %c0_18] : memref<16x512xf32, #tpu.memory_space<vmem>>, vector<1x256xf32>
    %c5 = arith.constant 5 : index
    %c0_19 = arith.constant 0 : index
    %45 = vector.load %arg6[%c5, %c0_19] : memref<16x512xf32, #tpu.memory_space<vmem>>, vector<1x256xf32>
    %cst_20 = arith.constant dense<0.000000e+00> : vector<16xf32>
    %46 = vector.multi_reduction <add>, %43, %cst_20 [1] : vector<16x256xf32> to vector<16xf32>
    %47 = vector.shape_cast %46 : vector<16xf32> to vector<16x1xf32>
    %cst_21 = arith.constant 2.560000e+02 : f32
    %48 = vector.broadcast %cst_21 : f32 to vector<16x1xf32>
    %49 = arith.divf %47, %48 : vector<16x1xf32>
    %50 = vector.broadcast %49 : vector<16x1xf32> to vector<16x256xf32>
    %51 = arith.subf %43, %50 : vector<16x256xf32>
    %52 = vector.broadcast %49 : vector<16x1xf32> to vector<16x256xf32>
    %53 = arith.subf %43, %52 : vector<16x256xf32>
    %54 = arith.mulf %51, %53 : vector<16x256xf32>
    %cst_22 = arith.constant dense<0.000000e+00> : vector<16xf32>
    %55 = vector.multi_reduction <add>, %54, %cst_22 [1] : vector<16x256xf32> to vector<16xf32>
    %56 = vector.shape_cast %55 : vector<16xf32> to vector<16x1xf32>
    %cst_23 = arith.constant 2.560000e+02 : f32
    %57 = vector.broadcast %cst_23 : f32 to vector<16x1xf32>
    %58 = arith.divf %56, %57 : vector<16x1xf32>
    %59 = vector.broadcast %49 : vector<16x1xf32> to vector<16x256xf32>
    %60 = arith.subf %43, %59 : vector<16x256xf32>
    %cst_24 = arith.constant 9.99999974E-6 : f32
    %61 = vector.broadcast %cst_24 : f32 to vector<16x1xf32>
    %62 = arith.addf %58, %61 : vector<16x1xf32>
    %63 = math.rsqrt %62 : vector<16x1xf32>
    %64 = vector.broadcast %63 : vector<16x1xf32> to vector<16x256xf32>
    %65 = arith.mulf %60, %64 : vector<16x256xf32>
    %66 = vector.broadcast %44 : vector<1x256xf32> to vector<16x256xf32>
    %67 = arith.mulf %65, %66 : vector<16x256xf32>
    %68 = vector.broadcast %45 : vector<1x256xf32> to vector<16x256xf32>
    %69 = arith.addf %67, %68 : vector<16x256xf32>
    %cst_25 = arith.constant 0.000000e+00 : f32
    %70 = vector.broadcast %cst_25 : f32 to vector<16x256xf32>
    %71 = arith.cmpf ogt, %69, %70 : vector<16x256xf32>
    %72 = math.exp %69 : vector<16x256xf32>
    %cst_26 = arith.constant 1.000000e+00 : f32
    %73 = vector.broadcast %cst_26 : f32 to vector<16x256xf32>
    %74 = arith.subf %72, %73 : vector<16x256xf32>
    %75 = arith.select %71, %69, %74 : vector<16x256xi1>, vector<16x256xf32>
    %76 = arith.truncf %75 : vector<16x256xf32> to vector<16x256xbf16>
    %c0_27 = arith.constant 0 : index
    %c0_28 = arith.constant 0 : index
    %77 = vector.load %arg4[%c0_27, %c0_28] : memref<256x128xbf16, #tpu.memory_space<vmem>>, vector<256x128xbf16>
    %cst_29 = arith.constant dense<0.000000e+00> : vector<16x128xf32>
    %78 = tpu.matmul %76, %77, %cst_29 {dimension_numbers = #tpu.dot_dimension_numbers<[1], [0], [0], [1], [0, 0, 1, 1], [], []>} : vector<16x256xbf16>, vector<256x128xbf16>, vector<16x128xf32> -> vector<16x128xf32>
    %c6 = arith.constant 6 : index
    %c0_30 = arith.constant 0 : index
    %79 = vector.load %arg6[%c6, %c0_30] : memref<16x512xf32, #tpu.memory_space<vmem>>, vector<1x128xf32>
    %80 = vector.broadcast %79 : vector<1x128xf32> to vector<16x128xf32>
    %81 = arith.addf %78, %80 : vector<16x128xf32>
    %c7 = arith.constant 7 : index
    %c0_31 = arith.constant 0 : index
    %82 = vector.load %arg6[%c7, %c0_31] : memref<16x512xf32, #tpu.memory_space<vmem>>, vector<1x128xf32>
    %c8 = arith.constant 8 : index
    %c0_32 = arith.constant 0 : index
    %83 = vector.load %arg6[%c8, %c0_32] : memref<16x512xf32, #tpu.memory_space<vmem>>, vector<1x128xf32>
    %cst_33 = arith.constant dense<0.000000e+00> : vector<16xf32>
    %84 = vector.multi_reduction <add>, %81, %cst_33 [1] : vector<16x128xf32> to vector<16xf32>
    %85 = vector.shape_cast %84 : vector<16xf32> to vector<16x1xf32>
    %cst_34 = arith.constant 1.280000e+02 : f32
    %86 = vector.broadcast %cst_34 : f32 to vector<16x1xf32>
    %87 = arith.divf %85, %86 : vector<16x1xf32>
    %88 = vector.broadcast %87 : vector<16x1xf32> to vector<16x128xf32>
    %89 = arith.subf %81, %88 : vector<16x128xf32>
    %90 = vector.broadcast %87 : vector<16x1xf32> to vector<16x128xf32>
    %91 = arith.subf %81, %90 : vector<16x128xf32>
    %92 = arith.mulf %89, %91 : vector<16x128xf32>
    %cst_35 = arith.constant dense<0.000000e+00> : vector<16xf32>
    %93 = vector.multi_reduction <add>, %92, %cst_35 [1] : vector<16x128xf32> to vector<16xf32>
    %94 = vector.shape_cast %93 : vector<16xf32> to vector<16x1xf32>
    %cst_36 = arith.constant 1.280000e+02 : f32
    %95 = vector.broadcast %cst_36 : f32 to vector<16x1xf32>
    %96 = arith.divf %94, %95 : vector<16x1xf32>
    %97 = vector.broadcast %87 : vector<16x1xf32> to vector<16x128xf32>
    %98 = arith.subf %81, %97 : vector<16x128xf32>
    %cst_37 = arith.constant 9.99999974E-6 : f32
    %99 = vector.broadcast %cst_37 : f32 to vector<16x1xf32>
    %100 = arith.addf %96, %99 : vector<16x1xf32>
    %101 = math.rsqrt %100 : vector<16x1xf32>
    %102 = vector.broadcast %101 : vector<16x1xf32> to vector<16x128xf32>
    %103 = arith.mulf %98, %102 : vector<16x128xf32>
    %104 = vector.broadcast %82 : vector<1x128xf32> to vector<16x128xf32>
    %105 = arith.mulf %103, %104 : vector<16x128xf32>
    %106 = vector.broadcast %83 : vector<1x128xf32> to vector<16x128xf32>
    %107 = arith.addf %105, %106 : vector<16x128xf32>
    %cst_38 = arith.constant 0.000000e+00 : f32
    %108 = vector.broadcast %cst_38 : f32 to vector<16x128xf32>
    %109 = arith.cmpf ogt, %107, %108 : vector<16x128xf32>
    %110 = math.exp %107 : vector<16x128xf32>
    %cst_39 = arith.constant 1.000000e+00 : f32
    %111 = vector.broadcast %cst_39 : f32 to vector<16x128xf32>
    %112 = arith.subf %110, %111 : vector<16x128xf32>
    %113 = arith.select %109, %107, %112 : vector<16x128xi1>, vector<16x128xf32>
    %114 = arith.truncf %113 : vector<16x128xf32> to vector<16x128xbf16>
    %c0_40 = arith.constant 0 : index
    %c0_41 = arith.constant 0 : index
    %115 = vector.load %arg5[%c0_40, %c0_41] : memref<128x128xbf16, #tpu.memory_space<vmem>>, vector<128x128xbf16>
    %cst_42 = arith.constant dense<0.000000e+00> : vector<16x128xf32>
    %116 = tpu.matmul %114, %115, %cst_42 {dimension_numbers = #tpu.dot_dimension_numbers<[1], [0], [0], [1], [0, 0, 1, 1], [], []>} : vector<16x128xbf16>, vector<128x128xbf16>, vector<16x128xf32> -> vector<16x128xf32>
    %c9 = arith.constant 9 : index
    %c0_43 = arith.constant 0 : index
    %117 = vector.load %arg6[%c9, %c0_43] : memref<16x512xf32, #tpu.memory_space<vmem>>, vector<1x128xf32>
    %118 = vector.broadcast %117 : vector<1x128xf32> to vector<16x128xf32>
    %119 = arith.addf %116, %118 : vector<16x128xf32>
    %cst_44 = arith.constant dense<0xFF800000> : vector<16xf32>
    %120 = vector.multi_reduction <maximumf>, %119, %cst_44 [1] : vector<16x128xf32> to vector<16xf32>
    %121 = vector.shape_cast %120 : vector<16xf32> to vector<16x1xf32>
    %122 = vector.broadcast %121 : vector<16x1xf32> to vector<16x128xf32>
    %123 = arith.subf %119, %122 : vector<16x128xf32>
    %124 = math.exp %123 : vector<16x128xf32>
    %cst_45 = arith.constant dense<0.000000e+00> : vector<16xf32>
    %125 = vector.multi_reduction <add>, %124, %cst_45 [1] : vector<16x128xf32> to vector<16xf32>
    %126 = vector.shape_cast %125 : vector<16xf32> to vector<16x1xf32>
    %127 = tpu.reciprocal %126 {approx = true} : vector<16x1xf32> -> vector<16x1xf32>
    %128 = vector.broadcast %127 : vector<16x1xf32> to vector<16x128xf32>
    %129 = arith.mulf %124, %128 : vector<16x128xf32>
    %c0_46 = arith.constant 0 : index
    %c0_47 = arith.constant 0 : index
    %130 = vector.load %arg7[%c0_46, %c0_47] : memref<16x128xf32, #tpu.memory_space<vmem>>, vector<16x128xf32>
    tpu.vector_store %arg7[%c0_46, %c0_47], %129 {strides = array<i32>} : memref<16x128xf32, #tpu.memory_space<vmem>>, vector<16x128xf32>,
    return
  }
  func.func @transform_0(%arg0: i32) -> (i32, i32) {
    %c0_i32 = arith.constant 0 : i32
    %c0_i32_0 = arith.constant 0 : i32
    return %arg0, %c0_i32 : i32, i32
  }
  func.func @transform_1(%arg0: i32) -> (i32, i32) {
    %c0_i32 = arith.constant 0 : i32
    %c0_i32_0 = arith.constant 0 : i32
    %c0_i32_1 = arith.constant 0 : i32
    return %c0_i32, %c0_i32_0 : i32, i32
  }
  func.func @transform_2(%arg0: i32) -> (i32, i32) {
    %c0_i32 = arith.constant 0 : i32
    %c0_i32_0 = arith.constant 0 : i32
    %c0_i32_1 = arith.constant 0 : i32
    return %c0_i32, %c0_i32_0 : i32, i32
  }
  func.func @transform_3(%arg0: i32) -> (i32, i32) {
    %c0_i32 = arith.constant 0 : i32
    %c0_i32_0 = arith.constant 0 : i32
    %c0_i32_1 = arith.constant 0 : i32
    return %c0_i32, %c0_i32_0 : i32, i32
  }
  func.func @transform_4(%arg0: i32) -> (i32, i32) {
    %c0_i32 = arith.constant 0 : i32
    %c0_i32_0 = arith.constant 0 : i32
    %c0_i32_1 = arith.constant 0 : i32
    return %c0_i32, %c0_i32_0 : i32, i32
  }
  func.func @transform_5(%arg0: i32) -> (i32, i32) {
    %c0_i32 = arith.constant 0 : i32
    %c0_i32_0 = arith.constant 0 : i32
    %c0_i32_1 = arith.constant 0 : i32
    return %c0_i32, %c0_i32_0 : i32, i32
  }
  func.func @transform_6(%arg0: i32) -> (i32, i32) {
    %c0_i32 = arith.constant 0 : i32
    %c0_i32_0 = arith.constant 0 : i32
    return %arg0, %c0_i32 : i32, i32
  }
}

</mosaic_0001>

<llo_original>
// kernel: actor_forward.1
$region0: #{actor_forward.1}
  #allocation0 [shape = 'u32[]', space=smem, size = 0x4, offset = 0x4, fixed_abs, tag = 'smem constant byte address 0x4 - core index']
  #allocation1 [shape = 'u32[144,128]{1,0:T(1,128)}', space=vmem, size = 0x12000, scoped, tag = 'internal scratch']
  %s0 = inlined_call_operand.vmem [shape: bf16[16,4096], index: 0, kind: input, shape index: {}]
  %s1 = inlined_call_operand.hbm [shape: bf16[4096,512], index: 1, kind: input, shape index: {}]
  %s2 = inlined_call_operand.hbm [shape: bf16[512,256], index: 2, kind: input, shape index: {}]
  %s3 = inlined_call_operand.hbm [shape: bf16[256,128], index: 3, kind: input, shape index: {}]
  %s4 = inlined_call_operand.vmem [shape: bf16[128,128], index: 4, kind: input, shape index: {}]
  %s5 = inlined_call_operand.vmem [shape: f32[16,512], index: 5, kind: input, shape index: {}]
  %s6 = inlined_call_operand.vmem [shape: f32[16,128], index: 6, kind: output, shape index: {}]
  %s7 = sld [smem:[#allocation0]]
  $region46: #{actor_forward.1} parent=0
    _
  %s9 = ssub.s32 1, %s7
  %s10 = scalar_select 0, %s9, %s7
  $region1: #{actor_forward.1} parent=0
    #allocation2 [shape = 'u8[4194304]{0}', space=vmem, size = 0x400000, scoped, tag = 'input window, operand 1, single buffered']
    #allocation3 [shape = 's32[1]{0}', space=sflag, size = 0x4, scoped, tag = 'scoped memory for actor_forward.1']
    #allocation4 [shape = 'u8[262144]{0}', space=vmem, size = 0x40000, scoped, tag = 'input window, operand 2, single buffered']
    #allocation5 [shape = 's32[1]{0}', space=sflag, size = 0x4, scoped, tag = 'scoped memory for actor_forward.1']
    #allocation6 [shape = 'u8[65536]{0}', space=vmem, size = 0x10000, scoped, tag = 'input window, operand 3, single buffered']
    %11 = vsyncpa [#allocation3], 0
    %12 = vsyncpa [#allocation5], 0
    // Predicated region
    $region2: #{actor_forward.1} parent=1 // pred_check
      _
    $region3: #{actor_forward.1} parent=1 // pred_check_branch
      %14 = sbr.rel (0) target = $region5
    $region4: #{actor_forward.1} parent=1 // pred_region
      _
    $region5: #{actor_forward.1} parent=1 // pred_fallthru
      _
    // Predicated region
    $region6: #{actor_forward.1} parent=1 // pred_check
      _
    $region7: #{actor_forward.1} parent=1 // pred_check_branch
      %16 = sbr.rel (0) target = $region9
    $region8: #{actor_forward.1} parent=1 // pred_region
      %s18 = ssub.s32 131072, 131072
      %19 = vsyncadd [#allocation3], %s18
      %s20 = sshll.u32 [#allocation2], 4
      %s21 = int_to_ptr.vmem [resolvable:$true] %s20
      %26 = dma.hbm_to_vmem [thread:$0]  %s1, 131072, %s21, [#allocation3], 256, 256, 16
    $region9: #{actor_forward.1} parent=1 // pred_fallthru
      _
    // Predicated region
    $region10: #{actor_forward.1} parent=1 // pred_check
      _
    $region11: #{actor_forward.1} parent=1 // pred_check_branch
      %28 = sbr.rel (0) target = $region13
    $region12: #{actor_forward.1} parent=1 // pred_region
      %s30 = ssub.s32 8192, 8192
      %31 = vsyncadd [#allocation5], %s30
      %s32 = sshll.u32 [#allocation4], 4
      %s33 = int_to_ptr.vmem [resolvable:$true] %s32
      %38 = dma.hbm_to_vmem [thread:$0]  %s2, 8192, %s33, [#allocation5], 128, 128, 8
    $region13: #{actor_forward.1} parent=1 // pred_fallthru
      _
    // Predicated region
    $region14: #{actor_forward.1} parent=1 // pred_check
      _
    $region15: #{actor_forward.1} parent=1 // pred_check_branch
      %40 = sbr.rel (0) target = $region17
    $region16: #{actor_forward.1} parent=1 // pred_region
      %s42 = ssub.s32 2048, 2048
      %43 = vsyncadd [#allocation5], %s42
      %s44 = sshll.u32 [#allocation6], 4
      %s45 = int_to_ptr.vmem [resolvable:$true] %s44
      %50 = dma.hbm_to_vmem [thread:$0]  %s3, 2048, %s45, [#allocation5], 64, 64, 4
    $region17: #{actor_forward.1} parent=1 // pred_fallthru
      _
    // Predicated region
    $region18: #{actor_forward.1} parent=1 // pred_check
      _
    $region19: #{actor_forward.1} parent=1 // pred_check_branch
      %52 = sbr.rel (0) target = $region21
    $region20: #{actor_forward.1} parent=1 // pred_region
      _
    $region21: #{actor_forward.1} parent=1 // pred_fallthru
      _
    // Predicated region
    $region22: #{actor_forward.1} parent=1 // pred_check
      _
    $region23: #{actor_forward.1} parent=1 // pred_check_branch
      %54 = sbr.rel (0) target = $region25
    $region24: #{actor_forward.1} parent=1 // pred_region
      _
    $region25: #{actor_forward.1} parent=1 // pred_fallthru
      _
    // Predicated region
    $region26: #{actor_forward.1} parent=1 // pred_check
      _
    $region27: #{actor_forward.1} parent=1 // pred_check_branch
      %56 = sbr.rel (0) target = $region29
    $region28: #{actor_forward.1} parent=1 // pred_region
      %57 = dma.done [#allocation3], 131072
    $region29: #{actor_forward.1} parent=1 // pred_fallthru
      _
    // Predicated region
    $region30: #{actor_forward.1} parent=1 // pred_check
      _
    $region31: #{actor_forward.1} parent=1 // pred_check_branch
      %59 = sbr.rel (0) target = $region33
    $region32: #{actor_forward.1} parent=1 // pred_region
      %60 = dma.done [#allocation5], 8192
    $region33: #{actor_forward.1} parent=1 // pred_fallthru
      _
    // Predicated region
    $region34: #{actor_forward.1} parent=1 // pred_check
      _
    $region35: #{actor_forward.1} parent=1 // pred_check_branch
      %62 = sbr.rel (0) target = $region37
    $region36: #{actor_forward.1} parent=1 // pred_region
      %63 = dma.done [#allocation5], 2048
    $region37: #{actor_forward.1} parent=1 // pred_fallthru
      _
    %v65 = vld [vmem:[%s0] sm:$0xff]
    %v66 = vld [vmem:[%s0 + $0x8] sm:$0xff]
    %v67 = vld [vmem:[%s0 + $0x10] sm:$0xff]
    %v68 = vld [vmem:[%s0 + $0x18] sm:$0xff]
    %v69 = vld [vmem:[%s0 + $0x20] sm:$0xff]
    %v70 = vld [vmem:[%s0 + $0x28] sm:$0xff]
    %v71 = vld [vmem:[%s0 + $0x30] sm:$0xff]
    %v72 = vld [vmem:[%s0 + $0x38] sm:$0xff]
    %v73 = vld [vmem:[%s0 + $0x40] sm:$0xff]
    %v74 = vld [vmem:[%s0 + $0x48] sm:$0xff]
    %v75 = vld [vmem:[%s0 + $0x50] sm:$0xff]
    %v76 = vld [vmem:[%s0 + $0x58] sm:$0xff]
    %v77 = vld [vmem:[%s0 + $0x60] sm:$0xff]
    %v78 = vld [vmem:[%s0 + $0x68] sm:$0xff]
    %v79 = vld [vmem:[%s0 + $0x70] sm:$0xff]
    %v80 = vld [vmem:[%s0 + $0x78] sm:$0xff]
    %v81 = vld [vmem:[%s0 + $0x80] sm:$0xff]
    %v82 = vld [vmem:[%s0 + $0x88] sm:$0xff]
    %v83 = vld [vmem:[%s0 + $0x90] sm:$0xff]
    %v84 = vld [vmem:[%s0 + $0x98] sm:$0xff]
    %v85 = vld [vmem:[%s0 + $0xa0] sm:$0xff]
    %v86 = vld [vmem:[%s0 + $0xa8] sm:$0xff]
    %v87 = vld [vmem:[%s0 + $0xb0] sm:$0xff]
    %v88 = vld [vmem:[%s0 + $0xb8] sm:$0xff]
    %v89 = vld [vmem:[%s0 + $0xc0] sm:$0xff]
    %v90 = vld [vmem:[%s0 + $0xc8] sm:$0xff]
    %v91 = vld [vmem:[%s0 + $0xd0] sm:$0xff]
    %v92 = vld [vmem:[%s0 + $0xd8] sm:$0xff]
    %v93 = vld [vmem:[%s0 + $0xe0] sm:$0xff]
    %v94 = vld [vmem:[%s0 + $0xe8] sm:$0xff]
    %v95 = vld [vmem:[%s0 + $0xf0] sm:$0xff]
    %v96 = vld [vmem:[%s0 + $0xf8] sm:$0xff]
    %v97 = vld [vmem:[#allocation2] sm:$0xff]
    %v98 = vld [vmem:[#allocation2 + $0x8] sm:$0xff]
    %v99 = vld [vmem:[#allocation2 + $0x10] sm:$0xff]
    %v100 = vld [vmem:[#allocation2 + $0x18] sm:$0xff]
    %v101 = vld [vmem:[#allocation2 + $0x20] sm:$0xff]
    %v102 = vld [vmem:[#allocation2 + $0x28] sm:$0xff]
    %v103 = vld [vmem:[#allocation2 + $0x30] sm:$0xff]
    %v104 = vld [vmem:[#allocation2 + $0x38] sm:$0xff]
    %v105 = vld [vmem:[#allocation2 + $0x40] sm:$0xff]
    %v106 = vld [vmem:[#allocation2 + $0x48] sm:$0xff]
    %v107 = vld [vmem:[#allocation2 + $0x50] sm:$0xff]
    %v108 = vld [vmem:[#allocation2 + $0x58] sm:$0xff]
    %v109 = vld [vmem:[#allocation2 + $0x60] sm:$0xff]
    %v110 = vld [vmem:[#allocation2 + $0x68] sm:$0xff]
    %v111 = vld [vmem:[#allocation2 + $0x70] sm:$0xff]
    %v112 = vld [vmem:[#allocation2 + $0x78] sm:$0xff]
    %v113 = vld [vmem:[#allocation2 + $0x80] sm:$0xff]
    %v114 = vld [vmem:[#allocation2 + $0x88] sm:$0xff]
    %v115 = vld [vmem:[#allocation2 + $0x90] sm:$0xff]
    %v116 = vld [vmem:[#allocation2 + $0x98] sm:$0xff]
    %v117 = vld [vmem:[#allocation2 + $0xa0] sm:$0xff]
    %v118 = vld [vmem:[#allocation2 + $0xa8] sm:$0xff]
    %v119 = vld [vmem:[#allocation2 + $0xb0] sm:$0xff]
    %v120 = vld [vmem:[#allocation2 + $0xb8] sm:$0xff]
    %v121 = vld [vmem:[#allocation2 + $0xc0] sm:$0xff]
    %v122 = vld [vmem:[#allocation2 + $0xc8] sm:$0xff]
    %v123 = vld [vmem:[#allocation2 + $0xd0] sm:$0xff]
    %v124 = vld [vmem:[#allocation2 + $0xd8] sm:$0xff]
    %v125 = vld [vmem:[#allocation2 + $0xe0] sm:$0xff]
    %v126 = vld [vmem:[#allocation2 + $0xe8] sm:$0xff]
    %v127 = vld [vmem:[#allocation2 + $0xf0] sm:$0xff]
    %v128 = vld [vmem:[#allocation2 + $0xf8] sm:$0xff]
    %v129 = vld [vmem:[#allocation2 + $0x100] sm:$0xff]
    %v130 = vld [vmem:[#allocation2 + $0x108] sm:$0xff]
    %v131 = vld [vmem:[#allocation2 + $0x110] sm:$0xff]
    %v132 = vld [vmem:[#allocation2 + $0x118] sm:$0xff]
    %v133 = vld [vmem:[#allocation2 + $0x120] sm:$0xff]
    %v134 = vld [vmem:[#allocation2 + $0x128] sm:$0xff]
    %v135 = vld [vmem:[#allocation2 + $0x130] sm:$0xff]
    %v136 = vld [vmem:[#allocation2 + $0x138] sm:$0xff]
    %v137 = vld [vmem:[#allocation2 + $0x140] sm:$0xff]
    %v138 = vld [vmem:[#allocation2 + $0x148] sm:$0xff]
    %v139 = vld [vmem:[#allocation2 + $0x150] sm:$0xff]
    %v140 = vld [vmem:[#allocation2 + $0x158] sm:$0xff]
    %v141 = vld [vmem:[#allocation2 + $0x160] sm:$0xff]
    %v142 = vld [vmem:[#allocation2 + $0x168] sm:$0xff]
    %v143 = vld [vmem:[#allocation2 + $0x170] sm:$0xff]
    %v144 = vld [vmem:[#allocation2 + $0x178] sm:$0xff]
    %v145 = vld [vmem:[#allocation2 + $0x180] sm:$0xff]
    %v146 = vld [vmem:[#allocation2 + $0x188] sm:$0xff]
    %v147 = vld [vmem:[#allocation2 + $0x190] sm:$0xff]
    %v148 = vld [vmem:[#allocation2 + $0x198] sm:$0xff]
    %v149 = vld [vmem:[#allocation2 + $0x1a0] sm:$0xff]
    %v150 = vld [vmem:[#allocation2 + $0x1a8] sm:$0xff]
    %v151 = vld [vmem:[#allocation2 + $0x1b0] sm:$0xff]
    %v152 = vld [vmem:[#allocation2 + $0x1b8] sm:$0xff]
    %v153 = vld [vmem:[#allocation2 + $0x1c0] sm:$0xff]
    %v154 = vld [vmem:[#allocation2 + $0x1c8] sm:$0xff]
    %v155 = vld [vmem:[#allocation2 + $0x1d0] sm:$0xff]
    %v156 = vld [vmem:[#allocation2 + $0x1d8] sm:$0xff]
    %v157 = vld [vmem:[#allocation2 + $0x1e0] sm:$0xff]
    %v158 = vld [vmem:[#allocation2 + $0x1e8] sm:$0xff]
    %v159 = vld [vmem:[#allocation2 + $0x1f0] sm:$0xff]
    %v160 = vld [vmem:[#allocation2 + $0x1f8] sm:$0xff]
    %v161 = vld [vmem:[#allocation2 + $0x200] sm:$0xff]
    %v162 = vld [vmem:[#allocation2 + $0x208] sm:$0xff]
    %v163 = vld [vmem:[#allocation2 + $0x210] sm:$0xff]
    %v164 = vld [vmem:[#allocation2 + $0x218] sm:$0xff]
    %v165 = vld [vmem:[#allocation2 + $0x220] sm:$0xff]
    %v166 = vld [vmem:[#allocation2 + $0x228] sm:$0xff]
    %v167 = vld [vmem:[#allocation2 + $0x230] sm:$0xff]
    %v168 = vld [vmem:[#allocation2 + $0x238] sm:$0xff]
    %v169 = vld [vmem:[#allocation2 + $0x240] sm:$0xff]
    %v170 = vld [vmem:[#allocation2 + $0x248] sm:$0xff]
    %v171 = vld [vmem:[#allocation2 + $0x250] sm:$0xff]
    %v172 = vld [vmem:[#allocation2 + $0x258] sm:$0xff]
    %v173 = vld [vmem:[#allocation2 + $0x260] sm:$0xff]
    %v174 = vld [vmem:[#allocation2 + $0x268] sm:$0xff]
    %v175 = vld [vmem:[#allocation2 + $0x270] sm:$0xff]
    %v176 = vld [vmem:[#allocation2 + $0x278] sm:$0xff]
    %v177 = vld [vmem:[#allocation2 + $0x280] sm:$0xff]
    %v178 = vld [vmem:[#allocation2 + $0x288] sm:$0xff]
    %v179 = vld [vmem:[#allocation2 + $0x290] sm:$0xff]
    %v180 = vld [vmem:[#allocation2 + $0x298] sm:$0xff]
    %v181 = vld [vmem:[#allocation2 + $0x2a0] sm:$0xff]
    %v182 = vld [vmem:[#allocation2 + $0x2a8] sm:$0xff]
    %v183 = vld [vmem:[#allocation2 + $0x2b0] sm:$0xff]
    %v184 = vld [vmem:[#allocation2 + $0x2b8] sm:$0xff]
    %v185 = vld [vmem:[#allocation2 + $0x2c0] sm:$0xff]
    %v186 = vld [vmem:[#allocation2 + $0x2c8] sm:$0xff]
    %v187 = vld [vmem:[#allocation2 + $0x2d0] sm:$0xff]
    %v188 = vld [vmem:[#allocation2 + $0x2d8] sm:$0xff]
    %v189 = vld [vmem:[#allocation2 + $0x2e0] sm:$0xff]
    %v190 = vld [vmem:[#allocation2 + $0x2e8] sm:$0xff]
    %v191 = vld [vmem:[#allocation2 + $0x2f0] sm:$0xff]
    %v192 = vld [vmem:[#allocation2 + $0x2f8] sm:$0xff]
    %v193 = vld [vmem:[#allocation2 + $0x300] sm:$0xff]
    %v194 = vld [vmem:[#allocation2 + $0x308] sm:$0xff]
    %v195 = vld [vmem:[#allocation2 + $0x310] sm:$0xff]
    %v196 = vld [vmem:[#allocation2 + $0x318] sm:$0xff]
    %v197 = vld [vmem:[#allocation2 + $0x320] sm:$0xff]
    %v198 = vld [vmem:[#allocation2 + $0x328] sm:$0xff]
    %v199 = vld [vmem:[#allocation2 + $0x330] sm:$0xff]
    %v200 = vld [vmem:[#allocation2 + $0x338] sm:$0xff]
    %v201 = vld [vmem:[#allocation2 + $0x340] sm:$0xff]
    %v202 = vld [vmem:[#allocation2 + $0x348] sm:$0xff]
    %v203 = vld [vmem:[#allocation2 + $0x350] sm:$0xff]
    %v204 = vld [vmem:[#allocation2 + $0x358] sm:$0xff]
    %v205 = vld [vmem:[#allocation2 + $0x360] sm:$0xff]
    %v206 = vld [vmem:[#allocation2 + $0x368] sm:$0xff]
    %v207 = vld [vmem:[#allocation2 + $0x370] sm:$0xff]
    %v208 = vld [vmem:[#allocation2 + $0x378] sm:$0xff]
    %v209 = vld [vmem:[#allocation2 + $0x380] sm:$0xff]
    %v210 = vld [vmem:[#allocation2 + $0x388] sm:$0xff]
    %v211 = vld [vmem:[#allocation2 + $0x390] sm:$0xff]
    %v212 = vld [vmem:[#allocation2 + $0x398] sm:$0xff]
    %v213 = vld [vmem:[#allocation2 + $0x3a0] sm:$0xff]
    %v214 = vld [vmem:[#allocation2 + $0x3a8] sm:$0xff]
    %v215 = vld [vmem:[#allocation2 + $0x3b0] sm:$0xff]
    %v216 = vld [vmem:[#allocation2 + $0x3b8] sm:$0xff]
    %v217 = vld [vmem:[#allocation2 + $0x3c0] sm:$0xff]
    %v218 = vld [vmem:[#allocation2 + $0x3c8] sm:$0xff]
    %v219 = vld [vmem:[#allocation2 + $0x3d0] sm:$0xff]
    %v220 = vld [vmem:[#allocation2 + $0x3d8] sm:$0xff]
    %v221 = vld [vmem:[#allocation2 + $0x3e0] sm:$0xff]
    %v222 = vld [vmem:[#allocation2 + $0x3e8] sm:$0xff]
    %v223 = vld [vmem:[#allocation2 + $0x3f0] sm:$0xff]
    %v224 = vld [vmem:[#allocation2 + $0x3f8] sm:$0xff]
    %v225 = vld [vmem:[#allocation2 + $0x400] sm:$0xff]
    %v226 = vld [vmem:[#allocation2 + $0x408] sm:$0xff]
    %v227 = vld [vmem:[#allocation2 + $0x410] sm:$0xff]
    %v228 = vld [vmem:[#allocation2 + $0x418] sm:$0xff]
    %v229 = vld [vmem:[#allocation2 + $0x420] sm:$0xff]
    %v230 = vld [vmem:[#allocation2 + $0x428] sm:$0xff]
    %v231 = vld [vmem:[#allocation2 + $0x430] sm:$0xff]
    %v232 = vld [vmem:[#allocation2 + $0x438] sm:$0xff]
    %v233 = vld [vmem:[#allocation2 + $0x440] sm:$0xff]
    %v234 = vld [vmem:[#allocation2 + $0x448] sm:$0xff]
    %v235 = vld [vmem:[#allocation2 + $0x450] sm:$0xff]
    %v236 = vld [vmem:[#allocation2 + $0x458] sm:$0xff]
    %v237 = vld [vmem:[#allocation2 + $0x460] sm:$0xff]
    %v238 = vld [vmem:[#allocation2 + $0x468] sm:$0xff]
    %v239 = vld [vmem:[#allocation2 + $0x470] sm:$0xff]
    %v240 = vld [vmem:[#allocation2 + $0x478] sm:$0xff]
    %v241 = vld [vmem:[#allocation2 + $0x480] sm:$0xff]
    %v242 = vld [vmem:[#allocation2 + $0x488] sm:$0xff]
    %v243 = vld [vmem:[#allocation2 + $0x490] sm:$0xff]
    %v244 = vld [vmem:[#allocation2 + $0x498] sm:$0xff]
    %v245 = vld [vmem:[#allocation2 + $0x4a0] sm:$0xff]
    %v246 = vld [vmem:[#allocation2 + $0x4a8] sm:$0xff]
    %v247 = vld [vmem:[#allocation2 + $0x4b0] sm:$0xff]
    %v248 = vld [vmem:[#allocation2 + $0x4b8] sm:$0xff]
    %v249 = vld [vmem:[#allocation2 + $0x4c0] sm:$0xff]
    %v250 = vld [vmem:[#allocation2 + $0x4c8] sm:$0xff]
    %v251 = vld [vmem:[#allocation2 + $0x4d0] sm:$0xff]
    %v252 = vld [vmem:[#allocation2 + $0x4d8] sm:$0xff]
    %v253 = vld [vmem:[#allocation2 + $0x4e0] sm:$0xff]
    %v254 = vld [vmem:[#allocation2 + $0x4e8] sm:$0xff]
    %v255 = vld [vmem:[#allocation2 + $0x4f0] sm:$0xff]
    %v256 = vld [vmem:[#allocation2 + $0x4f8] sm:$0xff]
    %v257 = vld [vmem:[#allocation2 + $0x500] sm:$0xff]
    %v258 = vld [vmem:[#allocation2 + $0x508] sm:$0xff]
    %v259 = vld [vmem:[#allocation2 + $0x510] sm:$0xff]
    %v260 = vld [vmem:[#allocation2 + $0x518] sm:$0xff]
    %v261 = vld [vmem:[#allocation2 + $0x520] sm:$0xff]
    %v262 = vld [vmem:[#allocation2 + $0x528] sm:$0xff]
    %v263 = vld [vmem:[#allocation2 + $0x530] sm:$0xff]
    %v264 = vld [vmem:[#allocation2 + $0x538] sm:$0xff]
    %v265 = vld [vmem:[#allocation2 + $0x540] sm:$0xff]
    %v266 = vld [vmem:[#allocation2 + $0x548] sm:$0xff]
    %v267 = vld [vmem:[#allocation2 + $0x550] sm:$0xff]
    %v268 = vld [vmem:[#allocation2 + $0x558] sm:$0xff]
    %v269 = vld [vmem:[#allocation2 + $0x560] sm:$0xff]
    %v270 = vld [vmem:[#allocation2 + $0x568] sm:$0xff]
    %v271 = vld [vmem:[#allocation2 + $0x570] sm:$0xff]
    %v272 = vld [vmem:[#allocation2 + $0x578] sm:$0xff]
    %v273 = vld [vmem:[#allocation2 + $0x580] sm:$0xff]
    %v274 = vld [vmem:[#allocation2 + $0x588] sm:$0xff]
    %v275 = vld [vmem:[#allocation2 + $0x590] sm:$0xff]
    %v276 = vld [vmem:[#allocation2 + $0x598] sm:$0xff]
    %v277 = vld [vmem:[#allocation2 + $0x5a0] sm:$0xff]
    %v278 = vld [vmem:[#allocation2 + $0x5a8] sm:$0xff]
    %v279 = vld [vmem:[#allocation2 + $0x5b0] sm:$0xff]
    %v280 = vld [vmem:[#allocation2 + $0x5b8] sm:$0xff]
    %v281 = vld [vmem:[#allocation2 + $0x5c0] sm:$0xff]
    %v282 = vld [vmem:[#allocation2 + $0x5c8] sm:$0xff]
    %v283 = vld [vmem:[#allocation2 + $0x5d0] sm:$0xff]
    %v284 = vld [vmem:[#allocation2 + $0x5d8] sm:$0xff]
    %v285 = vld [vmem:[#allocation2 + $0x5e0] sm:$0xff]
    %v286 = vld [vmem:[#allocation2 + $0x5e8] sm:$0xff]
    %v287 = vld [vmem:[#allocation2 + $0x5f0] sm:$0xff]
    %v288 = vld [vmem:[#allocation2 + $0x5f8] sm:$0xff]
    %v289 = vld [vmem:[#allocation2 + $0x600] sm:$0xff]
    %v290 = vld [vmem:[#allocation2 + $0x608] sm:$0xff]
    %v291 = vld [vmem:[#allocation2 + $0x610] sm:$0xff]
    %v292 = vld [vmem:[#allocation2 + $0x618] sm:$0xff]
    %v293 = vld [vmem:[#allocation2 + $0x620] sm:$0xff]
    %v294 = vld [vmem:[#allocation2 + $0x628] sm:$0xff]
    %v295 = vld [vmem:[#allocation2 + $0x630] sm:$0xff]
    %v296 = vld [vmem:[#allocation2 + $0x638] sm:$0xff]
    %v297 = vld [vmem:[#allocation2 + $0x640] sm:$0xff]
    %v298 = vld [vmem:[#allocation2 + $0x648] sm:$0xff]
    %v299 = vld [vmem:[#allocation2 + $0x650] sm:$0xff]
    %v300 = vld [vmem:[#allocation2 + $0x658] sm:$0xff]
    %v301 = vld [vmem:[#allocation2 + $0x660] sm:$0xff]
    %v302 = vld [vmem:[#allocation2 + $0x668] sm:$0xff]
    %v303 = vld [vmem:[#allocation2 + $0x670] sm:$0xff]
    %v304 = vld [vmem:[#allocation2 + $0x678] sm:$0xff]
    %v305 = vld [vmem:[#allocation2 + $0x680] sm:$0xff]
    %v306 = vld [vmem:[#allocation2 + $0x688] sm:$0xff]
    %v307 = vld [vmem:[#allocation2 + $0x690] sm:$0xff]
    %v308 = vld [vmem:[#allocation2 + $0x698] sm:$0xff]
    %v309 = vld [vmem:[#allocation2 + $0x6a0] sm:$0xff]
    %v310 = vld [vmem:[#allocation2 + $0x6a8] sm:$0xff]
    %v311 = vld [vmem:[#allocation2 + $0x6b0] sm:$0xff]
    %v312 = vld [vmem:[#allocation2 + $0x6b8] sm:$0xff]
    %v313 = vld [vmem:[#allocation2 + $0x6c0] sm:$0xff]
    %v314 = vld [vmem:[#allocation2 + $0x6c8] sm:$0xff]
    %v315 = vld [vmem:[#allocation2 + $0x6d0] sm:$0xff]
    %v316 = vld [vmem:[#allocation2 + $0x6d8] sm:$0xff]
    %v317 = vld [vmem:[#allocation2 + $0x6e0] sm:$0xff]
    %v318 = vld [vmem:[#allocation2 + $0x6e8] sm:$0xff]
    %v319 = vld [vmem:[#allocation2 + $0x6f0] sm:$0xff]
    %v320 = vld [vmem:[#allocation2 + $0x6f8] sm:$0xff]
    %v321 = vld [vmem:[#allocation2 + $0x700] sm:$0xff]
    %v322 = vld [vmem:[#allocation2 + $0x708] sm:$0xff]
    %v323 = vld [vmem:[#allocation2 + $0x710] sm:$0xff]
    %v324 = vld [vmem:[#allocation2 + $0x718] sm:$0xff]
    %v325 = vld [vmem:[#allocation2 + $0x720] sm:$0xff]
    %v326 = vld [vmem:[#allocation2 + $0x728] sm:$0xff]
    %v327 = vld [vmem:[#allocation2 + $0x730] sm:$0xff]
    %v328 = vld [vmem:[#allocation2 + $0x738] sm:$0xff]
    %v329 = vld [vmem:[#allocation2 + $0x740] sm:$0xff]
    %v330 = vld [vmem:[#allocation2 + $0x748] sm:$0xff]
    %v331 = vld [vmem:[#allocation2 + $0x750] sm:$0xff]
    %v332 = vld [vmem:[#allocation2 + $0x758] sm:$0xff]
    %v333 = vld [vmem:[#allocation2 + $0x760] sm:$0xff]
    %v334 = vld [vmem:[#allocation2 + $0x768] sm:$0xff]
    %v335 = vld [vmem:[#allocation2 + $0x770] sm:$0xff]
    %v336 = vld [vmem:[#allocation2 + $0x778] sm:$0xff]
    %v337 = vld [vmem:[#allocation2 + $0x780] sm:$0xff]
    %v338 = vld [vmem:[#allocation2 + $0x788] sm:$0xff]
    %v339 = vld [vmem:[#allocation2 + $0x790] sm:$0xff]
    %v340 = vld [vmem:[#allocation2 + $0x798] sm:$0xff]
    %v341 = vld [vmem:[#allocation2 + $0x7a0] sm:$0xff]
    %v342 = vld [vmem:[#allocation2 + $0x7a8] sm:$0xff]
    %v343 = vld [vmem:[#allocation2 + $0x7b0] sm:$0xff]
    %v344 = vld [vmem:[#allocation2 + $0x7b8] sm:$0xff]
    %v345 = vld [vmem:[#allocation2 + $0x7c0] sm:$0xff]
    %v346 = vld [vmem:[#allocation2 + $0x7c8] sm:$0xff]
    %v347 = vld [vmem:[#allocation2 + $0x7d0] sm:$0xff]
    %v348 = vld [vmem:[#allocation2 + $0x7d8] sm:$0xff]
    %v349 = vld [vmem:[#allocation2 + $0x7e0] sm:$0xff]
    %v350 = vld [vmem:[#allocation2 + $0x7e8] sm:$0xff]
    %v351 = vld [vmem:[#allocation2 + $0x7f0] sm:$0xff]
    %v352 = vld [vmem:[#allocation2 + $0x7f8] sm:$0xff]
    %v353 = vld [vmem:[#allocation2 + $0x800] sm:$0xff]
    %v354 = vld [vmem:[#allocation2 + $0x808] sm:$0xff]
    %v355 = vld [vmem:[#allocation2 + $0x810] sm:$0xff]
    %v356 = vld [vmem:[#allocation2 + $0x818] sm:$0xff]
    %v357 = vld [vmem:[#allocation2 + $0x820] sm:$0xff]
    %v358 = vld [vmem:[#allocation2 + $0x828] sm:$0xff]
    %v359 = vld [vmem:[#allocation2 + $0x830] sm:$0xff]
    %v360 = vld [vmem:[#allocation2 + $0x838] sm:$0xff]
    %v361 = vld [vmem:[#allocation2 + $0x840] sm:$0xff]
    %v362 = vld [vmem:[#allocation2 + $0x848] sm:$0xff]
    %v363 = vld [vmem:[#allocation2 + $0x850] sm:$0xff]
    %v364 = vld [vmem:[#allocation2 + $0x858] sm:$0xff]
    %v365 = vld [vmem:[#allocation2 + $0x860] sm:$0xff]
    %v366 = vld [vmem:[#allocation2 + $0x868] sm:$0xff]
    %v367 = vld [vmem:[#allocation2 + $0x870] sm:$0xff]
    %v368 = vld [vmem:[#allocation2 + $0x878] sm:$0xff]
    %v369 = vld [vmem:[#allocation2 + $0x880] sm:$0xff]
    %v370 = vld [vmem:[#allocation2 + $0x888] sm:$0xff]
    %v371 = vld [vmem:[#allocation2 + $0x890] sm:$0xff]
    %v372 = vld [vmem:[#allocation2 + $0x898] sm:$0xff]
    %v373 = vld [vmem:[#allocation2 + $0x8a0] sm:$0xff]
    %v374 = vld [vmem:[#allocation2 + $0x8a8] sm:$0xff]
    %v375 = vld [vmem:[#allocation2 + $0x8b0] sm:$0xff]
    %v376 = vld [vmem:[#allocation2 + $0x8b8] sm:$0xff]
    %v377 = vld [vmem:[#allocation2 + $0x8c0] sm:$0xff]
    %v378 = vld [vmem:[#allocation2 + $0x8c8] sm:$0xff]
    %v379 = vld [vmem:[#allocation2 + $0x8d0] sm:$0xff]
    %v380 = vld [vmem:[#allocation2 + $0x8d8] sm:$0xff]
    %v381 = vld [vmem:[#allocation2 + $0x8e0] sm:$0xff]
    %v382 = vld [vmem:[#allocation2 + $0x8e8] sm:$0xff]
    %v383 = vld [vmem:[#allocation2 + $0x8f0] sm:$0xff]
    %v384 = vld [vmem:[#allocation2 + $0x8f8] sm:$0xff]
    %v385 = vld [vmem:[#allocation2 + $0x900] sm:$0xff]
    %v386 = vld [vmem:[#allocation2 + $0x908] sm:$0xff]
    %v387 = vld [vmem:[#allocation2 + $0x910] sm:$0xff]
    %v388 = vld [vmem:[#allocation2 + $0x918] sm:$0xff]
    %v389 = vld [vmem:[#allocation2 + $0x920] sm:$0xff]
    %v390 = vld [vmem:[#allocation2 + $0x928] sm:$0xff]
    %v391 = vld [vmem:[#allocation2 + $0x930] sm:$0xff]
    %v392 = vld [vmem:[#allocation2 + $0x938] sm:$0xff]
    %v393 = vld [vmem:[#allocation2 + $0x940] sm:$0xff]
    %v394 = vld [vmem:[#allocation2 + $0x948] sm:$0xff]
    %v395 = vld [vmem:[#allocation2 + $0x950] sm:$0xff]
    %v396 = vld [vmem:[#allocation2 + $0x958] sm:$0xff]
    %v397 = vld [vmem:[#allocation2 + $0x960] sm:$0xff]
    %v398 = vld [vmem:[#allocation2 + $0x968] sm:$0xff]
    %v399 = vld [vmem:[#allocation2 + $0x970] sm:$0xff]
    %v400 = vld [vmem:[#allocation2 + $0x978] sm:$0xff]
    %v401 = vld [vmem:[#allocation2 + $0x980] sm:$0xff]
    %v402 = vld [vmem:[#allocation2 + $0x988] sm:$0xff]
    %v403 = vld [vmem:[#allocation2 + $0x990] sm:$0xff]
    %v404 = vld [vmem:[#allocation2 + $0x998] sm:$0xff]
    %v405 = vld [vmem:[#allocation2 + $0x9a0] sm:$0xff]
    %v406 = vld [vmem:[#allocation2 + $0x9a8] sm:$0xff]
    %v407 = vld [vmem:[#allocation2 + $0x9b0] sm:$0xff]
    %v408 = vld [vmem:[#allocation2 + $0x9b8] sm:$0xff]
    %v409 = vld [vmem:[#allocation2 + $0x9c0] sm:$0xff]
    %v410 = vld [vmem:[#allocation2 + $0x9c8] sm:$0xff]
    %v411 = vld [vmem:[#allocation2 + $0x9d0] sm:$0xff]
    %v412 = vld [vmem:[#allocation2 + $0x9d8] sm:$0xff]
    %v413 = vld [vmem:[#allocation2 + $0x9e0] sm:$0xff]
    %v414 = vld [vmem:[#allocation2 + $0x9e8] sm:$0xff]
    %v415 = vld [vmem:[#allocation2 + $0x9f0] sm:$0xff]
    %v416 = vld [vmem:[#allocation2 + $0x9f8] sm:$0xff]
    %v417 = vld [vmem:[#allocation2 + $0xa00] sm:$0xff]
    %v418 = vld [vmem:[#allocation2 + $0xa08] sm:$0xff]
    %v419 = vld [vmem:[#allocation2 + $0xa10] sm:$0xff]
    %v420 = vld [vmem:[#allocation2 + $0xa18] sm:$0xff]
    %v421 = vld [vmem:[#allocation2 + $0xa20] sm:$0xff]
    %v422 = vld [vmem:[#allocation2 + $0xa28] sm:$0xff]
    %v423 = vld [vmem:[#allocation2 + $0xa30] sm:$0xff]
    %v424 = vld [vmem:[#allocation2 + $0xa38] sm:$0xff]
    %v425 = vld [vmem:[#allocation2 + $0xa40] sm:$0xff]
    %v426 = vld [vmem:[#allocation2 + $0xa48] sm:$0xff]
    %v427 = vld [vmem:[#allocation2 + $0xa50] sm:$0xff]
    %v428 = vld [vmem:[#allocation2 + $0xa58] sm:$0xff]
    %v429 = vld [vmem:[#allocation2 + $0xa60] sm:$0xff]
    %v430 = vld [vmem:[#allocation2 + $0xa68] sm:$0xff]
    %v431 = vld [vmem:[#allocation2 + $0xa70] sm:$0xff]
    %v432 = vld [vmem:[#allocation2 + $0xa78] sm:$0xff]
    %v433 = vld [vmem:[#allocation2 + $0xa80] sm:$0xff]
    %v434 = vld [vmem:[#allocation2 + $0xa88] sm:$0xff]
    %v435 = vld [vmem:[#allocation2 + $0xa90] sm:$0xff]
    %v436 = vld [vmem:[#allocation2 + $0xa98] sm:$0xff]
    %v437 = vld [vmem:[#allocation2 + $0xaa0] sm:$0xff]
    %v438 = vld [vmem:[#allocation2 + $0xaa8] sm:$0xff]
    %v439 = vld [vmem:[#allocation2 + $0xab0] sm:$0xff]
    %v440 = vld [vmem:[#allocation2 + $0xab8] sm:$0xff]
    %v441 = vld [vmem:[#allocation2 + $0xac0] sm:$0xff]
    %v442 = vld [vmem:[#allocation2 + $0xac8] sm:$0xff]
    %v443 = vld [vmem:[#allocation2 + $0xad0] sm:$0xff]
    %v444 = vld [vmem:[#allocation2 + $0xad8] sm:$0xff]
    %v445 = vld [vmem:[#allocation2 + $0xae0] sm:$0xff]
    %v446 = vld [vmem:[#allocation2 + $0xae8] sm:$0xff]
    %v447 = vld [vmem:[#allocation2 + $0xaf0] sm:$0xff]
    %v448 = vld [vmem:[#allocation2 + $0xaf8] sm:$0xff]
    %v449 = vld [vmem:[#allocation2 + $0xb00] sm:$0xff]
    %v450 = vld [vmem:[#allocation2 + $0xb08] sm:$0xff]
    %v451 = vld [vmem:[#allocation2 + $0xb10] sm:$0xff]
    %v452 = vld [vmem:[#allocation2 + $0xb18] sm:$0xff]
    %v453 = vld [vmem:[#allocation2 + $0xb20] sm:$0xff]
    %v454 = vld [vmem:[#allocation2 + $0xb28] sm:$0xff]
    %v455 = vld [vmem:[#allocation2 + $0xb30] sm:$0xff]
    %v456 = vld [vmem:[#allocation2 + $0xb38] sm:$0xff]
    %v457 = vld [vmem:[#allocation2 + $0xb40] sm:$0xff]
    %v458 = vld [vmem:[#allocation2 + $0xb48] sm:$0xff]
    %v459 = vld [vmem:[#allocation2 + $0xb50] sm:$0xff]
    %v460 = vld [vmem:[#allocation2 + $0xb58] sm:$0xff]
    %v461 = vld [vmem:[#allocation2 + $0xb60] sm:$0xff]
    %v462 = vld [vmem:[#allocation2 + $0xb68] sm:$0xff]
    %v463 = vld [vmem:[#allocation2 + $0xb70] sm:$0xff]
    %v464 = vld [vmem:[#allocation2 + $0xb78] sm:$0xff]
    %v465 = vld [vmem:[#allocation2 + $0xb80] sm:$0xff]
    %v466 = vld [vmem:[#allocation2 + $0xb88] sm:$0xff]
    %v467 = vld [vmem:[#allocation2 + $0xb90] sm:$0xff]
    %v468 = vld [vmem:[#allocation2 + $0xb98] sm:$0xff]
    %v469 = vld [vmem:[#allocation2 + $0xba0] sm:$0xff]
    %v470 = vld [vmem:[#allocation2 + $0xba8] sm:$0xff]
    %v471 = vld [vmem:[#allocation2 + $0xbb0] sm:$0xff]
    %v472 = vld [vmem:[#allocation2 + $0xbb8] sm:$0xff]
    %v473 = vld [vmem:[#allocation2 + $0xbc0] sm:$0xff]
    %v474 = vld [vmem:[#allocation2 + $0xbc8] sm:$0xff]
    %v475 = vld [vmem:[#allocation2 + $0xbd0] sm:$0xff]
    %v476 = vld [vmem:[#allocation2 + $0xbd8] sm:$0xff]
    %v477 = vld [vmem:[#allocation2 + $0xbe0] sm:$0xff]
    %v478 = vld [vmem:[#allocation2 + $0xbe8] sm:$0xff]
    %v479 = vld [vmem:[#allocation2 + $0xbf0] sm:$0xff]
    %v480 = vld [vmem:[#allocation2 + $0xbf8] sm:$0xff]
    %v481 = vld [vmem:[#allocation2 + $0xc00] sm:$0xff]
    %v482 = vld [vmem:[#allocation2 + $0xc08] sm:$0xff]
    %v483 = vld [vmem:[#allocation2 + $0xc10] sm:$0xff]
    %v484 = vld [vmem:[#allocation2 + $0xc18] sm:$0xff]
    %v485 = vld [vmem:[#allocation2 + $0xc20] sm:$0xff]
    %v486 = vld [vmem:[#allocation2 + $0xc28] sm:$0xff]
    %v487 = vld [vmem:[#allocation2 + $0xc30] sm:$0xff]
    %v488 = vld [vmem:[#allocation2 + $0xc38] sm:$0xff]
    %v489 = vld [vmem:[#allocation2 + $0xc40] sm:$0xff]
    %v490 = vld [vmem:[#allocation2 + $0xc48] sm:$0xff]
    %v491 = vld [vmem:[#allocation2 + $0xc50] sm:$0xff]
    %v492 = vld [vmem:[#allocation2 + $0xc58] sm:$0xff]
    %v493 = vld [vmem:[#allocation2 + $0xc60] sm:$0xff]
    %v494 = vld [vmem:[#allocation2 + $0xc68] sm:$0xff]
    %v495 = vld [vmem:[#allocation2 + $0xc70] sm:$0xff]
    %v496 = vld [vmem:[#allocation2 + $0xc78] sm:$0xff]
    %v497 = vld [vmem:[#allocation2 + $0xc80] sm:$0xff]
    %v498 = vld [vmem:[#allocation2 + $0xc88] sm:$0xff]
    %v499 = vld [vmem:[#allocation2 + $0xc90] sm:$0xff]
    %v500 = vld [vmem:[#allocation2 + $0xc98] sm:$0xff]
    %v501 = vld [vmem:[#allocation2 + $0xca0] sm:$0xff]
    %v502 = vld [vmem:[#allocation2 + $0xca8] sm:$0xff]
    %v503 = vld [vmem:[#allocation2 + $0xcb0] sm:$0xff]
    %v504 = vld [vmem:[#allocation2 + $0xcb8] sm:$0xff]
    %v505 = vld [vmem:[#allocation2 + $0xcc0] sm:$0xff]
    %v506 = vld [vmem:[#allocation2 + $0xcc8] sm:$0xff]
    %v507 = vld [vmem:[#allocation2 + $0xcd0] sm:$0xff]
    %v508 = vld [vmem:[#allocation2 + $0xcd8] sm:$0xff]
    %v509 = vld [vmem:[#allocation2 + $0xce0] sm:$0xff]
    %v510 = vld [vmem:[#allocation2 + $0xce8] sm:$0xff]
    %v511 = vld [vmem:[#allocation2 + $0xcf0] sm:$0xff]
    %v512 = vld [vmem:[#allocation2 + $0xcf8] sm:$0xff]
    %v513 = vld [vmem:[#allocation2 + $0xd00] sm:$0xff]
    %v514 = vld [vmem:[#allocation2 + $0xd08] sm:$0xff]
    %v515 = vld [vmem:[#allocation2 + $0xd10] sm:$0xff]
    %v516 = vld [vmem:[#allocation2 + $0xd18] sm:$0xff]
    %v517 = vld [vmem:[#allocation2 + $0xd20] sm:$0xff]
    %v518 = vld [vmem:[#allocation2 + $0xd28] sm:$0xff]
    %v519 = vld [vmem:[#allocation2 + $0xd30] sm:$0xff]
    %v520 = vld [vmem:[#allocation2 + $0xd38] sm:$0xff]
    %v521 = vld [vmem:[#allocation2 + $0xd40] sm:$0xff]
    %v522 = vld [vmem:[#allocation2 + $0xd48] sm:$0xff]
    %v523 = vld [vmem:[#allocation2 + $0xd50] sm:$0xff]
    %v524 = vld [vmem:[#allocation2 + $0xd58] sm:$0xff]
    %v525 = vld [vmem:[#allocation2 + $0xd60] sm:$0xff]
    %v526 = vld [vmem:[#allocation2 + $0xd68] sm:$0xff]
    %v527 = vld [vmem:[#allocation2 + $0xd70] sm:$0xff]
    %v528 = vld [vmem:[#allocation2 + $0xd78] sm:$0xff]
    %v529 = vld [vmem:[#allocation2 + $0xd80] sm:$0xff]
    %v530 = vld [vmem:[#allocation2 + $0xd88] sm:$0xff]
    %v531 = vld [vmem:[#allocation2 + $0xd90] sm:$0xff]
    %v532 = vld [vmem:[#allocation2 + $0xd98] sm:$0xff]
    %v533 = vld [vmem:[#allocation2 + $0xda0] sm:$0xff]
    %v534 = vld [vmem:[#allocation2 + $0xda8] sm:$0xff]
    %v535 = vld [vmem:[#allocation2 + $0xdb0] sm:$0xff]
    %v536 = vld [vmem:[#allocation2 + $0xdb8] sm:$0xff]
    %v537 = vld [vmem:[#allocation2 + $0xdc0] sm:$0xff]
    %v538 = vld [vmem:[#allocation2 + $0xdc8] sm:$0xff]
    %v539 = vld [vmem:[#allocation2 + $0xdd0] sm:$0xff]
    %v540 = vld [vmem:[#allocation2 + $0xdd8] sm:$0xff]
    %v541 = vld [vmem:[#allocation2 + $0xde0] sm:$0xff]
    %v542 = vld [vmem:[#allocation2 + $0xde8] sm:$0xff]
    %v543 = vld [vmem:[#allocation2 + $0xdf0] sm:$0xff]
    %v544 = vld [vmem:[#allocation2 + $0xdf8] sm:$0xff]
    %v545 = vld [vmem:[#allocation2 + $0xe00] sm:$0xff]
    %v546 = vld [vmem:[#allocation2 + $0xe08] sm:$0xff]
    %v547 = vld [vmem:[#allocation2 + $0xe10] sm:$0xff]
    %v548 = vld [vmem:[#allocation2 + $0xe18] sm:$0xff]
    %v549 = vld [vmem:[#allocation2 + $0xe20] sm:$0xff]
    %v550 = vld [vmem:[#allocation2 + $0xe28] sm:$0xff]
    %v551 = vld [vmem:[#allocation2 + $0xe30] sm:$0xff]
    %v552 = vld [vmem:[#allocation2 + $0xe38] sm:$0xff]
    %v553 = vld [vmem:[#allocation2 + $0xe40] sm:$0xff]
    %v554 = vld [vmem:[#allocation2 + $0xe48] sm:$0xff]
    %v555 = vld [vmem:[#allocation2 + $0xe50] sm:$0xff]
    %v556 = vld [vmem:[#allocation2 + $0xe58] sm:$0xff]
    %v557 = vld [vmem:[#allocation2 + $0xe60] sm:$0xff]
    %v558 = vld [vmem:[#allocation2 + $0xe68] sm:$0xff]
    %v559 = vld [vmem:[#allocation2 + $0xe70] sm:$0xff]
    %v560 = vld [vmem:[#allocation2 + $0xe78] sm:$0xff]
    %v561 = vld [vmem:[#allocation2 + $0xe80] sm:$0xff]
    %v562 = vld [vmem:[#allocation2 + $0xe88] sm:$0xff]
    %v563 = vld [vmem:[#allocation2 + $0xe90] sm:$0xff]
    %v564 = vld [vmem:[#allocation2 + $0xe98] sm:$0xff]
    %v565 = vld [vmem:[#allocation2 + $0xea0] sm:$0xff]
    %v566 = vld [vmem:[#allocation2 + $0xea8] sm:$0xff]
    %v567 = vld [vmem:[#allocation2 + $0xeb0] sm:$0xff]
    %v568 = vld [vmem:[#allocation2 + $0xeb8] sm:$0xff]
    %v569 = vld [vmem:[#allocation2 + $0xec0] sm:$0xff]
    %v570 = vld [vmem:[#allocation2 + $0xec8] sm:$0xff]
    %v571 = vld [vmem:[#allocation2 + $0xed0] sm:$0xff]
    %v572 = vld [vmem:[#allocation2 + $0xed8] sm:$0xff]
    %v573 = vld [vmem:[#allocation2 + $0xee0] sm:$0xff]
    %v574 = vld [vmem:[#allocation2 + $0xee8] sm:$0xff]
    %v575 = vld [vmem:[#allocation2 + $0xef0] sm:$0xff]
    %v576 = vld [vmem:[#allocation2 + $0xef8] sm:$0xff]
    %v577 = vld [vmem:[#allocation2 + $0xf00] sm:$0xff]
    %v578 = vld [vmem:[#allocation2 + $0xf08] sm:$0xff]
    %v579 = vld [vmem:[#allocation2 + $0xf10] sm:$0xff]
    %v580 = vld [vmem:[#allocation2 + $0xf18] sm:$0xff]
    %v581 = vld [vmem:[#allocation2 + $0xf20] sm:$0xff]
    %v582 = vld [vmem:[#allocation2 + $0xf28] sm:$0xff]
    %v583 = vld [vmem:[#allocation2 + $0xf30] sm:$0xff]
    %v584 = vld [vmem:[#allocation2 + $0xf38] sm:$0xff]
    %v585 = vld [vmem:[#allocation2 + $0xf40] sm:$0xff]
    %v586 = vld [vmem:[#allocation2 + $0xf48] sm:$0xff]
    %v587 = vld [vmem:[#allocation2 + $0xf50] sm:$0xff]
    %v588 = vld [vmem:[#allocation2 + $0xf58] sm:$0xff]
    %v589 = vld [vmem:[#allocation2 + $0xf60] sm:$0xff]
    %v590 = vld [vmem:[#allocation2 + $0xf68] sm:$0xff]
    %v591 = vld [vmem:[#allocation2 + $0xf70] sm:$0xff]
    %v592 = vld [vmem:[#allocation2 + $0xf78] sm:$0xff]
    %v593 = vld [vmem:[#allocation2 + $0xf80] sm:$0xff]
    %v594 = vld [vmem:[#allocation2 + $0xf88] sm:$0xff]
    %v595 = vld [vmem:[#allocation2 + $0xf90] sm:$0xff]
    %v596 = vld [vmem:[#allocation2 + $0xf98] sm:$0xff]
    %v597 = vld [vmem:[#allocation2 + $0xfa0] sm:$0xff]
    %v598 = vld [vmem:[#allocation2 + $0xfa8] sm:$0xff]
    %v599 = vld [vmem:[#allocation2 + $0xfb0] sm:$0xff]
    %v600 = vld [vmem:[#allocation2 + $0xfb8] sm:$0xff]
    %v601 = vld [vmem:[#allocation2 + $0xfc0] sm:$0xff]
    %v602 = vld [vmem:[#allocation2 + $0xfc8] sm:$0xff]
    %v603 = vld [vmem:[#allocation2 + $0xfd0] sm:$0xff]
    %v604 = vld [vmem:[#allocation2 + $0xfd8] sm:$0xff]
    %v605 = vld [vmem:[#allocation2 + $0xfe0] sm:$0xff]
    %v606 = vld [vmem:[#allocation2 + $0xfe8] sm:$0xff]
    %v607 = vld [vmem:[#allocation2 + $0xff0] sm:$0xff]
    %v608 = vld [vmem:[#allocation2 + $0xff8] sm:$0xff]
    %v609 = vld [vmem:[#allocation2 + $0x1000] sm:$0xff]
    %v610 = vld [vmem:[#allocation2 + $0x1008] sm:$0xff]
    %v611 = vld [vmem:[#allocation2 + $0x1010] sm:$0xff]
    %v612 = vld [vmem:[#allocation2 + $0x1018] sm:$0xff]
    %v613 = vld [vmem:[#allocation2 + $0x1020] sm:$0xff]
    %v614 = vld [vmem:[#allocation2 + $0x1028] sm:$0xff]
    %v615 = vld [vmem:[#allocation2 + $0x1030] sm:$0xff]
    %v616 = vld [vmem:[#allocation2 + $0x1038] sm:$0xff]
    %v617 = vld [vmem:[#allocation2 + $0x1040] sm:$0xff]
    %v618 = vld [vmem:[#allocation2 + $0x1048] sm:$0xff]
    %v619 = vld [vmem:[#allocation2 + $0x1050] sm:$0xff]
    %v620 = vld [vmem:[#allocation2 + $0x1058] sm:$0xff]
    %v621 = vld [vmem:[#allocation2 + $0x1060] sm:$0xff]
    %v622 = vld [vmem:[#allocation2 + $0x1068] sm:$0xff]
    %v623 = vld [vmem:[#allocation2 + $0x1070] sm:$0xff]
    %v624 = vld [vmem:[#allocation2 + $0x1078] sm:$0xff]
    %v625 = vld [vmem:[#allocation2 + $0x1080] sm:$0xff]
    %v626 = vld [vmem:[#allocation2 + $0x1088] sm:$0xff]
    %v627 = vld [vmem:[#allocation2 + $0x1090] sm:$0xff]
    %v628 = vld [vmem:[#allocation2 + $0x1098] sm:$0xff]
    %v629 = vld [vmem:[#allocation2 + $0x10a0] sm:$0xff]
    %v630 = vld [vmem:[#allocation2 + $0x10a8] sm:$0xff]
    %v631 = vld [vmem:[#allocation2 + $0x10b0] sm:$0xff]
    %v632 = vld [vmem:[#allocation2 + $0x10b8] sm:$0xff]
    %v633 = vld [vmem:[#allocation2 + $0x10c0] sm:$0xff]
    %v634 = vld [vmem:[#allocation2 + $0x10c8] sm:$0xff]
    %v635 = vld [vmem:[#allocation2 + $0x10d0] sm:$0xff]
    %v636 = vld [vmem:[#allocation2 + $0x10d8] sm:$0xff]
    %v637 = vld [vmem:[#allocation2 + $0x10e0] sm:$0xff]
    %v638 = vld [vmem:[#allocation2 + $0x10e8] sm:$0xff]
    %v639 = vld [vmem:[#allocation2 + $0x10f0] sm:$0xff]
    %v640 = vld [vmem:[#allocation2 + $0x10f8] sm:$0xff]
    %v641 = vld [vmem:[#allocation2 + $0x1100] sm:$0xff]
    %v642 = vld [vmem:[#allocation2 + $0x1108] sm:$0xff]
    %v643 = vld [vmem:[#allocation2 + $0x1110] sm:$0xff]
    %v644 = vld [vmem:[#allocation2 + $0x1118] sm:$0xff]
    %v645 = vld [vmem:[#allocation2 + $0x1120] sm:$0xff]
    %v646 = vld [vmem:[#allocation2 + $0x1128] sm:$0xff]
    %v647 = vld [vmem:[#allocation2 + $0x1130] sm:$0xff]
    %v648 = vld [vmem:[#allocation2 + $0x1138] sm:$0xff]
    %v649 = vld [vmem:[#allocation2 + $0x1140] sm:$0xff]
    %v650 = vld [vmem:[#allocation2 + $0x1148] sm:$0xff]
    %v651 = vld [vmem:[#allocation2 + $0x1150] sm:$0xff]
    %v652 = vld [vmem:[#allocation2 + $0x1158] sm:$0xff]
    %v653 = vld [vmem:[#allocation2 + $0x1160] sm:$0xff]
    %v654 = vld [vmem:[#allocation2 + $0x1168] sm:$0xff]
    %v655 = vld [vmem:[#allocation2 + $0x1170] sm:$0xff]
    %v656 = vld [vmem:[#allocation2 + $0x1178] sm:$0xff]
    %v657 = vld [vmem:[#allocation2 + $0x1180] sm:$0xff]
    %v658 = vld [vmem:[#allocation2 + $0x1188] sm:$0xff]
    %v659 = vld [vmem:[#allocation2 + $0x1190] sm:$0xff]
    %v660 = vld [vmem:[#allocation2 + $0x1198] sm:$0xff]
    %v661 = vld [vmem:[#allocation2 + $0x11a0] sm:$0xff]
    %v662 = vld [vmem:[#allocation2 + $0x11a8] sm:$0xff]
    %v663 = vld [vmem:[#allocation2 + $0x11b0] sm:$0xff]
    %v664 = vld [vmem:[#allocation2 + $0x11b8] sm:$0xff]
    %v665 = vld [vmem:[#allocation2 + $0x11c0] sm:$0xff]
    %v666 = vld [vmem:[#allocation2 + $0x11c8] sm:$0xff]
    %v667 = vld [vmem:[#allocation2 + $0x11d0] sm:$0xff]
    %v668 = vld [vmem:[#allocation2 + $0x11d8] sm:$0xff]
    %v669 = vld [vmem:[#allocation2 + $0x11e0] sm:$0xff]
    %v670 = vld [vmem:[#allocation2 + $0x11e8] sm:$0xff]
    %v671 = vld [vmem:[#allocation2 + $0x11f0] sm:$0xff]
    %v672 = vld [vmem:[#allocation2 + $0x11f8] sm:$0xff]
    %v673 = vld [vmem:[#allocation2 + $0x1200] sm:$0xff]
    %v674 = vld [vmem:[#allocation2 + $0x1208] sm:$0xff]
    %v675 = vld [vmem:[#allocation2 + $0x1210] sm:$0xff]
    %v676 = vld [vmem:[#allocation2 + $0x1218] sm:$0xff]
    %v677 = vld [vmem:[#allocation2 + $0x1220] sm:$0xff]
    %v678 = vld [vmem:[#allocation2 + $0x1228] sm:$0xff]
    %v679 = vld [vmem:[#allocation2 + $0x1230] sm:$0xff]
    %v680 = vld [vmem:[#allocation2 + $0x1238] sm:$0xff]
    %v681 = vld [vmem:[#allocation2 + $0x1240] sm:$0xff]
    %v682 = vld [vmem:[#allocation2 + $0x1248] sm:$0xff]
    %v683 = vld [vmem:[#allocation2 + $0x1250] sm:$0xff]
    %v684 = vld [vmem:[#allocation2 + $0x1258] sm:$0xff]
    %v685 = vld [vmem:[#allocation2 + $0x1260] sm:$0xff]
    %v686 = vld [vmem:[#allocation2 + $0x1268] sm:$0xff]
    %v687 = vld [vmem:[#allocation2 + $0x1270] sm:$0xff]
    %v688 = vld [vmem:[#allocation2 + $0x1278] sm:$0xff]
    %v689 = vld [vmem:[#allocation2 + $0x1280] sm:$0xff]
    %v690 = vld [vmem:[#allocation2 + $0x1288] sm:$0xff]
    %v691 = vld [vmem:[#allocation2 + $0x1290] sm:$0xff]
    %v692 = vld [vmem:[#allocation2 + $0x1298] sm:$0xff]
    %v693 = vld [vmem:[#allocation2 + $0x12a0] sm:$0xff]
    %v694 = vld [vmem:[#allocation2 + $0x12a8] sm:$0xff]
    %v695 = vld [vmem:[#allocation2 + $0x12b0] sm:$0xff]
    %v696 = vld [vmem:[#allocation2 + $0x12b8] sm:$0xff]
    %v697 = vld [vmem:[#allocation2 + $0x12c0] sm:$0xff]
    %v698 = vld [vmem:[#allocation2 + $0x12c8] sm:$0xff]
    %v699 = vld [vmem:[#allocation2 + $0x12d0] sm:$0xff]
    %v700 = vld [vmem:[#allocation2 + $0x12d8] sm:$0xff]
    %v701 = vld [vmem:[#allocation2 + $0x12e0] sm:$0xff]
    %v702 = vld [vmem:[#allocation2 + $0x12e8] sm:$0xff]
    %v703 = vld [vmem:[#allocation2 + $0x12f0] sm:$0xff]
    %v704 = vld [vmem:[#allocation2 + $0x12f8] sm:$0xff]
    %v705 = vld [vmem:[#allocation2 + $0x1300] sm:$0xff]
    %v706 = vld [vmem:[#allocation2 + $0x1308] sm:$0xff]
    %v707 = vld [vmem:[#allocation2 + $0x1310] sm:$0xff]
    %v708 = vld [vmem:[#allocation2 + $0x1318] sm:$0xff]
    %v709 = vld [vmem:[#allocation2 + $0x1320] sm:$0xff]
    %v710 = vld [vmem:[#allocation2 + $0x1328] sm:$0xff]
    %v711 = vld [vmem:[#allocation2 + $0x1330] sm:$0xff]
    %v712 = vld [vmem:[#allocation2 + $0x1338] sm:$0xff]
    %v713 = vld [vmem:[#allocation2 + $0x1340] sm:$0xff]
    %v714 = vld [vmem:[#allocation2 + $0x1348] sm:$0xff]
    %v715 = vld [vmem:[#allocation2 + $0x1350] sm:$0xff]
    %v716 = vld [vmem:[#allocation2 + $0x1358] sm:$0xff]
    %v717 = vld [vmem:[#allocation2 + $0x1360] sm:$0xff]
    %v718 = vld [vmem:[#allocation2 + $0x1368] sm:$0xff]
    %v719 = vld [vmem:[#allocation2 + $0x1370] sm:$0xff]
    %v720 = vld [vmem:[#allocation2 + $0x1378] sm:$0xff]
    %v721 = vld [vmem:[#allocation2 + $0x1380] sm:$0xff]
    %v722 = vld [vmem:[#allocation2 + $0x1388] sm:$0xff]
    %v723 = vld [vmem:[#allocation2 + $0x1390] sm:$0xff]
    %v724 = vld [vmem:[#allocation2 + $0x1398] sm:$0xff]
    %v725 = vld [vmem:[#allocation2 + $0x13a0] sm:$0xff]
    %v726 = vld [vmem:[#allocation2 + $0x13a8] sm:$0xff]
    %v727 = vld [vmem:[#allocation2 + $0x13b0] sm:$0xff]
    %v728 = vld [vmem:[#allocation2 + $0x13b8] sm:$0xff]
    %v729 = vld [vmem:[#allocation2 + $0x13c0] sm:$0xff]
    %v730 = vld [vmem:[#allocation2 + $0x13c8] sm:$0xff]
    %v731 = vld [vmem:[#allocation2 + $0x13d0] sm:$0xff]
    %v732 = vld [vmem:[#allocation2 + $0x13d8] sm:$0xff]
    %v733 = vld [vmem:[#allocation2 + $0x13e0] sm:$0xff]
    %v734 = vld [vmem:[#allocation2 + $0x13e8] sm:$0xff]
    %v735 = vld [vmem:[#allocation2 + $0x13f0] sm:$0xff]
    %v736 = vld [vmem:[#allocation2 + $0x13f8] sm:$0xff]
    %v737 = vld [vmem:[#allocation2 + $0x1400] sm:$0xff]
    %v738 = vld [vmem:[#allocation2 + $0x1408] sm:$0xff]
    %v739 = vld [vmem:[#allocation2 + $0x1410] sm:$0xff]
    %v740 = vld [vmem:[#allocation2 + $0x1418] sm:$0xff]
    %v741 = vld [vmem:[#allocation2 + $0x1420] sm:$0xff]
    %v742 = vld [vmem:[#allocation2 + $0x1428] sm:$0xff]
    %v743 = vld [vmem:[#allocation2 + $0x1430] sm:$0xff]
    %v744 = vld [vmem:[#allocation2 + $0x1438] sm:$0xff]
    %v745 = vld [vmem:[#allocation2 + $0x1440] sm:$0xff]
    %v746 = vld [vmem:[#allocation2 + $0x1448] sm:$0xff]
    %v747 = vld [vmem:[#allocation2 + $0x1450] sm:$0xff]
    %v748 = vld [vmem:[#allocation2 + $0x1458] sm:$0xff]
    %v749 = vld [vmem:[#allocation2 + $0x1460] sm:$0xff]
    %v750 = vld [vmem:[#allocation2 + $0x1468] sm:$0xff]
    %v751 = vld [vmem:[#allocation2 + $0x1470] sm:$0xff]
    %v752 = vld [vmem:[#allocation2 + $0x1478] sm:$0xff]
    %v753 = vld [vmem:[#allocation2 + $0x1480] sm:$0xff]
    %v754 = vld [vmem:[#allocation2 + $0x1488] sm:$0xff]
    %v755 = vld [vmem:[#allocation2 + $0x1490] sm:$0xff]
    %v756 = vld [vmem:[#allocation2 + $0x1498] sm:$0xff]
    %v757 = vld [vmem:[#allocation2 + $0x14a0] sm:$0xff]
    %v758 = vld [vmem:[#allocation2 + $0x14a8] sm:$0xff]
    %v759 = vld [vmem:[#allocation2 + $0x14b0] sm:$0xff]
    %v760 = vld [vmem:[#allocation2 + $0x14b8] sm:$0xff]
    %v761 = vld [vmem:[#allocation2 + $0x14c0] sm:$0xff]
    %v762 = vld [vmem:[#allocation2 + $0x14c8] sm:$0xff]
    %v763 = vld [vmem:[#allocation2 + $0x14d0] sm:$0xff]
    %v764 = vld [vmem:[#allocation2 + $0x14d8] sm:$0xff]
    %v765 = vld [vmem:[#allocation2 + $0x14e0] sm:$0xff]
    %v766 = vld [vmem:[#allocation2 + $0x14e8] sm:$0xff]
    %v767 = vld [vmem:[#allocation2 + $0x14f0] sm:$0xff]
    %v768 = vld [vmem:[#allocation2 + $0x14f8] sm:$0xff]
    %v769 = vld [vmem:[#allocation2 + $0x1500] sm:$0xff]
    %v770 = vld [vmem:[#allocation2 + $0x1508] sm:$0xff]
    %v771 = vld [vmem:[#allocation2 + $0x1510] sm:$0xff]
    %v772 = vld [vmem:[#allocation2 + $0x1518] sm:$0xff]
    %v773 = vld [vmem:[#allocation2 + $0x1520] sm:$0xff]
    %v774 = vld [vmem:[#allocation2 + $0x1528] sm:$0xff]
    %v775 = vld [vmem:[#allocation2 + $0x1530] sm:$0xff]
    %v776 = vld [vmem:[#allocation2 + $0x1538] sm:$0xff]
    %v777 = vld [vmem:[#allocation2 + $0x1540] sm:$0xff]
    %v778 = vld [vmem:[#allocation2 + $0x1548] sm:$0xff]
    %v779 = vld [vmem:[#allocation2 + $0x1550] sm:$0xff]
    %v780 = vld [vmem:[#allocation2 + $0x1558] sm:$0xff]
    %v781 = vld [vmem:[#allocation2 + $0x1560] sm:$0xff]
    %v782 = vld [vmem:[#allocation2 + $0x1568] sm:$0xff]
    %v783 = vld [vmem:[#allocation2 + $0x1570] sm:$0xff]
    %v784 = vld [vmem:[#allocation2 + $0x1578] sm:$0xff]
    %v785 = vld [vmem:[#allocation2 + $0x1580] sm:$0xff]
    %v786 = vld [vmem:[#allocation2 + $0x1588] sm:$0xff]
    %v787 = vld [vmem:[#allocation2 + $0x1590] sm:$0xff]
    %v788 = vld [vmem:[#allocation2 + $0x1598] sm:$0xff]
    %v789 = vld [vmem:[#allocation2 + $0x15a0] sm:$0xff]
    %v790 = vld [vmem:[#allocation2 + $0x15a8] sm:$0xff]
    %v791 = vld [vmem:[#allocation2 + $0x15b0] sm:$0xff]
    %v792 = vld [vmem:[#allocation2 + $0x15b8] sm:$0xff]
    %v793 = vld [vmem:[#allocation2 + $0x15c0] sm:$0xff]
    %v794 = vld [vmem:[#allocation2 + $0x15c8] sm:$0xff]
    %v795 = vld [vmem:[#allocation2 + $0x15d0] sm:$0xff]
    %v796 = vld [vmem:[#allocation2 + $0x15d8] sm:$0xff]
    %v797 = vld [vmem:[#allocation2 + $0x15e0] sm:$0xff]
    %v798 = vld [vmem:[#allocation2 + $0x15e8] sm:$0xff]
    %v799 = vld [vmem:[#allocation2 + $0x15f0] sm:$0xff]
    %v800 = vld [vmem:[#allocation2 + $0x15f8] sm:$0xff]
    %v801 = vld [vmem:[#allocation2 + $0x1600] sm:$0xff]
    %v802 = vld [vmem:[#allocation2 + $0x1608] sm:$0xff]
    %v803 = vld [vmem:[#allocation2 + $0x1610] sm:$0xff]
    %v804 = vld [vmem:[#allocation2 + $0x1618] sm:$0xff]
    %v805 = vld [vmem:[#allocation2 + $0x1620] sm:$0xff]
    %v806 = vld [vmem:[#allocation2 + $0x1628] sm:$0xff]
    %v807 = vld [vmem:[#allocation2 + $0x1630] sm:$0xff]
    %v808 = vld [vmem:[#allocation2 + $0x1638] sm:$0xff]
    %v809 = vld [vmem:[#allocation2 + $0x1640] sm:$0xff]
    %v810 = vld [vmem:[#allocation2 + $0x1648] sm:$0xff]
    %v811 = vld [vmem:[#allocation2 + $0x1650] sm:$0xff]
    %v812 = vld [vmem:[#allocation2 + $0x1658] sm:$0xff]
    %v813 = vld [vmem:[#allocation2 + $0x1660] sm:$0xff]
    %v814 = vld [vmem:[#allocation2 + $0x1668] sm:$0xff]
    %v815 = vld [vmem:[#allocation2 + $0x1670] sm:$0xff]
    %v816 = vld [vmem:[#allocation2 + $0x1678] sm:$0xff]
    %v817 = vld [vmem:[#allocation2 + $0x1680] sm:$0xff]
    %v818 = vld [vmem:[#allocation2 + $0x1688] sm:$0xff]
    %v819 = vld [vmem:[#allocation2 + $0x1690] sm:$0xff]
    %v820 = vld [vmem:[#allocation2 + $0x1698] sm:$0xff]
    %v821 = vld [vmem:[#allocation2 + $0x16a0] sm:$0xff]
    %v822 = vld [vmem:[#allocation2 + $0x16a8] sm:$0xff]
    %v823 = vld [vmem:[#allocation2 + $0x16b0] sm:$0xff]
    %v824 = vld [vmem:[#allocation2 + $0x16b8] sm:$0xff]
    %v825 = vld [vmem:[#allocation2 + $0x16c0] sm:$0xff]
    %v826 = vld [vmem:[#allocation2 + $0x16c8] sm:$0xff]
    %v827 = vld [vmem:[#allocation2 + $0x16d0] sm:$0xff]
    %v828 = vld [vmem:[#allocation2 + $0x16d8] sm:$0xff]
    %v829 = vld [vmem:[#allocation2 + $0x16e0] sm:$0xff]
    %v830 = vld [vmem:[#allocation2 + $0x16e8] sm:$0xff]
    %v831 = vld [vmem:[#allocation2 + $0x16f0] sm:$0xff]
    %v832 = vld [vmem:[#allocation2 + $0x16f8] sm:$0xff]
    %v833 = vld [vmem:[#allocation2 + $0x1700] sm:$0xff]
    %v834 = vld [vmem:[#allocation2 + $0x1708] sm:$0xff]
    %v835 = vld [vmem:[#allocation2 + $0x1710] sm:$0xff]
    %v836 = vld [vmem:[#allocation2 + $0x1718] sm:$0xff]
    %v837 = vld [vmem:[#allocation2 + $0x1720] sm:$0xff]
    %v838 = vld [vmem:[#allocation2 + $0x1728] sm:$0xff]
    %v839 = vld [vmem:[#allocation2 + $0x1730] sm:$0xff]
    %v840 = vld [vmem:[#allocation2 + $0x1738] sm:$0xff]
    %v841 = vld [vmem:[#allocation2 + $0x1740] sm:$0xff]
    %v842 = vld [vmem:[#allocation2 + $0x1748] sm:$0xff]
    %v843 = vld [vmem:[#allocation2 + $0x1750] sm:$0xff]
    %v844 = vld [vmem:[#allocation2 + $0x1758] sm:$0xff]
    %v845 = vld [vmem:[#allocation2 + $0x1760] sm:$0xff]
    %v846 = vld [vmem:[#allocation2 + $0x1768] sm:$0xff]
    %v847 = vld [vmem:[#allocation2 + $0x1770] sm:$0xff]
    %v848 = vld [vmem:[#allocation2 + $0x1778] sm:$0xff]
    %v849 = vld [vmem:[#allocation2 + $0x1780] sm:$0xff]
    %v850 = vld [vmem:[#allocation2 + $0x1788] sm:$0xff]
    %v851 = vld [vmem:[#allocation2 + $0x1790] sm:$0xff]
    %v852 = vld [vmem:[#allocation2 + $0x1798] sm:$0xff]
    %v853 = vld [vmem:[#allocation2 + $0x17a0] sm:$0xff]
    %v854 = vld [vmem:[#allocation2 + $0x17a8] sm:$0xff]
    %v855 = vld [vmem:[#allocation2 + $0x17b0] sm:$0xff]
    %v856 = vld [vmem:[#allocation2 + $0x17b8] sm:$0xff]
    %v857 = vld [vmem:[#allocation2 + $0x17c0] sm:$0xff]
    %v858 = vld [vmem:[#allocation2 + $0x17c8] sm:$0xff]
    %v859 = vld [vmem:[#allocation2 + $0x17d0] sm:$0xff]
    %v860 = vld [vmem:[#allocation2 + $0x17d8] sm:$0xff]
    %v861 = vld [vmem:[#allocation2 + $0x17e0] sm:$0xff]
    %v862 = vld [vmem:[#allocation2 + $0x17e8] sm:$0xff]
    %v863 = vld [vmem:[#allocation2 + $0x17f0] sm:$0xff]
    %v864 = vld [vmem:[#allocation2 + $0x17f8] sm:$0xff]
    %v865 = vld [vmem:[#allocation2 + $0x1800] sm:$0xff]
    %v866 = vld [vmem:[#allocation2 + $0x1808] sm:$0xff]
    %v867 = vld [vmem:[#allocation2 + $0x1810] sm:$0xff]
    %v868 = vld [vmem:[#allocation2 + $0x1818] sm:$0xff]
    %v869 = vld [vmem:[#allocation2 + $0x1820] sm:$0xff]
    %v870 = vld [vmem:[#allocation2 + $0x1828] sm:$0xff]
    %v871 = vld [vmem:[#allocation2 + $0x1830] sm:$0xff]
    %v872 = vld [vmem:[#allocation2 + $0x1838] sm:$0xff]
    %v873 = vld [vmem:[#allocation2 + $0x1840] sm:$0xff]
    %v874 = vld [vmem:[#allocation2 + $0x1848] sm:$0xff]
    %v875 = vld [vmem:[#allocation2 + $0x1850] sm:$0xff]
    %v876 = vld [vmem:[#allocation2 + $0x1858] sm:$0xff]
    %v877 = vld [vmem:[#allocation2 + $0x1860] sm:$0xff]
    %v878 = vld [vmem:[#allocation2 + $0x1868] sm:$0xff]
    %v879 = vld [vmem:[#allocation2 + $0x1870] sm:$0xff]
    %v880 = vld [vmem:[#allocation2 + $0x1878] sm:$0xff]
    %v881 = vld [vmem:[#allocation2 + $0x1880] sm:$0xff]
    %v882 = vld [vmem:[#allocation2 + $0x1888] sm:$0xff]
    %v883 = vld [vmem:[#allocation2 + $0x1890] sm:$0xff]
    %v884 = vld [vmem:[#allocation2 + $0x1898] sm:$0xff]
    %v885 = vld [vmem:[#allocation2 + $0x18a0] sm:$0xff]
    %v886 = vld [vmem:[#allocation2 + $0x18a8] sm:$0xff]
    %v887 = vld [vmem:[#allocation2 + $0x18b0] sm:$0xff]
    %v888 = vld [vmem:[#allocation2 + $0x18b8] sm:$0xff]
    %v889 = vld [vmem:[#allocation2 + $0x18c0] sm:$0xff]
    %v890 = vld [vmem:[#allocation2 + $0x18c8] sm:$0xff]
    %v891 = vld [vmem:[#allocation2 + $0x18d0] sm:$0xff]
    %v892 = vld [vmem:[#allocation2 + $0x18d8] sm:$0xff]
    %v893 = vld [vmem:[#allocation2 + $0x18e0] sm:$0xff]
    %v894 = vld [vmem:[#allocation2 + $0x18e8] sm:$0xff]
    %v895 = vld [vmem:[#allocation2 + $0x18f0] sm:$0xff]
    %v896 = vld [vmem:[#allocation2 + $0x18f8] sm:$0xff]
    %v897 = vld [vmem:[#allocation2 + $0x1900] sm:$0xff]
    %v898 = vld [vmem:[#allocation2 + $0x1908] sm:$0xff]
    %v899 = vld [vmem:[#allocation2 + $0x1910] sm:$0xff]
    %v900 = vld [vmem:[#allocation2 + $0x1918] sm:$0xff]
    %v901 = vld [vmem:[#allocation2 + $0x1920] sm:$0xff]
    %v902 = vld [vmem:[#allocation2 + $0x1928] sm:$0xff]
    %v903 = vld [vmem:[#allocation2 + $0x1930] sm:$0xff]
    %v904 = vld [vmem:[#allocation2 + $0x1938] sm:$0xff]
    %v905 = vld [vmem:[#allocation2 + $0x1940] sm:$0xff]
    %v906 = vld [vmem:[#allocation2 + $0x1948] sm:$0xff]
    %v907 = vld [vmem:[#allocation2 + $0x1950] sm:$0xff]
    %v908 = vld [vmem:[#allocation2 + $0x1958] sm:$0xff]
    %v909 = vld [vmem:[#allocation2 + $0x1960] sm:$0xff]
    %v910 = vld [vmem:[#allocation2 + $0x1968] sm:$0xff]
    %v911 = vld [vmem:[#allocation2 + $0x1970] sm:$0xff]
    %v912 = vld [vmem:[#allocation2 + $0x1978] sm:$0xff]
    %v913 = vld [vmem:[#allocation2 + $0x1980] sm:$0xff]
    %v914 = vld [vmem:[#allocation2 + $0x1988] sm:$0xff]
    %v915 = vld [vmem:[#allocation2 + $0x1990] sm:$0xff]
    %v916 = vld [vmem:[#allocation2 + $0x1998] sm:$0xff]
    %v917 = vld [vmem:[#allocation2 + $0x19a0] sm:$0xff]
    %v918 = vld [vmem:[#allocation2 + $0x19a8] sm:$0xff]
    %v919 = vld [vmem:[#allocation2 + $0x19b0] sm:$0xff]
    %v920 = vld [vmem:[#allocation2 + $0x19b8] sm:$0xff]
    %v921 = vld [vmem:[#allocation2 + $0x19c0] sm:$0xff]
    %v922 = vld [vmem:[#allocation2 + $0x19c8] sm:$0xff]
    %v923 = vld [vmem:[#allocation2 + $0x19d0] sm:$0xff]
    %v924 = vld [vmem:[#allocation2 + $0x19d8] sm:$0xff]
    %v925 = vld [vmem:[#allocation2 + $0x19e0] sm:$0xff]
    %v926 = vld [vmem:[#allocation2 + $0x19e8] sm:$0xff]
    %v927 = vld [vmem:[#allocation2 + $0x19f0] sm:$0xff]
    %v928 = vld [vmem:[#allocation2 + $0x19f8] sm:$0xff]
    %v929 = vld [vmem:[#allocation2 + $0x1a00] sm:$0xff]
    %v930 = vld [vmem:[#allocation2 + $0x1a08] sm:$0xff]
    %v931 = vld [vmem:[#allocation2 + $0x1a10] sm:$0xff]
    %v932 = vld [vmem:[#allocation2 + $0x1a18] sm:$0xff]
    %v933 = vld [vmem:[#allocation2 + $0x1a20] sm:$0xff]
    %v934 = vld [vmem:[#allocation2 + $0x1a28] sm:$0xff]
    %v935 = vld [vmem:[#allocation2 + $0x1a30] sm:$0xff]
    %v936 = vld [vmem:[#allocation2 + $0x1a38] sm:$0xff]
    %v937 = vld [vmem:[#allocation2 + $0x1a40] sm:$0xff]
    %v938 = vld [vmem:[#allocation2 + $0x1a48] sm:$0xff]
    %v939 = vld [vmem:[#allocation2 + $0x1a50] sm:$0xff]
    %v940 = vld [vmem:[#allocation2 + $0x1a58] sm:$0xff]
    %v941 = vld [vmem:[#allocation2 + $0x1a60] sm:$0xff]
    %v942 = vld [vmem:[#allocation2 + $0x1a68] sm:$0xff]
    %v943 = vld [vmem:[#allocation2 + $0x1a70] sm:$0xff]
    %v944 = vld [vmem:[#allocation2 + $0x1a78] sm:$0xff]
    %v945 = vld [vmem:[#allocation2 + $0x1a80] sm:$0xff]
    %v946 = vld [vmem:[#allocation2 + $0x1a88] sm:$0xff]
    %v947 = vld [vmem:[#allocation2 + $0x1a90] sm:$0xff]
    %v948 = vld [vmem:[#allocation2 + $0x1a98] sm:$0xff]
    %v949 = vld [vmem:[#allocation2 + $0x1aa0] sm:$0xff]
    %v950 = vld [vmem:[#allocation2 + $0x1aa8] sm:$0xff]
    %v951 = vld [vmem:[#allocation2 + $0x1ab0] sm:$0xff]
    %v952 = vld [vmem:[#allocation2 + $0x1ab8] sm:$0xff]
    %v953 = vld [vmem:[#allocation2 + $0x1ac0] sm:$0xff]
    %v954 = vld [vmem:[#allocation2 + $0x1ac8] sm:$0xff]
    %v955 = vld [vmem:[#allocation2 + $0x1ad0] sm:$0xff]
    %v956 = vld [vmem:[#allocation2 + $0x1ad8] sm:$0xff]
    %v957 = vld [vmem:[#allocation2 + $0x1ae0] sm:$0xff]
    %v958 = vld [vmem:[#allocation2 + $0x1ae8] sm:$0xff]
    %v959 = vld [vmem:[#allocation2 + $0x1af0] sm:$0xff]
    %v960 = vld [vmem:[#allocation2 + $0x1af8] sm:$0xff]
    %v961 = vld [vmem:[#allocation2 + $0x1b00] sm:$0xff]
    %v962 = vld [vmem:[#allocation2 + $0x1b08] sm:$0xff]
    %v963 = vld [vmem:[#allocation2 + $0x1b10] sm:$0xff]
    %v964 = vld [vmem:[#allocation2 + $0x1b18] sm:$0xff]
    %v965 = vld [vmem:[#allocation2 + $0x1b20] sm:$0xff]
    %v966 = vld [vmem:[#allocation2 + $0x1b28] sm:$0xff]
    %v967 = vld [vmem:[#allocation2 + $0x1b30] sm:$0xff]
    %v968 = vld [vmem:[#allocation2 + $0x1b38] sm:$0xff]
    %v969 = vld [vmem:[#allocation2 + $0x1b40] sm:$0xff]
    %v970 = vld [vmem:[#allocation2 + $0x1b48] sm:$0xff]
    %v971 = vld [vmem:[#allocation2 + $0x1b50] sm:$0xff]
    %v972 = vld [vmem:[#allocation2 + $0x1b58] sm:$0xff]
    %v973 = vld [vmem:[#allocation2 + $0x1b60] sm:$0xff]
    %v974 = vld [vmem:[#allocation2 + $0x1b68] sm:$0xff]
    %v975 = vld [vmem:[#allocation2 + $0x1b70] sm:$0xff]
    %v976 = vld [vmem:[#allocation2 + $0x1b78] sm:$0xff]
    %v977 = vld [vmem:[#allocation2 + $0x1b80] sm:$0xff]
    %v978 = vld [vmem:[#allocation2 + $0x1b88] sm:$0xff]
    %v979 = vld [vmem:[#allocation2 + $0x1b90] sm:$0xff]
    %v980 = vld [vmem:[#allocation2 + $0x1b98] sm:$0xff]
    %v981 = vld [vmem:[#allocation2 + $0x1ba0] sm:$0xff]
    %v982 = vld [vmem:[#allocation2 + $0x1ba8] sm:$0xff]
    %v983 = vld [vmem:[#allocation2 + $0x1bb0] sm:$0xff]
    %v984 = vld [vmem:[#allocation2 + $0x1bb8] sm:$0xff]
    %v985 = vld [vmem:[#allocation2 + $0x1bc0] sm:$0xff]
    %v986 = vld [vmem:[#allocation2 + $0x1bc8] sm:$0xff]
    %v987 = vld [vmem:[#allocation2 + $0x1bd0] sm:$0xff]
    %v988 = vld [vmem:[#allocation2 + $0x1bd8] sm:$0xff]
    %v989 = vld [vmem:[#allocation2 + $0x1be0] sm:$0xff]
    %v990 = vld [vmem:[#allocation2 + $0x1be8] sm:$0xff]
    %v991 = vld [vmem:[#allocation2 + $0x1bf0] sm:$0xff]
    %v992 = vld [vmem:[#allocation2 + $0x1bf8] sm:$0xff]
    %v993 = vld [vmem:[#allocation2 + $0x1c00] sm:$0xff]
    %v994 = vld [vmem:[#allocation2 + $0x1c08] sm:$0xff]
    %v995 = vld [vmem:[#allocation2 + $0x1c10] sm:$0xff]
    %v996 = vld [vmem:[#allocation2 + $0x1c18] sm:$0xff]
    %v997 = vld [vmem:[#allocation2 + $0x1c20] sm:$0xff]
    %v998 = vld [vmem:[#allocation2 + $0x1c28] sm:$0xff]
    %v999 = vld [vmem:[#allocation2 + $0x1c30] sm:$0xff]
    %v1000 = vld [vmem:[#allocation2 + $0x1c38] sm:$0xff]
    %v1001 = vld [vmem:[#allocation2 + $0x1c40] sm:$0xff]
    %v1002 = vld [vmem:[#allocation2 + $0x1c48] sm:$0xff]
    %v1003 = vld [vmem:[#allocation2 + $0x1c50] sm:$0xff]
    %v1004 = vld [vmem:[#allocation2 + $0x1c58] sm:$0xff]
    %v1005 = vld [vmem:[#allocation2 + $0x1c60] sm:$0xff]
    %v1006 = vld [vmem:[#allocation2 + $0x1c68] sm:$0xff]
    %v1007 = vld [vmem:[#allocation2 + $0x1c70] sm:$0xff]
    %v1008 = vld [vmem:[#allocation2 + $0x1c78] sm:$0xff]
    %v1009 = vld [vmem:[#allocation2 + $0x1c80] sm:$0xff]
    %v1010 = vld [vmem:[#allocation2 + $0x1c88] sm:$0xff]
    %v1011 = vld [vmem:[#allocation2 + $0x1c90] sm:$0xff]
    %v1012 = vld [vmem:[#allocation2 + $0x1c98] sm:$0xff]
    %v1013 = vld [vmem:[#allocation2 + $0x1ca0] sm:$0xff]
    %v1014 = vld [vmem:[#allocation2 + $0x1ca8] sm:$0xff]
    %v1015 = vld [vmem:[#allocation2 + $0x1cb0] sm:$0xff]
    %v1016 = vld [vmem:[#allocation2 + $0x1cb8] sm:$0xff]
    %v1017 = vld [vmem:[#allocation2 + $0x1cc0] sm:$0xff]
    %v1018 = vld [vmem:[#allocation2 + $0x1cc8] sm:$0xff]
    %v1019 = vld [vmem:[#allocation2 + $0x1cd0] sm:$0xff]
    %v1020 = vld [vmem:[#allocation2 + $0x1cd8] sm:$0xff]
    %v1021 = vld [vmem:[#allocation2 + $0x1ce0] sm:$0xff]
    %v1022 = vld [vmem:[#allocation2 + $0x1ce8] sm:$0xff]
    %v1023 = vld [vmem:[#allocation2 + $0x1cf0] sm:$0xff]
    %v1024 = vld [vmem:[#allocation2 + $0x1cf8] sm:$0xff]
    %v1025 = vld [vmem:[#allocation2 + $0x1d00] sm:$0xff]
    %v1026 = vld [vmem:[#allocation2 + $0x1d08] sm:$0xff]
    %v1027 = vld [vmem:[#allocation2 + $0x1d10] sm:$0xff]
    %v1028 = vld [vmem:[#allocation2 + $0x1d18] sm:$0xff]
    %v1029 = vld [vmem:[#allocation2 + $0x1d20] sm:$0xff]
    %v1030 = vld [vmem:[#allocation2 + $0x1d28] sm:$0xff]
    %v1031 = vld [vmem:[#allocation2 + $0x1d30] sm:$0xff]
    %v1032 = vld [vmem:[#allocation2 + $0x1d38] sm:$0xff]
    %v1033 = vld [vmem:[#allocation2 + $0x1d40] sm:$0xff]
    %v1034 = vld [vmem:[#allocation2 + $0x1d48] sm:$0xff]
    %v1035 = vld [vmem:[#allocation2 + $0x1d50] sm:$0xff]
    %v1036 = vld [vmem:[#allocation2 + $0x1d58] sm:$0xff]
    %v1037 = vld [vmem:[#allocation2 + $0x1d60] sm:$0xff]
    %v1038 = vld [vmem:[#allocation2 + $0x1d68] sm:$0xff]
    %v1039 = vld [vmem:[#allocation2 + $0x1d70] sm:$0xff]
    %v1040 = vld [vmem:[#allocation2 + $0x1d78] sm:$0xff]
    %v1041 = vld [vmem:[#allocation2 + $0x1d80] sm:$0xff]
    %v1042 = vld [vmem:[#allocation2 + $0x1d88] sm:$0xff]
    %v1043 = vld [vmem:[#allocation2 + $0x1d90] sm:$0xff]
    %v1044 = vld [vmem:[#allocation2 + $0x1d98] sm:$0xff]
    %v1045 = vld [vmem:[#allocation2 + $0x1da0] sm:$0xff]
    %v1046 = vld [vmem:[#allocation2 + $0x1da8] sm:$0xff]
    %v1047 = vld [vmem:[#allocation2 + $0x1db0] sm:$0xff]
    %v1048 = vld [vmem:[#allocation2 + $0x1db8] sm:$0xff]
    %v1049 = vld [vmem:[#allocation2 + $0x1dc0] sm:$0xff]
    %v1050 = vld [vmem:[#allocation2 + $0x1dc8] sm:$0xff]
    %v1051 = vld [vmem:[#allocation2 + $0x1dd0] sm:$0xff]
    %v1052 = vld [vmem:[#allocation2 + $0x1dd8] sm:$0xff]
    %v1053 = vld [vmem:[#allocation2 + $0x1de0] sm:$0xff]
    %v1054 = vld [vmem:[#allocation2 + $0x1de8] sm:$0xff]
    %v1055 = vld [vmem:[#allocation2 + $0x1df0] sm:$0xff]
    %v1056 = vld [vmem:[#allocation2 + $0x1df8] sm:$0xff]
    %v1057 = vld [vmem:[#allocation2 + $0x1e00] sm:$0xff]
    %v1058 = vld [vmem:[#allocation2 + $0x1e08] sm:$0xff]
    %v1059 = vld [vmem:[#allocation2 + $0x1e10] sm:$0xff]
    %v1060 = vld [vmem:[#allocation2 + $0x1e18] sm:$0xff]
    %v1061 = vld [vmem:[#allocation2 + $0x1e20] sm:$0xff]
    %v1062 = vld [vmem:[#allocation2 + $0x1e28] sm:$0xff]
    %v1063 = vld [vmem:[#allocation2 + $0x1e30] sm:$0xff]
    %v1064 = vld [vmem:[#allocation2 + $0x1e38] sm:$0xff]
    %v1065 = vld [vmem:[#allocation2 + $0x1e40] sm:$0xff]
    %v1066 = vld [vmem:[#allocation2 + $0x1e48] sm:$0xff]
    %v1067 = vld [vmem:[#allocation2 + $0x1e50] sm:$0xff]
    %v1068 = vld [vmem:[#allocation2 + $0x1e58] sm:$0xff]
    %v1069 = vld [vmem:[#allocation2 + $0x1e60] sm:$0xff]
    %v1070 = vld [vmem:[#allocation2 + $0x1e68] sm:$0xff]
    %v1071 = vld [vmem:[#allocation2 + $0x1e70] sm:$0xff]
    %v1072 = vld [vmem:[#allocation2 + $0x1e78] sm:$0xff]
    %v1073 = vld [vmem:[#allocation2 + $0x1e80] sm:$0xff]
    %v1074 = vld [vmem:[#allocation2 + $0x1e88] sm:$0xff]
    %v1075 = vld [vmem:[#allocation2 + $0x1e90] sm:$0xff]
    %v1076 = vld [vmem:[#allocation2 + $0x1e98] sm:$0xff]
    %v1077 = vld [vmem:[#allocation2 + $0x1ea0] sm:$0xff]
    %v1078 = vld [vmem:[#allocation2 + $0x1ea8] sm:$0xff]
    %v1079 = vld [vmem:[#allocation2 + $0x1eb0] sm:$0xff]
    %v1080 = vld [vmem:[#allocation2 + $0x1eb8] sm:$0xff]
    %v1081 = vld [vmem:[#allocation2 + $0x1ec0] sm:$0xff]
    %v1082 = vld [vmem:[#allocation2 + $0x1ec8] sm:$0xff]
    %v1083 = vld [vmem:[#allocation2 + $0x1ed0] sm:$0xff]
    %v1084 = vld [vmem:[#allocation2 + $0x1ed8] sm:$0xff]
    %v1085 = vld [vmem:[#allocation2 + $0x1ee0] sm:$0xff]
    %v1086 = vld [vmem:[#allocation2 + $0x1ee8] sm:$0xff]
    %v1087 = vld [vmem:[#allocation2 + $0x1ef0] sm:$0xff]
    %v1088 = vld [vmem:[#allocation2 + $0x1ef8] sm:$0xff]
    %v1089 = vld [vmem:[#allocation2 + $0x1f00] sm:$0xff]
    %v1090 = vld [vmem:[#allocation2 + $0x1f08] sm:$0xff]
    %v1091 = vld [vmem:[#allocation2 + $0x1f10] sm:$0xff]
    %v1092 = vld [vmem:[#allocation2 + $0x1f18] sm:$0xff]
    %v1093 = vld [vmem:[#allocation2 + $0x1f20] sm:$0xff]
    %v1094 = vld [vmem:[#allocation2 + $0x1f28] sm:$0xff]
    %v1095 = vld [vmem:[#allocation2 + $0x1f30] sm:$0xff]
    %v1096 = vld [vmem:[#allocation2 + $0x1f38] sm:$0xff]
    %v1097 = vld [vmem:[#allocation2 + $0x1f40] sm:$0xff]
    %v1098 = vld [vmem:[#allocation2 + $0x1f48] sm:$0xff]
    %v1099 = vld [vmem:[#allocation2 + $0x1f50] sm:$0xff]
    %v1100 = vld [vmem:[#allocation2 + $0x1f58] sm:$0xff]
    %v1101 = vld [vmem:[#allocation2 + $0x1f60] sm:$0xff]
    %v1102 = vld [vmem:[#allocation2 + $0x1f68] sm:$0xff]
    %v1103 = vld [vmem:[#allocation2 + $0x1f70] sm:$0xff]
    %v1104 = vld [vmem:[#allocation2 + $0x1f78] sm:$0xff]
    %v1105 = vld [vmem:[#allocation2 + $0x1f80] sm:$0xff]
    %v1106 = vld [vmem:[#allocation2 + $0x1f88] sm:$0xff]
    %v1107 = vld [vmem:[#allocation2 + $0x1f90] sm:$0xff]
    %v1108 = vld [vmem:[#allocation2 + $0x1f98] sm:$0xff]
    %v1109 = vld [vmem:[#allocation2 + $0x1fa0] sm:$0xff]
    %v1110 = vld [vmem:[#allocation2 + $0x1fa8] sm:$0xff]
    %v1111 = vld [vmem:[#allocation2 + $0x1fb0] sm:$0xff]
    %v1112 = vld [vmem:[#allocation2 + $0x1fb8] sm:$0xff]
    %v1113 = vld [vmem:[#allocation2 + $0x1fc0] sm:$0xff]
    %v1114 = vld [vmem:[#allocation2 + $0x1fc8] sm:$0xff]
    %v1115 = vld [vmem:[#allocation2 + $0x1fd0] sm:$0xff]
    %v1116 = vld [vmem:[#allocation2 + $0x1fd8] sm:$0xff]
    %v1117 = vld [vmem:[#allocation2 + $0x1fe0] sm:$0xff]
    %v1118 = vld [vmem:[#allocation2 + $0x1fe8] sm:$0xff]
    %v1119 = vld [vmem:[#allocation2 + $0x1ff0] sm:$0xff]
    %v1120 = vld [vmem:[#allocation2 + $0x1ff8] sm:$0xff]
    %v1121 = vld [vmem:[%s5] ss:$8 sm:$0xf]
    %v1123 = vlaneseq
    %v1124 = vshrl.u32 %v1123, 7
    %v1125 = vsub.s32 0, %v1124
    %v1126 = vrot.slane %v1121, %v1125
    %v1127 = vlaneseq
    %v1128 = vshrl.u32 %v1127, 7
    %v1129 = vsub.s32 1, %v1128
    %v1130 = vrot.slane %v1121, %v1129
    %v1131 = vlaneseq
    %v1132 = vshrl.u32 %v1131, 7
    %v1133 = vsub.s32 2, %v1132
    %v1134 = vrot.slane %v1121, %v1133
    %v1135 = vlaneseq
    %v1136 = vshrl.u32 %v1135, 7
    %v1137 = vsub.s32 3, %v1136
    %v1138 = vrot.slane %v1121, %v1137
    %v1175 = vunpack.c.l.b16 %v65
    %v1176 = vunpack.c.h.b16 %v65
    %v1177 = vunpack.c.l.b16 %v66
    %v1178 = vunpack.c.h.b16 %v66
    %v1179 = vunpack.c.l.b16 %v67
    %v1180 = vunpack.c.h.b16 %v67
    %v1181 = vunpack.c.l.b16 %v68
    %v1182 = vunpack.c.h.b16 %v68
    %v1183 = vunpack.c.l.b16 %v69
    %v1184 = vunpack.c.h.b16 %v69
    %v1185 = vunpack.c.l.b16 %v70
    %v1186 = vunpack.c.h.b16 %v70
    %v1187 = vunpack.c.l.b16 %v71
    %v1188 = vunpack.c.h.b16 %v71
    %v1189 = vunpack.c.l.b16 %v72
    %v1190 = vunpack.c.h.b16 %v72
    %v1191 = vunpack.c.l.b16 %v73
    %v1192 = vunpack.c.h.b16 %v73
    %v1193 = vunpack.c.l.b16 %v74
    %v1194 = vunpack.c.h.b16 %v74
    %v1195 = vunpack.c.l.b16 %v75
    %v1196 = vunpack.c.h.b16 %v75
    %v1197 = vunpack.c.l.b16 %v76
    %v1198 = vunpack.c.h.b16 %v76
    %v1199 = vunpack.c.l.b16 %v77
    %v1200 = vunpack.c.h.b16 %v77
    %v1201 = vunpack.c.l.b16 %v78
    %v1202 = vunpack.c.h.b16 %v78
    %v1203 = vunpack.c.l.b16 %v79
    %v1204 = vunpack.c.h.b16 %v79
    %v1205 = vunpack.c.l.b16 %v80
    %v1206 = vunpack.c.h.b16 %v80
    %v1207 = vunpack.c.l.b16 %v81
    %v1208 = vunpack.c.h.b16 %v81
    %v1209 = vunpack.c.l.b16 %v82
    %v1210 = vunpack.c.h.b16 %v82
    %v1211 = vunpack.c.l.b16 %v83
    %v1212 = vunpack.c.h.b16 %v83
    %v1213 = vunpack.c.l.b16 %v84
    %v1214 = vunpack.c.h.b16 %v84
    %v1215 = vunpack.c.l.b16 %v85
    %v1216 = vunpack.c.h.b16 %v85
    %v1217 = vunpack.c.l.b16 %v86
    %v1218 = vunpack.c.h.b16 %v86
    %v1219 = vunpack.c.l.b16 %v87
    %v1220 = vunpack.c.h.b16 %v87
    %v1221 = vunpack.c.l.b16 %v88
    %v1222 = vunpack.c.h.b16 %v88
    %v1223 = vunpack.c.l.b16 %v89
    %v1224 = vunpack.c.h.b16 %v89
    %v1225 = vunpack.c.l.b16 %v90
    %v1226 = vunpack.c.h.b16 %v90
    %v1227 = vunpack.c.l.b16 %v91
    %v1228 = vunpack.c.h.b16 %v91
    %v1229 = vunpack.c.l.b16 %v92
    %v1230 = vunpack.c.h.b16 %v92
    %v1231 = vunpack.c.l.b16 %v93
    %v1232 = vunpack.c.h.b16 %v93
    %v1233 = vunpack.c.l.b16 %v94
    %v1234 = vunpack.c.h.b16 %v94
    %v1235 = vunpack.c.l.b16 %v95
    %v1236 = vunpack.c.h.b16 %v95
    %v1237 = vunpack.c.l.b16 %v96
    %v1238 = vunpack.c.h.b16 %v96
    %v1239 = vpack.c.b16 %v1207, %v1175
    %v1240 = vpack.c.b16 %v1208, %v1176
    %v1241 = vpack.c.b16 %v1209, %v1177
    %v1242 = vpack.c.b16 %v1210, %v1178
    %v1243 = vpack.c.b16 %v1211, %v1179
    %v1244 = vpack.c.b16 %v1212, %v1180
    %v1245 = vpack.c.b16 %v1213, %v1181
    %v1246 = vpack.c.b16 %v1214, %v1182
    %v1247 = vpack.c.b16 %v1215, %v1183
    %v1248 = vpack.c.b16 %v1216, %v1184
    %v1249 = vpack.c.b16 %v1217, %v1185
    %v1250 = vpack.c.b16 %v1218, %v1186
    %v1251 = vpack.c.b16 %v1219, %v1187
    %v1252 = vpack.c.b16 %v1220, %v1188
    %v1253 = vpack.c.b16 %v1221, %v1189
    %v1254 = vpack.c.b16 %v1222, %v1190
    %v1255 = vpack.c.b16 %v1223, %v1191
    %v1256 = vpack.c.b16 %v1224, %v1192
    %v1257 = vpack.c.b16 %v1225, %v1193
    %v1258 = vpack.c.b16 %v1226, %v1194
    %v1259 = vpack.c.b16 %v1227, %v1195
    %v1260 = vpack.c.b16 %v1228, %v1196
    %v1261 = vpack.c.b16 %v1229, %v1197
    %v1262 = vpack.c.b16 %v1230, %v1198
    %v1263 = vpack.c.b16 %v1231, %v1199
    %v1264 = vpack.c.b16 %v1232, %v1200
    %v1265 = vpack.c.b16 %v1233, %v1201
    %v1266 = vpack.c.b16 %v1234, %v1202
    %v1267 = vpack.c.b16 %v1235, %v1203
    %v1268 = vpack.c.b16 %v1236, %v1204
    %v1269 = vpack.c.b16 %v1237, %v1205
    %v1270 = vpack.c.b16 %v1238, %v1206
    %v2327 = vunpack.c.l.b16 %v97
    %v2328 = vunpack.c.h.b16 %v97
    %v2329 = vunpack.c.l.b16 %v98
    %v2330 = vunpack.c.h.b16 %v98
    %v2331 = vunpack.c.l.b16 %v99
    %v2332 = vunpack.c.h.b16 %v99
    %v2333 = vunpack.c.l.b16 %v100
    %v2334 = vunpack.c.h.b16 %v100
    %v2335 = vunpack.c.l.b16 %v101
    %v2336 = vunpack.c.h.b16 %v101
    %v2337 = vunpack.c.l.b16 %v102
    %v2338 = vunpack.c.h.b16 %v102
    %v2339 = vunpack.c.l.b16 %v103
    %v2340 = vunpack.c.h.b16 %v103
    %v2341 = vunpack.c.l.b16 %v104
    %v2342 = vunpack.c.h.b16 %v104
    %v2343 = vunpack.c.l.b16 %v105
    %v2344 = vunpack.c.h.b16 %v105
    %v2345 = vunpack.c.l.b16 %v106
    %v2346 = vunpack.c.h.b16 %v106
    %v2347 = vunpack.c.l.b16 %v107
    %v2348 = vunpack.c.h.b16 %v107
    %v2349 = vunpack.c.l.b16 %v108
    %v2350 = vunpack.c.h.b16 %v108
    %v2351 = vunpack.c.l.b16 %v109
    %v2352 = vunpack.c.h.b16 %v109
    %v2353 = vunpack.c.l.b16 %v110
    %v2354 = vunpack.c.h.b16 %v110
    %v2355 = vunpack.c.l.b16 %v111
    %v2356 = vunpack.c.h.b16 %v111
    %v2357 = vunpack.c.l.b16 %v112
    %v2358 = vunpack.c.h.b16 %v112
    %v2359 = vunpack.c.l.b16 %v113
    %v2360 = vunpack.c.h.b16 %v113
    %v2361 = vunpack.c.l.b16 %v114
    %v2362 = vunpack.c.h.b16 %v114
    %v2363 = vunpack.c.l.b16 %v115
    %v2364 = vunpack.c.h.b16 %v115
    %v2365 = vunpack.c.l.b16 %v116
    %v2366 = vunpack.c.h.b16 %v116
    %v2367 = vunpack.c.l.b16 %v117
    %v2368 = vunpack.c.h.b16 %v117
    %v2369 = vunpack.c.l.b16 %v118
    %v2370 = vunpack.c.h.b16 %v118
    %v2371 = vunpack.c.l.b16 %v119
    %v2372 = vunpack.c.h.b16 %v119
    %v2373 = vunpack.c.l.b16 %v120
    %v2374 = vunpack.c.h.b16 %v120
    %v2375 = vunpack.c.l.b16 %v121
    %v2376 = vunpack.c.h.b16 %v121
    %v2377 = vunpack.c.l.b16 %v122
    %v2378 = vunpack.c.h.b16 %v122
    %v2379 = vunpack.c.l.b16 %v123
    %v2380 = vunpack.c.h.b16 %v123
    %v2381 = vunpack.c.l.b16 %v124
    %v2382 = vunpack.c.h.b16 %v124
    %v2383 = vunpack.c.l.b16 %v125
    %v2384 = vunpack.c.h.b16 %v125
    %v2385 = vunpack.c.l.b16 %v126
    %v2386 = vunpack.c.h.b16 %v126
    %v2387 = vunpack.c.l.b16 %v127
    %v2388 = vunpack.c.h.b16 %v127
    %v2389 = vunpack.c.l.b16 %v128
    %v2390 = vunpack.c.h.b16 %v128
    %v2391 = vunpack.c.l.b16 %v129
    %v2392 = vunpack.c.h.b16 %v129
    %v2393 = vunpack.c.l.b16 %v130
    %v2394 = vunpack.c.h.b16 %v130
    %v2395 = vunpack.c.l.b16 %v131
    %v2396 = vunpack.c.h.b16 %v131
    %v2397 = vunpack.c.l.b16 %v132
    %v2398 = vunpack.c.h.b16 %v132
    %v2399 = vunpack.c.l.b16 %v133
    %v2400 = vunpack.c.h.b16 %v133
    %v2401 = vunpack.c.l.b16 %v134
    %v2402 = vunpack.c.h.b16 %v134
    %v2403 = vunpack.c.l.b16 %v135
    %v2404 = vunpack.c.h.b16 %v135
    %v2405 = vunpack.c.l.b16 %v136
    %v2406 = vunpack.c.h.b16 %v136
    %v2407 = vunpack.c.l.b16 %v137
    %v2408 = vunpack.c.h.b16 %v137
    %v2409 = vunpack.c.l.b16 %v138
    %v2410 = vunpack.c.h.b16 %v138
    %v2411 = vunpack.c.l.b16 %v139
    %v2412 = vunpack.c.h.b16 %v139
    %v2413 = vunpack.c.l.b16 %v140
    %v2414 = vunpack.c.h.b16 %v140
    %v2415 = vunpack.c.l.b16 %v141
    %v2416 = vunpack.c.h.b16 %v141
    %v2417 = vunpack.c.l.b16 %v142
    %v2418 = vunpack.c.h.b16 %v142
    %v2419 = vunpack.c.l.b16 %v143
    %v2420 = vunpack.c.h.b16 %v143
    %v2421 = vunpack.c.l.b16 %v144
    %v2422 = vunpack.c.h.b16 %v144
    %v2423 = vunpack.c.l.b16 %v145
    %v2424 = vunpack.c.h.b16 %v145
    %v2425 = vunpack.c.l.b16 %v146
    %v2426 = vunpack.c.h.b16 %v146
    %v2427 = vunpack.c.l.b16 %v147
    %v2428 = vunpack.c.h.b16 %v147
    %v2429 = vunpack.c.l.b16 %v148
    %v2430 = vunpack.c.h.b16 %v148
    %v2431 = vunpack.c.l.b16 %v149
    %v2432 = vunpack.c.h.b16 %v149
    %v2433 = vunpack.c.l.b16 %v150
    %v2434 = vunpack.c.h.b16 %v150
    %v2435 = vunpack.c.l.b16 %v151
    %v2436 = vunpack.c.h.b16 %v151
    %v2437 = vunpack.c.l.b16 %v152
    %v2438 = vunpack.c.h.b16 %v152
    %v2439 = vunpack.c.l.b16 %v153
    %v2440 = vunpack.c.h.b16 %v153
    %v2441 = vunpack.c.l.b16 %v154
    %v2442 = vunpack.c.h.b16 %v154
    %v2443 = vunpack.c.l.b16 %v155
    %v2444 = vunpack.c.h.b16 %v155
    %v2445 = vunpack.c.l.b16 %v156
    %v2446 = vunpack.c.h.b16 %v156
    %v2447 = vunpack.c.l.b16 %v157
    %v2448 = vunpack.c.h.b16 %v157
    %v2449 = vunpack.c.l.b16 %v158
    %v2450 = vunpack.c.h.b16 %v158
    %v2451 = vunpack.c.l.b16 %v159
    %v2452 = vunpack.c.h.b16 %v159
    %v2453 = vunpack.c.l.b16 %v160
    %v2454 = vunpack.c.h.b16 %v160
    %v2455 = vunpack.c.l.b16 %v161
    %v2456 = vunpack.c.h.b16 %v161
    %v2457 = vunpack.c.l.b16 %v162
    %v2458 = vunpack.c.h.b16 %v162
    %v2459 = vunpack.c.l.b16 %v163
    %v2460 = vunpack.c.h.b16 %v163
    %v2461 = vunpack.c.l.b16 %v164
    %v2462 = vunpack.c.h.b16 %v164
    %v2463 = vunpack.c.l.b16 %v165
    %v2464 = vunpack.c.h.b16 %v165
    %v2465 = vunpack.c.l.b16 %v166
    %v2466 = vunpack.c.h.b16 %v166
    %v2467 = vunpack.c.l.b16 %v167
    %v2468 = vunpack.c.h.b16 %v167
    %v2469 = vunpack.c.l.b16 %v168
    %v2470 = vunpack.c.h.b16 %v168
    %v2471 = vunpack.c.l.b16 %v169
    %v2472 = vunpack.c.h.b16 %v169
    %v2473 = vunpack.c.l.b16 %v170
    %v2474 = vunpack.c.h.b16 %v170
    %v2475 = vunpack.c.l.b16 %v171
    %v2476 = vunpack.c.h.b16 %v171
    %v2477 = vunpack.c.l.b16 %v172
    %v2478 = vunpack.c.h.b16 %v172
    %v2479 = vunpack.c.l.b16 %v173
    %v2480 = vunpack.c.h.b16 %v173
    %v2481 = vunpack.c.l.b16 %v174
    %v2482 = vunpack.c.h.b16 %v174
    %v2483 = vunpack.c.l.b16 %v175
    %v2484 = vunpack.c.h.b16 %v175
    %v2485 = vunpack.c.l.b16 %v176
    %v2486 = vunpack.c.h.b16 %v176
    %v2487 = vunpack.c.l.b16 %v177
    %v2488 = vunpack.c.h.b16 %v177
    %v2489 = vunpack.c.l.b16 %v178
    %v2490 = vunpack.c.h.b16 %v178
    %v2491 = vunpack.c.l.b16 %v179
    %v2492 = vunpack.c.h.b16 %v179
    %v2493 = vunpack.c.l.b16 %v180
    %v2494 = vunpack.c.h.b16 %v180
    %v2495 = vunpack.c.l.b16 %v181
    %v2496 = vunpack.c.h.b16 %v181
    %v2497 = vunpack.c.l.b16 %v182
    %v2498 = vunpack.c.h.b16 %v182
    %v2499 = vunpack.c.l.b16 %v183
    %v2500 = vunpack.c.h.b16 %v183
    %v2501 = vunpack.c.l.b16 %v184
    %v2502 = vunpack.c.h.b16 %v184
    %v2503 = vunpack.c.l.b16 %v185
    %v2504 = vunpack.c.h.b16 %v185
    %v2505 = vunpack.c.l.b16 %v186
    %v2506 = vunpack.c.h.b16 %v186
    %v2507 = vunpack.c.l.b16 %v187
    %v2508 = vunpack.c.h.b16 %v187
    %v2509 = vunpack.c.l.b16 %v188
    %v2510 = vunpack.c.h.b16 %v188
    %v2511 = vunpack.c.l.b16 %v189
    %v2512 = vunpack.c.h.b16 %v189
    %v2513 = vunpack.c.l.b16 %v190
    %v2514 = vunpack.c.h.b16 %v190
    %v2515 = vunpack.c.l.b16 %v191
    %v2516 = vunpack.c.h.b16 %v191
    %v2517 = vunpack.c.l.b16 %v192
    %v2518 = vunpack.c.h.b16 %v192
    %v2519 = vunpack.c.l.b16 %v193
    %v2520 = vunpack.c.h.b16 %v193
    %v2521 = vunpack.c.l.b16 %v194
    %v2522 = vunpack.c.h.b16 %v194
    %v2523 = vunpack.c.l.b16 %v195
    %v2524 = vunpack.c.h.b16 %v195
    %v2525 = vunpack.c.l.b16 %v196
    %v2526 = vunpack.c.h.b16 %v196
    %v2527 = vunpack.c.l.b16 %v197
    %v2528 = vunpack.c.h.b16 %v197
    %v2529 = vunpack.c.l.b16 %v198
    %v2530 = vunpack.c.h.b16 %v198
    %v2531 = vunpack.c.l.b16 %v199
    %v2532 = vunpack.c.h.b16 %v199
    %v2533 = vunpack.c.l.b16 %v200
    %v2534 = vunpack.c.h.b16 %v200
    %v2535 = vunpack.c.l.b16 %v201
    %v2536 = vunpack.c.h.b16 %v201
    %v2537 = vunpack.c.l.b16 %v202
    %v2538 = vunpack.c.h.b16 %v202
    %v2539 = vunpack.c.l.b16 %v203
    %v2540 = vunpack.c.h.b16 %v203
    %v2541 = vunpack.c.l.b16 %v204
    %v2542 = vunpack.c.h.b16 %v204
    %v2543 = vunpack.c.l.b16 %v205
    %v2544 = vunpack.c.h.b16 %v205
    %v2545 = vunpack.c.l.b16 %v206
    %v2546 = vunpack.c.h.b16 %v206
    %v2547 = vunpack.c.l.b16 %v207
    %v2548 = vunpack.c.h.b16 %v207
    %v2549 = vunpack.c.l.b16 %v208
    %v2550 = vunpack.c.h.b16 %v208
    %v2551 = vunpack.c.l.b16 %v209
    %v2552 = vunpack.c.h.b16 %v209
    %v2553 = vunpack.c.l.b16 %v210
    %v2554 = vunpack.c.h.b16 %v210
    %v2555 = vunpack.c.l.b16 %v211
    %v2556 = vunpack.c.h.b16 %v211
    %v2557 = vunpack.c.l.b16 %v212
    %v2558 = vunpack.c.h.b16 %v212
    %v2559 = vunpack.c.l.b16 %v213
    %v2560 = vunpack.c.h.b16 %v213
    %v2561 = vunpack.c.l.b16 %v214
    %v2562 = vunpack.c.h.b16 %v214
    %v2563 = vunpack.c.l.b16 %v215
    %v2564 = vunpack.c.h.b16 %v215
    %v2565 = vunpack.c.l.b16 %v216
    %v2566 = vunpack.c.h.b16 %v216
    %v2567 = vunpack.c.l.b16 %v217
    %v2568 = vunpack.c.h.b16 %v217
    %v2569 = vunpack.c.l.b16 %v218
    %v2570 = vunpack.c.h.b16 %v218
    %v2571 = vunpack.c.l.b16 %v219
    %v2572 = vunpack.c.h.b16 %v219
    %v2573 = vunpack.c.l.b16 %v220
    %v2574 = vunpack.c.h.b16 %v220
    %v2575 = vunpack.c.l.b16 %v221
    %v2576 = vunpack.c.h.b16 %v221
    %v2577 = vunpack.c.l.b16 %v222
    %v2578 = vunpack.c.h.b16 %v222
    %v2579 = vunpack.c.l.b16 %v223
    %v2580 = vunpack.c.h.b16 %v223
    %v2581 = vunpack.c.l.b16 %v224
    %v2582 = vunpack.c.h.b16 %v224
    %v2583 = vunpack.c.l.b16 %v225
    %v2584 = vunpack.c.h.b16 %v225
    %v2585 = vunpack.c.l.b16 %v226
    %v2586 = vunpack.c.h.b16 %v226
    %v2587 = vunpack.c.l.b16 %v227
    %v2588 = vunpack.c.h.b16 %v227
    %v2589 = vunpack.c.l.b16 %v228
    %v2590 = vunpack.c.h.b16 %v228
    %v2591 = vunpack.c.l.b16 %v229
    %v2592 = vunpack.c.h.b16 %v229
    %v2593 = vunpack.c.l.b16 %v230
    %v2594 = vunpack.c.h.b16 %v230
    %v2595 = vunpack.c.l.b16 %v231
    %v2596 = vunpack.c.h.b16 %v231
    %v2597 = vunpack.c.l.b16 %v232
    %v2598 = vunpack.c.h.b16 %v232
    %v2599 = vunpack.c.l.b16 %v233
    %v2600 = vunpack.c.h.b16 %v233
    %v2601 = vunpack.c.l.b16 %v234
    %v2602 = vunpack.c.h.b16 %v234
    %v2603 = vunpack.c.l.b16 %v235
    %v2604 = vunpack.c.h.b16 %v235
    %v2605 = vunpack.c.l.b16 %v236
    %v2606 = vunpack.c.h.b16 %v236
    %v2607 = vunpack.c.l.b16 %v237
    %v2608 = vunpack.c.h.b16 %v237
    %v2609 = vunpack.c.l.b16 %v238
    %v2610 = vunpack.c.h.b16 %v238
    %v2611 = vunpack.c.l.b16 %v239
    %v2612 = vunpack.c.h.b16 %v239
    %v2613 = vunpack.c.l.b16 %v240
    %v2614 = vunpack.c.h.b16 %v240
    %v2615 = vunpack.c.l.b16 %v241
    %v2616 = vunpack.c.h.b16 %v241
    %v2617 = vunpack.c.l.b16 %v242
    %v2618 = vunpack.c.h.b16 %v242
    %v2619 = vunpack.c.l.b16 %v243
    %v2620 = vunpack.c.h.b16 %v243
    %v2621 = vunpack.c.l.b16 %v244
    %v2622 = vunpack.c.h.b16 %v244
    %v2623 = vunpack.c.l.b16 %v245
    %v2624 = vunpack.c.h.b16 %v245
    %v2625 = vunpack.c.l.b16 %v246
    %v2626 = vunpack.c.h.b16 %v246
    %v2627 = vunpack.c.l.b16 %v247
    %v2628 = vunpack.c.h.b16 %v247
    %v2629 = vunpack.c.l.b16 %v248
    %v2630 = vunpack.c.h.b16 %v248
    %v2631 = vunpack.c.l.b16 %v249
    %v2632 = vunpack.c.h.b16 %v249
    %v2633 = vunpack.c.l.b16 %v250
    %v2634 = vunpack.c.h.b16 %v250
    %v2635 = vunpack.c.l.b16 %v251
    %v2636 = vunpack.c.h.b16 %v251
    %v2637 = vunpack.c.l.b16 %v252
    %v2638 = vunpack.c.h.b16 %v252
    %v2639 = vunpack.c.l.b16 %v253
    %v2640 = vunpack.c.h.b16 %v253
    %v2641 = vunpack.c.l.b16 %v254
    %v2642 = vunpack.c.h.b16 %v254
    %v2643 = vunpack.c.l.b16 %v255
    %v2644 = vunpack.c.h.b16 %v255
    %v2645 = vunpack.c.l.b16 %v256
    %v2646 = vunpack.c.h.b16 %v256
    %v2647 = vunpack.c.l.b16 %v257
    %v2648 = vunpack.c.h.b16 %v257
    %v2649 = vunpack.c.l.b16 %v258
    %v2650 = vunpack.c.h.b16 %v258
    %v2651 = vunpack.c.l.b16 %v259
    %v2652 = vunpack.c.h.b16 %v259
    %v2653 = vunpack.c.l.b16 %v260
    %v2654 = vunpack.c.h.b16 %v260
    %v2655 = vunpack.c.l.b16 %v261
    %v2656 = vunpack.c.h.b16 %v261
    %v2657 = vunpack.c.l.b16 %v262
    %v2658 = vunpack.c.h.b16 %v262
    %v2659 = vunpack.c.l.b16 %v263
    %v2660 = vunpack.c.h.b16 %v263
    %v2661 = vunpack.c.l.b16 %v264
    %v2662 = vunpack.c.h.b16 %v264
    %v2663 = vunpack.c.l.b16 %v265
    %v2664 = vunpack.c.h.b16 %v265
    %v2665 = vunpack.c.l.b16 %v266
    %v2666 = vunpack.c.h.b16 %v266
    %v2667 = vunpack.c.l.b16 %v267
    %v2668 = vunpack.c.h.b16 %v267
    %v2669 = vunpack.c.l.b16 %v268
    %v2670 = vunpack.c.h.b16 %v268
    %v2671 = vunpack.c.l.b16 %v269
    %v2672 = vunpack.c.h.b16 %v269
    %v2673 = vunpack.c.l.b16 %v270
    %v2674 = vunpack.c.h.b16 %v270
    %v2675 = vunpack.c.l.b16 %v271
    %v2676 = vunpack.c.h.b16 %v271
    %v2677 = vunpack.c.l.b16 %v272
    %v2678 = vunpack.c.h.b16 %v272
    %v2679 = vunpack.c.l.b16 %v273
    %v2680 = vunpack.c.h.b16 %v273
    %v2681 = vunpack.c.l.b16 %v274
    %v2682 = vunpack.c.h.b16 %v274
    %v2683 = vunpack.c.l.b16 %v275
    %v2684 = vunpack.c.h.b16 %v275
    %v2685 = vunpack.c.l.b16 %v276
    %v2686 = vunpack.c.h.b16 %v276
    %v2687 = vunpack.c.l.b16 %v277
    %v2688 = vunpack.c.h.b16 %v277
    %v2689 = vunpack.c.l.b16 %v278
    %v2690 = vunpack.c.h.b16 %v278
    %v2691 = vunpack.c.l.b16 %v279
    %v2692 = vunpack.c.h.b16 %v279
    %v2693 = vunpack.c.l.b16 %v280
    %v2694 = vunpack.c.h.b16 %v280
    %v2695 = vunpack.c.l.b16 %v281
    %v2696 = vunpack.c.h.b16 %v281
    %v2697 = vunpack.c.l.b16 %v282
    %v2698 = vunpack.c.h.b16 %v282
    %v2699 = vunpack.c.l.b16 %v283
    %v2700 = vunpack.c.h.b16 %v283
    %v2701 = vunpack.c.l.b16 %v284
    %v2702 = vunpack.c.h.b16 %v284
    %v2703 = vunpack.c.l.b16 %v285
    %v2704 = vunpack.c.h.b16 %v285
    %v2705 = vunpack.c.l.b16 %v286
    %v2706 = vunpack.c.h.b16 %v286
    %v2707 = vunpack.c.l.b16 %v287
    %v2708 = vunpack.c.h.b16 %v287
    %v2709 = vunpack.c.l.b16 %v288
    %v2710 = vunpack.c.h.b16 %v288
    %v2711 = vunpack.c.l.b16 %v289
    %v2712 = vunpack.c.h.b16 %v289
    %v2713 = vunpack.c.l.b16 %v290
    %v2714 = vunpack.c.h.b16 %v290
    %v2715 = vunpack.c.l.b16 %v291
    %v2716 = vunpack.c.h.b16 %v291
    %v2717 = vunpack.c.l.b16 %v292
    %v2718 = vunpack.c.h.b16 %v292
    %v2719 = vunpack.c.l.b16 %v293
    %v2720 = vunpack.c.h.b16 %v293
    %v2721 = vunpack.c.l.b16 %v294
    %v2722 = vunpack.c.h.b16 %v294
    %v2723 = vunpack.c.l.b16 %v295
    %v2724 = vunpack.c.h.b16 %v295
    %v2725 = vunpack.c.l.b16 %v296
    %v2726 = vunpack.c.h.b16 %v296
    %v2727 = vunpack.c.l.b16 %v297
    %v2728 = vunpack.c.h.b16 %v297
    %v2729 = vunpack.c.l.b16 %v298
    %v2730 = vunpack.c.h.b16 %v298
    %v2731 = vunpack.c.l.b16 %v299
    %v2732 = vunpack.c.h.b16 %v299
    %v2733 = vunpack.c.l.b16 %v300
    %v2734 = vunpack.c.h.b16 %v300
    %v2735 = vunpack.c.l.b16 %v301
    %v2736 = vunpack.c.h.b16 %v301
    %v2737 = vunpack.c.l.b16 %v302
    %v2738 = vunpack.c.h.b16 %v302
    %v2739 = vunpack.c.l.b16 %v303
    %v2740 = vunpack.c.h.b16 %v303
    %v2741 = vunpack.c.l.b16 %v304
    %v2742 = vunpack.c.h.b16 %v304
    %v2743 = vunpack.c.l.b16 %v305
    %v2744 = vunpack.c.h.b16 %v305
    %v2745 = vunpack.c.l.b16 %v306
    %v2746 = vunpack.c.h.b16 %v306
    %v2747 = vunpack.c.l.b16 %v307
    %v2748 = vunpack.c.h.b16 %v307
    %v2749 = vunpack.c.l.b16 %v308
    %v2750 = vunpack.c.h.b16 %v308
    %v2751 = vunpack.c.l.b16 %v309
    %v2752 = vunpack.c.h.b16 %v309
    %v2753 = vunpack.c.l.b16 %v310
    %v2754 = vunpack.c.h.b16 %v310
    %v2755 = vunpack.c.l.b16 %v311
    %v2756 = vunpack.c.h.b16 %v311
    %v2757 = vunpack.c.l.b16 %v312
    %v2758 = vunpack.c.h.b16 %v312
    %v2759 = vunpack.c.l.b16 %v313
    %v2760 = vunpack.c.h.b16 %v313
    %v2761 = vunpack.c.l.b16 %v314
    %v2762 = vunpack.c.h.b16 %v314
    %v2763 = vunpack.c.l.b16 %v315
    %v2764 = vunpack.c.h.b16 %v315
    %v2765 = vunpack.c.l.b16 %v316
    %v2766 = vunpack.c.h.b16 %v316
    %v2767 = vunpack.c.l.b16 %v317
    %v2768 = vunpack.c.h.b16 %v317
    %v2769 = vunpack.c.l.b16 %v318
    %v2770 = vunpack.c.h.b16 %v318
    %v2771 = vunpack.c.l.b16 %v319
    %v2772 = vunpack.c.h.b16 %v319
    %v2773 = vunpack.c.l.b16 %v320
    %v2774 = vunpack.c.h.b16 %v320
    %v2775 = vunpack.c.l.b16 %v321
    %v2776 = vunpack.c.h.b16 %v321
    %v2777 = vunpack.c.l.b16 %v322
    %v2778 = vunpack.c.h.b16 %v322
    %v2779 = vunpack.c.l.b16 %v323
    %v2780 = vunpack.c.h.b16 %v323
    %v2781 = vunpack.c.l.b16 %v324
    %v2782 = vunpack.c.h.b16 %v324
    %v2783 = vunpack.c.l.b16 %v325
    %v2784 = vunpack.c.h.b16 %v325
    %v2785 = vunpack.c.l.b16 %v326
    %v2786 = vunpack.c.h.b16 %v326
    %v2787 = vunpack.c.l.b16 %v327
    %v2788 = vunpack.c.h.b16 %v327
    %v2789 = vunpack.c.l.b16 %v328
    %v2790 = vunpack.c.h.b16 %v328
    %v2791 = vunpack.c.l.b16 %v329
    %v2792 = vunpack.c.h.b16 %v329
    %v2793 = vunpack.c.l.b16 %v330
    %v2794 = vunpack.c.h.b16 %v330
    %v2795 = vunpack.c.l.b16 %v331
    %v2796 = vunpack.c.h.b16 %v331
    %v2797 = vunpack.c.l.b16 %v332
    %v2798 = vunpack.c.h.b16 %v332
    %v2799 = vunpack.c.l.b16 %v333
    %v2800 = vunpack.c.h.b16 %v333
    %v2801 = vunpack.c.l.b16 %v334
    %v2802 = vunpack.c.h.b16 %v334
    %v2803 = vunpack.c.l.b16 %v335
    %v2804 = vunpack.c.h.b16 %v335
    %v2805 = vunpack.c.l.b16 %v336
    %v2806 = vunpack.c.h.b16 %v336
    %v2807 = vunpack.c.l.b16 %v337
    %v2808 = vunpack.c.h.b16 %v337
    %v2809 = vunpack.c.l.b16 %v338
    %v2810 = vunpack.c.h.b16 %v338
    %v2811 = vunpack.c.l.b16 %v339
    %v2812 = vunpack.c.h.b16 %v339
    %v2813 = vunpack.c.l.b16 %v340
    %v2814 = vunpack.c.h.b16 %v340
    %v2815 = vunpack.c.l.b16 %v341
    %v2816 = vunpack.c.h.b16 %v341
    %v2817 = vunpack.c.l.b16 %v342
    %v2818 = vunpack.c.h.b16 %v342
    %v2819 = vunpack.c.l.b16 %v343
    %v2820 = vunpack.c.h.b16 %v343
    %v2821 = vunpack.c.l.b16 %v344
    %v2822 = vunpack.c.h.b16 %v344
    %v2823 = vunpack.c.l.b16 %v345
    %v2824 = vunpack.c.h.b16 %v345
    %v2825 = vunpack.c.l.b16 %v346
    %v2826 = vunpack.c.h.b16 %v346
    %v2827 = vunpack.c.l.b16 %v347
    %v2828 = vunpack.c.h.b16 %v347
    %v2829 = vunpack.c.l.b16 %v348
    %v2830 = vunpack.c.h.b16 %v348
    %v2831 = vunpack.c.l.b16 %v349
    %v2832 = vunpack.c.h.b16 %v349
    %v2833 = vunpack.c.l.b16 %v350
    %v2834 = vunpack.c.h.b16 %v350
    %v2835 = vunpack.c.l.b16 %v351
    %v2836 = vunpack.c.h.b16 %v351
    %v2837 = vunpack.c.l.b16 %v352
    %v2838 = vunpack.c.h.b16 %v352
    %v2839 = vunpack.c.l.b16 %v353
    %v2840 = vunpack.c.h.b16 %v353
    %v2841 = vunpack.c.l.b16 %v354
    %v2842 = vunpack.c.h.b16 %v354
    %v2843 = vunpack.c.l.b16 %v355
    %v2844 = vunpack.c.h.b16 %v355
    %v2845 = vunpack.c.l.b16 %v356
    %v2846 = vunpack.c.h.b16 %v356
    %v2847 = vunpack.c.l.b16 %v357
    %v2848 = vunpack.c.h.b16 %v357
    %v2849 = vunpack.c.l.b16 %v358
    %v2850 = vunpack.c.h.b16 %v358
    %v2851 = vunpack.c.l.b16 %v359
    %v2852 = vunpack.c.h.b16 %v359
    %v2853 = vunpack.c.l.b16 %v360
    %v2854 = vunpack.c.h.b16 %v360
    %v2855 = vunpack.c.l.b16 %v361
    %v2856 = vunpack.c.h.b16 %v361
    %v2857 = vunpack.c.l.b16 %v362
    %v2858 = vunpack.c.h.b16 %v362
    %v2859 = vunpack.c.l.b16 %v363
    %v2860 = vunpack.c.h.b16 %v363
    %v2861 = vunpack.c.l.b16 %v364
    %v2862 = vunpack.c.h.b16 %v364
    %v2863 = vunpack.c.l.b16 %v365
    %v2864 = vunpack.c.h.b16 %v365
    %v2865 = vunpack.c.l.b16 %v366
    %v2866 = vunpack.c.h.b16 %v366
    %v2867 = vunpack.c.l.b16 %v367
    %v2868 = vunpack.c.h.b16 %v367
    %v2869 = vunpack.c.l.b16 %v368
    %v2870 = vunpack.c.h.b16 %v368
    %v2871 = vunpack.c.l.b16 %v369
    %v2872 = vunpack.c.h.b16 %v369
    %v2873 = vunpack.c.l.b16 %v370
    %v2874 = vunpack.c.h.b16 %v370
    %v2875 = vunpack.c.l.b16 %v371
    %v2876 = vunpack.c.h.b16 %v371
    %v2877 = vunpack.c.l.b16 %v372
    %v2878 = vunpack.c.h.b16 %v372
    %v2879 = vunpack.c.l.b16 %v373
    %v2880 = vunpack.c.h.b16 %v373
    %v2881 = vunpack.c.l.b16 %v374
    %v2882 = vunpack.c.h.b16 %v374
    %v2883 = vunpack.c.l.b16 %v375
    %v2884 = vunpack.c.h.b16 %v375
    %v2885 = vunpack.c.l.b16 %v376
    %v2886 = vunpack.c.h.b16 %v376
    %v2887 = vunpack.c.l.b16 %v377
    %v2888 = vunpack.c.h.b16 %v377
    %v2889 = vunpack.c.l.b16 %v378
    %v2890 = vunpack.c.h.b16 %v378
    %v2891 = vunpack.c.l.b16 %v379
    %v2892 = vunpack.c.h.b16 %v379
    %v2893 = vunpack.c.l.b16 %v380
    %v2894 = vunpack.c.h.b16 %v380
    %v2895 = vunpack.c.l.b16 %v381
    %v2896 = vunpack.c.h.b16 %v381
    %v2897 = vunpack.c.l.b16 %v382
    %v2898 = vunpack.c.h.b16 %v382
    %v2899 = vunpack.c.l.b16 %v383
    %v2900 = vunpack.c.h.b16 %v383
    %v2901 = vunpack.c.l.b16 %v384
    %v2902 = vunpack.c.h.b16 %v384
    %v2903 = vunpack.c.l.b16 %v385
    %v2904 = vunpack.c.h.b16 %v385
    %v2905 = vunpack.c.l.b16 %v386
    %v2906 = vunpack.c.h.b16 %v386
    %v2907 = vunpack.c.l.b16 %v387
    %v2908 = vunpack.c.h.b16 %v387
    %v2909 = vunpack.c.l.b16 %v388
    %v2910 = vunpack.c.h.b16 %v388
    %v2911 = vunpack.c.l.b16 %v389
    %v2912 = vunpack.c.h.b16 %v389
    %v2913 = vunpack.c.l.b16 %v390
    %v2914 = vunpack.c.h.b16 %v390
    %v2915 = vunpack.c.l.b16 %v391
    %v2916 = vunpack.c.h.b16 %v391
    %v2917 = vunpack.c.l.b16 %v392
    %v2918 = vunpack.c.h.b16 %v392
    %v2919 = vunpack.c.l.b16 %v393
    %v2920 = vunpack.c.h.b16 %v393
    %v2921 = vunpack.c.l.b16 %v394
    %v2922 = vunpack.c.h.b16 %v394
    %v2923 = vunpack.c.l.b16 %v395
    %v2924 = vunpack.c.h.b16 %v395
    %v2925 = vunpack.c.l.b16 %v396
    %v2926 = vunpack.c.h.b16 %v396
    %v2927 = vunpack.c.l.b16 %v397
    %v2928 = vunpack.c.h.b16 %v397
    %v2929 = vunpack.c.l.b16 %v398
    %v2930 = vunpack.c.h.b16 %v398
    %v2931 = vunpack.c.l.b16 %v399
    %v2932 = vunpack.c.h.b16 %v399
    %v2933 = vunpack.c.l.b16 %v400
    %v2934 = vunpack.c.h.b16 %v400
    %v2935 = vunpack.c.l.b16 %v401
    %v2936 = vunpack.c.h.b16 %v401
    %v2937 = vunpack.c.l.b16 %v402
    %v2938 = vunpack.c.h.b16 %v402
    %v2939 = vunpack.c.l.b16 %v403
    %v2940 = vunpack.c.h.b16 %v403
    %v2941 = vunpack.c.l.b16 %v404
    %v2942 = vunpack.c.h.b16 %v404
    %v2943 = vunpack.c.l.b16 %v405
    %v2944 = vunpack.c.h.b16 %v405
    %v2945 = vunpack.c.l.b16 %v406
    %v2946 = vunpack.c.h.b16 %v406
    %v2947 = vunpack.c.l.b16 %v407
    %v2948 = vunpack.c.h.b16 %v407
    %v2949 = vunpack.c.l.b16 %v408
    %v2950 = vunpack.c.h.b16 %v408
    %v2951 = vunpack.c.l.b16 %v409
    %v2952 = vunpack.c.h.b16 %v409
    %v2953 = vunpack.c.l.b16 %v410
    %v2954 = vunpack.c.h.b16 %v410
    %v2955 = vunpack.c.l.b16 %v411
    %v2956 = vunpack.c.h.b16 %v411
    %v2957 = vunpack.c.l.b16 %v412
    %v2958 = vunpack.c.h.b16 %v412
    %v2959 = vunpack.c.l.b16 %v413
    %v2960 = vunpack.c.h.b16 %v413
    %v2961 = vunpack.c.l.b16 %v414
    %v2962 = vunpack.c.h.b16 %v414
    %v2963 = vunpack.c.l.b16 %v415
    %v2964 = vunpack.c.h.b16 %v415
    %v2965 = vunpack.c.l.b16 %v416
    %v2966 = vunpack.c.h.b16 %v416
    %v2967 = vunpack.c.l.b16 %v417
    %v2968 = vunpack.c.h.b16 %v417
    %v2969 = vunpack.c.l.b16 %v418
    %v2970 = vunpack.c.h.b16 %v418
    %v2971 = vunpack.c.l.b16 %v419
    %v2972 = vunpack.c.h.b16 %v419
    %v2973 = vunpack.c.l.b16 %v420
    %v2974 = vunpack.c.h.b16 %v420
    %v2975 = vunpack.c.l.b16 %v421
    %v2976 = vunpack.c.h.b16 %v421
    %v2977 = vunpack.c.l.b16 %v422
    %v2978 = vunpack.c.h.b16 %v422
    %v2979 = vunpack.c.l.b16 %v423
    %v2980 = vunpack.c.h.b16 %v423
    %v2981 = vunpack.c.l.b16 %v424
    %v2982 = vunpack.c.h.b16 %v424
    %v2983 = vunpack.c.l.b16 %v425
    %v2984 = vunpack.c.h.b16 %v425
    %v2985 = vunpack.c.l.b16 %v426
    %v2986 = vunpack.c.h.b16 %v426
    %v2987 = vunpack.c.l.b16 %v427
    %v2988 = vunpack.c.h.b16 %v427
    %v2989 = vunpack.c.l.b16 %v428
    %v2990 = vunpack.c.h.b16 %v428
    %v2991 = vunpack.c.l.b16 %v429
    %v2992 = vunpack.c.h.b16 %v429
    %v2993 = vunpack.c.l.b16 %v430
    %v2994 = vunpack.c.h.b16 %v430
    %v2995 = vunpack.c.l.b16 %v431
    %v2996 = vunpack.c.h.b16 %v431
    %v2997 = vunpack.c.l.b16 %v432
    %v2998 = vunpack.c.h.b16 %v432
    %v2999 = vunpack.c.l.b16 %v433
    %v3000 = vunpack.c.h.b16 %v433
    %v3001 = vunpack.c.l.b16 %v434
    %v3002 = vunpack.c.h.b16 %v434
    %v3003 = vunpack.c.l.b16 %v435
    %v3004 = vunpack.c.h.b16 %v435
    %v3005 = vunpack.c.l.b16 %v436
    %v3006 = vunpack.c.h.b16 %v436
    %v3007 = vunpack.c.l.b16 %v437
    %v3008 = vunpack.c.h.b16 %v437
    %v3009 = vunpack.c.l.b16 %v438
    %v3010 = vunpack.c.h.b16 %v438
    %v3011 = vunpack.c.l.b16 %v439
    %v3012 = vunpack.c.h.b16 %v439
    %v3013 = vunpack.c.l.b16 %v440
    %v3014 = vunpack.c.h.b16 %v440
    %v3015 = vunpack.c.l.b16 %v441
    %v3016 = vunpack.c.h.b16 %v441
    %v3017 = vunpack.c.l.b16 %v442
    %v3018 = vunpack.c.h.b16 %v442
    %v3019 = vunpack.c.l.b16 %v443
    %v3020 = vunpack.c.h.b16 %v443
    %v3021 = vunpack.c.l.b16 %v444
    %v3022 = vunpack.c.h.b16 %v444
    %v3023 = vunpack.c.l.b16 %v445
    %v3024 = vunpack.c.h.b16 %v445
    %v3025 = vunpack.c.l.b16 %v446
    %v3026 = vunpack.c.h.b16 %v446
    %v3027 = vunpack.c.l.b16 %v447
    %v3028 = vunpack.c.h.b16 %v447
    %v3029 = vunpack.c.l.b16 %v448
    %v3030 = vunpack.c.h.b16 %v448
    %v3031 = vunpack.c.l.b16 %v449
    %v3032 = vunpack.c.h.b16 %v449
    %v3033 = vunpack.c.l.b16 %v450
    %v3034 = vunpack.c.h.b16 %v450
    %v3035 = vunpack.c.l.b16 %v451
    %v3036 = vunpack.c.h.b16 %v451
    %v3037 = vunpack.c.l.b16 %v452
    %v3038 = vunpack.c.h.b16 %v452
    %v3039 = vunpack.c.l.b16 %v453
    %v3040 = vunpack.c.h.b16 %v453
    %v3041 = vunpack.c.l.b16 %v454
    %v3042 = vunpack.c.h.b16 %v454
    %v3043 = vunpack.c.l.b16 %v455
    %v3044 = vunpack.c.h.b16 %v455
    %v3045 = vunpack.c.l.b16 %v456
    %v3046 = vunpack.c.h.b16 %v456
    %v3047 = vunpack.c.l.b16 %v457
    %v3048 = vunpack.c.h.b16 %v457
    %v3049 = vunpack.c.l.b16 %v458
    %v3050 = vunpack.c.h.b16 %v458
    %v3051 = vunpack.c.l.b16 %v459
    %v3052 = vunpack.c.h.b16 %v459
    %v3053 = vunpack.c.l.b16 %v460
    %v3054 = vunpack.c.h.b16 %v460
    %v3055 = vunpack.c.l.b16 %v461
    %v3056 = vunpack.c.h.b16 %v461
    %v3057 = vunpack.c.l.b16 %v462
    %v3058 = vunpack.c.h.b16 %v462
    %v3059 = vunpack.c.l.b16 %v463
    %v3060 = vunpack.c.h.b16 %v463
    %v3061 = vunpack.c.l.b16 %v464
    %v3062 = vunpack.c.h.b16 %v464
    %v3063 = vunpack.c.l.b16 %v465
    %v3064 = vunpack.c.h.b16 %v465
    %v3065 = vunpack.c.l.b16 %v466
    %v3066 = vunpack.c.h.b16 %v466
    %v3067 = vunpack.c.l.b16 %v467
    %v3068 = vunpack.c.h.b16 %v467
    %v3069 = vunpack.c.l.b16 %v468
    %v3070 = vunpack.c.h.b16 %v468
    %v3071 = vunpack.c.l.b16 %v469
    %v3072 = vunpack.c.h.b16 %v469
    %v3073 = vunpack.c.l.b16 %v470
    %v3074 = vunpack.c.h.b16 %v470
    %v3075 = vunpack.c.l.b16 %v471
    %v3076 = vunpack.c.h.b16 %v471
    %v3077 = vunpack.c.l.b16 %v472
    %v3078 = vunpack.c.h.b16 %v472
    %v3079 = vunpack.c.l.b16 %v473
    %v3080 = vunpack.c.h.b16 %v473
    %v3081 = vunpack.c.l.b16 %v474
    %v3082 = vunpack.c.h.b16 %v474
    %v3083 = vunpack.c.l.b16 %v475
    %v3084 = vunpack.c.h.b16 %v475
    %v3085 = vunpack.c.l.b16 %v476
    %v3086 = vunpack.c.h.b16 %v476
    %v3087 = vunpack.c.l.b16 %v477
    %v3088 = vunpack.c.h.b16 %v477
    %v3089 = vunpack.c.l.b16 %v478
    %v3090 = vunpack.c.h.b16 %v478
    %v3091 = vunpack.c.l.b16 %v479
    %v3092 = vunpack.c.h.b16 %v479
    %v3093 = vunpack.c.l.b16 %v480
    %v3094 = vunpack.c.h.b16 %v480
    %v3095 = vunpack.c.l.b16 %v481
    %v3096 = vunpack.c.h.b16 %v481
    %v3097 = vunpack.c.l.b16 %v482
    %v3098 = vunpack.c.h.b16 %v482
    %v3099 = vunpack.c.l.b16 %v483
    %v3100 = vunpack.c.h.b16 %v483
    %v3101 = vunpack.c.l.b16 %v484
    %v3102 = vunpack.c.h.b16 %v484
    %v3103 = vunpack.c.l.b16 %v485
    %v3104 = vunpack.c.h.b16 %v485
    %v3105 = vunpack.c.l.b16 %v486
    %v3106 = vunpack.c.h.b16 %v486
    %v3107 = vunpack.c.l.b16 %v487
    %v3108 = vunpack.c.h.b16 %v487
    %v3109 = vunpack.c.l.b16 %v488
    %v3110 = vunpack.c.h.b16 %v488
    %v3111 = vunpack.c.l.b16 %v489
    %v3112 = vunpack.c.h.b16 %v489
    %v3113 = vunpack.c.l.b16 %v490
    %v3114 = vunpack.c.h.b16 %v490
    %v3115 = vunpack.c.l.b16 %v491
    %v3116 = vunpack.c.h.b16 %v491
    %v3117 = vunpack.c.l.b16 %v492
    %v3118 = vunpack.c.h.b16 %v492
    %v3119 = vunpack.c.l.b16 %v493
    %v3120 = vunpack.c.h.b16 %v493
    %v3121 = vunpack.c.l.b16 %v494
    %v3122 = vunpack.c.h.b16 %v494
    %v3123 = vunpack.c.l.b16 %v495
    %v3124 = vunpack.c.h.b16 %v495
    %v3125 = vunpack.c.l.b16 %v496
    %v3126 = vunpack.c.h.b16 %v496
    %v3127 = vunpack.c.l.b16 %v497
    %v3128 = vunpack.c.h.b16 %v497
    %v3129 = vunpack.c.l.b16 %v498
    %v3130 = vunpack.c.h.b16 %v498
    %v3131 = vunpack.c.l.b16 %v499
    %v3132 = vunpack.c.h.b16 %v499
    %v3133 = vunpack.c.l.b16 %v500
    %v3134 = vunpack.c.h.b16 %v500
    %v3135 = vunpack.c.l.b16 %v501
    %v3136 = vunpack.c.h.b16 %v501
    %v3137 = vunpack.c.l.b16 %v502
    %v3138 = vunpack.c.h.b16 %v502
    %v3139 = vunpack.c.l.b16 %v503
    %v3140 = vunpack.c.h.b16 %v503
    %v3141 = vunpack.c.l.b16 %v504
    %v3142 = vunpack.c.h.b16 %v504
    %v3143 = vunpack.c.l.b16 %v505
    %v3144 = vunpack.c.h.b16 %v505
    %v3145 = vunpack.c.l.b16 %v506
    %v3146 = vunpack.c.h.b16 %v506
    %v3147 = vunpack.c.l.b16 %v507
    %v3148 = vunpack.c.h.b16 %v507
    %v3149 = vunpack.c.l.b16 %v508
    %v3150 = vunpack.c.h.b16 %v508
    %v3151 = vunpack.c.l.b16 %v509
    %v3152 = vunpack.c.h.b16 %v509
    %v3153 = vunpack.c.l.b16 %v510
    %v3154 = vunpack.c.h.b16 %v510
    %v3155 = vunpack.c.l.b16 %v511
    %v3156 = vunpack.c.h.b16 %v511
    %v3157 = vunpack.c.l.b16 %v512
    %v3158 = vunpack.c.h.b16 %v512
    %v3159 = vunpack.c.l.b16 %v513
    %v3160 = vunpack.c.h.b16 %v513
    %v3161 = vunpack.c.l.b16 %v514
    %v3162 = vunpack.c.h.b16 %v514
    %v3163 = vunpack.c.l.b16 %v515
    %v3164 = vunpack.c.h.b16 %v515
    %v3165 = vunpack.c.l.b16 %v516
    %v3166 = vunpack.c.h.b16 %v516
    %v3167 = vunpack.c.l.b16 %v517
    %v3168 = vunpack.c.h.b16 %v517
    %v3169 = vunpack.c.l.b16 %v518
    %v3170 = vunpack.c.h.b16 %v518
    %v3171 = vunpack.c.l.b16 %v519
    %v3172 = vunpack.c.h.b16 %v519
    %v3173 = vunpack.c.l.b16 %v520
    %v3174 = vunpack.c.h.b16 %v520
    %v3175 = vunpack.c.l.b16 %v521
    %v3176 = vunpack.c.h.b16 %v521
    %v3177 = vunpack.c.l.b16 %v522
    %v3178 = vunpack.c.h.b16 %v522
    %v3179 = vunpack.c.l.b16 %v523
    %v3180 = vunpack.c.h.b16 %v523
    %v3181 = vunpack.c.l.b16 %v524
    %v3182 = vunpack.c.h.b16 %v524
    %v3183 = vunpack.c.l.b16 %v525
    %v3184 = vunpack.c.h.b16 %v525
    %v3185 = vunpack.c.l.b16 %v526
    %v3186 = vunpack.c.h.b16 %v526
    %v3187 = vunpack.c.l.b16 %v527
    %v3188 = vunpack.c.h.b16 %v527
    %v3189 = vunpack.c.l.b16 %v528
    %v3190 = vunpack.c.h.b16 %v528
    %v3191 = vunpack.c.l.b16 %v529
    %v3192 = vunpack.c.h.b16 %v529
    %v3193 = vunpack.c.l.b16 %v530
    %v3194 = vunpack.c.h.b16 %v530
    %v3195 = vunpack.c.l.b16 %v531
    %v3196 = vunpack.c.h.b16 %v531
    %v3197 = vunpack.c.l.b16 %v532
    %v3198 = vunpack.c.h.b16 %v532
    %v3199 = vunpack.c.l.b16 %v533
    %v3200 = vunpack.c.h.b16 %v533
    %v3201 = vunpack.c.l.b16 %v534
    %v3202 = vunpack.c.h.b16 %v534
    %v3203 = vunpack.c.l.b16 %v535
    %v3204 = vunpack.c.h.b16 %v535
    %v3205 = vunpack.c.l.b16 %v536
    %v3206 = vunpack.c.h.b16 %v536
    %v3207 = vunpack.c.l.b16 %v537
    %v3208 = vunpack.c.h.b16 %v537
    %v3209 = vunpack.c.l.b16 %v538
    %v3210 = vunpack.c.h.b16 %v538
    %v3211 = vunpack.c.l.b16 %v539
    %v3212 = vunpack.c.h.b16 %v539
    %v3213 = vunpack.c.l.b16 %v540
    %v3214 = vunpack.c.h.b16 %v540
    %v3215 = vunpack.c.l.b16 %v541
    %v3216 = vunpack.c.h.b16 %v541
    %v3217 = vunpack.c.l.b16 %v542
    %v3218 = vunpack.c.h.b16 %v542
    %v3219 = vunpack.c.l.b16 %v543
    %v3220 = vunpack.c.h.b16 %v543
    %v3221 = vunpack.c.l.b16 %v544
    %v3222 = vunpack.c.h.b16 %v544
    %v3223 = vunpack.c.l.b16 %v545
    %v3224 = vunpack.c.h.b16 %v545
    %v3225 = vunpack.c.l.b16 %v546
    %v3226 = vunpack.c.h.b16 %v546
    %v3227 = vunpack.c.l.b16 %v547
    %v3228 = vunpack.c.h.b16 %v547
    %v3229 = vunpack.c.l.b16 %v548
    %v3230 = vunpack.c.h.b16 %v548
    %v3231 = vunpack.c.l.b16 %v549
    %v3232 = vunpack.c.h.b16 %v549
    %v3233 = vunpack.c.l.b16 %v550
    %v3234 = vunpack.c.h.b16 %v550
    %v3235 = vunpack.c.l.b16 %v551
    %v3236 = vunpack.c.h.b16 %v551
    %v3237 = vunpack.c.l.b16 %v552
    %v3238 = vunpack.c.h.b16 %v552
    %v3239 = vunpack.c.l.b16 %v553
    %v3240 = vunpack.c.h.b16 %v553
    %v3241 = vunpack.c.l.b16 %v554
    %v3242 = vunpack.c.h.b16 %v554
    %v3243 = vunpack.c.l.b16 %v555
    %v3244 = vunpack.c.h.b16 %v555
    %v3245 = vunpack.c.l.b16 %v556
    %v3246 = vunpack.c.h.b16 %v556
    %v3247 = vunpack.c.l.b16 %v557
    %v3248 = vunpack.c.h.b16 %v557
    %v3249 = vunpack.c.l.b16 %v558
    %v3250 = vunpack.c.h.b16 %v558
    %v3251 = vunpack.c.l.b16 %v559
    %v3252 = vunpack.c.h.b16 %v559
    %v3253 = vunpack.c.l.b16 %v560
    %v3254 = vunpack.c.h.b16 %v560
    %v3255 = vunpack.c.l.b16 %v561
    %v3256 = vunpack.c.h.b16 %v561
    %v3257 = vunpack.c.l.b16 %v562
    %v3258 = vunpack.c.h.b16 %v562
    %v3259 = vunpack.c.l.b16 %v563
    %v3260 = vunpack.c.h.b16 %v563
    %v3261 = vunpack.c.l.b16 %v564
    %v3262 = vunpack.c.h.b16 %v564
    %v3263 = vunpack.c.l.b16 %v565
    %v3264 = vunpack.c.h.b16 %v565
    %v3265 = vunpack.c.l.b16 %v566
    %v3266 = vunpack.c.h.b16 %v566
    %v3267 = vunpack.c.l.b16 %v567
    %v3268 = vunpack.c.h.b16 %v567
    %v3269 = vunpack.c.l.b16 %v568
    %v3270 = vunpack.c.h.b16 %v568
    %v3271 = vunpack.c.l.b16 %v569
    %v3272 = vunpack.c.h.b16 %v569
    %v3273 = vunpack.c.l.b16 %v570
    %v3274 = vunpack.c.h.b16 %v570
    %v3275 = vunpack.c.l.b16 %v571
    %v3276 = vunpack.c.h.b16 %v571
    %v3277 = vunpack.c.l.b16 %v572
    %v3278 = vunpack.c.h.b16 %v572
    %v3279 = vunpack.c.l.b16 %v573
    %v3280 = vunpack.c.h.b16 %v573
    %v3281 = vunpack.c.l.b16 %v574
    %v3282 = vunpack.c.h.b16 %v574
    %v3283 = vunpack.c.l.b16 %v575
    %v3284 = vunpack.c.h.b16 %v575
    %v3285 = vunpack.c.l.b16 %v576
    %v3286 = vunpack.c.h.b16 %v576
    %v3287 = vunpack.c.l.b16 %v577
    %v3288 = vunpack.c.h.b16 %v577
    %v3289 = vunpack.c.l.b16 %v578
    %v3290 = vunpack.c.h.b16 %v578
    %v3291 = vunpack.c.l.b16 %v579
    %v3292 = vunpack.c.h.b16 %v579
    %v3293 = vunpack.c.l.b16 %v580
    %v3294 = vunpack.c.h.b16 %v580
    %v3295 = vunpack.c.l.b16 %v581
    %v3296 = vunpack.c.h.b16 %v581
    %v3297 = vunpack.c.l.b16 %v582
    %v3298 = vunpack.c.h.b16 %v582
    %v3299 = vunpack.c.l.b16 %v583
    %v3300 = vunpack.c.h.b16 %v583
    %v3301 = vunpack.c.l.b16 %v584
    %v3302 = vunpack.c.h.b16 %v584
    %v3303 = vunpack.c.l.b16 %v585
    %v3304 = vunpack.c.h.b16 %v585
    %v3305 = vunpack.c.l.b16 %v586
    %v3306 = vunpack.c.h.b16 %v586
    %v3307 = vunpack.c.l.b16 %v587
    %v3308 = vunpack.c.h.b16 %v587
    %v3309 = vunpack.c.l.b16 %v588
    %v3310 = vunpack.c.h.b16 %v588
    %v3311 = vunpack.c.l.b16 %v589
    %v3312 = vunpack.c.h.b16 %v589
    %v3313 = vunpack.c.l.b16 %v590
    %v3314 = vunpack.c.h.b16 %v590
    %v3315 = vunpack.c.l.b16 %v591
    %v3316 = vunpack.c.h.b16 %v591
    %v3317 = vunpack.c.l.b16 %v592
    %v3318 = vunpack.c.h.b16 %v592
    %v3319 = vunpack.c.l.b16 %v593
    %v3320 = vunpack.c.h.b16 %v593
    %v3321 = vunpack.c.l.b16 %v594
    %v3322 = vunpack.c.h.b16 %v594
    %v3323 = vunpack.c.l.b16 %v595
    %v3324 = vunpack.c.h.b16 %v595
    %v3325 = vunpack.c.l.b16 %v596
    %v3326 = vunpack.c.h.b16 %v596
    %v3327 = vunpack.c.l.b16 %v597
    %v3328 = vunpack.c.h.b16 %v597
    %v3329 = vunpack.c.l.b16 %v598
    %v3330 = vunpack.c.h.b16 %v598
    %v3331 = vunpack.c.l.b16 %v599
    %v3332 = vunpack.c.h.b16 %v599
    %v3333 = vunpack.c.l.b16 %v600
    %v3334 = vunpack.c.h.b16 %v600
    %v3335 = vunpack.c.l.b16 %v601
    %v3336 = vunpack.c.h.b16 %v601
    %v3337 = vunpack.c.l.b16 %v602
    %v3338 = vunpack.c.h.b16 %v602
    %v3339 = vunpack.c.l.b16 %v603
    %v3340 = vunpack.c.h.b16 %v603
    %v3341 = vunpack.c.l.b16 %v604
    %v3342 = vunpack.c.h.b16 %v604
    %v3343 = vunpack.c.l.b16 %v605
    %v3344 = vunpack.c.h.b16 %v605
    %v3345 = vunpack.c.l.b16 %v606
    %v3346 = vunpack.c.h.b16 %v606
    %v3347 = vunpack.c.l.b16 %v607
    %v3348 = vunpack.c.h.b16 %v607
    %v3349 = vunpack.c.l.b16 %v608
    %v3350 = vunpack.c.h.b16 %v608
    %v3351 = vunpack.c.l.b16 %v609
    %v3352 = vunpack.c.h.b16 %v609
    %v3353 = vunpack.c.l.b16 %v610
    %v3354 = vunpack.c.h.b16 %v610
    %v3355 = vunpack.c.l.b16 %v611
    %v3356 = vunpack.c.h.b16 %v611
    %v3357 = vunpack.c.l.b16 %v612
    %v3358 = vunpack.c.h.b16 %v612
    %v3359 = vunpack.c.l.b16 %v613
    %v3360 = vunpack.c.h.b16 %v613
    %v3361 = vunpack.c.l.b16 %v614
    %v3362 = vunpack.c.h.b16 %v614
    %v3363 = vunpack.c.l.b16 %v615
    %v3364 = vunpack.c.h.b16 %v615
    %v3365 = vunpack.c.l.b16 %v616
    %v3366 = vunpack.c.h.b16 %v616
    %v3367 = vunpack.c.l.b16 %v617
    %v3368 = vunpack.c.h.b16 %v617
    %v3369 = vunpack.c.l.b16 %v618
    %v3370 = vunpack.c.h.b16 %v618
    %v3371 = vunpack.c.l.b16 %v619
    %v3372 = vunpack.c.h.b16 %v619
    %v3373 = vunpack.c.l.b16 %v620
    %v3374 = vunpack.c.h.b16 %v620
    %v3375 = vunpack.c.l.b16 %v621
    %v3376 = vunpack.c.h.b16 %v621
    %v3377 = vunpack.c.l.b16 %v622
    %v3378 = vunpack.c.h.b16 %v622
    %v3379 = vunpack.c.l.b16 %v623
    %v3380 = vunpack.c.h.b16 %v623
    %v3381 = vunpack.c.l.b16 %v624
    %v3382 = vunpack.c.h.b16 %v624
    %v3383 = vunpack.c.l.b16 %v625
    %v3384 = vunpack.c.h.b16 %v625
    %v3385 = vunpack.c.l.b16 %v626
    %v3386 = vunpack.c.h.b16 %v626
    %v3387 = vunpack.c.l.b16 %v627
    %v3388 = vunpack.c.h.b16 %v627
    %v3389 = vunpack.c.l.b16 %v628
    %v3390 = vunpack.c.h.b16 %v628
    %v3391 = vunpack.c.l.b16 %v629
    %v3392 = vunpack.c.h.b16 %v629
    %v3393 = vunpack.c.l.b16 %v630
    %v3394 = vunpack.c.h.b16 %v630
    %v3395 = vunpack.c.l.b16 %v631
    %v3396 = vunpack.c.h.b16 %v631
    %v3397 = vunpack.c.l.b16 %v632
    %v3398 = vunpack.c.h.b16 %v632
    %v3399 = vunpack.c.l.b16 %v633
    %v3400 = vunpack.c.h.b16 %v633
    %v3401 = vunpack.c.l.b16 %v634
    %v3402 = vunpack.c.h.b16 %v634
    %v3403 = vunpack.c.l.b16 %v635
    %v3404 = vunpack.c.h.b16 %v635
    %v3405 = vunpack.c.l.b16 %v636
    %v3406 = vunpack.c.h.b16 %v636
    %v3407 = vunpack.c.l.b16 %v637
    %v3408 = vunpack.c.h.b16 %v637
    %v3409 = vunpack.c.l.b16 %v638
    %v3410 = vunpack.c.h.b16 %v638
    %v3411 = vunpack.c.l.b16 %v639
    %v3412 = vunpack.c.h.b16 %v639
    %v3413 = vunpack.c.l.b16 %v640
    %v3414 = vunpack.c.h.b16 %v640
    %v3415 = vunpack.c.l.b16 %v641
    %v3416 = vunpack.c.h.b16 %v641
    %v3417 = vunpack.c.l.b16 %v642
    %v3418 = vunpack.c.h.b16 %v642
    %v3419 = vunpack.c.l.b16 %v643
    %v3420 = vunpack.c.h.b16 %v643
    %v3421 = vunpack.c.l.b16 %v644
    %v3422 = vunpack.c.h.b16 %v644
    %v3423 = vunpack.c.l.b16 %v645
    %v3424 = vunpack.c.h.b16 %v645
    %v3425 = vunpack.c.l.b16 %v646
    %v3426 = vunpack.c.h.b16 %v646
    %v3427 = vunpack.c.l.b16 %v647
    %v3428 = vunpack.c.h.b16 %v647
    %v3429 = vunpack.c.l.b16 %v648
    %v3430 = vunpack.c.h.b16 %v648
    %v3431 = vunpack.c.l.b16 %v649
    %v3432 = vunpack.c.h.b16 %v649
    %v3433 = vunpack.c.l.b16 %v650
    %v3434 = vunpack.c.h.b16 %v650
    %v3435 = vunpack.c.l.b16 %v651
    %v3436 = vunpack.c.h.b16 %v651
    %v3437 = vunpack.c.l.b16 %v652
    %v3438 = vunpack.c.h.b16 %v652
    %v3439 = vunpack.c.l.b16 %v653
    %v3440 = vunpack.c.h.b16 %v653
    %v3441 = vunpack.c.l.b16 %v654
    %v3442 = vunpack.c.h.b16 %v654
    %v3443 = vunpack.c.l.b16 %v655
    %v3444 = vunpack.c.h.b16 %v655
    %v3445 = vunpack.c.l.b16 %v656
    %v3446 = vunpack.c.h.b16 %v656
    %v3447 = vunpack.c.l.b16 %v657
    %v3448 = vunpack.c.h.b16 %v657
    %v3449 = vunpack.c.l.b16 %v658
    %v3450 = vunpack.c.h.b16 %v658
    %v3451 = vunpack.c.l.b16 %v659
    %v3452 = vunpack.c.h.b16 %v659
    %v3453 = vunpack.c.l.b16 %v660
    %v3454 = vunpack.c.h.b16 %v660
    %v3455 = vunpack.c.l.b16 %v661
    %v3456 = vunpack.c.h.b16 %v661
    %v3457 = vunpack.c.l.b16 %v662
    %v3458 = vunpack.c.h.b16 %v662
    %v3459 = vunpack.c.l.b16 %v663
    %v3460 = vunpack.c.h.b16 %v663
    %v3461 = vunpack.c.l.b16 %v664
    %v3462 = vunpack.c.h.b16 %v664
    %v3463 = vunpack.c.l.b16 %v665
    %v3464 = vunpack.c.h.b16 %v665
    %v3465 = vunpack.c.l.b16 %v666
    %v3466 = vunpack.c.h.b16 %v666
    %v3467 = vunpack.c.l.b16 %v667
    %v3468 = vunpack.c.h.b16 %v667
    %v3469 = vunpack.c.l.b16 %v668
    %v3470 = vunpack.c.h.b16 %v668
    %v3471 = vunpack.c.l.b16 %v669
    %v3472 = vunpack.c.h.b16 %v669
    %v3473 = vunpack.c.l.b16 %v670
    %v3474 = vunpack.c.h.b16 %v670
    %v3475 = vunpack.c.l.b16 %v671
    %v3476 = vunpack.c.h.b16 %v671
    %v3477 = vunpack.c.l.b16 %v672
    %v3478 = vunpack.c.h.b16 %v672
    %v3479 = vunpack.c.l.b16 %v673
    %v3480 = vunpack.c.h.b16 %v673
    %v3481 = vunpack.c.l.b16 %v674
    %v3482 = vunpack.c.h.b16 %v674
    %v3483 = vunpack.c.l.b16 %v675
    %v3484 = vunpack.c.h.b16 %v675
    %v3485 = vunpack.c.l.b16 %v676
    %v3486 = vunpack.c.h.b16 %v676
    %v3487 = vunpack.c.l.b16 %v677
    %v3488 = vunpack.c.h.b16 %v677
    %v3489 = vunpack.c.l.b16 %v678
    %v3490 = vunpack.c.h.b16 %v678
    %v3491 = vunpack.c.l.b16 %v679
    %v3492 = vunpack.c.h.b16 %v679
    %v3493 = vunpack.c.l.b16 %v680
    %v3494 = vunpack.c.h.b16 %v680
    %v3495 = vunpack.c.l.b16 %v681
    %v3496 = vunpack.c.h.b16 %v681
    %v3497 = vunpack.c.l.b16 %v682
    %v3498 = vunpack.c.h.b16 %v682
    %v3499 = vunpack.c.l.b16 %v683
    %v3500 = vunpack.c.h.b16 %v683
    %v3501 = vunpack.c.l.b16 %v684
    %v3502 = vunpack.c.h.b16 %v684
    %v3503 = vunpack.c.l.b16 %v685
    %v3504 = vunpack.c.h.b16 %v685
    %v3505 = vunpack.c.l.b16 %v686
    %v3506 = vunpack.c.h.b16 %v686
    %v3507 = vunpack.c.l.b16 %v687
    %v3508 = vunpack.c.h.b16 %v687
    %v3509 = vunpack.c.l.b16 %v688
    %v3510 = vunpack.c.h.b16 %v688
    %v3511 = vunpack.c.l.b16 %v689
    %v3512 = vunpack.c.h.b16 %v689
    %v3513 = vunpack.c.l.b16 %v690
    %v3514 = vunpack.c.h.b16 %v690
    %v3515 = vunpack.c.l.b16 %v691
    %v3516 = vunpack.c.h.b16 %v691
    %v3517 = vunpack.c.l.b16 %v692
    %v3518 = vunpack.c.h.b16 %v692
    %v3519 = vunpack.c.l.b16 %v693
    %v3520 = vunpack.c.h.b16 %v693
    %v3521 = vunpack.c.l.b16 %v694
    %v3522 = vunpack.c.h.b16 %v694
    %v3523 = vunpack.c.l.b16 %v695
    %v3524 = vunpack.c.h.b16 %v695
    %v3525 = vunpack.c.l.b16 %v696
    %v3526 = vunpack.c.h.b16 %v696
    %v3527 = vunpack.c.l.b16 %v697
    %v3528 = vunpack.c.h.b16 %v697
    %v3529 = vunpack.c.l.b16 %v698
    %v3530 = vunpack.c.h.b16 %v698
    %v3531 = vunpack.c.l.b16 %v699
    %v3532 = vunpack.c.h.b16 %v699
    %v3533 = vunpack.c.l.b16 %v700
    %v3534 = vunpack.c.h.b16 %v700
    %v3535 = vunpack.c.l.b16 %v701
    %v3536 = vunpack.c.h.b16 %v701
    %v3537 = vunpack.c.l.b16 %v702
    %v3538 = vunpack.c.h.b16 %v702
    %v3539 = vunpack.c.l.b16 %v703
    %v3540 = vunpack.c.h.b16 %v703
    %v3541 = vunpack.c.l.b16 %v704
    %v3542 = vunpack.c.h.b16 %v704
    %v3543 = vunpack.c.l.b16 %v705
    %v3544 = vunpack.c.h.b16 %v705
    %v3545 = vunpack.c.l.b16 %v706
    %v3546 = vunpack.c.h.b16 %v706
    %v3547 = vunpack.c.l.b16 %v707
    %v3548 = vunpack.c.h.b16 %v707
    %v3549 = vunpack.c.l.b16 %v708
    %v3550 = vunpack.c.h.b16 %v708
    %v3551 = vunpack.c.l.b16 %v709
    %v3552 = vunpack.c.h.b16 %v709
    %v3553 = vunpack.c.l.b16 %v710
    %v3554 = vunpack.c.h.b16 %v710
    %v3555 = vunpack.c.l.b16 %v711
    %v3556 = vunpack.c.h.b16 %v711
    %v3557 = vunpack.c.l.b16 %v712
    %v3558 = vunpack.c.h.b16 %v712
    %v3559 = vunpack.c.l.b16 %v713
    %v3560 = vunpack.c.h.b16 %v713
    %v3561 = vunpack.c.l.b16 %v714
    %v3562 = vunpack.c.h.b16 %v714
    %v3563 = vunpack.c.l.b16 %v715
    %v3564 = vunpack.c.h.b16 %v715
    %v3565 = vunpack.c.l.b16 %v716
    %v3566 = vunpack.c.h.b16 %v716
    %v3567 = vunpack.c.l.b16 %v717
    %v3568 = vunpack.c.h.b16 %v717
    %v3569 = vunpack.c.l.b16 %v718
    %v3570 = vunpack.c.h.b16 %v718
    %v3571 = vunpack.c.l.b16 %v719
    %v3572 = vunpack.c.h.b16 %v719
    %v3573 = vunpack.c.l.b16 %v720
    %v3574 = vunpack.c.h.b16 %v720
    %v3575 = vunpack.c.l.b16 %v721
    %v3576 = vunpack.c.h.b16 %v721
    %v3577 = vunpack.c.l.b16 %v722
    %v3578 = vunpack.c.h.b16 %v722
    %v3579 = vunpack.c.l.b16 %v723
    %v3580 = vunpack.c.h.b16 %v723
    %v3581 = vunpack.c.l.b16 %v724
    %v3582 = vunpack.c.h.b16 %v724
    %v3583 = vunpack.c.l.b16 %v725
    %v3584 = vunpack.c.h.b16 %v725
    %v3585 = vunpack.c.l.b16 %v726
    %v3586 = vunpack.c.h.b16 %v726
    %v3587 = vunpack.c.l.b16 %v727
    %v3588 = vunpack.c.h.b16 %v727
    %v3589 = vunpack.c.l.b16 %v728
    %v3590 = vunpack.c.h.b16 %v728
    %v3591 = vunpack.c.l.b16 %v729
    %v3592 = vunpack.c.h.b16 %v729
    %v3593 = vunpack.c.l.b16 %v730
    %v3594 = vunpack.c.h.b16 %v730
    %v3595 = vunpack.c.l.b16 %v731
    %v3596 = vunpack.c.h.b16 %v731
    %v3597 = vunpack.c.l.b16 %v732
    %v3598 = vunpack.c.h.b16 %v732
    %v3599 = vunpack.c.l.b16 %v733
    %v3600 = vunpack.c.h.b16 %v733
    %v3601 = vunpack.c.l.b16 %v734
    %v3602 = vunpack.c.h.b16 %v734
    %v3603 = vunpack.c.l.b16 %v735
    %v3604 = vunpack.c.h.b16 %v735
    %v3605 = vunpack.c.l.b16 %v736
    %v3606 = vunpack.c.h.b16 %v736
    %v3607 = vunpack.c.l.b16 %v737
    %v3608 = vunpack.c.h.b16 %v737
    %v3609 = vunpack.c.l.b16 %v738
    %v3610 = vunpack.c.h.b16 %v738
    %v3611 = vunpack.c.l.b16 %v739
    %v3612 = vunpack.c.h.b16 %v739
    %v3613 = vunpack.c.l.b16 %v740
    %v3614 = vunpack.c.h.b16 %v740
    %v3615 = vunpack.c.l.b16 %v741
    %v3616 = vunpack.c.h.b16 %v741
    %v3617 = vunpack.c.l.b16 %v742
    %v3618 = vunpack.c.h.b16 %v742
    %v3619 = vunpack.c.l.b16 %v743
    %v3620 = vunpack.c.h.b16 %v743
    %v3621 = vunpack.c.l.b16 %v744
    %v3622 = vunpack.c.h.b16 %v744
    %v3623 = vunpack.c.l.b16 %v745
    %v3624 = vunpack.c.h.b16 %v745
    %v3625 = vunpack.c.l.b16 %v746
    %v3626 = vunpack.c.h.b16 %v746
    %v3627 = vunpack.c.l.b16 %v747
    %v3628 = vunpack.c.h.b16 %v747
    %v3629 = vunpack.c.l.b16 %v748
    %v3630 = vunpack.c.h.b16 %v748
    %v3631 = vunpack.c.l.b16 %v749
    %v3632 = vunpack.c.h.b16 %v749
    %v3633 = vunpack.c.l.b16 %v750
    %v3634 = vunpack.c.h.b16 %v750
    %v3635 = vunpack.c.l.b16 %v751
    %v3636 = vunpack.c.h.b16 %v751
    %v3637 = vunpack.c.l.b16 %v752
    %v3638 = vunpack.c.h.b16 %v752
    %v3639 = vunpack.c.l.b16 %v753
    %v3640 = vunpack.c.h.b16 %v753
    %v3641 = vunpack.c.l.b16 %v754
    %v3642 = vunpack.c.h.b16 %v754
    %v3643 = vunpack.c.l.b16 %v755
    %v3644 = vunpack.c.h.b16 %v755
    %v3645 = vunpack.c.l.b16 %v756
    %v3646 = vunpack.c.h.b16 %v756
    %v3647 = vunpack.c.l.b16 %v757
    %v3648 = vunpack.c.h.b16 %v757
    %v3649 = vunpack.c.l.b16 %v758
    %v3650 = vunpack.c.h.b16 %v758
    %v3651 = vunpack.c.l.b16 %v759
    %v3652 = vunpack.c.h.b16 %v759
    %v3653 = vunpack.c.l.b16 %v760
    %v3654 = vunpack.c.h.b16 %v760
    %v3655 = vunpack.c.l.b16 %v761
    %v3656 = vunpack.c.h.b16 %v761
    %v3657 = vunpack.c.l.b16 %v762
    %v3658 = vunpack.c.h.b16 %v762
    %v3659 = vunpack.c.l.b16 %v763
    %v3660 = vunpack.c.h.b16 %v763
    %v3661 = vunpack.c.l.b16 %v764
    %v3662 = vunpack.c.h.b16 %v764
    %v3663 = vunpack.c.l.b16 %v765
    %v3664 = vunpack.c.h.b16 %v765
    %v3665 = vunpack.c.l.b16 %v766
    %v3666 = vunpack.c.h.b16 %v766
    %v3667 = vunpack.c.l.b16 %v767
    %v3668 = vunpack.c.h.b16 %v767
    %v3669 = vunpack.c.l.b16 %v768
    %v3670 = vunpack.c.h.b16 %v768
    %v3671 = vunpack.c.l.b16 %v769
    %v3672 = vunpack.c.h.b16 %v769
    %v3673 = vunpack.c.l.b16 %v770
    %v3674 = vunpack.c.h.b16 %v770
    %v3675 = vunpack.c.l.b16 %v771
    %v3676 = vunpack.c.h.b16 %v771
    %v3677 = vunpack.c.l.b16 %v772
    %v3678 = vunpack.c.h.b16 %v772
    %v3679 = vunpack.c.l.b16 %v773
    %v3680 = vunpack.c.h.b16 %v773
    %v3681 = vunpack.c.l.b16 %v774
    %v3682 = vunpack.c.h.b16 %v774
    %v3683 = vunpack.c.l.b16 %v775
    %v3684 = vunpack.c.h.b16 %v775
    %v3685 = vunpack.c.l.b16 %v776
    %v3686 = vunpack.c.h.b16 %v776
    %v3687 = vunpack.c.l.b16 %v777
    %v3688 = vunpack.c.h.b16 %v777
    %v3689 = vunpack.c.l.b16 %v778
    %v3690 = vunpack.c.h.b16 %v778
    %v3691 = vunpack.c.l.b16 %v779
    %v3692 = vunpack.c.h.b16 %v779
    %v3693 = vunpack.c.l.b16 %v780
    %v3694 = vunpack.c.h.b16 %v780
    %v3695 = vunpack.c.l.b16 %v781
    %v3696 = vunpack.c.h.b16 %v781
    %v3697 = vunpack.c.l.b16 %v782
    %v3698 = vunpack.c.h.b16 %v782
    %v3699 = vunpack.c.l.b16 %v783
    %v3700 = vunpack.c.h.b16 %v783
    %v3701 = vunpack.c.l.b16 %v784
    %v3702 = vunpack.c.h.b16 %v784
    %v3703 = vunpack.c.l.b16 %v785
    %v3704 = vunpack.c.h.b16 %v785
    %v3705 = vunpack.c.l.b16 %v786
    %v3706 = vunpack.c.h.b16 %v786
    %v3707 = vunpack.c.l.b16 %v787
    %v3708 = vunpack.c.h.b16 %v787
    %v3709 = vunpack.c.l.b16 %v788
    %v3710 = vunpack.c.h.b16 %v788
    %v3711 = vunpack.c.l.b16 %v789
    %v3712 = vunpack.c.h.b16 %v789
    %v3713 = vunpack.c.l.b16 %v790
    %v3714 = vunpack.c.h.b16 %v790
    %v3715 = vunpack.c.l.b16 %v791
    %v3716 = vunpack.c.h.b16 %v791
    %v3717 = vunpack.c.l.b16 %v792
    %v3718 = vunpack.c.h.b16 %v792
    %v3719 = vunpack.c.l.b16 %v793
    %v3720 = vunpack.c.h.b16 %v793
    %v3721 = vunpack.c.l.b16 %v794
    %v3722 = vunpack.c.h.b16 %v794
    %v3723 = vunpack.c.l.b16 %v795
    %v3724 = vunpack.c.h.b16 %v795
    %v3725 = vunpack.c.l.b16 %v796
    %v3726 = vunpack.c.h.b16 %v796
    %v3727 = vunpack.c.l.b16 %v797
    %v3728 = vunpack.c.h.b16 %v797
    %v3729 = vunpack.c.l.b16 %v798
    %v3730 = vunpack.c.h.b16 %v798
    %v3731 = vunpack.c.l.b16 %v799
    %v3732 = vunpack.c.h.b16 %v799
    %v3733 = vunpack.c.l.b16 %v800
    %v3734 = vunpack.c.h.b16 %v800
    %v3735 = vunpack.c.l.b16 %v801
    %v3736 = vunpack.c.h.b16 %v801
    %v3737 = vunpack.c.l.b16 %v802
    %v3738 = vunpack.c.h.b16 %v802
    %v3739 = vunpack.c.l.b16 %v803
    %v3740 = vunpack.c.h.b16 %v803
    %v3741 = vunpack.c.l.b16 %v804
    %v3742 = vunpack.c.h.b16 %v804
    %v3743 = vunpack.c.l.b16 %v805
    %v3744 = vunpack.c.h.b16 %v805
    %v3745 = vunpack.c.l.b16 %v806
    %v3746 = vunpack.c.h.b16 %v806
    %v3747 = vunpack.c.l.b16 %v807
    %v3748 = vunpack.c.h.b16 %v807
    %v3749 = vunpack.c.l.b16 %v808
    %v3750 = vunpack.c.h.b16 %v808
    %v3751 = vunpack.c.l.b16 %v809
    %v3752 = vunpack.c.h.b16 %v809
    %v3753 = vunpack.c.l.b16 %v810
    %v3754 = vunpack.c.h.b16 %v810
    %v3755 = vunpack.c.l.b16 %v811
    %v3756 = vunpack.c.h.b16 %v811
    %v3757 = vunpack.c.l.b16 %v812
    %v3758 = vunpack.c.h.b16 %v812
    %v3759 = vunpack.c.l.b16 %v813
    %v3760 = vunpack.c.h.b16 %v813
    %v3761 = vunpack.c.l.b16 %v814
    %v3762 = vunpack.c.h.b16 %v814
    %v3763 = vunpack.c.l.b16 %v815
    %v3764 = vunpack.c.h.b16 %v815
    %v3765 = vunpack.c.l.b16 %v816
    %v3766 = vunpack.c.h.b16 %v816
    %v3767 = vunpack.c.l.b16 %v817
    %v3768 = vunpack.c.h.b16 %v817
    %v3769 = vunpack.c.l.b16 %v818
    %v3770 = vunpack.c.h.b16 %v818
    %v3771 = vunpack.c.l.b16 %v819
    %v3772 = vunpack.c.h.b16 %v819
    %v3773 = vunpack.c.l.b16 %v820
    %v3774 = vunpack.c.h.b16 %v820
    %v3775 = vunpack.c.l.b16 %v821
    %v3776 = vunpack.c.h.b16 %v821
    %v3777 = vunpack.c.l.b16 %v822
    %v3778 = vunpack.c.h.b16 %v822
    %v3779 = vunpack.c.l.b16 %v823
    %v3780 = vunpack.c.h.b16 %v823
    %v3781 = vunpack.c.l.b16 %v824
    %v3782 = vunpack.c.h.b16 %v824
    %v3783 = vunpack.c.l.b16 %v825
    %v3784 = vunpack.c.h.b16 %v825
    %v3785 = vunpack.c.l.b16 %v826
    %v3786 = vunpack.c.h.b16 %v826
    %v3787 = vunpack.c.l.b16 %v827
    %v3788 = vunpack.c.h.b16 %v827
    %v3789 = vunpack.c.l.b16 %v828
    %v3790 = vunpack.c.h.b16 %v828
    %v3791 = vunpack.c.l.b16 %v829
    %v3792 = vunpack.c.h.b16 %v829
    %v3793 = vunpack.c.l.b16 %v830
    %v3794 = vunpack.c.h.b16 %v830
    %v3795 = vunpack.c.l.b16 %v831
    %v3796 = vunpack.c.h.b16 %v831
    %v3797 = vunpack.c.l.b16 %v832
    %v3798 = vunpack.c.h.b16 %v832
    %v3799 = vunpack.c.l.b16 %v833
    %v3800 = vunpack.c.h.b16 %v833
    %v3801 = vunpack.c.l.b16 %v834
    %v3802 = vunpack.c.h.b16 %v834
    %v3803 = vunpack.c.l.b16 %v835
    %v3804 = vunpack.c.h.b16 %v835
    %v3805 = vunpack.c.l.b16 %v836
    %v3806 = vunpack.c.h.b16 %v836
    %v3807 = vunpack.c.l.b16 %v837
    %v3808 = vunpack.c.h.b16 %v837
    %v3809 = vunpack.c.l.b16 %v838
    %v3810 = vunpack.c.h.b16 %v838
    %v3811 = vunpack.c.l.b16 %v839
    %v3812 = vunpack.c.h.b16 %v839
    %v3813 = vunpack.c.l.b16 %v840
    %v3814 = vunpack.c.h.b16 %v840
    %v3815 = vunpack.c.l.b16 %v841
    %v3816 = vunpack.c.h.b16 %v841
    %v3817 = vunpack.c.l.b16 %v842
    %v3818 = vunpack.c.h.b16 %v842
    %v3819 = vunpack.c.l.b16 %v843
    %v3820 = vunpack.c.h.b16 %v843
    %v3821 = vunpack.c.l.b16 %v844
    %v3822 = vunpack.c.h.b16 %v844
    %v3823 = vunpack.c.l.b16 %v845
    %v3824 = vunpack.c.h.b16 %v845
    %v3825 = vunpack.c.l.b16 %v846
    %v3826 = vunpack.c.h.b16 %v846
    %v3827 = vunpack.c.l.b16 %v847
    %v3828 = vunpack.c.h.b16 %v847
    %v3829 = vunpack.c.l.b16 %v848
    %v3830 = vunpack.c.h.b16 %v848
    %v3831 = vunpack.c.l.b16 %v849
    %v3832 = vunpack.c.h.b16 %v849
    %v3833 = vunpack.c.l.b16 %v850
    %v3834 = vunpack.c.h.b16 %v850
    %v3835 = vunpack.c.l.b16 %v851
    %v3836 = vunpack.c.h.b16 %v851
    %v3837 = vunpack.c.l.b16 %v852
    %v3838 = vunpack.c.h.b16 %v852
    %v3839 = vunpack.c.l.b16 %v853
    %v3840 = vunpack.c.h.b16 %v853
    %v3841 = vunpack.c.l.b16 %v854
    %v3842 = vunpack.c.h.b16 %v854
    %v3843 = vunpack.c.l.b16 %v855
    %v3844 = vunpack.c.h.b16 %v855
    %v3845 = vunpack.c.l.b16 %v856
    %v3846 = vunpack.c.h.b16 %v856
    %v3847 = vunpack.c.l.b16 %v857
    %v3848 = vunpack.c.h.b16 %v857
    %v3849 = vunpack.c.l.b16 %v858
    %v3850 = vunpack.c.h.b16 %v858
    %v3851 = vunpack.c.l.b16 %v859
    %v3852 = vunpack.c.h.b16 %v859
    %v3853 = vunpack.c.l.b16 %v860
    %v3854 = vunpack.c.h.b16 %v860
    %v3855 = vunpack.c.l.b16 %v861
    %v3856 = vunpack.c.h.b16 %v861
    %v3857 = vunpack.c.l.b16 %v862
    %v3858 = vunpack.c.h.b16 %v862
    %v3859 = vunpack.c.l.b16 %v863
    %v3860 = vunpack.c.h.b16 %v863
    %v3861 = vunpack.c.l.b16 %v864
    %v3862 = vunpack.c.h.b16 %v864
    %v3863 = vunpack.c.l.b16 %v865
    %v3864 = vunpack.c.h.b16 %v865
    %v3865 = vunpack.c.l.b16 %v866
    %v3866 = vunpack.c.h.b16 %v866
    %v3867 = vunpack.c.l.b16 %v867
    %v3868 = vunpack.c.h.b16 %v867
    %v3869 = vunpack.c.l.b16 %v868
    %v3870 = vunpack.c.h.b16 %v868
    %v3871 = vunpack.c.l.b16 %v869
    %v3872 = vunpack.c.h.b16 %v869
    %v3873 = vunpack.c.l.b16 %v870
    %v3874 = vunpack.c.h.b16 %v870
    %v3875 = vunpack.c.l.b16 %v871
    %v3876 = vunpack.c.h.b16 %v871
    %v3877 = vunpack.c.l.b16 %v872
    %v3878 = vunpack.c.h.b16 %v872
    %v3879 = vunpack.c.l.b16 %v873
    %v3880 = vunpack.c.h.b16 %v873
    %v3881 = vunpack.c.l.b16 %v874
    %v3882 = vunpack.c.h.b16 %v874
    %v3883 = vunpack.c.l.b16 %v875
    %v3884 = vunpack.c.h.b16 %v875
    %v3885 = vunpack.c.l.b16 %v876
    %v3886 = vunpack.c.h.b16 %v876
    %v3887 = vunpack.c.l.b16 %v877
    %v3888 = vunpack.c.h.b16 %v877
    %v3889 = vunpack.c.l.b16 %v878
    %v3890 = vunpack.c.h.b16 %v878
    %v3891 = vunpack.c.l.b16 %v879
    %v3892 = vunpack.c.h.b16 %v879
    %v3893 = vunpack.c.l.b16 %v880
    %v3894 = vunpack.c.h.b16 %v880
    %v3895 = vunpack.c.l.b16 %v881
    %v3896 = vunpack.c.h.b16 %v881
    %v3897 = vunpack.c.l.b16 %v882
    %v3898 = vunpack.c.h.b16 %v882
    %v3899 = vunpack.c.l.b16 %v883
    %v3900 = vunpack.c.h.b16 %v883
    %v3901 = vunpack.c.l.b16 %v884
    %v3902 = vunpack.c.h.b16 %v884
    %v3903 = vunpack.c.l.b16 %v885
    %v3904 = vunpack.c.h.b16 %v885
    %v3905 = vunpack.c.l.b16 %v886
    %v3906 = vunpack.c.h.b16 %v886
    %v3907 = vunpack.c.l.b16 %v887
    %v3908 = vunpack.c.h.b16 %v887
    %v3909 = vunpack.c.l.b16 %v888
    %v3910 = vunpack.c.h.b16 %v888
    %v3911 = vunpack.c.l.b16 %v889
    %v3912 = vunpack.c.h.b16 %v889
    %v3913 = vunpack.c.l.b16 %v890
    %v3914 = vunpack.c.h.b16 %v890
    %v3915 = vunpack.c.l.b16 %v891
    %v3916 = vunpack.c.h.b16 %v891
    %v3917 = vunpack.c.l.b16 %v892
    %v3918 = vunpack.c.h.b16 %v892
    %v3919 = vunpack.c.l.b16 %v893
    %v3920 = vunpack.c.h.b16 %v893
    %v3921 = vunpack.c.l.b16 %v894
    %v3922 = vunpack.c.h.b16 %v894
    %v3923 = vunpack.c.l.b16 %v895
    %v3924 = vunpack.c.h.b16 %v895
    %v3925 = vunpack.c.l.b16 %v896
    %v3926 = vunpack.c.h.b16 %v896
    %v3927 = vunpack.c.l.b16 %v897
    %v3928 = vunpack.c.h.b16 %v897
    %v3929 = vunpack.c.l.b16 %v898
    %v3930 = vunpack.c.h.b16 %v898
    %v3931 = vunpack.c.l.b16 %v899
    %v3932 = vunpack.c.h.b16 %v899
    %v3933 = vunpack.c.l.b16 %v900
    %v3934 = vunpack.c.h.b16 %v900
    %v3935 = vunpack.c.l.b16 %v901
    %v3936 = vunpack.c.h.b16 %v901
    %v3937 = vunpack.c.l.b16 %v902
    %v3938 = vunpack.c.h.b16 %v902
    %v3939 = vunpack.c.l.b16 %v903
    %v3940 = vunpack.c.h.b16 %v903
    %v3941 = vunpack.c.l.b16 %v904
    %v3942 = vunpack.c.h.b16 %v904
    %v3943 = vunpack.c.l.b16 %v905
    %v3944 = vunpack.c.h.b16 %v905
    %v3945 = vunpack.c.l.b16 %v906
    %v3946 = vunpack.c.h.b16 %v906
    %v3947 = vunpack.c.l.b16 %v907
    %v3948 = vunpack.c.h.b16 %v907
    %v3949 = vunpack.c.l.b16 %v908
    %v3950 = vunpack.c.h.b16 %v908
    %v3951 = vunpack.c.l.b16 %v909
    %v3952 = vunpack.c.h.b16 %v909
    %v3953 = vunpack.c.l.b16 %v910
    %v3954 = vunpack.c.h.b16 %v910
    %v3955 = vunpack.c.l.b16 %v911
    %v3956 = vunpack.c.h.b16 %v911
    %v3957 = vunpack.c.l.b16 %v912
    %v3958 = vunpack.c.h.b16 %v912
    %v3959 = vunpack.c.l.b16 %v913
    %v3960 = vunpack.c.h.b16 %v913
    %v3961 = vunpack.c.l.b16 %v914
    %v3962 = vunpack.c.h.b16 %v914
    %v3963 = vunpack.c.l.b16 %v915
    %v3964 = vunpack.c.h.b16 %v915
    %v3965 = vunpack.c.l.b16 %v916
    %v3966 = vunpack.c.h.b16 %v916
    %v3967 = vunpack.c.l.b16 %v917
    %v3968 = vunpack.c.h.b16 %v917
    %v3969 = vunpack.c.l.b16 %v918
    %v3970 = vunpack.c.h.b16 %v918
    %v3971 = vunpack.c.l.b16 %v919
    %v3972 = vunpack.c.h.b16 %v919
    %v3973 = vunpack.c.l.b16 %v920
    %v3974 = vunpack.c.h.b16 %v920
    %v3975 = vunpack.c.l.b16 %v921
    %v3976 = vunpack.c.h.b16 %v921
    %v3977 = vunpack.c.l.b16 %v922
    %v3978 = vunpack.c.h.b16 %v922
    %v3979 = vunpack.c.l.b16 %v923
    %v3980 = vunpack.c.h.b16 %v923
    %v3981 = vunpack.c.l.b16 %v924
    %v3982 = vunpack.c.h.b16 %v924
    %v3983 = vunpack.c.l.b16 %v925
    %v3984 = vunpack.c.h.b16 %v925
    %v3985 = vunpack.c.l.b16 %v926
    %v3986 = vunpack.c.h.b16 %v926
    %v3987 = vunpack.c.l.b16 %v927
    %v3988 = vunpack.c.h.b16 %v927
    %v3989 = vunpack.c.l.b16 %v928
    %v3990 = vunpack.c.h.b16 %v928
    %v3991 = vunpack.c.l.b16 %v929
    %v3992 = vunpack.c.h.b16 %v929
    %v3993 = vunpack.c.l.b16 %v930
    %v3994 = vunpack.c.h.b16 %v930
    %v3995 = vunpack.c.l.b16 %v931
    %v3996 = vunpack.c.h.b16 %v931
    %v3997 = vunpack.c.l.b16 %v932
    %v3998 = vunpack.c.h.b16 %v932
    %v3999 = vunpack.c.l.b16 %v933
    %v4000 = vunpack.c.h.b16 %v933
    %v4001 = vunpack.c.l.b16 %v934
    %v4002 = vunpack.c.h.b16 %v934
    %v4003 = vunpack.c.l.b16 %v935
    %v4004 = vunpack.c.h.b16 %v935
    %v4005 = vunpack.c.l.b16 %v936
    %v4006 = vunpack.c.h.b16 %v936
    %v4007 = vunpack.c.l.b16 %v937
    %v4008 = vunpack.c.h.b16 %v937
    %v4009 = vunpack.c.l.b16 %v938
    %v4010 = vunpack.c.h.b16 %v938
    %v4011 = vunpack.c.l.b16 %v939
    %v4012 = vunpack.c.h.b16 %v939
    %v4013 = vunpack.c.l.b16 %v940
    %v4014 = vunpack.c.h.b16 %v940
    %v4015 = vunpack.c.l.b16 %v941
    %v4016 = vunpack.c.h.b16 %v941
    %v4017 = vunpack.c.l.b16 %v942
    %v4018 = vunpack.c.h.b16 %v942
    %v4019 = vunpack.c.l.b16 %v943
    %v4020 = vunpack.c.h.b16 %v943
    %v4021 = vunpack.c.l.b16 %v944
    %v4022 = vunpack.c.h.b16 %v944
    %v4023 = vunpack.c.l.b16 %v945
    %v4024 = vunpack.c.h.b16 %v945
    %v4025 = vunpack.c.l.b16 %v946
    %v4026 = vunpack.c.h.b16 %v946
    %v4027 = vunpack.c.l.b16 %v947
    %v4028 = vunpack.c.h.b16 %v947
    %v4029 = vunpack.c.l.b16 %v948
    %v4030 = vunpack.c.h.b16 %v948
    %v4031 = vunpack.c.l.b16 %v949
    %v4032 = vunpack.c.h.b16 %v949
    %v4033 = vunpack.c.l.b16 %v950
    %v4034 = vunpack.c.h.b16 %v950
    %v4035 = vunpack.c.l.b16 %v951
    %v4036 = vunpack.c.h.b16 %v951
    %v4037 = vunpack.c.l.b16 %v952
    %v4038 = vunpack.c.h.b16 %v952
    %v4039 = vunpack.c.l.b16 %v953
    %v4040 = vunpack.c.h.b16 %v953
    %v4041 = vunpack.c.l.b16 %v954
    %v4042 = vunpack.c.h.b16 %v954
    %v4043 = vunpack.c.l.b16 %v955
    %v4044 = vunpack.c.h.b16 %v955
    %v4045 = vunpack.c.l.b16 %v956
    %v4046 = vunpack.c.h.b16 %v956
    %v4047 = vunpack.c.l.b16 %v957
    %v4048 = vunpack.c.h.b16 %v957
    %v4049 = vunpack.c.l.b16 %v958
    %v4050 = vunpack.c.h.b16 %v958
    %v4051 = vunpack.c.l.b16 %v959
    %v4052 = vunpack.c.h.b16 %v959
    %v4053 = vunpack.c.l.b16 %v960
    %v4054 = vunpack.c.h.b16 %v960
    %v4055 = vunpack.c.l.b16 %v961
    %v4056 = vunpack.c.h.b16 %v961
    %v4057 = vunpack.c.l.b16 %v962
    %v4058 = vunpack.c.h.b16 %v962
    %v4059 = vunpack.c.l.b16 %v963
    %v4060 = vunpack.c.h.b16 %v963
    %v4061 = vunpack.c.l.b16 %v964
    %v4062 = vunpack.c.h.b16 %v964
    %v4063 = vunpack.c.l.b16 %v965
    %v4064 = vunpack.c.h.b16 %v965
    %v4065 = vunpack.c.l.b16 %v966
    %v4066 = vunpack.c.h.b16 %v966
    %v4067 = vunpack.c.l.b16 %v967
    %v4068 = vunpack.c.h.b16 %v967
    %v4069 = vunpack.c.l.b16 %v968
    %v4070 = vunpack.c.h.b16 %v968
    %v4071 = vunpack.c.l.b16 %v969
    %v4072 = vunpack.c.h.b16 %v969
    %v4073 = vunpack.c.l.b16 %v970
    %v4074 = vunpack.c.h.b16 %v970
    %v4075 = vunpack.c.l.b16 %v971
    %v4076 = vunpack.c.h.b16 %v971
    %v4077 = vunpack.c.l.b16 %v972
    %v4078 = vunpack.c.h.b16 %v972
    %v4079 = vunpack.c.l.b16 %v973
    %v4080 = vunpack.c.h.b16 %v973
    %v4081 = vunpack.c.l.b16 %v974
    %v4082 = vunpack.c.h.b16 %v974
    %v4083 = vunpack.c.l.b16 %v975
    %v4084 = vunpack.c.h.b16 %v975
    %v4085 = vunpack.c.l.b16 %v976
    %v4086 = vunpack.c.h.b16 %v976
    %v4087 = vunpack.c.l.b16 %v977
    %v4088 = vunpack.c.h.b16 %v977
    %v4089 = vunpack.c.l.b16 %v978
    %v4090 = vunpack.c.h.b16 %v978
    %v4091 = vunpack.c.l.b16 %v979
    %v4092 = vunpack.c.h.b16 %v979
    %v4093 = vunpack.c.l.b16 %v980
    %v4094 = vunpack.c.h.b16 %v980
    %v4095 = vunpack.c.l.b16 %v981
    %v4096 = vunpack.c.h.b16 %v981
    %v4097 = vunpack.c.l.b16 %v982
    %v4098 = vunpack.c.h.b16 %v982
    %v4099 = vunpack.c.l.b16 %v983
    %v4100 = vunpack.c.h.b16 %v983
    %v4101 = vunpack.c.l.b16 %v984
    %v4102 = vunpack.c.h.b16 %v984
    %v4103 = vunpack.c.l.b16 %v985
    %v4104 = vunpack.c.h.b16 %v985
    %v4105 = vunpack.c.l.b16 %v986
    %v4106 = vunpack.c.h.b16 %v986
    %v4107 = vunpack.c.l.b16 %v987
    %v4108 = vunpack.c.h.b16 %v987
    %v4109 = vunpack.c.l.b16 %v988
    %v4110 = vunpack.c.h.b16 %v988
    %v4111 = vunpack.c.l.b16 %v989
    %v4112 = vunpack.c.h.b16 %v989
    %v4113 = vunpack.c.l.b16 %v990
    %v4114 = vunpack.c.h.b16 %v990
    %v4115 = vunpack.c.l.b16 %v991
    %v4116 = vunpack.c.h.b16 %v991
    %v4117 = vunpack.c.l.b16 %v992
    %v4118 = vunpack.c.h.b16 %v992
    %v4119 = vunpack.c.l.b16 %v993
    %v4120 = vunpack.c.h.b16 %v993
    %v4121 = vunpack.c.l.b16 %v994
    %v4122 = vunpack.c.h.b16 %v994
    %v4123 = vunpack.c.l.b16 %v995
    %v4124 = vunpack.c.h.b16 %v995
    %v4125 = vunpack.c.l.b16 %v996
    %v4126 = vunpack.c.h.b16 %v996
    %v4127 = vunpack.c.l.b16 %v997
    %v4128 = vunpack.c.h.b16 %v997
    %v4129 = vunpack.c.l.b16 %v998
    %v4130 = vunpack.c.h.b16 %v998
    %v4131 = vunpack.c.l.b16 %v999
    %v4132 = vunpack.c.h.b16 %v999
    %v4133 = vunpack.c.l.b16 %v1000
    %v4134 = vunpack.c.h.b16 %v1000
    %v4135 = vunpack.c.l.b16 %v1001
    %v4136 = vunpack.c.h.b16 %v1001
    %v4137 = vunpack.c.l.b16 %v1002
    %v4138 = vunpack.c.h.b16 %v1002
    %v4139 = vunpack.c.l.b16 %v1003
    %v4140 = vunpack.c.h.b16 %v1003
    %v4141 = vunpack.c.l.b16 %v1004
    %v4142 = vunpack.c.h.b16 %v1004
    %v4143 = vunpack.c.l.b16 %v1005
    %v4144 = vunpack.c.h.b16 %v1005
    %v4145 = vunpack.c.l.b16 %v1006
    %v4146 = vunpack.c.h.b16 %v1006
    %v4147 = vunpack.c.l.b16 %v1007
    %v4148 = vunpack.c.h.b16 %v1007
    %v4149 = vunpack.c.l.b16 %v1008
    %v4150 = vunpack.c.h.b16 %v1008
    %v4151 = vunpack.c.l.b16 %v1009
    %v4152 = vunpack.c.h.b16 %v1009
    %v4153 = vunpack.c.l.b16 %v1010
    %v4154 = vunpack.c.h.b16 %v1010
    %v4155 = vunpack.c.l.b16 %v1011
    %v4156 = vunpack.c.h.b16 %v1011
    %v4157 = vunpack.c.l.b16 %v1012
    %v4158 = vunpack.c.h.b16 %v1012
    %v4159 = vunpack.c.l.b16 %v1013
    %v4160 = vunpack.c.h.b16 %v1013
    %v4161 = vunpack.c.l.b16 %v1014
    %v4162 = vunpack.c.h.b16 %v1014
    %v4163 = vunpack.c.l.b16 %v1015
    %v4164 = vunpack.c.h.b16 %v1015
    %v4165 = vunpack.c.l.b16 %v1016
    %v4166 = vunpack.c.h.b16 %v1016
    %v4167 = vunpack.c.l.b16 %v1017
    %v4168 = vunpack.c.h.b16 %v1017
    %v4169 = vunpack.c.l.b16 %v1018
    %v4170 = vunpack.c.h.b16 %v1018
    %v4171 = vunpack.c.l.b16 %v1019
    %v4172 = vunpack.c.h.b16 %v1019
    %v4173 = vunpack.c.l.b16 %v1020
    %v4174 = vunpack.c.h.b16 %v1020
    %v4175 = vunpack.c.l.b16 %v1021
    %v4176 = vunpack.c.h.b16 %v1021
    %v4177 = vunpack.c.l.b16 %v1022
    %v4178 = vunpack.c.h.b16 %v1022
    %v4179 = vunpack.c.l.b16 %v1023
    %v4180 = vunpack.c.h.b16 %v1023
    %v4181 = vunpack.c.l.b16 %v1024
    %v4182 = vunpack.c.h.b16 %v1024
    %v4183 = vunpack.c.l.b16 %v1025
    %v4184 = vunpack.c.h.b16 %v1025
    %v4185 = vunpack.c.l.b16 %v1026
    %v4186 = vunpack.c.h.b16 %v1026
    %v4187 = vunpack.c.l.b16 %v1027
    %v4188 = vunpack.c.h.b16 %v1027
    %v4189 = vunpack.c.l.b16 %v1028
    %v4190 = vunpack.c.h.b16 %v1028
    %v4191 = vunpack.c.l.b16 %v1029
    %v4192 = vunpack.c.h.b16 %v1029
    %v4193 = vunpack.c.l.b16 %v1030
    %v4194 = vunpack.c.h.b16 %v1030
    %v4195 = vunpack.c.l.b16 %v1031
    %v4196 = vunpack.c.h.b16 %v1031
    %v4197 = vunpack.c.l.b16 %v1032
    %v4198 = vunpack.c.h.b16 %v1032
    %v4199 = vunpack.c.l.b16 %v1033
    %v4200 = vunpack.c.h.b16 %v1033
    %v4201 = vunpack.c.l.b16 %v1034
    %v4202 = vunpack.c.h.b16 %v1034
    %v4203 = vunpack.c.l.b16 %v1035
    %v4204 = vunpack.c.h.b16 %v1035
    %v4205 = vunpack.c.l.b16 %v1036
    %v4206 = vunpack.c.h.b16 %v1036
    %v4207 = vunpack.c.l.b16 %v1037
    %v4208 = vunpack.c.h.b16 %v1037
    %v4209 = vunpack.c.l.b16 %v1038
    %v4210 = vunpack.c.h.b16 %v1038
    %v4211 = vunpack.c.l.b16 %v1039
    %v4212 = vunpack.c.h.b16 %v1039
    %v4213 = vunpack.c.l.b16 %v1040
    %v4214 = vunpack.c.h.b16 %v1040
    %v4215 = vunpack.c.l.b16 %v1041
    %v4216 = vunpack.c.h.b16 %v1041
    %v4217 = vunpack.c.l.b16 %v1042
    %v4218 = vunpack.c.h.b16 %v1042
    %v4219 = vunpack.c.l.b16 %v1043
    %v4220 = vunpack.c.h.b16 %v1043
    %v4221 = vunpack.c.l.b16 %v1044
    %v4222 = vunpack.c.h.b16 %v1044
    %v4223 = vunpack.c.l.b16 %v1045
    %v4224 = vunpack.c.h.b16 %v1045
    %v4225 = vunpack.c.l.b16 %v1046
    %v4226 = vunpack.c.h.b16 %v1046
    %v4227 = vunpack.c.l.b16 %v1047
    %v4228 = vunpack.c.h.b16 %v1047
    %v4229 = vunpack.c.l.b16 %v1048
    %v4230 = vunpack.c.h.b16 %v1048
    %v4231 = vunpack.c.l.b16 %v1049
    %v4232 = vunpack.c.h.b16 %v1049
    %v4233 = vunpack.c.l.b16 %v1050
    %v4234 = vunpack.c.h.b16 %v1050
    %v4235 = vunpack.c.l.b16 %v1051
    %v4236 = vunpack.c.h.b16 %v1051
    %v4237 = vunpack.c.l.b16 %v1052
    %v4238 = vunpack.c.h.b16 %v1052
    %v4239 = vunpack.c.l.b16 %v1053
    %v4240 = vunpack.c.h.b16 %v1053
    %v4241 = vunpack.c.l.b16 %v1054
    %v4242 = vunpack.c.h.b16 %v1054
    %v4243 = vunpack.c.l.b16 %v1055
    %v4244 = vunpack.c.h.b16 %v1055
    %v4245 = vunpack.c.l.b16 %v1056
    %v4246 = vunpack.c.h.b16 %v1056
    %v4247 = vunpack.c.l.b16 %v1057
    %v4248 = vunpack.c.h.b16 %v1057
    %v4249 = vunpack.c.l.b16 %v1058
    %v4250 = vunpack.c.h.b16 %v1058
    %v4251 = vunpack.c.l.b16 %v1059
    %v4252 = vunpack.c.h.b16 %v1059
    %v4253 = vunpack.c.l.b16 %v1060
    %v4254 = vunpack.c.h.b16 %v1060
    %v4255 = vunpack.c.l.b16 %v1061
    %v4256 = vunpack.c.h.b16 %v1061
    %v4257 = vunpack.c.l.b16 %v1062
    %v4258 = vunpack.c.h.b16 %v1062
    %v4259 = vunpack.c.l.b16 %v1063
    %v4260 = vunpack.c.h.b16 %v1063
    %v4261 = vunpack.c.l.b16 %v1064
    %v4262 = vunpack.c.h.b16 %v1064
    %v4263 = vunpack.c.l.b16 %v1065
    %v4264 = vunpack.c.h.b16 %v1065
    %v4265 = vunpack.c.l.b16 %v1066
    %v4266 = vunpack.c.h.b16 %v1066
    %v4267 = vunpack.c.l.b16 %v1067
    %v4268 = vunpack.c.h.b16 %v1067
    %v4269 = vunpack.c.l.b16 %v1068
    %v4270 = vunpack.c.h.b16 %v1068
    %v4271 = vunpack.c.l.b16 %v1069
    %v4272 = vunpack.c.h.b16 %v1069
    %v4273 = vunpack.c.l.b16 %v1070
    %v4274 = vunpack.c.h.b16 %v1070
    %v4275 = vunpack.c.l.b16 %v1071
    %v4276 = vunpack.c.h.b16 %v1071
    %v4277 = vunpack.c.l.b16 %v1072
    %v4278 = vunpack.c.h.b16 %v1072
    %v4279 = vunpack.c.l.b16 %v1073
    %v4280 = vunpack.c.h.b16 %v1073
    %v4281 = vunpack.c.l.b16 %v1074
    %v4282 = vunpack.c.h.b16 %v1074
    %v4283 = vunpack.c.l.b16 %v1075
    %v4284 = vunpack.c.h.b16 %v1075
    %v4285 = vunpack.c.l.b16 %v1076
    %v4286 = vunpack.c.h.b16 %v1076
    %v4287 = vunpack.c.l.b16 %v1077
    %v4288 = vunpack.c.h.b16 %v1077
    %v4289 = vunpack.c.l.b16 %v1078
    %v4290 = vunpack.c.h.b16 %v1078
    %v4291 = vunpack.c.l.b16 %v1079
    %v4292 = vunpack.c.h.b16 %v1079
    %v4293 = vunpack.c.l.b16 %v1080
    %v4294 = vunpack.c.h.b16 %v1080
    %v4295 = vunpack.c.l.b16 %v1081
    %v4296 = vunpack.c.h.b16 %v1081
    %v4297 = vunpack.c.l.b16 %v1082
    %v4298 = vunpack.c.h.b16 %v1082
    %v4299 = vunpack.c.l.b16 %v1083
    %v4300 = vunpack.c.h.b16 %v1083
    %v4301 = vunpack.c.l.b16 %v1084
    %v4302 = vunpack.c.h.b16 %v1084
    %v4303 = vunpack.c.l.b16 %v1085
    %v4304 = vunpack.c.h.b16 %v1085
    %v4305 = vunpack.c.l.b16 %v1086
    %v4306 = vunpack.c.h.b16 %v1086
    %v4307 = vunpack.c.l.b16 %v1087
    %v4308 = vunpack.c.h.b16 %v1087
    %v4309 = vunpack.c.l.b16 %v1088
    %v4310 = vunpack.c.h.b16 %v1088
    %v4311 = vunpack.c.l.b16 %v1089
    %v4312 = vunpack.c.h.b16 %v1089
    %v4313 = vunpack.c.l.b16 %v1090
    %v4314 = vunpack.c.h.b16 %v1090
    %v4315 = vunpack.c.l.b16 %v1091
    %v4316 = vunpack.c.h.b16 %v1091
    %v4317 = vunpack.c.l.b16 %v1092
    %v4318 = vunpack.c.h.b16 %v1092
    %v4319 = vunpack.c.l.b16 %v1093
    %v4320 = vunpack.c.h.b16 %v1093
    %v4321 = vunpack.c.l.b16 %v1094
    %v4322 = vunpack.c.h.b16 %v1094
    %v4323 = vunpack.c.l.b16 %v1095
    %v4324 = vunpack.c.h.b16 %v1095
    %v4325 = vunpack.c.l.b16 %v1096
    %v4326 = vunpack.c.h.b16 %v1096
    %v4327 = vunpack.c.l.b16 %v1097
    %v4328 = vunpack.c.h.b16 %v1097
    %v4329 = vunpack.c.l.b16 %v1098
    %v4330 = vunpack.c.h.b16 %v1098
    %v4331 = vunpack.c.l.b16 %v1099
    %v4332 = vunpack.c.h.b16 %v1099
    %v4333 = vunpack.c.l.b16 %v1100
    %v4334 = vunpack.c.h.b16 %v1100
    %v4335 = vunpack.c.l.b16 %v1101
    %v4336 = vunpack.c.h.b16 %v1101
    %v4337 = vunpack.c.l.b16 %v1102
    %v4338 = vunpack.c.h.b16 %v1102
    %v4339 = vunpack.c.l.b16 %v1103
    %v4340 = vunpack.c.h.b16 %v1103
    %v4341 = vunpack.c.l.b16 %v1104
    %v4342 = vunpack.c.h.b16 %v1104
    %v4343 = vunpack.c.l.b16 %v1105
    %v4344 = vunpack.c.h.b16 %v1105
    %v4345 = vunpack.c.l.b16 %v1106
    %v4346 = vunpack.c.h.b16 %v1106
    %v4347 = vunpack.c.l.b16 %v1107
    %v4348 = vunpack.c.h.b16 %v1107
    %v4349 = vunpack.c.l.b16 %v1108
    %v4350 = vunpack.c.h.b16 %v1108
    %v4351 = vunpack.c.l.b16 %v1109
    %v4352 = vunpack.c.h.b16 %v1109
    %v4353 = vunpack.c.l.b16 %v1110
    %v4354 = vunpack.c.h.b16 %v1110
    %v4355 = vunpack.c.l.b16 %v1111
    %v4356 = vunpack.c.h.b16 %v1111
    %v4357 = vunpack.c.l.b16 %v1112
    %v4358 = vunpack.c.h.b16 %v1112
    %v4359 = vunpack.c.l.b16 %v1113
    %v4360 = vunpack.c.h.b16 %v1113
    %v4361 = vunpack.c.l.b16 %v1114
    %v4362 = vunpack.c.h.b16 %v1114
    %v4363 = vunpack.c.l.b16 %v1115
    %v4364 = vunpack.c.h.b16 %v1115
    %v4365 = vunpack.c.l.b16 %v1116
    %v4366 = vunpack.c.h.b16 %v1116
    %v4367 = vunpack.c.l.b16 %v1117
    %v4368 = vunpack.c.h.b16 %v1117
    %v4369 = vunpack.c.l.b16 %v1118
    %v4370 = vunpack.c.h.b16 %v1118
    %v4371 = vunpack.c.l.b16 %v1119
    %v4372 = vunpack.c.h.b16 %v1119
    %v4373 = vunpack.c.l.b16 %v1120
    %v4374 = vunpack.c.h.b16 %v1120
    %v4375 = vpack.c.b16 %v2331, %v2327
    %v4376 = vpack.c.b16 %v2332, %v2328
    %v4377 = vpack.c.b16 %v2333, %v2329
    %v4378 = vpack.c.b16 %v2334, %v2330
    %v4379 = vpack.c.b16 %v2339, %v2335
    %v4380 = vpack.c.b16 %v2340, %v2336
    %v4381 = vpack.c.b16 %v2341, %v2337
    %v4382 = vpack.c.b16 %v2342, %v2338
    %v4383 = vpack.c.b16 %v2347, %v2343
    %v4384 = vpack.c.b16 %v2348, %v2344
    %v4385 = vpack.c.b16 %v2349, %v2345
    %v4386 = vpack.c.b16 %v2350, %v2346
    %v4387 = vpack.c.b16 %v2355, %v2351
    %v4388 = vpack.c.b16 %v2356, %v2352
    %v4389 = vpack.c.b16 %v2357, %v2353
    %v4390 = vpack.c.b16 %v2358, %v2354
    %v4391 = vpack.c.b16 %v2363, %v2359
    %v4392 = vpack.c.b16 %v2364, %v2360
    %v4393 = vpack.c.b16 %v2365, %v2361
    %v4394 = vpack.c.b16 %v2366, %v2362
    %v4395 = vpack.c.b16 %v2371, %v2367
    %v4396 = vpack.c.b16 %v2372, %v2368
    %v4397 = vpack.c.b16 %v2373, %v2369
    %v4398 = vpack.c.b16 %v2374, %v2370
    %v4399 = vpack.c.b16 %v2379, %v2375
    %v4400 = vpack.c.b16 %v2380, %v2376
    %v4401 = vpack.c.b16 %v2381, %v2377
    %v4402 = vpack.c.b16 %v2382, %v2378
    %v4403 = vpack.c.b16 %v2387, %v2383
    %v4404 = vpack.c.b16 %v2388, %v2384
    %v4405 = vpack.c.b16 %v2389, %v2385
    %v4406 = vpack.c.b16 %v2390, %v2386
    %v4407 = vpack.c.b16 %v2395, %v2391
    %v4408 = vpack.c.b16 %v2396, %v2392
    %v4409 = vpack.c.b16 %v2397, %v2393
    %v4410 = vpack.c.b16 %v2398, %v2394
    %v4411 = vpack.c.b16 %v2403, %v2399
    %v4412 = vpack.c.b16 %v2404, %v2400
    %v4413 = vpack.c.b16 %v2405, %v2401
    %v4414 = vpack.c.b16 %v2406, %v2402
    %v4415 = vpack.c.b16 %v2411, %v2407
    %v4416 = vpack.c.b16 %v2412, %v2408
    %v4417 = vpack.c.b16 %v2413, %v2409
    %v4418 = vpack.c.b16 %v2414, %v2410
    %v4419 = vpack.c.b16 %v2419, %v2415
    %v4420 = vpack.c.b16 %v2420, %v2416
    %v4421 = vpack.c.b16 %v2421, %v2417
    %v4422 = vpack.c.b16 %v2422, %v2418
    %v4423 = vpack.c.b16 %v2427, %v2423
    %v4424 = vpack.c.b16 %v2428, %v2424
    %v4425 = vpack.c.b16 %v2429, %v2425
    %v4426 = vpack.c.b16 %v2430, %v2426
    %v4427 = vpack.c.b16 %v2435, %v2431
    %v4428 = vpack.c.b16 %v2436, %v2432
    %v4429 = vpack.c.b16 %v2437, %v2433
    %v4430 = vpack.c.b16 %v2438, %v2434
    %v4431 = vpack.c.b16 %v2443, %v2439
    %v4432 = vpack.c.b16 %v2444, %v2440
    %v4433 = vpack.c.b16 %v2445, %v2441
    %v4434 = vpack.c.b16 %v2446, %v2442
    %v4435 = vpack.c.b16 %v2451, %v2447
    %v4436 = vpack.c.b16 %v2452, %v2448
    %v4437 = vpack.c.b16 %v2453, %v2449
    %v4438 = vpack.c.b16 %v2454, %v2450
    %v4439 = vpack.c.b16 %v2459, %v2455
    %v4440 = vpack.c.b16 %v2460, %v2456
    %v4441 = vpack.c.b16 %v2461, %v2457
    %v4442 = vpack.c.b16 %v2462, %v2458
    %v4443 = vpack.c.b16 %v2467, %v2463
    %v4444 = vpack.c.b16 %v2468, %v2464
    %v4445 = vpack.c.b16 %v2469, %v2465
    %v4446 = vpack.c.b16 %v2470, %v2466
    %v4447 = vpack.c.b16 %v2475, %v2471
    %v4448 = vpack.c.b16 %v2476, %v2472
    %v4449 = vpack.c.b16 %v2477, %v2473
    %v4450 = vpack.c.b16 %v2478, %v2474
    %v4451 = vpack.c.b16 %v2483, %v2479
    %v4452 = vpack.c.b16 %v2484, %v2480
    %v4453 = vpack.c.b16 %v2485, %v2481
    %v4454 = vpack.c.b16 %v2486, %v2482
    %v4455 = vpack.c.b16 %v2491, %v2487
    %v4456 = vpack.c.b16 %v2492, %v2488
    %v4457 = vpack.c.b16 %v2493, %v2489
    %v4458 = vpack.c.b16 %v2494, %v2490
    %v4459 = vpack.c.b16 %v2499, %v2495
    %v4460 = vpack.c.b16 %v2500, %v2496
    %v4461 = vpack.c.b16 %v2501, %v2497
    %v4462 = vpack.c.b16 %v2502, %v2498
    %v4463 = vpack.c.b16 %v2507, %v2503
    %v4464 = vpack.c.b16 %v2508, %v2504
    %v4465 = vpack.c.b16 %v2509, %v2505
    %v4466 = vpack.c.b16 %v2510, %v2506
    %v4467 = vpack.c.b16 %v2515, %v2511
    %v4468 = vpack.c.b16 %v2516, %v2512
    %v4469 = vpack.c.b16 %v2517, %v2513
    %v4470 = vpack.c.b16 %v2518, %v2514
    %v4471 = vpack.c.b16 %v2523, %v2519
    %v4472 = vpack.c.b16 %v2524, %v2520
    %v4473 = vpack.c.b16 %v2525, %v2521
    %v4474 = vpack.c.b16 %v2526, %v2522
    %v4475 = vpack.c.b16 %v2531, %v2527
    %v4476 = vpack.c.b16 %v2532, %v2528
    %v4477 = vpack.c.b16 %v2533, %v2529
    %v4478 = vpack.c.b16 %v2534, %v2530
    %v4479 = vpack.c.b16 %v2539, %v2535
    %v4480 = vpack.c.b16 %v2540, %v2536
    %v4481 = vpack.c.b16 %v2541, %v2537
    %v4482 = vpack.c.b16 %v2542, %v2538
    %v4483 = vpack.c.b16 %v2547, %v2543
    %v4484 = vpack.c.b16 %v2548, %v2544
    %v4485 = vpack.c.b16 %v2549, %v2545
    %v4486 = vpack.c.b16 %v2550, %v2546
    %v4487 = vpack.c.b16 %v2555, %v2551
    %v4488 = vpack.c.b16 %v2556, %v2552
    %v4489 = vpack.c.b16 %v2557, %v2553
    %v4490 = vpack.c.b16 %v2558, %v2554
    %v4491 = vpack.c.b16 %v2563, %v2559
    %v4492 = vpack.c.b16 %v2564, %v2560
    %v4493 = vpack.c.b16 %v2565, %v2561
    %v4494 = vpack.c.b16 %v2566, %v2562
    %v4495 = vpack.c.b16 %v2571, %v2567
    %v4496 = vpack.c.b16 %v2572, %v2568
    %v4497 = vpack.c.b16 %v2573, %v2569
    %v4498 = vpack.c.b16 %v2574, %v2570
    %v4499 = vpack.c.b16 %v2579, %v2575
    %v4500 = vpack.c.b16 %v2580, %v2576
    %v4501 = vpack.c.b16 %v2581, %v2577
    %v4502 = vpack.c.b16 %v2582, %v2578
    %v4503 = vpack.c.b16 %v2587, %v2583
    %v4504 = vpack.c.b16 %v2588, %v2584
    %v4505 = vpack.c.b16 %v2589, %v2585
    %v4506 = vpack.c.b16 %v2590, %v2586
    %v4507 = vpack.c.b16 %v2595, %v2591
    %v4508 = vpack.c.b16 %v2596, %v2592
    %v4509 = vpack.c.b16 %v2597, %v2593
    %v4510 = vpack.c.b16 %v2598, %v2594
    %v4511 = vpack.c.b16 %v2603, %v2599
    %v4512 = vpack.c.b16 %v2604, %v2600
    %v4513 = vpack.c.b16 %v2605, %v2601
    %v4514 = vpack.c.b16 %v2606, %v2602
    %v4515 = vpack.c.b16 %v2611, %v2607
    %v4516 = vpack.c.b16 %v2612, %v2608
    %v4517 = vpack.c.b16 %v2613, %v2609
    %v4518 = vpack.c.b16 %v2614, %v2610
    %v4519 = vpack.c.b16 %v2619, %v2615
    %v4520 = vpack.c.b16 %v2620, %v2616
    %v4521 = vpack.c.b16 %v2621, %v2617
    %v4522 = vpack.c.b16 %v2622, %v2618
    %v4523 = vpack.c.b16 %v2627, %v2623
    %v4524 = vpack.c.b16 %v2628, %v2624
    %v4525 = vpack.c.b16 %v2629, %v2625
    %v4526 = vpack.c.b16 %v2630, %v2626
    %v4527 = vpack.c.b16 %v2635, %v2631
    %v4528 = vpack.c.b16 %v2636, %v2632
    %v4529 = vpack.c.b16 %v2637, %v2633
    %v4530 = vpack.c.b16 %v2638, %v2634
    %v4531 = vpack.c.b16 %v2643, %v2639
    %v4532 = vpack.c.b16 %v2644, %v2640
    %v4533 = vpack.c.b16 %v2645, %v2641
    %v4534 = vpack.c.b16 %v2646, %v2642
    %v4535 = vpack.c.b16 %v2651, %v2647
    %v4536 = vpack.c.b16 %v2652, %v2648
    %v4537 = vpack.c.b16 %v2653, %v2649
    %v4538 = vpack.c.b16 %v2654, %v2650
    %v4539 = vpack.c.b16 %v2659, %v2655
    %v4540 = vpack.c.b16 %v2660, %v2656
    %v4541 = vpack.c.b16 %v2661, %v2657
    %v4542 = vpack.c.b16 %v2662, %v2658
    %v4543 = vpack.c.b16 %v2667, %v2663
    %v4544 = vpack.c.b16 %v2668, %v2664
    %v4545 = vpack.c.b16 %v2669, %v2665
    %v4546 = vpack.c.b16 %v2670, %v2666
    %v4547 = vpack.c.b16 %v2675, %v2671
    %v4548 = vpack.c.b16 %v2676, %v2672
    %v4549 = vpack.c.b16 %v2677, %v2673
    %v4550 = vpack.c.b16 %v2678, %v2674
    %v4551 = vpack.c.b16 %v2683, %v2679
    %v4552 = vpack.c.b16 %v2684, %v2680
    %v4553 = vpack.c.b16 %v2685, %v2681
    %v4554 = vpack.c.b16 %v2686, %v2682
    %v4555 = vpack.c.b16 %v2691, %v2687
    %v4556 = vpack.c.b16 %v2692, %v2688
    %v4557 = vpack.c.b16 %v2693, %v2689
    %v4558 = vpack.c.b16 %v2694, %v2690
    %v4559 = vpack.c.b16 %v2699, %v2695
    %v4560 = vpack.c.b16 %v2700, %v2696
    %v4561 = vpack.c.b16 %v2701, %v2697
    %v4562 = vpack.c.b16 %v2702, %v2698
    %v4563 = vpack.c.b16 %v2707, %v2703
    %v4564 = vpack.c.b16 %v2708, %v2704
    %v4565 = vpack.c.b16 %v2709, %v2705
    %v4566 = vpack.c.b16 %v2710, %v2706
    %v4567 = vpack.c.b16 %v2715, %v2711
    %v4568 = vpack.c.b16 %v2716, %v2712
    %v4569 = vpack.c.b16 %v2717, %v2713
    %v4570 = vpack.c.b16 %v2718, %v2714
    %v4571 = vpack.c.b16 %v2723, %v2719
    %v4572 = vpack.c.b16 %v2724, %v2720
    %v4573 = vpack.c.b16 %v2725, %v2721
    %v4574 = vpack.c.b16 %v2726, %v2722
    %v4575 = vpack.c.b16 %v2731, %v2727
    %v4576 = vpack.c.b16 %v2732, %v2728
    %v4577 = vpack.c.b16 %v2733, %v2729
    %v4578 = vpack.c.b16 %v2734, %v2730
    %v4579 = vpack.c.b16 %v2739, %v2735
    %v4580 = vpack.c.b16 %v2740, %v2736
    %v4581 = vpack.c.b16 %v2741, %v2737
    %v4582 = vpack.c.b16 %v2742, %v2738
    %v4583 = vpack.c.b16 %v2747, %v2743
    %v4584 = vpack.c.b16 %v2748, %v2744
    %v4585 = vpack.c.b16 %v2749, %v2745
    %v4586 = vpack.c.b16 %v2750, %v2746
    %v4587 = vpack.c.b16 %v2755, %v2751
    %v4588 = vpack.c.b16 %v2756, %v2752
    %v4589 = vpack.c.b16 %v2757, %v2753
    %v4590 = vpack.c.b16 %v2758, %v2754
    %v4591 = vpack.c.b16 %v2763, %v2759
    %v4592 = vpack.c.b16 %v2764, %v2760
    %v4593 = vpack.c.b16 %v2765, %v2761
    %v4594 = vpack.c.b16 %v2766, %v2762
    %v4595 = vpack.c.b16 %v2771, %v2767
    %v4596 = vpack.c.b16 %v2772, %v2768
    %v4597 = vpack.c.b16 %v2773, %v2769
    %v4598 = vpack.c.b16 %v2774, %v2770
    %v4599 = vpack.c.b16 %v2779, %v2775
    %v4600 = vpack.c.b16 %v2780, %v2776
    %v4601 = vpack.c.b16 %v2781, %v2777
    %v4602 = vpack.c.b16 %v2782, %v2778
    %v4603 = vpack.c.b16 %v2787, %v2783
    %v4604 = vpack.c.b16 %v2788, %v2784
    %v4605 = vpack.c.b16 %v2789, %v2785
    %v4606 = vpack.c.b16 %v2790, %v2786
    %v4607 = vpack.c.b16 %v2795, %v2791
    %v4608 = vpack.c.b16 %v2796, %v2792
    %v4609 = vpack.c.b16 %v2797, %v2793
    %v4610 = vpack.c.b16 %v2798, %v2794
    %v4611 = vpack.c.b16 %v2803, %v2799
    %v4612 = vpack.c.b16 %v2804, %v2800
    %v4613 = vpack.c.b16 %v2805, %v2801
    %v4614 = vpack.c.b16 %v2806, %v2802
    %v4615 = vpack.c.b16 %v2811, %v2807
    %v4616 = vpack.c.b16 %v2812, %v2808
    %v4617 = vpack.c.b16 %v2813, %v2809
    %v4618 = vpack.c.b16 %v2814, %v2810
    %v4619 = vpack.c.b16 %v2819, %v2815
    %v4620 = vpack.c.b16 %v2820, %v2816
    %v4621 = vpack.c.b16 %v2821, %v2817
    %v4622 = vpack.c.b16 %v2822, %v2818
    %v4623 = vpack.c.b16 %v2827, %v2823
    %v4624 = vpack.c.b16 %v2828, %v2824
    %v4625 = vpack.c.b16 %v2829, %v2825
    %v4626 = vpack.c.b16 %v2830, %v2826
    %v4627 = vpack.c.b16 %v2835, %v2831
    %v4628 = vpack.c.b16 %v2836, %v2832
    %v4629 = vpack.c.b16 %v2837, %v2833
    %v4630 = vpack.c.b16 %v2838, %v2834
    %v4631 = vpack.c.b16 %v2843, %v2839
    %v4632 = vpack.c.b16 %v2844, %v2840
    %v4633 = vpack.c.b16 %v2845, %v2841
    %v4634 = vpack.c.b16 %v2846, %v2842
    %v4635 = vpack.c.b16 %v2851, %v2847
    %v4636 = vpack.c.b16 %v2852, %v2848
    %v4637 = vpack.c.b16 %v2853, %v2849
    %v4638 = vpack.c.b16 %v2854, %v2850
    %v4639 = vpack.c.b16 %v2859, %v2855
    %v4640 = vpack.c.b16 %v2860, %v2856
    %v4641 = vpack.c.b16 %v2861, %v2857
    %v4642 = vpack.c.b16 %v2862, %v2858
    %v4643 = vpack.c.b16 %v2867, %v2863
    %v4644 = vpack.c.b16 %v2868, %v2864
    %v4645 = vpack.c.b16 %v2869, %v2865
    %v4646 = vpack.c.b16 %v2870, %v2866
    %v4647 = vpack.c.b16 %v2875, %v2871
    %v4648 = vpack.c.b16 %v2876, %v2872
    %v4649 = vpack.c.b16 %v2877, %v2873
    %v4650 = vpack.c.b16 %v2878, %v2874
    %v4651 = vpack.c.b16 %v2883, %v2879
    %v4652 = vpack.c.b16 %v2884, %v2880
    %v4653 = vpack.c.b16 %v2885, %v2881
    %v4654 = vpack.c.b16 %v2886, %v2882
    %v4655 = vpack.c.b16 %v2891, %v2887
    %v4656 = vpack.c.b16 %v2892, %v2888
    %v4657 = vpack.c.b16 %v2893, %v2889
    %v4658 = vpack.c.b16 %v2894, %v2890
    %v4659 = vpack.c.b16 %v2899, %v2895
    %v4660 = vpack.c.b16 %v2900, %v2896
    %v4661 = vpack.c.b16 %v2901, %v2897
    %v4662 = vpack.c.b16 %v2902, %v2898
    %v4663 = vpack.c.b16 %v2907, %v2903
    %v4664 = vpack.c.b16 %v2908, %v2904
    %v4665 = vpack.c.b16 %v2909, %v2905
    %v4666 = vpack.c.b16 %v2910, %v2906
    %v4667 = vpack.c.b16 %v2915, %v2911
    %v4668 = vpack.c.b16 %v2916, %v2912
    %v4669 = vpack.c.b16 %v2917, %v2913
    %v4670 = vpack.c.b16 %v2918, %v2914
    %v4671 = vpack.c.b16 %v2923, %v2919
    %v4672 = vpack.c.b16 %v2924, %v2920
    %v4673 = vpack.c.b16 %v2925, %v2921
    %v4674 = vpack.c.b16 %v2926, %v2922
    %v4675 = vpack.c.b16 %v2931, %v2927
    %v4676 = vpack.c.b16 %v2932, %v2928
    %v4677 = vpack.c.b16 %v2933, %v2929
    %v4678 = vpack.c.b16 %v2934, %v2930
    %v4679 = vpack.c.b16 %v2939, %v2935
    %v4680 = vpack.c.b16 %v2940, %v2936
    %v4681 = vpack.c.b16 %v2941, %v2937
    %v4682 = vpack.c.b16 %v2942, %v2938
    %v4683 = vpack.c.b16 %v2947, %v2943
    %v4684 = vpack.c.b16 %v2948, %v2944
    %v4685 = vpack.c.b16 %v2949, %v2945
    %v4686 = vpack.c.b16 %v2950, %v2946
    %v4687 = vpack.c.b16 %v2955, %v2951
    %v4688 = vpack.c.b16 %v2956, %v2952
    %v4689 = vpack.c.b16 %v2957, %v2953
    %v4690 = vpack.c.b16 %v2958, %v2954
    %v4691 = vpack.c.b16 %v2963, %v2959
    %v4692 = vpack.c.b16 %v2964, %v2960
    %v4693 = vpack.c.b16 %v2965, %v2961
    %v4694 = vpack.c.b16 %v2966, %v2962
    %v4695 = vpack.c.b16 %v2971, %v2967
    %v4696 = vpack.c.b16 %v2972, %v2968
    %v4697 = vpack.c.b16 %v2973, %v2969
    %v4698 = vpack.c.b16 %v2974, %v2970
    %v4699 = vpack.c.b16 %v2979, %v2975
    %v4700 = vpack.c.b16 %v2980, %v2976
    %v4701 = vpack.c.b16 %v2981, %v2977
    %v4702 = vpack.c.b16 %v2982, %v2978
    %v4703 = vpack.c.b16 %v2987, %v2983
    %v4704 = vpack.c.b16 %v2988, %v2984
    %v4705 = vpack.c.b16 %v2989, %v2985
    %v4706 = vpack.c.b16 %v2990, %v2986
    %v4707 = vpack.c.b16 %v2995, %v2991
    %v4708 = vpack.c.b16 %v2996, %v2992
    %v4709 = vpack.c.b16 %v2997, %v2993
    %v4710 = vpack.c.b16 %v2998, %v2994
    %v4711 = vpack.c.b16 %v3003, %v2999
    %v4712 = vpack.c.b16 %v3004, %v3000
    %v4713 = vpack.c.b16 %v3005, %v3001
    %v4714 = vpack.c.b16 %v3006, %v3002
    %v4715 = vpack.c.b16 %v3011, %v3007
    %v4716 = vpack.c.b16 %v3012, %v3008
    %v4717 = vpack.c.b16 %v3013, %v3009
    %v4718 = vpack.c.b16 %v3014, %v3010
    %v4719 = vpack.c.b16 %v3019, %v3015
    %v4720 = vpack.c.b16 %v3020, %v3016
    %v4721 = vpack.c.b16 %v3021, %v3017
    %v4722 = vpack.c.b16 %v3022, %v3018
    %v4723 = vpack.c.b16 %v3027, %v3023
    %v4724 = vpack.c.b16 %v3028, %v3024
    %v4725 = vpack.c.b16 %v3029, %v3025
    %v4726 = vpack.c.b16 %v3030, %v3026
    %v4727 = vpack.c.b16 %v3035, %v3031
    %v4728 = vpack.c.b16 %v3036, %v3032
    %v4729 = vpack.c.b16 %v3037, %v3033
    %v4730 = vpack.c.b16 %v3038, %v3034
    %v4731 = vpack.c.b16 %v3043, %v3039
    %v4732 = vpack.c.b16 %v3044, %v3040
    %v4733 = vpack.c.b16 %v3045, %v3041
    %v4734 = vpack.c.b16 %v3046, %v3042
    %v4735 = vpack.c.b16 %v3051, %v3047
    %v4736 = vpack.c.b16 %v3052, %v3048
    %v4737 = vpack.c.b16 %v3053, %v3049
    %v4738 = vpack.c.b16 %v3054, %v3050
    %v4739 = vpack.c.b16 %v3059, %v3055
    %v4740 = vpack.c.b16 %v3060, %v3056
    %v4741 = vpack.c.b16 %v3061, %v3057
    %v4742 = vpack.c.b16 %v3062, %v3058
    %v4743 = vpack.c.b16 %v3067, %v3063
    %v4744 = vpack.c.b16 %v3068, %v3064
    %v4745 = vpack.c.b16 %v3069, %v3065
    %v4746 = vpack.c.b16 %v3070, %v3066
    %v4747 = vpack.c.b16 %v3075, %v3071
    %v4748 = vpack.c.b16 %v3076, %v3072
    %v4749 = vpack.c.b16 %v3077, %v3073
    %v4750 = vpack.c.b16 %v3078, %v3074
    %v4751 = vpack.c.b16 %v3083, %v3079
    %v4752 = vpack.c.b16 %v3084, %v3080
    %v4753 = vpack.c.b16 %v3085, %v3081
    %v4754 = vpack.c.b16 %v3086, %v3082
    %v4755 = vpack.c.b16 %v3091, %v3087
    %v4756 = vpack.c.b16 %v3092, %v3088
    %v4757 = vpack.c.b16 %v3093, %v3089
    %v4758 = vpack.c.b16 %v3094, %v3090
    %v4759 = vpack.c.b16 %v3099, %v3095
    %v4760 = vpack.c.b16 %v3100, %v3096
    %v4761 = vpack.c.b16 %v3101, %v3097
    %v4762 = vpack.c.b16 %v3102, %v3098
    %v4763 = vpack.c.b16 %v3107, %v3103
    %v4764 = vpack.c.b16 %v3108, %v3104
    %v4765 = vpack.c.b16 %v3109, %v3105
    %v4766 = vpack.c.b16 %v3110, %v3106
    %v4767 = vpack.c.b16 %v3115, %v3111
    %v4768 = vpack.c.b16 %v3116, %v3112
    %v4769 = vpack.c.b16 %v3117, %v3113
    %v4770 = vpack.c.b16 %v3118, %v3114
    %v4771 = vpack.c.b16 %v3123, %v3119
    %v4772 = vpack.c.b16 %v3124, %v3120
    %v4773 = vpack.c.b16 %v3125, %v3121
    %v4774 = vpack.c.b16 %v3126, %v3122
    %v4775 = vpack.c.b16 %v3131, %v3127
    %v4776 = vpack.c.b16 %v3132, %v3128
    %v4777 = vpack.c.b16 %v3133, %v3129
    %v4778 = vpack.c.b16 %v3134, %v3130
    %v4779 = vpack.c.b16 %v3139, %v3135
    %v4780 = vpack.c.b16 %v3140, %v3136
    %v4781 = vpack.c.b16 %v3141, %v3137
    %v4782 = vpack.c.b16 %v3142, %v3138
    %v4783 = vpack.c.b16 %v3147, %v3143
    %v4784 = vpack.c.b16 %v3148, %v3144
    %v4785 = vpack.c.b16 %v3149, %v3145
    %v4786 = vpack.c.b16 %v3150, %v3146
    %v4787 = vpack.c.b16 %v3155, %v3151
    %v4788 = vpack.c.b16 %v3156, %v3152
    %v4789 = vpack.c.b16 %v3157, %v3153
    %v4790 = vpack.c.b16 %v3158, %v3154
    %v4791 = vpack.c.b16 %v3163, %v3159
    %v4792 = vpack.c.b16 %v3164, %v3160
    %v4793 = vpack.c.b16 %v3165, %v3161
    %v4794 = vpack.c.b16 %v3166, %v3162
    %v4795 = vpack.c.b16 %v3171, %v3167
    %v4796 = vpack.c.b16 %v3172, %v3168
    %v4797 = vpack.c.b16 %v3173, %v3169
    %v4798 = vpack.c.b16 %v3174, %v3170
    %v4799 = vpack.c.b16 %v3179, %v3175
    %v4800 = vpack.c.b16 %v3180, %v3176
    %v4801 = vpack.c.b16 %v3181, %v3177
    %v4802 = vpack.c.b16 %v3182, %v3178
    %v4803 = vpack.c.b16 %v3187, %v3183
    %v4804 = vpack.c.b16 %v3188, %v3184
    %v4805 = vpack.c.b16 %v3189, %v3185
    %v4806 = vpack.c.b16 %v3190, %v3186
    %v4807 = vpack.c.b16 %v3195, %v3191
    %v4808 = vpack.c.b16 %v3196, %v3192
    %v4809 = vpack.c.b16 %v3197, %v3193
    %v4810 = vpack.c.b16 %v3198, %v3194
    %v4811 = vpack.c.b16 %v3203, %v3199
    %v4812 = vpack.c.b16 %v3204, %v3200
    %v4813 = vpack.c.b16 %v3205, %v3201
    %v4814 = vpack.c.b16 %v3206, %v3202
    %v4815 = vpack.c.b16 %v3211, %v3207
    %v4816 = vpack.c.b16 %v3212, %v3208
    %v4817 = vpack.c.b16 %v3213, %v3209
    %v4818 = vpack.c.b16 %v3214, %v3210
    %v4819 = vpack.c.b16 %v3219, %v3215
    %v4820 = vpack.c.b16 %v3220, %v3216
    %v4821 = vpack.c.b16 %v3221, %v3217
    %v4822 = vpack.c.b16 %v3222, %v3218
    %v4823 = vpack.c.b16 %v3227, %v3223
    %v4824 = vpack.c.b16 %v3228, %v3224
    %v4825 = vpack.c.b16 %v3229, %v3225
    %v4826 = vpack.c.b16 %v3230, %v3226
    %v4827 = vpack.c.b16 %v3235, %v3231
    %v4828 = vpack.c.b16 %v3236, %v3232
    %v4829 = vpack.c.b16 %v3237, %v3233
    %v4830 = vpack.c.b16 %v3238, %v3234
    %v4831 = vpack.c.b16 %v3243, %v3239
    %v4832 = vpack.c.b16 %v3244, %v3240
    %v4833 = vpack.c.b16 %v3245, %v3241
    %v4834 = vpack.c.b16 %v3246, %v3242
    %v4835 = vpack.c.b16 %v3251, %v3247
    %v4836 = vpack.c.b16 %v3252, %v3248
    %v4837 = vpack.c.b16 %v3253, %v3249
    %v4838 = vpack.c.b16 %v3254, %v3250
    %v4839 = vpack.c.b16 %v3259, %v3255
    %v4840 = vpack.c.b16 %v3260, %v3256
    %v4841 = vpack.c.b16 %v3261, %v3257
    %v4842 = vpack.c.b16 %v3262, %v3258
    %v4843 = vpack.c.b16 %v3267, %v3263
    %v4844 = vpack.c.b16 %v3268, %v3264
    %v4845 = vpack.c.b16 %v3269, %v3265
    %v4846 = vpack.c.b16 %v3270, %v3266
    %v4847 = vpack.c.b16 %v3275, %v3271
    %v4848 = vpack.c.b16 %v3276, %v3272
    %v4849 = vpack.c.b16 %v3277, %v3273
    %v4850 = vpack.c.b16 %v3278, %v3274
    %v4851 = vpack.c.b16 %v3283, %v3279
    %v4852 = vpack.c.b16 %v3284, %v3280
    %v4853 = vpack.c.b16 %v3285, %v3281
    %v4854 = vpack.c.b16 %v3286, %v3282
    %v4855 = vpack.c.b16 %v3291, %v3287
    %v4856 = vpack.c.b16 %v3292, %v3288
    %v4857 = vpack.c.b16 %v3293, %v3289
    %v4858 = vpack.c.b16 %v3294, %v3290
    %v4859 = vpack.c.b16 %v3299, %v3295
    %v4860 = vpack.c.b16 %v3300, %v3296
    %v4861 = vpack.c.b16 %v3301, %v3297
    %v4862 = vpack.c.b16 %v3302, %v3298
    %v4863 = vpack.c.b16 %v3307, %v3303
    %v4864 = vpack.c.b16 %v3308, %v3304
    %v4865 = vpack.c.b16 %v3309, %v3305
    %v4866 = vpack.c.b16 %v3310, %v3306
    %v4867 = vpack.c.b16 %v3315, %v3311
    %v4868 = vpack.c.b16 %v3316, %v3312
    %v4869 = vpack.c.b16 %v3317, %v3313
    %v4870 = vpack.c.b16 %v3318, %v3314
    %v4871 = vpack.c.b16 %v3323, %v3319
    %v4872 = vpack.c.b16 %v3324, %v3320
    %v4873 = vpack.c.b16 %v3325, %v3321
    %v4874 = vpack.c.b16 %v3326, %v3322
    %v4875 = vpack.c.b16 %v3331, %v3327
    %v4876 = vpack.c.b16 %v3332, %v3328
    %v4877 = vpack.c.b16 %v3333, %v3329
    %v4878 = vpack.c.b16 %v3334, %v3330
    %v4879 = vpack.c.b16 %v3339, %v3335
    %v4880 = vpack.c.b16 %v3340, %v3336
    %v4881 = vpack.c.b16 %v3341, %v3337
    %v4882 = vpack.c.b16 %v3342, %v3338
    %v4883 = vpack.c.b16 %v3347, %v3343
    %v4884 = vpack.c.b16 %v3348, %v3344
    %v4885 = vpack.c.b16 %v3349, %v3345
    %v4886 = vpack.c.b16 %v3350, %v3346
    %v4887 = vpack.c.b16 %v3355, %v3351
    %v4888 = vpack.c.b16 %v3356, %v3352
    %v4889 = vpack.c.b16 %v3357, %v3353
    %v4890 = vpack.c.b16 %v3358, %v3354
    %v4891 = vpack.c.b16 %v3363, %v3359
    %v4892 = vpack.c.b16 %v3364, %v3360
    %v4893 = vpack.c.b16 %v3365, %v3361
    %v4894 = vpack.c.b16 %v3366, %v3362
    %v4895 = vpack.c.b16 %v3371, %v3367
    %v4896 = vpack.c.b16 %v3372, %v3368
    %v4897 = vpack.c.b16 %v3373, %v3369
    %v4898 = vpack.c.b16 %v3374, %v3370
    %v4899 = vpack.c.b16 %v3379, %v3375
    %v4900 = vpack.c.b16 %v3380, %v3376
    %v4901 = vpack.c.b16 %v3381, %v3377
    %v4902 = vpack.c.b16 %v3382, %v3378
    %v4903 = vpack.c.b16 %v3387, %v3383
    %v4904 = vpack.c.b16 %v3388, %v3384
    %v4905 = vpack.c.b16 %v3389, %v3385
    %v4906 = vpack.c.b16 %v3390, %v3386
    %v4907 = vpack.c.b16 %v3395, %v3391
    %v4908 = vpack.c.b16 %v3396, %v3392
    %v4909 = vpack.c.b16 %v3397, %v3393
    %v4910 = vpack.c.b16 %v3398, %v3394
    %v4911 = vpack.c.b16 %v3403, %v3399
    %v4912 = vpack.c.b16 %v3404, %v3400
    %v4913 = vpack.c.b16 %v3405, %v3401
    %v4914 = vpack.c.b16 %v3406, %v3402
    %v4915 = vpack.c.b16 %v3411, %v3407
    %v4916 = vpack.c.b16 %v3412, %v3408
    %v4917 = vpack.c.b16 %v3413, %v3409
    %v4918 = vpack.c.b16 %v3414, %v3410
    %v4919 = vpack.c.b16 %v3419, %v3415
    %v4920 = vpack.c.b16 %v3420, %v3416
    %v4921 = vpack.c.b16 %v3421, %v3417
    %v4922 = vpack.c.b16 %v3422, %v3418
    %v4923 = vpack.c.b16 %v3427, %v3423
    %v4924 = vpack.c.b16 %v3428, %v3424
    %v4925 = vpack.c.b16 %v3429, %v3425
    %v4926 = vpack.c.b16 %v3430, %v3426
    %v4927 = vpack.c.b16 %v3435, %v3431
    %v4928 = vpack.c.b16 %v3436, %v3432
    %v4929 = vpack.c.b16 %v3437, %v3433
    %v4930 = vpack.c.b16 %v3438, %v3434
    %v4931 = vpack.c.b16 %v3443, %v3439
    %v4932 = vpack.c.b16 %v3444, %v3440
    %v4933 = vpack.c.b16 %v3445, %v3441
    %v4934 = vpack.c.b16 %v3446, %v3442
    %v4935 = vpack.c.b16 %v3451, %v3447
    %v4936 = vpack.c.b16 %v3452, %v3448
    %v4937 = vpack.c.b16 %v3453, %v3449
    %v4938 = vpack.c.b16 %v3454, %v3450
    %v4939 = vpack.c.b16 %v3459, %v3455
    %v4940 = vpack.c.b16 %v3460, %v3456
    %v4941 = vpack.c.b16 %v3461, %v3457
    %v4942 = vpack.c.b16 %v3462, %v3458
    %v4943 = vpack.c.b16 %v3467, %v3463
    %v4944 = vpack.c.b16 %v3468, %v3464
    %v4945 = vpack.c.b16 %v3469, %v3465
    %v4946 = vpack.c.b16 %v3470, %v3466
    %v4947 = vpack.c.b16 %v3475, %v3471
    %v4948 = vpack.c.b16 %v3476, %v3472
    %v4949 = vpack.c.b16 %v3477, %v3473
    %v4950 = vpack.c.b16 %v3478, %v3474
    %v4951 = vpack.c.b16 %v3483, %v3479
    %v4952 = vpack.c.b16 %v3484, %v3480
    %v4953 = vpack.c.b16 %v3485, %v3481
    %v4954 = vpack.c.b16 %v3486, %v3482
    %v4955 = vpack.c.b16 %v3491, %v3487
    %v4956 = vpack.c.b16 %v3492, %v3488
    %v4957 = vpack.c.b16 %v3493, %v3489
    %v4958 = vpack.c.b16 %v3494, %v3490
    %v4959 = vpack.c.b16 %v3499, %v3495
    %v4960 = vpack.c.b16 %v3500, %v3496
    %v4961 = vpack.c.b16 %v3501, %v3497
    %v4962 = vpack.c.b16 %v3502, %v3498
    %v4963 = vpack.c.b16 %v3507, %v3503
    %v4964 = vpack.c.b16 %v3508, %v3504
    %v4965 = vpack.c.b16 %v3509, %v3505
    %v4966 = vpack.c.b16 %v3510, %v3506
    %v4967 = vpack.c.b16 %v3515, %v3511
    %v4968 = vpack.c.b16 %v3516, %v3512
    %v4969 = vpack.c.b16 %v3517, %v3513
    %v4970 = vpack.c.b16 %v3518, %v3514
    %v4971 = vpack.c.b16 %v3523, %v3519
    %v4972 = vpack.c.b16 %v3524, %v3520
    %v4973 = vpack.c.b16 %v3525, %v3521
    %v4974 = vpack.c.b16 %v3526, %v3522
    %v4975 = vpack.c.b16 %v3531, %v3527
    %v4976 = vpack.c.b16 %v3532, %v3528
    %v4977 = vpack.c.b16 %v3533, %v3529
    %v4978 = vpack.c.b16 %v3534, %v3530
    %v4979 = vpack.c.b16 %v3539, %v3535
    %v4980 = vpack.c.b16 %v3540, %v3536
    %v4981 = vpack.c.b16 %v3541, %v3537
    %v4982 = vpack.c.b16 %v3542, %v3538
    %v4983 = vpack.c.b16 %v3547, %v3543
    %v4984 = vpack.c.b16 %v3548, %v3544
    %v4985 = vpack.c.b16 %v3549, %v3545
    %v4986 = vpack.c.b16 %v3550, %v3546
    %v4987 = vpack.c.b16 %v3555, %v3551
    %v4988 = vpack.c.b16 %v3556, %v3552
    %v4989 = vpack.c.b16 %v3557, %v3553
    %v4990 = vpack.c.b16 %v3558, %v3554
    %v4991 = vpack.c.b16 %v3563, %v3559
    %v4992 = vpack.c.b16 %v3564, %v3560
    %v4993 = vpack.c.b16 %v3565, %v3561
    %v4994 = vpack.c.b16 %v3566, %v3562
    %v4995 = vpack.c.b16 %v3571, %v3567
    %v4996 = vpack.c.b16 %v3572, %v3568
    %v4997 = vpack.c.b16 %v3573, %v3569
    %v4998 = vpack.c.b16 %v3574, %v3570
    %v4999 = vpack.c.b16 %v3579, %v3575
    %v5000 = vpack.c.b16 %v3580, %v3576
    %v5001 = vpack.c.b16 %v3581, %v3577
    %v5002 = vpack.c.b16 %v3582, %v3578
    %v5003 = vpack.c.b16 %v3587, %v3583
    %v5004 = vpack.c.b16 %v3588, %v3584
    %v5005 = vpack.c.b16 %v3589, %v3585
    %v5006 = vpack.c.b16 %v3590, %v3586
    %v5007 = vpack.c.b16 %v3595, %v3591
    %v5008 = vpack.c.b16 %v3596, %v3592
    %v5009 = vpack.c.b16 %v3597, %v3593
    %v5010 = vpack.c.b16 %v3598, %v3594
    %v5011 = vpack.c.b16 %v3603, %v3599
    %v5012 = vpack.c.b16 %v3604, %v3600
    %v5013 = vpack.c.b16 %v3605, %v3601
    %v5014 = vpack.c.b16 %v3606, %v3602
    %v5015 = vpack.c.b16 %v3611, %v3607
    %v5016 = vpack.c.b16 %v3612, %v3608
    %v5017 = vpack.c.b16 %v3613, %v3609
    %v5018 = vpack.c.b16 %v3614, %v3610
    %v5019 = vpack.c.b16 %v3619, %v3615
    %v5020 = vpack.c.b16 %v3620, %v3616
    %v5021 = vpack.c.b16 %v3621, %v3617
    %v5022 = vpack.c.b16 %v3622, %v3618
    %v5023 = vpack.c.b16 %v3627, %v3623
    %v5024 = vpack.c.b16 %v3628, %v3624
    %v5025 = vpack.c.b16 %v3629, %v3625
    %v5026 = vpack.c.b16 %v3630, %v3626
    %v5027 = vpack.c.b16 %v3635, %v3631
    %v5028 = vpack.c.b16 %v3636, %v3632
    %v5029 = vpack.c.b16 %v3637, %v3633
    %v5030 = vpack.c.b16 %v3638, %v3634
    %v5031 = vpack.c.b16 %v3643, %v3639
    %v5032 = vpack.c.b16 %v3644, %v3640
    %v5033 = vpack.c.b16 %v3645, %v3641
    %v5034 = vpack.c.b16 %v3646, %v3642
    %v5035 = vpack.c.b16 %v3651, %v3647
    %v5036 = vpack.c.b16 %v3652, %v3648
    %v5037 = vpack.c.b16 %v3653, %v3649
    %v5038 = vpack.c.b16 %v3654, %v3650
    %v5039 = vpack.c.b16 %v3659, %v3655
    %v5040 = vpack.c.b16 %v3660, %v3656
    %v5041 = vpack.c.b16 %v3661, %v3657
    %v5042 = vpack.c.b16 %v3662, %v3658
    %v5043 = vpack.c.b16 %v3667, %v3663
    %v5044 = vpack.c.b16 %v3668, %v3664
    %v5045 = vpack.c.b16 %v3669, %v3665
    %v5046 = vpack.c.b16 %v3670, %v3666
    %v5047 = vpack.c.b16 %v3675, %v3671
    %v5048 = vpack.c.b16 %v3676, %v3672
    %v5049 = vpack.c.b16 %v3677, %v3673
    %v5050 = vpack.c.b16 %v3678, %v3674
    %v5051 = vpack.c.b16 %v3683, %v3679
    %v5052 = vpack.c.b16 %v3684, %v3680
    %v5053 = vpack.c.b16 %v3685, %v3681
    %v5054 = vpack.c.b16 %v3686, %v3682
    %v5055 = vpack.c.b16 %v3691, %v3687
    %v5056 = vpack.c.b16 %v3692, %v3688
    %v5057 = vpack.c.b16 %v3693, %v3689
    %v5058 = vpack.c.b16 %v3694, %v3690
    %v5059 = vpack.c.b16 %v3699, %v3695
    %v5060 = vpack.c.b16 %v3700, %v3696
    %v5061 = vpack.c.b16 %v3701, %v3697
    %v5062 = vpack.c.b16 %v3702, %v3698
    %v5063 = vpack.c.b16 %v3707, %v3703
    %v5064 = vpack.c.b16 %v3708, %v3704
    %v5065 = vpack.c.b16 %v3709, %v3705
    %v5066 = vpack.c.b16 %v3710, %v3706
    %v5067 = vpack.c.b16 %v3715, %v3711
    %v5068 = vpack.c.b16 %v3716, %v3712
    %v5069 = vpack.c.b16 %v3717, %v3713
    %v5070 = vpack.c.b16 %v3718, %v3714
    %v5071 = vpack.c.b16 %v3723, %v3719
    %v5072 = vpack.c.b16 %v3724, %v3720
    %v5073 = vpack.c.b16 %v3725, %v3721
    %v5074 = vpack.c.b16 %v3726, %v3722
    %v5075 = vpack.c.b16 %v3731, %v3727
    %v5076 = vpack.c.b16 %v3732, %v3728
    %v5077 = vpack.c.b16 %v3733, %v3729
    %v5078 = vpack.c.b16 %v3734, %v3730
    %v5079 = vpack.c.b16 %v3739, %v3735
    %v5080 = vpack.c.b16 %v3740, %v3736
    %v5081 = vpack.c.b16 %v3741, %v3737
    %v5082 = vpack.c.b16 %v3742, %v3738
    %v5083 = vpack.c.b16 %v3747, %v3743
    %v5084 = vpack.c.b16 %v3748, %v3744
    %v5085 = vpack.c.b16 %v3749, %v3745
    %v5086 = vpack.c.b16 %v3750, %v3746
    %v5087 = vpack.c.b16 %v3755, %v3751
    %v5088 = vpack.c.b16 %v3756, %v3752
    %v5089 = vpack.c.b16 %v3757, %v3753
    %v5090 = vpack.c.b16 %v3758, %v3754
    %v5091 = vpack.c.b16 %v3763, %v3759
    %v5092 = vpack.c.b16 %v3764, %v3760
    %v5093 = vpack.c.b16 %v3765, %v3761
    %v5094 = vpack.c.b16 %v3766, %v3762
    %v5095 = vpack.c.b16 %v3771, %v3767
    %v5096 = vpack.c.b16 %v3772, %v3768
    %v5097 = vpack.c.b16 %v3773, %v3769
    %v5098 = vpack.c.b16 %v3774, %v3770
    %v5099 = vpack.c.b16 %v3779, %v3775
    %v5100 = vpack.c.b16 %v3780, %v3776
    %v5101 = vpack.c.b16 %v3781, %v3777
    %v5102 = vpack.c.b16 %v3782, %v3778
    %v5103 = vpack.c.b16 %v3787, %v3783
    %v5104 = vpack.c.b16 %v3788, %v3784
    %v5105 = vpack.c.b16 %v3789, %v3785
    %v5106 = vpack.c.b16 %v3790, %v3786
    %v5107 = vpack.c.b16 %v3795, %v3791
    %v5108 = vpack.c.b16 %v3796, %v3792
    %v5109 = vpack.c.b16 %v3797, %v3793
    %v5110 = vpack.c.b16 %v3798, %v3794
    %v5111 = vpack.c.b16 %v3803, %v3799
    %v5112 = vpack.c.b16 %v3804, %v3800
    %v5113 = vpack.c.b16 %v3805, %v3801
    %v5114 = vpack.c.b16 %v3806, %v3802
    %v5115 = vpack.c.b16 %v3811, %v3807
    %v5116 = vpack.c.b16 %v3812, %v3808
    %v5117 = vpack.c.b16 %v3813, %v3809
    %v5118 = vpack.c.b16 %v3814, %v3810
    %v5119 = vpack.c.b16 %v3819, %v3815
    %v5120 = vpack.c.b16 %v3820, %v3816
    %v5121 = vpack.c.b16 %v3821, %v3817
    %v5122 = vpack.c.b16 %v3822, %v3818
    %v5123 = vpack.c.b16 %v3827, %v3823
    %v5124 = vpack.c.b16 %v3828, %v3824
    %v5125 = vpack.c.b16 %v3829, %v3825
    %v5126 = vpack.c.b16 %v3830, %v3826
    %v5127 = vpack.c.b16 %v3835, %v3831
    %v5128 = vpack.c.b16 %v3836, %v3832
    %v5129 = vpack.c.b16 %v3837, %v3833
    %v5130 = vpack.c.b16 %v3838, %v3834
    %v5131 = vpack.c.b16 %v3843, %v3839
    %v5132 = vpack.c.b16 %v3844, %v3840
    %v5133 = vpack.c.b16 %v3845, %v3841
    %v5134 = vpack.c.b16 %v3846, %v3842
    %v5135 = vpack.c.b16 %v3851, %v3847
    %v5136 = vpack.c.b16 %v3852, %v3848
    %v5137 = vpack.c.b16 %v3853, %v3849
    %v5138 = vpack.c.b16 %v3854, %v3850
    %v5139 = vpack.c.b16 %v3859, %v3855
    %v5140 = vpack.c.b16 %v3860, %v3856
    %v5141 = vpack.c.b16 %v3861, %v3857
    %v5142 = vpack.c.b16 %v3862, %v3858
    %v5143 = vpack.c.b16 %v3867, %v3863
    %v5144 = vpack.c.b16 %v3868, %v3864
    %v5145 = vpack.c.b16 %v3869, %v3865
    %v5146 = vpack.c.b16 %v3870, %v3866
    %v5147 = vpack.c.b16 %v3875, %v3871
    %v5148 = vpack.c.b16 %v3876, %v3872
    %v5149 = vpack.c.b16 %v3877, %v3873
    %v5150 = vpack.c.b16 %v3878, %v3874
    %v5151 = vpack.c.b16 %v3883, %v3879
    %v5152 = vpack.c.b16 %v3884, %v3880
    %v5153 = vpack.c.b16 %v3885, %v3881
    %v5154 = vpack.c.b16 %v3886, %v3882
    %v5155 = vpack.c.b16 %v3891, %v3887
    %v5156 = vpack.c.b16 %v3892, %v3888
    %v5157 = vpack.c.b16 %v3893, %v3889
    %v5158 = vpack.c.b16 %v3894, %v3890
    %v5159 = vpack.c.b16 %v3899, %v3895
    %v5160 = vpack.c.b16 %v3900, %v3896
    %v5161 = vpack.c.b16 %v3901, %v3897
    %v5162 = vpack.c.b16 %v3902, %v3898
    %v5163 = vpack.c.b16 %v3907, %v3903
    %v5164 = vpack.c.b16 %v3908, %v3904
    %v5165 = vpack.c.b16 %v3909, %v3905
    %v5166 = vpack.c.b16 %v3910, %v3906
    %v5167 = vpack.c.b16 %v3915, %v3911
    %v5168 = vpack.c.b16 %v3916, %v3912
    %v5169 = vpack.c.b16 %v3917, %v3913
    %v5170 = vpack.c.b16 %v3918, %v3914
    %v5171 = vpack.c.b16 %v3923, %v3919
    %v5172 = vpack.c.b16 %v3924, %v3920
    %v5173 = vpack.c.b16 %v3925, %v3921
    %v5174 = vpack.c.b16 %v3926, %v3922
    %v5175 = vpack.c.b16 %v3931, %v3927
    %v5176 = vpack.c.b16 %v3932, %v3928
    %v5177 = vpack.c.b16 %v3933, %v3929
    %v5178 = vpack.c.b16 %v3934, %v3930
    %v5179 = vpack.c.b16 %v3939, %v3935
    %v5180 = vpack.c.b16 %v3940, %v3936
    %v5181 = vpack.c.b16 %v3941, %v3937
    %v5182 = vpack.c.b16 %v3942, %v3938
    %v5183 = vpack.c.b16 %v3947, %v3943
    %v5184 = vpack.c.b16 %v3948, %v3944
    %v5185 = vpack.c.b16 %v3949, %v3945
    %v5186 = vpack.c.b16 %v3950, %v3946
    %v5187 = vpack.c.b16 %v3955, %v3951
    %v5188 = vpack.c.b16 %v3956, %v3952
    %v5189 = vpack.c.b16 %v3957, %v3953
    %v5190 = vpack.c.b16 %v3958, %v3954
    %v5191 = vpack.c.b16 %v3963, %v3959
    %v5192 = vpack.c.b16 %v3964, %v3960
    %v5193 = vpack.c.b16 %v3965, %v3961
    %v5194 = vpack.c.b16 %v3966, %v3962
    %v5195 = vpack.c.b16 %v3971, %v3967
    %v5196 = vpack.c.b16 %v3972, %v3968
    %v5197 = vpack.c.b16 %v3973, %v3969
    %v5198 = vpack.c.b16 %v3974, %v3970
    %v5199 = vpack.c.b16 %v3979, %v3975
    %v5200 = vpack.c.b16 %v3980, %v3976
    %v5201 = vpack.c.b16 %v3981, %v3977
    %v5202 = vpack.c.b16 %v3982, %v3978
    %v5203 = vpack.c.b16 %v3987, %v3983
    %v5204 = vpack.c.b16 %v3988, %v3984
    %v5205 = vpack.c.b16 %v3989, %v3985
    %v5206 = vpack.c.b16 %v3990, %v3986
    %v5207 = vpack.c.b16 %v3995, %v3991
    %v5208 = vpack.c.b16 %v3996, %v3992
    %v5209 = vpack.c.b16 %v3997, %v3993
    %v5210 = vpack.c.b16 %v3998, %v3994
    %v5211 = vpack.c.b16 %v4003, %v3999
    %v5212 = vpack.c.b16 %v4004, %v4000
    %v5213 = vpack.c.b16 %v4005, %v4001
    %v5214 = vpack.c.b16 %v4006, %v4002
    %v5215 = vpack.c.b16 %v4011, %v4007
    %v5216 = vpack.c.b16 %v4012, %v4008
    %v5217 = vpack.c.b16 %v4013, %v4009
    %v5218 = vpack.c.b16 %v4014, %v4010
    %v5219 = vpack.c.b16 %v4019, %v4015
    %v5220 = vpack.c.b16 %v4020, %v4016
    %v5221 = vpack.c.b16 %v4021, %v4017
    %v5222 = vpack.c.b16 %v4022, %v4018
    %v5223 = vpack.c.b16 %v4027, %v4023
    %v5224 = vpack.c.b16 %v4028, %v4024
    %v5225 = vpack.c.b16 %v4029, %v4025
    %v5226 = vpack.c.b16 %v4030, %v4026
    %v5227 = vpack.c.b16 %v4035, %v4031
    %v5228 = vpack.c.b16 %v4036, %v4032
    %v5229 = vpack.c.b16 %v4037, %v4033
    %v5230 = vpack.c.b16 %v4038, %v4034
    %v5231 = vpack.c.b16 %v4043, %v4039
    %v5232 = vpack.c.b16 %v4044, %v4040
    %v5233 = vpack.c.b16 %v4045, %v4041
    %v5234 = vpack.c.b16 %v4046, %v4042
    %v5235 = vpack.c.b16 %v4051, %v4047
    %v5236 = vpack.c.b16 %v4052, %v4048
    %v5237 = vpack.c.b16 %v4053, %v4049
    %v5238 = vpack.c.b16 %v4054, %v4050
    %v5239 = vpack.c.b16 %v4059, %v4055
    %v5240 = vpack.c.b16 %v4060, %v4056
    %v5241 = vpack.c.b16 %v4061, %v4057
    %v5242 = vpack.c.b16 %v4062, %v4058
    %v5243 = vpack.c.b16 %v4067, %v4063
    %v5244 = vpack.c.b16 %v4068, %v4064
    %v5245 = vpack.c.b16 %v4069, %v4065
    %v5246 = vpack.c.b16 %v4070, %v4066
    %v5247 = vpack.c.b16 %v4075, %v4071
    %v5248 = vpack.c.b16 %v4076, %v4072
    %v5249 = vpack.c.b16 %v4077, %v4073
    %v5250 = vpack.c.b16 %v4078, %v4074
    %v5251 = vpack.c.b16 %v4083, %v4079
    %v5252 = vpack.c.b16 %v4084, %v4080
    %v5253 = vpack.c.b16 %v4085, %v4081
    %v5254 = vpack.c.b16 %v4086, %v4082
    %v5255 = vpack.c.b16 %v4091, %v4087
    %v5256 = vpack.c.b16 %v4092, %v4088
    %v5257 = vpack.c.b16 %v4093, %v4089
    %v5258 = vpack.c.b16 %v4094, %v4090
    %v5259 = vpack.c.b16 %v4099, %v4095
    %v5260 = vpack.c.b16 %v4100, %v4096
    %v5261 = vpack.c.b16 %v4101, %v4097
    %v5262 = vpack.c.b16 %v4102, %v4098
    %v5263 = vpack.c.b16 %v4107, %v4103
    %v5264 = vpack.c.b16 %v4108, %v4104
    %v5265 = vpack.c.b16 %v4109, %v4105
    %v5266 = vpack.c.b16 %v4110, %v4106
    %v5267 = vpack.c.b16 %v4115, %v4111
    %v5268 = vpack.c.b16 %v4116, %v4112
    %v5269 = vpack.c.b16 %v4117, %v4113
    %v5270 = vpack.c.b16 %v4118, %v4114
    %v5271 = vpack.c.b16 %v4123, %v4119
    %v5272 = vpack.c.b16 %v4124, %v4120
    %v5273 = vpack.c.b16 %v4125, %v4121
    %v5274 = vpack.c.b16 %v4126, %v4122
    %v5275 = vpack.c.b16 %v4131, %v4127
    %v5276 = vpack.c.b16 %v4132, %v4128
    %v5277 = vpack.c.b16 %v4133, %v4129
    %v5278 = vpack.c.b16 %v4134, %v4130
    %v5279 = vpack.c.b16 %v4139, %v4135
    %v5280 = vpack.c.b16 %v4140, %v4136
    %v5281 = vpack.c.b16 %v4141, %v4137
    %v5282 = vpack.c.b16 %v4142, %v4138
    %v5283 = vpack.c.b16 %v4147, %v4143
    %v5284 = vpack.c.b16 %v4148, %v4144
    %v5285 = vpack.c.b16 %v4149, %v4145
    %v5286 = vpack.c.b16 %v4150, %v4146
    %v5287 = vpack.c.b16 %v4155, %v4151
    %v5288 = vpack.c.b16 %v4156, %v4152
    %v5289 = vpack.c.b16 %v4157, %v4153
    %v5290 = vpack.c.b16 %v4158, %v4154
    %v5291 = vpack.c.b16 %v4163, %v4159
    %v5292 = vpack.c.b16 %v4164, %v4160
    %v5293 = vpack.c.b16 %v4165, %v4161
    %v5294 = vpack.c.b16 %v4166, %v4162
    %v5295 = vpack.c.b16 %v4171, %v4167
    %v5296 = vpack.c.b16 %v4172, %v4168
    %v5297 = vpack.c.b16 %v4173, %v4169
    %v5298 = vpack.c.b16 %v4174, %v4170
    %v5299 = vpack.c.b16 %v4179, %v4175
    %v5300 = vpack.c.b16 %v4180, %v4176
    %v5301 = vpack.c.b16 %v4181, %v4177
    %v5302 = vpack.c.b16 %v4182, %v4178
    %v5303 = vpack.c.b16 %v4187, %v4183
    %v5304 = vpack.c.b16 %v4188, %v4184
    %v5305 = vpack.c.b16 %v4189, %v4185
    %v5306 = vpack.c.b16 %v4190, %v4186
    %v5307 = vpack.c.b16 %v4195, %v4191
    %v5308 = vpack.c.b16 %v4196, %v4192
    %v5309 = vpack.c.b16 %v4197, %v4193
    %v5310 = vpack.c.b16 %v4198, %v4194
    %v5311 = vpack.c.b16 %v4203, %v4199
    %v5312 = vpack.c.b16 %v4204, %v4200
    %v5313 = vpack.c.b16 %v4205, %v4201
    %v5314 = vpack.c.b16 %v4206, %v4202
    %v5315 = vpack.c.b16 %v4211, %v4207
    %v5316 = vpack.c.b16 %v4212, %v4208
    %v5317 = vpack.c.b16 %v4213, %v4209
    %v5318 = vpack.c.b16 %v4214, %v4210
    %v5319 = vpack.c.b16 %v4219, %v4215
    %v5320 = vpack.c.b16 %v4220, %v4216
    %v5321 = vpack.c.b16 %v4221, %v4217
    %v5322 = vpack.c.b16 %v4222, %v4218
    %v5323 = vpack.c.b16 %v4227, %v4223
    %v5324 = vpack.c.b16 %v4228, %v4224
    %v5325 = vpack.c.b16 %v4229, %v4225
    %v5326 = vpack.c.b16 %v4230, %v4226
    %v5327 = vpack.c.b16 %v4235, %v4231
    %v5328 = vpack.c.b16 %v4236, %v4232
    %v5329 = vpack.c.b16 %v4237, %v4233
    %v5330 = vpack.c.b16 %v4238, %v4234
    %v5331 = vpack.c.b16 %v4243, %v4239
    %v5332 = vpack.c.b16 %v4244, %v4240
    %v5333 = vpack.c.b16 %v4245, %v4241
    %v5334 = vpack.c.b16 %v4246, %v4242
    %v5335 = vpack.c.b16 %v4251, %v4247
    %v5336 = vpack.c.b16 %v4252, %v4248
    %v5337 = vpack.c.b16 %v4253, %v4249
    %v5338 = vpack.c.b16 %v4254, %v4250
    %v5339 = vpack.c.b16 %v4259, %v4255
    %v5340 = vpack.c.b16 %v4260, %v4256
    %v5341 = vpack.c.b16 %v4261, %v4257
    %v5342 = vpack.c.b16 %v4262, %v4258
    %v5343 = vpack.c.b16 %v4267, %v4263
    %v5344 = vpack.c.b16 %v4268, %v4264
    %v5345 = vpack.c.b16 %v4269, %v4265
    %v5346 = vpack.c.b16 %v4270, %v4266
    %v5347 = vpack.c.b16 %v4275, %v4271
    %v5348 = vpack.c.b16 %v4276, %v4272
    %v5349 = vpack.c.b16 %v4277, %v4273
    %v5350 = vpack.c.b16 %v4278, %v4274
    %v5351 = vpack.c.b16 %v4283, %v4279
    %v5352 = vpack.c.b16 %v4284, %v4280
    %v5353 = vpack.c.b16 %v4285, %v4281
    %v5354 = vpack.c.b16 %v4286, %v4282
    %v5355 = vpack.c.b16 %v4291, %v4287
    %v5356 = vpack.c.b16 %v4292, %v4288
    %v5357 = vpack.c.b16 %v4293, %v4289
    %v5358 = vpack.c.b16 %v4294, %v4290
    %v5359 = vpack.c.b16 %v4299, %v4295
    %v5360 = vpack.c.b16 %v4300, %v4296
    %v5361 = vpack.c.b16 %v4301, %v4297
    %v5362 = vpack.c.b16 %v4302, %v4298
    %v5363 = vpack.c.b16 %v4307, %v4303
    %v5364 = vpack.c.b16 %v4308, %v4304
    %v5365 = vpack.c.b16 %v4309, %v4305
    %v5366 = vpack.c.b16 %v4310, %v4306
    %v5367 = vpack.c.b16 %v4315, %v4311
    %v5368 = vpack.c.b16 %v4316, %v4312
    %v5369 = vpack.c.b16 %v4317, %v4313
    %v5370 = vpack.c.b16 %v4318, %v4314
    %v5371 = vpack.c.b16 %v4323, %v4319
    %v5372 = vpack.c.b16 %v4324, %v4320
    %v5373 = vpack.c.b16 %v4325, %v4321
    %v5374 = vpack.c.b16 %v4326, %v4322
    %v5375 = vpack.c.b16 %v4331, %v4327
    %v5376 = vpack.c.b16 %v4332, %v4328
    %v5377 = vpack.c.b16 %v4333, %v4329
    %v5378 = vpack.c.b16 %v4334, %v4330
    %v5379 = vpack.c.b16 %v4339, %v4335
    %v5380 = vpack.c.b16 %v4340, %v4336
    %v5381 = vpack.c.b16 %v4341, %v4337
    %v5382 = vpack.c.b16 %v4342, %v4338
    %v5383 = vpack.c.b16 %v4347, %v4343
    %v5384 = vpack.c.b16 %v4348, %v4344
    %v5385 = vpack.c.b16 %v4349, %v4345
    %v5386 = vpack.c.b16 %v4350, %v4346
    %v5387 = vpack.c.b16 %v4355, %v4351
    %v5388 = vpack.c.b16 %v4356, %v4352
    %v5389 = vpack.c.b16 %v4357, %v4353
    %v5390 = vpack.c.b16 %v4358, %v4354
    %v5391 = vpack.c.b16 %v4363, %v4359
    %v5392 = vpack.c.b16 %v4364, %v4360
    %v5393 = vpack.c.b16 %v4365, %v4361
    %v5394 = vpack.c.b16 %v4366, %v4362
    %v5395 = vpack.c.b16 %v4371, %v4367
    %v5396 = vpack.c.b16 %v4372, %v4368
    %v5397 = vpack.c.b16 %v4373, %v4369
    %v5398 = vpack.c.b16 %v4374, %v4370
    %6423 = vmatprep.subr.bf16.mxu0 %v4404
    %6424 = vmatpush1.bf16.msra.mxu0 %v4403
    %6425 = vmatprep.subr.bf16.mxu0 %v4400
    %6426 = vmatpush1.bf16.msra.mxu0 %v4399
    %6427 = vmatprep.subr.bf16.mxu0 %v4396
    %6428 = vmatpush1.bf16.msra.mxu0 %v4395
    %6429 = vmatprep.subr.bf16.mxu0 %v4392
    %6430 = vmatpush1.bf16.msra.mxu0 %v4391
    %6431 = vmatprep.subr.bf16.mxu0 %v4388
    %6432 = vmatpush1.bf16.msra.mxu0 %v4387
    %6433 = vmatprep.subr.bf16.mxu0 %v4384
    %6434 = vmatpush1.bf16.msra.mxu0 %v4383
    %6435 = vmatprep.subr.bf16.mxu0 %v4380
    %6436 = vmatpush1.bf16.msra.mxu0 %v4379
    %6437 = vmatprep.subr.bf16.mxu0 %v4376
    %6438 = vmatpush1.bf16.msra.mxu0 %v4375
    %6439 = vmatprep.subr.bf16.mxu0 %v4436
    %6440 = vmatpush2.bf16.msra.mxu0 %v4435
    %6441 = vmatprep.subr.bf16.mxu0 %v4432
    %6442 = vmatpush2.bf16.msra.mxu0 %v4431
    %6443 = vmatprep.subr.bf16.mxu0 %v4428
    %6444 = vmatpush2.bf16.msra.mxu0 %v4427
    %6445 = vmatprep.subr.bf16.mxu0 %v4424
    %6446 = vmatpush2.bf16.msra.mxu0 %v4423
    %6447 = vmatprep.subr.bf16.mxu0 %v4420
    %6448 = vmatpush2.bf16.msra.mxu0 %v4419
    %6449 = vmatprep.subr.bf16.mxu0 %v4416
    %6450 = vmatpush2.bf16.msra.mxu0 %v4415
    %6451 = vmatprep.subr.bf16.mxu0 %v4412
    %6452 = vmatpush2.bf16.msra.mxu0 %v4411
    %6453 = vmatprep.subr.bf16.mxu0 %v4408
    %6454 = vmatpush2.bf16.msra.mxu0 %v4407
    %6455 = vmatprep.mubr.bf16.mxu0 %v1240
    %6456 = vmatmul.mubr.bf16.gmra.mxu0 %v1239
    %v6457 = vpop.f32.mrf.mxu0
    %v6458 = vadd.f32 %v1126, %v6457
    %v6459 = vpop.f32.mrf.mxu0
    %v6460 = vadd.f32 %v1130, %v6459
    %v6461 = vpop.f32.mrf.mxu0
    %v6462 = vadd.f32 %v1126, %v6461
    %v6463 = vpop.f32.mrf.mxu0
    %v6464 = vadd.f32 %v1130, %v6463
    %6465 = vdwg.mxu0
    %6466 = vmatprep.subr.bf16.mxu0 %v4468
    %6467 = vmatpush1.bf16.msra.mxu0 %v4467
    %6468 = vmatprep.subr.bf16.mxu0 %v4464
    %6469 = vmatpush1.bf16.msra.mxu0 %v4463
    %6470 = vmatprep.subr.bf16.mxu0 %v4460
    %6471 = vmatpush1.bf16.msra.mxu0 %v4459
    %6472 = vmatprep.subr.bf16.mxu0 %v4456
    %6473 = vmatpush1.bf16.msra.mxu0 %v4455
    %6474 = vmatprep.subr.bf16.mxu0 %v4452
    %6475 = vmatpush1.bf16.msra.mxu0 %v4451
    %6476 = vmatprep.subr.bf16.mxu0 %v4448
    %6477 = vmatpush1.bf16.msra.mxu0 %v4447
    %6478 = vmatprep.subr.bf16.mxu0 %v4444
    %6479 = vmatpush1.bf16.msra.mxu0 %v4443
    %6480 = vmatprep.subr.bf16.mxu0 %v4440
    %6481 = vmatpush1.bf16.msra.mxu0 %v4439
    %6482 = vmatprep.subr.bf16.mxu0 %v4500
    %6483 = vmatpush2.bf16.msra.mxu0 %v4499
    %6484 = vmatprep.subr.bf16.mxu0 %v4496
    %6485 = vmatpush2.bf16.msra.mxu0 %v4495
    %6486 = vmatprep.subr.bf16.mxu0 %v4492
    %6487 = vmatpush2.bf16.msra.mxu0 %v4491
    %6488 = vmatprep.subr.bf16.mxu0 %v4488
    %6489 = vmatpush2.bf16.msra.mxu0 %v4487
    %6490 = vmatprep.subr.bf16.mxu0 %v4484
    %6491 = vmatpush2.bf16.msra.mxu0 %v4483
    %6492 = vmatprep.subr.bf16.mxu0 %v4480
    %6493 = vmatpush2.bf16.msra.mxu0 %v4479
    %6494 = vmatprep.subr.bf16.mxu0 %v4476
    %6495 = vmatpush2.bf16.msra.mxu0 %v4475
    %6496 = vmatprep.subr.bf16.mxu0 %v4472
    %6497 = vmatpush2.bf16.msra.mxu0 %v4471
    %6498 = vmatprep.mubr.bf16.mxu0 %v1242
    %6499 = vmatmul.mubr.bf16.gmra.mxu0 %v1241
    %v6500 = vpop.f32.mrf.mxu0
    %v6501 = vadd.f32 %v6458, %v6500
    %v6502 = vpop.f32.mrf.mxu0
    %v6503 = vadd.f32 %v6460, %v6502
    %v6504 = vpop.f32.mrf.mxu0
    %v6505 = vadd.f32 %v6462, %v6504
    %v6506 = vpop.f32.mrf.mxu0
    %v6507 = vadd.f32 %v6464, %v6506
    %6508 = vdwg.mxu0
    %6509 = vmatprep.subr.bf16.mxu0 %v4532
    %6510 = vmatpush1.bf16.msra.mxu0 %v4531
    %6511 = vmatprep.subr.bf16.mxu0 %v4528
    %6512 = vmatpush1.bf16.msra.mxu0 %v4527
    %6513 = vmatprep.subr.bf16.mxu0 %v4524
    %6514 = vmatpush1.bf16.msra.mxu0 %v4523
    %6515 = vmatprep.subr.bf16.mxu0 %v4520
    %6516 = vmatpush1.bf16.msra.mxu0 %v4519
    %6517 = vmatprep.subr.bf16.mxu0 %v4516
    %6518 = vmatpush1.bf16.msra.mxu0 %v4515
    %6519 = vmatprep.subr.bf16.mxu0 %v4512
    %6520 = vmatpush1.bf16.msra.mxu0 %v4511
    %6521 = vmatprep.subr.bf16.mxu0 %v4508
    %6522 = vmatpush1.bf16.msra.mxu0 %v4507
    %6523 = vmatprep.subr.bf16.mxu0 %v4504
    %6524 = vmatpush1.bf16.msra.mxu0 %v4503
    %6525 = vmatprep.subr.bf16.mxu0 %v4564
    %6526 = vmatpush2.bf16.msra.mxu0 %v4563
    %6527 = vmatprep.subr.bf16.mxu0 %v4560
    %6528 = vmatpush2.bf16.msra.mxu0 %v4559
    %6529 = vmatprep.subr.bf16.mxu0 %v4556
    %6530 = vmatpush2.bf16.msra.mxu0 %v4555
    %6531 = vmatprep.subr.bf16.mxu0 %v4552
    %6532 = vmatpush2.bf16.msra.mxu0 %v4551
    %6533 = vmatprep.subr.bf16.mxu0 %v4548
    %6534 = vmatpush2.bf16.msra.mxu0 %v4547
    %6535 = vmatprep.subr.bf16.mxu0 %v4544
    %6536 = vmatpush2.bf16.msra.mxu0 %v4543
    %6537 = vmatprep.subr.bf16.mxu0 %v4540
    %6538 = vmatpush2.bf16.msra.mxu0 %v4539
    %6539 = vmatprep.subr.bf16.mxu0 %v4536
    %6540 = vmatpush2.bf16.msra.mxu0 %v4535
    %6541 = vmatprep.mubr.bf16.mxu0 %v1244
    %6542 = vmatmul.mubr.bf16.gmra.mxu0 %v1243
    %v6543 = vpop.f32.mrf.mxu0
    %v6544 = vadd.f32 %v6501, %v6543
    %v6545 = vpop.f32.mrf.mxu0
    %v6546 = vadd.f32 %v6503, %v6545
    %v6547 = vpop.f32.mrf.mxu0
    %v6548 = vadd.f32 %v6505, %v6547
    %v6549 = vpop.f32.mrf.mxu0
    %v6550 = vadd.f32 %v6507, %v6549
    %6551 = vdwg.mxu0
    %6552 = vmatprep.subr.bf16.mxu0 %v4596
    %6553 = vmatpush1.bf16.msra.mxu0 %v4595
    %6554 = vmatprep.subr.bf16.mxu0 %v4592
    %6555 = vmatpush1.bf16.msra.mxu0 %v4591
    %6556 = vmatprep.subr.bf16.mxu0 %v4588
    %6557 = vmatpush1.bf16.msra.mxu0 %v4587
    %6558 = vmatprep.subr.bf16.mxu0 %v4584
    %6559 = vmatpush1.bf16.msra.mxu0 %v4583
    %6560 = vmatprep.subr.bf16.mxu0 %v4580
    %6561 = vmatpush1.bf16.msra.mxu0 %v4579
    %6562 = vmatprep.subr.bf16.mxu0 %v4576
    %6563 = vmatpush1.bf16.msra.mxu0 %v4575
    %6564 = vmatprep.subr.bf16.mxu0 %v4572
    %6565 = vmatpush1.bf16.msra.mxu0 %v4571
    %6566 = vmatprep.subr.bf16.mxu0 %v4568
    %6567 = vmatpush1.bf16.msra.mxu0 %v4567
    %6568 = vmatprep.subr.bf16.mxu0 %v4628
    %6569 = vmatpush2.bf16.msra.mxu0 %v4627
    %6570 = vmatprep.subr.bf16.mxu0 %v4624
    %6571 = vmatpush2.bf16.msra.mxu0 %v4623
    %6572 = vmatprep.subr.bf16.mxu0 %v4620
    %6573 = vmatpush2.bf16.msra.mxu0 %v4619
    %6574 = vmatprep.subr.bf16.mxu0 %v4616
    %6575 = vmatpush2.bf16.msra.mxu0 %v4615
    %6576 = vmatprep.subr.bf16.mxu0 %v4612
    %6577 = vmatpush2.bf16.msra.mxu0 %v4611
    %6578 = vmatprep.subr.bf16.mxu0 %v4608
    %6579 = vmatpush2.bf16.msra.mxu0 %v4607
    %6580 = vmatprep.subr.bf16.mxu0 %v4604
    %6581 = vmatpush2.bf16.msra.mxu0 %v4603
    %6582 = vmatprep.subr.bf16.mxu0 %v4600
    %6583 = vmatpush2.bf16.msra.mxu0 %v4599
    %6584 = vmatprep.mubr.bf16.mxu0 %v1246
    %6585 = vmatmul.mubr.bf16.gmra.mxu0 %v1245
    %v6586 = vpop.f32.mrf.mxu0
    %v6587 = vadd.f32 %v6544, %v6586
    %v6588 = vpop.f32.mrf.mxu0
    %v6589 = vadd.f32 %v6546, %v6588
    %v6590 = vpop.f32.mrf.mxu0
    %v6591 = vadd.f32 %v6548, %v6590
    %v6592 = vpop.f32.mrf.mxu0
    %v6593 = vadd.f32 %v6550, %v6592
    %6594 = vdwg.mxu0
    %6595 = vmatprep.subr.bf16.mxu0 %v4660
    %6596 = vmatpush1.bf16.msra.mxu0 %v4659
    %6597 = vmatprep.subr.bf16.mxu0 %v4656
    %6598 = vmatpush1.bf16.msra.mxu0 %v4655
    %6599 = vmatprep.subr.bf16.mxu0 %v4652
    %6600 = vmatpush1.bf16.msra.mxu0 %v4651
    %6601 = vmatprep.subr.bf16.mxu0 %v4648
    %6602 = vmatpush1.bf16.msra.mxu0 %v4647
    %6603 = vmatprep.subr.bf16.mxu0 %v4644
    %6604 = vmatpush1.bf16.msra.mxu0 %v4643
    %6605 = vmatprep.subr.bf16.mxu0 %v4640
    %6606 = vmatpush1.bf16.msra.mxu0 %v4639
    %6607 = vmatprep.subr.bf16.mxu0 %v4636
    %6608 = vmatpush1.bf16.msra.mxu0 %v4635
    %6609 = vmatprep.subr.bf16.mxu0 %v4632
    %6610 = vmatpush1.bf16.msra.mxu0 %v4631
    %6611 = vmatprep.subr.bf16.mxu0 %v4692
    %6612 = vmatpush2.bf16.msra.mxu0 %v4691
    %6613 = vmatprep.subr.bf16.mxu0 %v4688
    %6614 = vmatpush2.bf16.msra.mxu0 %v4687
    %6615 = vmatprep.subr.bf16.mxu0 %v4684
    %6616 = vmatpush2.bf16.msra.mxu0 %v4683
    %6617 = vmatprep.subr.bf16.mxu0 %v4680
    %6618 = vmatpush2.bf16.msra.mxu0 %v4679
    %6619 = vmatprep.subr.bf16.mxu0 %v4676
    %6620 = vmatpush2.bf16.msra.mxu0 %v4675
    %6621 = vmatprep.subr.bf16.mxu0 %v4672
    %6622 = vmatpush2.bf16.msra.mxu0 %v4671
    %6623 = vmatprep.subr.bf16.mxu0 %v4668
    %6624 = vmatpush2.bf16.msra.mxu0 %v4667
    %6625 = vmatprep.subr.bf16.mxu0 %v4664
    %6626 = vmatpush2.bf16.msra.mxu0 %v4663
    %6627 = vmatprep.mubr.bf16.mxu0 %v1248
    %6628 = vmatmul.mubr.bf16.gmra.mxu0 %v1247
    %v6629 = vpop.f32.mrf.mxu0
    %v6630 = vadd.f32 %v6587, %v6629
    %v6631 = vpop.f32.mrf.mxu0
    %v6632 = vadd.f32 %v6589, %v6631
    %v6633 = vpop.f32.mrf.mxu0
    %v6634 = vadd.f32 %v6591, %v6633
    %v6635 = vpop.f32.mrf.mxu0
    %v6636 = vadd.f32 %v6593, %v6635
    %6637 = vdwg.mxu0
    %6638 = vmatprep.subr.bf16.mxu0 %v4724
    %6639 = vmatpush1.bf16.msra.mxu0 %v4723
    %6640 = vmatprep.subr.bf16.mxu0 %v4720
    %6641 = vmatpush1.bf16.msra.mxu0 %v4719
    %6642 = vmatprep.subr.bf16.mxu0 %v4716
    %6643 = vmatpush1.bf16.msra.mxu0 %v4715
    %6644 = vmatprep.subr.bf16.mxu0 %v4712
    %6645 = vmatpush1.bf16.msra.mxu0 %v4711
    %6646 = vmatprep.subr.bf16.mxu0 %v4708
    %6647 = vmatpush1.bf16.msra.mxu0 %v4707
    %6648 = vmatprep.subr.bf16.mxu0 %v4704
    %6649 = vmatpush1.bf16.msra.mxu0 %v4703
    %6650 = vmatprep.subr.bf16.mxu0 %v4700
    %6651 = vmatpush1.bf16.msra.mxu0 %v4699
    %6652 = vmatprep.subr.bf16.mxu0 %v4696
    %6653 = vmatpush1.bf16.msra.mxu0 %v4695
    %6654 = vmatprep.subr.bf16.mxu0 %v4756
    %6655 = vmatpush2.bf16.msra.mxu0 %v4755
    %6656 = vmatprep.subr.bf16.mxu0 %v4752
    %6657 = vmatpush2.bf16.msra.mxu0 %v4751
    %6658 = vmatprep.subr.bf16.mxu0 %v4748
    %6659 = vmatpush2.bf16.msra.mxu0 %v4747
    %6660 = vmatprep.subr.bf16.mxu0 %v4744
    %6661 = vmatpush2.bf16.msra.mxu0 %v4743
    %6662 = vmatprep.subr.bf16.mxu0 %v4740
    %6663 = vmatpush2.bf16.msra.mxu0 %v4739
    %6664 = vmatprep.subr.bf16.mxu0 %v4736
    %6665 = vmatpush2.bf16.msra.mxu0 %v4735
    %6666 = vmatprep.subr.bf16.mxu0 %v4732
    %6667 = vmatpush2.bf16.msra.mxu0 %v4731
    %6668 = vmatprep.subr.bf16.mxu0 %v4728
    %6669 = vmatpush2.bf16.msra.mxu0 %v4727
    %6670 = vmatprep.mubr.bf16.mxu0 %v1250
    %6671 = vmatmul.mubr.bf16.gmra.mxu0 %v1249
    %v6672 = vpop.f32.mrf.mxu0
    %v6673 = vadd.f32 %v6630, %v6672
    %v6674 = vpop.f32.mrf.mxu0
    %v6675 = vadd.f32 %v6632, %v6674
    %v6676 = vpop.f32.mrf.mxu0
    %v6677 = vadd.f32 %v6634, %v6676
    %v6678 = vpop.f32.mrf.mxu0
    %v6679 = vadd.f32 %v6636, %v6678
    %6680 = vdwg.mxu0
    %6681 = vmatprep.subr.bf16.mxu0 %v4788
    %6682 = vmatpush1.bf16.msra.mxu0 %v4787
    %6683 = vmatprep.subr.bf16.mxu0 %v4784
    %6684 = vmatpush1.bf16.msra.mxu0 %v4783
    %6685 = vmatprep.subr.bf16.mxu0 %v4780
    %6686 = vmatpush1.bf16.msra.mxu0 %v4779
    %6687 = vmatprep.subr.bf16.mxu0 %v4776
    %6688 = vmatpush1.bf16.msra.mxu0 %v4775
    %6689 = vmatprep.subr.bf16.mxu0 %v4772
    %6690 = vmatpush1.bf16.msra.mxu0 %v4771
    %6691 = vmatprep.subr.bf16.mxu0 %v4768
    %6692 = vmatpush1.bf16.msra.mxu0 %v4767
    %6693 = vmatprep.subr.bf16.mxu0 %v4764
    %6694 = vmatpush1.bf16.msra.mxu0 %v4763
    %6695 = vmatprep.subr.bf16.mxu0 %v4760
    %6696 = vmatpush1.bf16.msra.mxu0 %v4759
    %6697 = vmatprep.subr.bf16.mxu0 %v4820
    %6698 = vmatpush2.bf16.msra.mxu0 %v4819
    %6699 = vmatprep.subr.bf16.mxu0 %v4816
    %6700 = vmatpush2.bf16.msra.mxu0 %v4815
    %6701 = vmatprep.subr.bf16.mxu0 %v4812
    %6702 = vmatpush2.bf16.msra.mxu0 %v4811
    %6703 = vmatprep.subr.bf16.mxu0 %v4808
    %6704 = vmatpush2.bf16.msra.mxu0 %v4807
    %6705 = vmatprep.subr.bf16.mxu0 %v4804
    %6706 = vmatpush2.bf16.msra.mxu0 %v4803
    %6707 = vmatprep.subr.bf16.mxu0 %v4800
    %6708 = vmatpush2.bf16.msra.mxu0 %v4799
    %6709 = vmatprep.subr.bf16.mxu0 %v4796
    %6710 = vmatpush2.bf16.msra.mxu0 %v4795
    %6711 = vmatprep.subr.bf16.mxu0 %v4792
    %6712 = vmatpush2.bf16.msra.mxu0 %v4791
    %6713 = vmatprep.mubr.bf16.mxu0 %v1252
    %6714 = vmatmul.mubr.bf16.gmra.mxu0 %v1251
    %v6715 = vpop.f32.mrf.mxu0
    %v6716 = vadd.f32 %v6673, %v6715
    %v6717 = vpop.f32.mrf.mxu0
    %v6718 = vadd.f32 %v6675, %v6717
    %v6719 = vpop.f32.mrf.mxu0
    %v6720 = vadd.f32 %v6677, %v6719
    %v6721 = vpop.f32.mrf.mxu0
    %v6722 = vadd.f32 %v6679, %v6721
    %6723 = vdwg.mxu0
    %6724 = vmatprep.subr.bf16.mxu0 %v4852
    %6725 = vmatpush1.bf16.msra.mxu0 %v4851
    %6726 = vmatprep.subr.bf16.mxu0 %v4848
    %6727 = vmatpush1.bf16.msra.mxu0 %v4847
    %6728 = vmatprep.subr.bf16.mxu0 %v4844
    %6729 = vmatpush1.bf16.msra.mxu0 %v4843
    %6730 = vmatprep.subr.bf16.mxu0 %v4840
    %6731 = vmatpush1.bf16.msra.mxu0 %v4839
    %6732 = vmatprep.subr.bf16.mxu0 %v4836
    %6733 = vmatpush1.bf16.msra.mxu0 %v4835
    %6734 = vmatprep.subr.bf16.mxu0 %v4832
    %6735 = vmatpush1.bf16.msra.mxu0 %v4831
    %6736 = vmatprep.subr.bf16.mxu0 %v4828
    %6737 = vmatpush1.bf16.msra.mxu0 %v4827
    %6738 = vmatprep.subr.bf16.mxu0 %v4824
    %6739 = vmatpush1.bf16.msra.mxu0 %v4823
    %6740 = vmatprep.subr.bf16.mxu0 %v4884
    %6741 = vmatpush2.bf16.msra.mxu0 %v4883
    %6742 = vmatprep.subr.bf16.mxu0 %v4880
    %6743 = vmatpush2.bf16.msra.mxu0 %v4879
    %6744 = vmatprep.subr.bf16.mxu0 %v4876
    %6745 = vmatpush2.bf16.msra.mxu0 %v4875
    %6746 = vmatprep.subr.bf16.mxu0 %v4872
    %6747 = vmatpush2.bf16.msra.mxu0 %v4871
    %6748 = vmatprep.subr.bf16.mxu0 %v4868
    %6749 = vmatpush2.bf16.msra.mxu0 %v4867
    %6750 = vmatprep.subr.bf16.mxu0 %v4864
    %6751 = vmatpush2.bf16.msra.mxu0 %v4863
    %6752 = vmatprep.subr.bf16.mxu0 %v4860
    %6753 = vmatpush2.bf16.msra.mxu0 %v4859
    %6754 = vmatprep.subr.bf16.mxu0 %v4856
    %6755 = vmatpush2.bf16.msra.mxu0 %v4855
    %6756 = vmatprep.mubr.bf16.mxu0 %v1254
    %6757 = vmatmul.mubr.bf16.gmra.mxu0 %v1253
    %v6758 = vpop.f32.mrf.mxu0
    %v6759 = vadd.f32 %v6716, %v6758
    %v6760 = vpop.f32.mrf.mxu0
    %v6761 = vadd.f32 %v6718, %v6760
    %v6762 = vpop.f32.mrf.mxu0
    %v6763 = vadd.f32 %v6720, %v6762
    %v6764 = vpop.f32.mrf.mxu0
    %v6765 = vadd.f32 %v6722, %v6764
    %6766 = vdwg.mxu0
    %6767 = vmatprep.subr.bf16.mxu0 %v4916
    %6768 = vmatpush1.bf16.msra.mxu0 %v4915
    %6769 = vmatprep.subr.bf16.mxu0 %v4912
    %6770 = vmatpush1.bf16.msra.mxu0 %v4911
    %6771 = vmatprep.subr.bf16.mxu0 %v4908
    %6772 = vmatpush1.bf16.msra.mxu0 %v4907
    %6773 = vmatprep.subr.bf16.mxu0 %v4904
    %6774 = vmatpush1.bf16.msra.mxu0 %v4903
    %6775 = vmatprep.subr.bf16.mxu0 %v4900
    %6776 = vmatpush1.bf16.msra.mxu0 %v4899
    %6777 = vmatprep.subr.bf16.mxu0 %v4896
    %6778 = vmatpush1.bf16.msra.mxu0 %v4895
    %6779 = vmatprep.subr.bf16.mxu0 %v4892
    %6780 = vmatpush1.bf16.msra.mxu0 %v4891
    %6781 = vmatprep.subr.bf16.mxu0 %v4888
    %6782 = vmatpush1.bf16.msra.mxu0 %v4887
    %6783 = vmatprep.subr.bf16.mxu0 %v4948
    %6784 = vmatpush2.bf16.msra.mxu0 %v4947
    %6785 = vmatprep.subr.bf16.mxu0 %v4944
    %6786 = vmatpush2.bf16.msra.mxu0 %v4943
    %6787 = vmatprep.subr.bf16.mxu0 %v4940
    %6788 = vmatpush2.bf16.msra.mxu0 %v4939
    %6789 = vmatprep.subr.bf16.mxu0 %v4936
    %6790 = vmatpush2.bf16.msra.mxu0 %v4935
    %6791 = vmatprep.subr.bf16.mxu0 %v4932
    %6792 = vmatpush2.bf16.msra.mxu0 %v4931
    %6793 = vmatprep.subr.bf16.mxu0 %v4928
    %6794 = vmatpush2.bf16.msra.mxu0 %v4927
    %6795 = vmatprep.subr.bf16.mxu0 %v4924
    %6796 = vmatpush2.bf16.msra.mxu0 %v4923
    %6797 = vmatprep.subr.bf16.mxu0 %v4920
    %6798 = vmatpush2.bf16.msra.mxu0 %v4919
    %6799 = vmatprep.mubr.bf16.mxu0 %v1256
    %6800 = vmatmul.mubr.bf16.gmra.mxu0 %v1255
    %v6801 = vpop.f32.mrf.mxu0
    %v6802 = vadd.f32 %v6759, %v6801
    %v6803 = vpop.f32.mrf.mxu0
    %v6804 = vadd.f32 %v6761, %v6803
    %v6805 = vpop.f32.mrf.mxu0
    %v6806 = vadd.f32 %v6763, %v6805
    %v6807 = vpop.f32.mrf.mxu0
    %v6808 = vadd.f32 %v6765, %v6807
    %6809 = vdwg.mxu0
    %6810 = vmatprep.subr.bf16.mxu0 %v4980
    %6811 = vmatpush1.bf16.msra.mxu0 %v4979
    %6812 = vmatprep.subr.bf16.mxu0 %v4976
    %6813 = vmatpush1.bf16.msra.mxu0 %v4975
    %6814 = vmatprep.subr.bf16.mxu0 %v4972
    %6815 = vmatpush1.bf16.msra.mxu0 %v4971
    %6816 = vmatprep.subr.bf16.mxu0 %v4968
    %6817 = vmatpush1.bf16.msra.mxu0 %v4967
    %6818 = vmatprep.subr.bf16.mxu0 %v4964
    %6819 = vmatpush1.bf16.msra.mxu0 %v4963
    %6820 = vmatprep.subr.bf16.mxu0 %v4960
    %6821 = vmatpush1.bf16.msra.mxu0 %v4959
    %6822 = vmatprep.subr.bf16.mxu0 %v4956
    %6823 = vmatpush1.bf16.msra.mxu0 %v4955
    %6824 = vmatprep.subr.bf16.mxu0 %v4952
    %6825 = vmatpush1.bf16.msra.mxu0 %v4951
    %6826 = vmatprep.subr.bf16.mxu0 %v5012
    %6827 = vmatpush2.bf16.msra.mxu0 %v5011
    %6828 = vmatprep.subr.bf16.mxu0 %v5008
    %6829 = vmatpush2.bf16.msra.mxu0 %v5007
    %6830 = vmatprep.subr.bf16.mxu0 %v5004
    %6831 = vmatpush2.bf16.msra.mxu0 %v5003
    %6832 = vmatprep.subr.bf16.mxu0 %v5000
    %6833 = vmatpush2.bf16.msra.mxu0 %v4999
    %6834 = vmatprep.subr.bf16.mxu0 %v4996
    %6835 = vmatpush2.bf16.msra.mxu0 %v4995
    %6836 = vmatprep.subr.bf16.mxu0 %v4992
    %6837 = vmatpush2.bf16.msra.mxu0 %v4991
    %6838 = vmatprep.subr.bf16.mxu0 %v4988
    %6839 = vmatpush2.bf16.msra.mxu0 %v4987
    %6840 = vmatprep.subr.bf16.mxu0 %v4984
    %6841 = vmatpush2.bf16.msra.mxu0 %v4983
    %6842 = vmatprep.mubr.bf16.mxu0 %v1258
    %6843 = vmatmul.mubr.bf16.gmra.mxu0 %v1257
    %v6844 = vpop.f32.mrf.mxu0
    %v6845 = vadd.f32 %v6802, %v6844
    %v6846 = vpop.f32.mrf.mxu0
    %v6847 = vadd.f32 %v6804, %v6846
    %v6848 = vpop.f32.mrf.mxu0
    %v6849 = vadd.f32 %v6806, %v6848
    %v6850 = vpop.f32.mrf.mxu0
    %v6851 = vadd.f32 %v6808, %v6850
    %6852 = vdwg.mxu0
    %6853 = vmatprep.subr.bf16.mxu0 %v5044
    %6854 = vmatpush1.bf16.msra.mxu0 %v5043
    %6855 = vmatprep.subr.bf16.mxu0 %v5040
    %6856 = vmatpush1.bf16.msra.mxu0 %v5039
    %6857 = vmatprep.subr.bf16.mxu0 %v5036
    %6858 = vmatpush1.bf16.msra.mxu0 %v5035
    %6859 = vmatprep.subr.bf16.mxu0 %v5032
    %6860 = vmatpush1.bf16.msra.mxu0 %v5031
    %6861 = vmatprep.subr.bf16.mxu0 %v5028
    %6862 = vmatpush1.bf16.msra.mxu0 %v5027
    %6863 = vmatprep.subr.bf16.mxu0 %v5024
    %6864 = vmatpush1.bf16.msra.mxu0 %v5023
    %6865 = vmatprep.subr.bf16.mxu0 %v5020
    %6866 = vmatpush1.bf16.msra.mxu0 %v5019
    %6867 = vmatprep.subr.bf16.mxu0 %v5016
    %6868 = vmatpush1.bf16.msra.mxu0 %v5015
    %6869 = vmatprep.subr.bf16.mxu0 %v5076
    %6870 = vmatpush2.bf16.msra.mxu0 %v5075
    %6871 = vmatprep.subr.bf16.mxu0 %v5072
    %6872 = vmatpush2.bf16.msra.mxu0 %v5071
    %6873 = vmatprep.subr.bf16.mxu0 %v5068
    %6874 = vmatpush2.bf16.msra.mxu0 %v5067
    %6875 = vmatprep.subr.bf16.mxu0 %v5064
    %6876 = vmatpush2.bf16.msra.mxu0 %v5063
    %6877 = vmatprep.subr.bf16.mxu0 %v5060
    %6878 = vmatpush2.bf16.msra.mxu0 %v5059
    %6879 = vmatprep.subr.bf16.mxu0 %v5056
    %6880 = vmatpush2.bf16.msra.mxu0 %v5055
    %6881 = vmatprep.subr.bf16.mxu0 %v5052
    %6882 = vmatpush2.bf16.msra.mxu0 %v5051
    %6883 = vmatprep.subr.bf16.mxu0 %v5048
    %6884 = vmatpush2.bf16.msra.mxu0 %v5047
    %6885 = vmatprep.mubr.bf16.mxu0 %v1260
    %6886 = vmatmul.mubr.bf16.gmra.mxu0 %v1259
    %v6887 = vpop.f32.mrf.mxu0
    %v6888 = vadd.f32 %v6845, %v6887
    %v6889 = vpop.f32.mrf.mxu0
    %v6890 = vadd.f32 %v6847, %v6889
    %v6891 = vpop.f32.mrf.mxu0
    %v6892 = vadd.f32 %v6849, %v6891
    %v6893 = vpop.f32.mrf.mxu0
    %v6894 = vadd.f32 %v6851, %v6893
    %6895 = vdwg.mxu0
    %6896 = vmatprep.subr.bf16.mxu0 %v5108
    %6897 = vmatpush1.bf16.msra.mxu0 %v5107
    %6898 = vmatprep.subr.bf16.mxu0 %v5104
    %6899 = vmatpush1.bf16.msra.mxu0 %v5103
    %6900 = vmatprep.subr.bf16.mxu0 %v5100
    %6901 = vmatpush1.bf16.msra.mxu0 %v5099
    %6902 = vmatprep.subr.bf16.mxu0 %v5096
    %6903 = vmatpush1.bf16.msra.mxu0 %v5095
    %6904 = vmatprep.subr.bf16.mxu0 %v5092
    %6905 = vmatpush1.bf16.msra.mxu0 %v5091
    %6906 = vmatprep.subr.bf16.mxu0 %v5088
    %6907 = vmatpush1.bf16.msra.mxu0 %v5087
    %6908 = vmatprep.subr.bf16.mxu0 %v5084
    %6909 = vmatpush1.bf16.msra.mxu0 %v5083
    %6910 = vmatprep.subr.bf16.mxu0 %v5080
    %6911 = vmatpush1.bf16.msra.mxu0 %v5079
    %6912 = vmatprep.subr.bf16.mxu0 %v5140
    %6913 = vmatpush2.bf16.msra.mxu0 %v5139
    %6914 = vmatprep.subr.bf16.mxu0 %v5136
    %6915 = vmatpush2.bf16.msra.mxu0 %v5135
    %6916 = vmatprep.subr.bf16.mxu0 %v5132
    %6917 = vmatpush2.bf16.msra.mxu0 %v5131
    %6918 = vmatprep.subr.bf16.mxu0 %v5128
    %6919 = vmatpush2.bf16.msra.mxu0 %v5127
    %6920 = vmatprep.subr.bf16.mxu0 %v5124
    %6921 = vmatpush2.bf16.msra.mxu0 %v5123
    %6922 = vmatprep.subr.bf16.mxu0 %v5120
    %6923 = vmatpush2.bf16.msra.mxu0 %v5119
    %6924 = vmatprep.subr.bf16.mxu0 %v5116
    %6925 = vmatpush2.bf16.msra.mxu0 %v5115
    %6926 = vmatprep.subr.bf16.mxu0 %v5112
    %6927 = vmatpush2.bf16.msra.mxu0 %v5111
    %6928 = vmatprep.mubr.bf16.mxu0 %v1262
    %6929 = vmatmul.mubr.bf16.gmra.mxu0 %v1261
    %v6930 = vpop.f32.mrf.mxu0
    %v6931 = vadd.f32 %v6888, %v6930
    %v6932 = vpop.f32.mrf.mxu0
    %v6933 = vadd.f32 %v6890, %v6932
    %v6934 = vpop.f32.mrf.mxu0
    %v6935 = vadd.f32 %v6892, %v6934
    %v6936 = vpop.f32.mrf.mxu0
    %v6937 = vadd.f32 %v6894, %v6936
    %6938 = vdwg.mxu0
    %6939 = vmatprep.subr.bf16.mxu0 %v5172
    %6940 = vmatpush1.bf16.msra.mxu0 %v5171
    %6941 = vmatprep.subr.bf16.mxu0 %v5168
    %6942 = vmatpush1.bf16.msra.mxu0 %v5167
    %6943 = vmatprep.subr.bf16.mxu0 %v5164
    %6944 = vmatpush1.bf16.msra.mxu0 %v5163
    %6945 = vmatprep.subr.bf16.mxu0 %v5160
    %6946 = vmatpush1.bf16.msra.mxu0 %v5159
    %6947 = vmatprep.subr.bf16.mxu0 %v5156
    %6948 = vmatpush1.bf16.msra.mxu0 %v5155
    %6949 = vmatprep.subr.bf16.mxu0 %v5152
    %6950 = vmatpush1.bf16.msra.mxu0 %v5151
    %6951 = vmatprep.subr.bf16.mxu0 %v5148
    %6952 = vmatpush1.bf16.msra.mxu0 %v5147
    %6953 = vmatprep.subr.bf16.mxu0 %v5144
    %6954 = vmatpush1.bf16.msra.mxu0 %v5143
    %6955 = vmatprep.subr.bf16.mxu0 %v5204
    %6956 = vmatpush2.bf16.msra.mxu0 %v5203
    %6957 = vmatprep.subr.bf16.mxu0 %v5200
    %6958 = vmatpush2.bf16.msra.mxu0 %v5199
    %6959 = vmatprep.subr.bf16.mxu0 %v5196
    %6960 = vmatpush2.bf16.msra.mxu0 %v5195
    %6961 = vmatprep.subr.bf16.mxu0 %v5192
    %6962 = vmatpush2.bf16.msra.mxu0 %v5191
    %6963 = vmatprep.subr.bf16.mxu0 %v5188
    %6964 = vmatpush2.bf16.msra.mxu0 %v5187
    %6965 = vmatprep.subr.bf16.mxu0 %v5184
    %6966 = vmatpush2.bf16.msra.mxu0 %v5183
    %6967 = vmatprep.subr.bf16.mxu0 %v5180
    %6968 = vmatpush2.bf16.msra.mxu0 %v5179
    %6969 = vmatprep.subr.bf16.mxu0 %v5176
    %6970 = vmatpush2.bf16.msra.mxu0 %v5175
    %6971 = vmatprep.mubr.bf16.mxu0 %v1264
    %6972 = vmatmul.mubr.bf16.gmra.mxu0 %v1263
    %v6973 = vpop.f32.mrf.mxu0
    %v6974 = vadd.f32 %v6931, %v6973
    %v6975 = vpop.f32.mrf.mxu0
    %v6976 = vadd.f32 %v6933, %v6975
    %v6977 = vpop.f32.mrf.mxu0
    %v6978 = vadd.f32 %v6935, %v6977
    %v6979 = vpop.f32.mrf.mxu0
    %v6980 = vadd.f32 %v6937, %v6979
    %6981 = vdwg.mxu0
    %6982 = vmatprep.subr.bf16.mxu0 %v5236
    %6983 = vmatpush1.bf16.msra.mxu0 %v5235
    %6984 = vmatprep.subr.bf16.mxu0 %v5232
    %6985 = vmatpush1.bf16.msra.mxu0 %v5231
    %6986 = vmatprep.subr.bf16.mxu0 %v5228
    %6987 = vmatpush1.bf16.msra.mxu0 %v5227
    %6988 = vmatprep.subr.bf16.mxu0 %v5224
    %6989 = vmatpush1.bf16.msra.mxu0 %v5223
    %6990 = vmatprep.subr.bf16.mxu0 %v5220
    %6991 = vmatpush1.bf16.msra.mxu0 %v5219
    %6992 = vmatprep.subr.bf16.mxu0 %v5216
    %6993 = vmatpush1.bf16.msra.mxu0 %v5215
    %6994 = vmatprep.subr.bf16.mxu0 %v5212
    %6995 = vmatpush1.bf16.msra.mxu0 %v5211
    %6996 = vmatprep.subr.bf16.mxu0 %v5208
    %6997 = vmatpush1.bf16.msra.mxu0 %v5207
    %6998 = vmatprep.subr.bf16.mxu0 %v5268
    %6999 = vmatpush2.bf16.msra.mxu0 %v5267
    %7000 = vmatprep.subr.bf16.mxu0 %v5264
    %7001 = vmatpush2.bf16.msra.mxu0 %v5263
    %7002 = vmatprep.subr.bf16.mxu0 %v5260
    %7003 = vmatpush2.bf16.msra.mxu0 %v5259
    %7004 = vmatprep.subr.bf16.mxu0 %v5256
    %7005 = vmatpush2.bf16.msra.mxu0 %v5255
    %7006 = vmatprep.subr.bf16.mxu0 %v5252
    %7007 = vmatpush2.bf16.msra.mxu0 %v5251
    %7008 = vmatprep.subr.bf16.mxu0 %v5248
    %7009 = vmatpush2.bf16.msra.mxu0 %v5247
    %7010 = vmatprep.subr.bf16.mxu0 %v5244
    %7011 = vmatpush2.bf16.msra.mxu0 %v5243
    %7012 = vmatprep.subr.bf16.mxu0 %v5240
    %7013 = vmatpush2.bf16.msra.mxu0 %v5239
    %7014 = vmatprep.mubr.bf16.mxu0 %v1266
    %7015 = vmatmul.mubr.bf16.gmra.mxu0 %v1265
    %v7016 = vpop.f32.mrf.mxu0
    %v7017 = vadd.f32 %v6974, %v7016
    %v7018 = vpop.f32.mrf.mxu0
    %v7019 = vadd.f32 %v6976, %v7018
    %v7020 = vpop.f32.mrf.mxu0
    %v7021 = vadd.f32 %v6978, %v7020
    %v7022 = vpop.f32.mrf.mxu0
    %v7023 = vadd.f32 %v6980, %v7022
    %7024 = vdwg.mxu0
    %7025 = vmatprep.subr.bf16.mxu0 %v5300
    %7026 = vmatpush1.bf16.msra.mxu0 %v5299
    %7027 = vmatprep.subr.bf16.mxu0 %v5296
    %7028 = vmatpush1.bf16.msra.mxu0 %v5295
    %7029 = vmatprep.subr.bf16.mxu0 %v5292
    %7030 = vmatpush1.bf16.msra.mxu0 %v5291
    %7031 = vmatprep.subr.bf16.mxu0 %v5288
    %7032 = vmatpush1.bf16.msra.mxu0 %v5287
    %7033 = vmatprep.subr.bf16.mxu0 %v5284
    %7034 = vmatpush1.bf16.msra.mxu0 %v5283
    %7035 = vmatprep.subr.bf16.mxu0 %v5280
    %7036 = vmatpush1.bf16.msra.mxu0 %v5279
    %7037 = vmatprep.subr.bf16.mxu0 %v5276
    %7038 = vmatpush1.bf16.msra.mxu0 %v5275
    %7039 = vmatprep.subr.bf16.mxu0 %v5272
    %7040 = vmatpush1.bf16.msra.mxu0 %v5271
    %7041 = vmatprep.subr.bf16.mxu0 %v5332
    %7042 = vmatpush2.bf16.msra.mxu0 %v5331
    %7043 = vmatprep.subr.bf16.mxu0 %v5328
    %7044 = vmatpush2.bf16.msra.mxu0 %v5327
    %7045 = vmatprep.subr.bf16.mxu0 %v5324
    %7046 = vmatpush2.bf16.msra.mxu0 %v5323
    %7047 = vmatprep.subr.bf16.mxu0 %v5320
    %7048 = vmatpush2.bf16.msra.mxu0 %v5319
    %7049 = vmatprep.subr.bf16.mxu0 %v5316
    %7050 = vmatpush2.bf16.msra.mxu0 %v5315
    %7051 = vmatprep.subr.bf16.mxu0 %v5312
    %7052 = vmatpush2.bf16.msra.mxu0 %v5311
    %7053 = vmatprep.subr.bf16.mxu0 %v5308
    %7054 = vmatpush2.bf16.msra.mxu0 %v5307
    %7055 = vmatprep.subr.bf16.mxu0 %v5304
    %7056 = vmatpush2.bf16.msra.mxu0 %v5303
    %7057 = vmatprep.mubr.bf16.mxu0 %v1268
    %7058 = vmatmul.mubr.bf16.gmra.mxu0 %v1267
    %v7059 = vpop.f32.mrf.mxu0
    %v7060 = vadd.f32 %v7017, %v7059
    %v7061 = vpop.f32.mrf.mxu0
    %v7062 = vadd.f32 %v7019, %v7061
    %v7063 = vpop.f32.mrf.mxu0
    %v7064 = vadd.f32 %v7021, %v7063
    %v7065 = vpop.f32.mrf.mxu0
    %v7066 = vadd.f32 %v7023, %v7065
    %7067 = vdwg.mxu0
    %7068 = vmatprep.subr.bf16.mxu0 %v5364
    %7069 = vmatpush1.bf16.msra.mxu0 %v5363
    %7070 = vmatprep.subr.bf16.mxu0 %v5360
    %7071 = vmatpush1.bf16.msra.mxu0 %v5359
    %7072 = vmatprep.subr.bf16.mxu0 %v5356
    %7073 = vmatpush1.bf16.msra.mxu0 %v5355
    %7074 = vmatprep.subr.bf16.mxu0 %v5352
    %7075 = vmatpush1.bf16.msra.mxu0 %v5351
    %7076 = vmatprep.subr.bf16.mxu0 %v5348
    %7077 = vmatpush1.bf16.msra.mxu0 %v5347
    %7078 = vmatprep.subr.bf16.mxu0 %v5344
    %7079 = vmatpush1.bf16.msra.mxu0 %v5343
    %7080 = vmatprep.subr.bf16.mxu0 %v5340
    %7081 = vmatpush1.bf16.msra.mxu0 %v5339
    %7082 = vmatprep.subr.bf16.mxu0 %v5336
    %7083 = vmatpush1.bf16.msra.mxu0 %v5335
    %7084 = vmatprep.subr.bf16.mxu0 %v5396
    %7085 = vmatpush2.bf16.msra.mxu0 %v5395
    %7086 = vmatprep.subr.bf16.mxu0 %v5392
    %7087 = vmatpush2.bf16.msra.mxu0 %v5391
    %7088 = vmatprep.subr.bf16.mxu0 %v5388
    %7089 = vmatpush2.bf16.msra.mxu0 %v5387
    %7090 = vmatprep.subr.bf16.mxu0 %v5384
    %7091 = vmatpush2.bf16.msra.mxu0 %v5383
    %7092 = vmatprep.subr.bf16.mxu0 %v5380
    %7093 = vmatpush2.bf16.msra.mxu0 %v5379
    %7094 = vmatprep.subr.bf16.mxu0 %v5376
    %7095 = vmatpush2.bf16.msra.mxu0 %v5375
    %7096 = vmatprep.subr.bf16.mxu0 %v5372
    %7097 = vmatpush2.bf16.msra.mxu0 %v5371
    %7098 = vmatprep.subr.bf16.mxu0 %v5368
    %7099 = vmatpush2.bf16.msra.mxu0 %v5367
    %7100 = vmatprep.mubr.bf16.mxu0 %v1270
    %7101 = vmatmul.mubr.bf16.gmra.mxu0 %v1269
    %v7102 = vpop.f32.mrf.mxu0
    %v7103 = vadd.f32 %v7060, %v7102
    %v7104 = vpop.f32.mrf.mxu0
    %v7105 = vadd.f32 %v7062, %v7104
    %v7106 = vpop.f32.mrf.mxu0
    %v7107 = vadd.f32 %v7064, %v7106
    %v7108 = vpop.f32.mrf.mxu0
    %v7109 = vadd.f32 %v7066, %v7108
    %7110 = vdwg.mxu0
    %7111 = vmatprep.subr.bf16.mxu0 %v4406
    %7112 = vmatpush1.bf16.msra.mxu0 %v4405
    %7113 = vmatprep.subr.bf16.mxu0 %v4402
    %7114 = vmatpush1.bf16.msra.mxu0 %v4401
    %7115 = vmatprep.subr.bf16.mxu0 %v4398
    %7116 = vmatpush1.bf16.msra.mxu0 %v4397
    %7117 = vmatprep.subr.bf16.mxu0 %v4394
    %7118 = vmatpush1.bf16.msra.mxu0 %v4393
    %7119 = vmatprep.subr.bf16.mxu0 %v4390
    %7120 = vmatpush1.bf16.msra.mxu0 %v4389
    %7121 = vmatprep.subr.bf16.mxu0 %v4386
    %7122 = vmatpush1.bf16.msra.mxu0 %v4385
    %7123 = vmatprep.subr.bf16.mxu0 %v4382
    %7124 = vmatpush1.bf16.msra.mxu0 %v4381
    %7125 = vmatprep.subr.bf16.mxu0 %v4378
    %7126 = vmatpush1.bf16.msra.mxu0 %v4377
    %7127 = vmatprep.subr.bf16.mxu0 %v4438
    %7128 = vmatpush2.bf16.msra.mxu0 %v4437
    %7129 = vmatprep.subr.bf16.mxu0 %v4434
    %7130 = vmatpush2.bf16.msra.mxu0 %v4433
    %7131 = vmatprep.subr.bf16.mxu0 %v4430
    %7132 = vmatpush2.bf16.msra.mxu0 %v4429
    %7133 = vmatprep.subr.bf16.mxu0 %v4426
    %7134 = vmatpush2.bf16.msra.mxu0 %v4425
    %7135 = vmatprep.subr.bf16.mxu0 %v4422
    %7136 = vmatpush2.bf16.msra.mxu0 %v4421
    %7137 = vmatprep.subr.bf16.mxu0 %v4418
    %7138 = vmatpush2.bf16.msra.mxu0 %v4417
    %7139 = vmatprep.subr.bf16.mxu0 %v4414
    %7140 = vmatpush2.bf16.msra.mxu0 %v4413
    %7141 = vmatprep.subr.bf16.mxu0 %v4410
    %7142 = vmatpush2.bf16.msra.mxu0 %v4409
    %7143 = vmatprep.mubr.bf16.mxu0 %v1240
    %7144 = vmatmul.mubr.bf16.gmra.mxu0 %v1239
    %v7145 = vpop.f32.mrf.mxu0
    %v7146 = vadd.f32 %v1134, %v7145
    %v7147 = vpop.f32.mrf.mxu0
    %v7148 = vadd.f32 %v1138, %v7147
    %v7149 = vpop.f32.mrf.mxu0
    %v7150 = vadd.f32 %v1134, %v7149
    %v7151 = vpop.f32.mrf.mxu0
    %v7152 = vadd.f32 %v1138, %v7151
    %7153 = vdwg.mxu0
    %7154 = vmatprep.subr.bf16.mxu0 %v4470
    %7155 = vmatpush1.bf16.msra.mxu0 %v4469
    %7156 = vmatprep.subr.bf16.mxu0 %v4466
    %7157 = vmatpush1.bf16.msra.mxu0 %v4465
    %7158 = vmatprep.subr.bf16.mxu0 %v4462
    %7159 = vmatpush1.bf16.msra.mxu0 %v4461
    %7160 = vmatprep.subr.bf16.mxu0 %v4458
    %7161 = vmatpush1.bf16.msra.mxu0 %v4457
    %7162 = vmatprep.subr.bf16.mxu0 %v4454
    %7163 = vmatpush1.bf16.msra.mxu0 %v4453
    %7164 = vmatprep.subr.bf16.mxu0 %v4450
    %7165 = vmatpush1.bf16.msra.mxu0 %v4449
    %7166 = vmatprep.subr.bf16.mxu0 %v4446
    %7167 = vmatpush1.bf16.msra.mxu0 %v4445
    %7168 = vmatprep.subr.bf16.mxu0 %v4442
    %7169 = vmatpush1.bf16.msra.mxu0 %v4441
    %7170 = vmatprep.subr.bf16.mxu0 %v4502
    %7171 = vmatpush2.bf16.msra.mxu0 %v4501
    %7172 = vmatprep.subr.bf16.mxu0 %v4498
    %7173 = vmatpush2.bf16.msra.mxu0 %v4497
    %7174 = vmatprep.subr.bf16.mxu0 %v4494
    %7175 = vmatpush2.bf16.msra.mxu0 %v4493
    %7176 = vmatprep.subr.bf16.mxu0 %v4490
    %7177 = vmatpush2.bf16.msra.mxu0 %v4489
    %7178 = vmatprep.subr.bf16.mxu0 %v4486
    %7179 = vmatpush2.bf16.msra.mxu0 %v4485
    %7180 = vmatprep.subr.bf16.mxu0 %v4482
    %7181 = vmatpush2.bf16.msra.mxu0 %v4481
    %7182 = vmatprep.subr.bf16.mxu0 %v4478
    %7183 = vmatpush2.bf16.msra.mxu0 %v4477
    %7184 = vmatprep.subr.bf16.mxu0 %v4474
    %7185 = vmatpush2.bf16.msra.mxu0 %v4473
    %7186 = vmatprep.mubr.bf16.mxu0 %v1242
    %7187 = vmatmul.mubr.bf16.gmra.mxu0 %v1241
    %v7188 = vpop.f32.mrf.mxu0
    %v7189 = vadd.f32 %v7146, %v7188
    %v7190 = vpop.f32.mrf.mxu0
    %v7191 = vadd.f32 %v7148, %v7190
    %v7192 = vpop.f32.mrf.mxu0
    %v7193 = vadd.f32 %v7150, %v7192
    %v7194 = vpop.f32.mrf.mxu0
    %v7195 = vadd.f32 %v7152, %v7194
    %7196 = vdwg.mxu0
    %7197 = vmatprep.subr.bf16.mxu0 %v4534
    %7198 = vmatpush1.bf16.msra.mxu0 %v4533
    %7199 = vmatprep.subr.bf16.mxu0 %v4530
    %7200 = vmatpush1.bf16.msra.mxu0 %v4529
    %7201 = vmatprep.subr.bf16.mxu0 %v4526
    %7202 = vmatpush1.bf16.msra.mxu0 %v4525
    %7203 = vmatprep.subr.bf16.mxu0 %v4522
    %7204 = vmatpush1.bf16.msra.mxu0 %v4521
    %7205 = vmatprep.subr.bf16.mxu0 %v4518
    %7206 = vmatpush1.bf16.msra.mxu0 %v4517
    %7207 = vmatprep.subr.bf16.mxu0 %v4514
    %7208 = vmatpush1.bf16.msra.mxu0 %v4513
    %7209 = vmatprep.subr.bf16.mxu0 %v4510
    %7210 = vmatpush1.bf16.msra.mxu0 %v4509
    %7211 = vmatprep.subr.bf16.mxu0 %v4506
    %7212 = vmatpush1.bf16.msra.mxu0 %v4505
    %7213 = vmatprep.subr.bf16.mxu0 %v4566
    %7214 = vmatpush2.bf16.msra.mxu0 %v4565
    %7215 = vmatprep.subr.bf16.mxu0 %v4562
    %7216 = vmatpush2.bf16.msra.mxu0 %v4561
    %7217 = vmatprep.subr.bf16.mxu0 %v4558
    %7218 = vmatpush2.bf16.msra.mxu0 %v4557
    %7219 = vmatprep.subr.bf16.mxu0 %v4554
    %7220 = vmatpush2.bf16.msra.mxu0 %v4553
    %7221 = vmatprep.subr.bf16.mxu0 %v4550
    %7222 = vmatpush2.bf16.msra.mxu0 %v4549
    %7223 = vmatprep.subr.bf16.mxu0 %v4546
    %7224 = vmatpush2.bf16.msra.mxu0 %v4545
    %7225 = vmatprep.subr.bf16.mxu0 %v4542
    %7226 = vmatpush2.bf16.msra.mxu0 %v4541
    %7227 = vmatprep.subr.bf16.mxu0 %v4538
    %7228 = vmatpush2.bf16.msra.mxu0 %v4537
    %7229 = vmatprep.mubr.bf16.mxu0 %v1244
    %7230 = vmatmul.mubr.bf16.gmra.mxu0 %v1243
    %v7231 = vpop.f32.mrf.mxu0
    %v7232 = vadd.f32 %v7189, %v7231
    %v7233 = vpop.f32.mrf.mxu0
    %v7234 = vadd.f32 %v7191, %v7233
    %v7235 = vpop.f32.mrf.mxu0
    %v7236 = vadd.f32 %v7193, %v7235
    %v7237 = vpop.f32.mrf.mxu0
    %v7238 = vadd.f32 %v7195, %v7237
    %7239 = vdwg.mxu0
    %7240 = vmatprep.subr.bf16.mxu0 %v4598
    %7241 = vmatpush1.bf16.msra.mxu0 %v4597
    %7242 = vmatprep.subr.bf16.mxu0 %v4594
    %7243 = vmatpush1.bf16.msra.mxu0 %v4593
    %7244 = vmatprep.subr.bf16.mxu0 %v4590
    %7245 = vmatpush1.bf16.msra.mxu0 %v4589
    %7246 = vmatprep.subr.bf16.mxu0 %v4586
    %7247 = vmatpush1.bf16.msra.mxu0 %v4585
    %7248 = vmatprep.subr.bf16.mxu0 %v4582
    %7249 = vmatpush1.bf16.msra.mxu0 %v4581
    %7250 = vmatprep.subr.bf16.mxu0 %v4578
    %7251 = vmatpush1.bf16.msra.mxu0 %v4577
    %7252 = vmatprep.subr.bf16.mxu0 %v4574
    %7253 = vmatpush1.bf16.msra.mxu0 %v4573
    %7254 = vmatprep.subr.bf16.mxu0 %v4570
    %7255 = vmatpush1.bf16.msra.mxu0 %v4569
    %7256 = vmatprep.subr.bf16.mxu0 %v4630
    %7257 = vmatpush2.bf16.msra.mxu0 %v4629
    %7258 = vmatprep.subr.bf16.mxu0 %v4626
    %7259 = vmatpush2.bf16.msra.mxu0 %v4625
    %7260 = vmatprep.subr.bf16.mxu0 %v4622
    %7261 = vmatpush2.bf16.msra.mxu0 %v4621
    %7262 = vmatprep.subr.bf16.mxu0 %v4618
    %7263 = vmatpush2.bf16.msra.mxu0 %v4617
    %7264 = vmatprep.subr.bf16.mxu0 %v4614
    %7265 = vmatpush2.bf16.msra.mxu0 %v4613
    %7266 = vmatprep.subr.bf16.mxu0 %v4610
    %7267 = vmatpush2.bf16.msra.mxu0 %v4609
    %7268 = vmatprep.subr.bf16.mxu0 %v4606
    %7269 = vmatpush2.bf16.msra.mxu0 %v4605
    %7270 = vmatprep.subr.bf16.mxu0 %v4602
    %7271 = vmatpush2.bf16.msra.mxu0 %v4601
    %7272 = vmatprep.mubr.bf16.mxu0 %v1246
    %7273 = vmatmul.mubr.bf16.gmra.mxu0 %v1245
    %v7274 = vpop.f32.mrf.mxu0
    %v7275 = vadd.f32 %v7232, %v7274
    %v7276 = vpop.f32.mrf.mxu0
    %v7277 = vadd.f32 %v7234, %v7276
    %v7278 = vpop.f32.mrf.mxu0
    %v7279 = vadd.f32 %v7236, %v7278
    %v7280 = vpop.f32.mrf.mxu0
    %v7281 = vadd.f32 %v7238, %v7280
    %7282 = vdwg.mxu0
    %7283 = vmatprep.subr.bf16.mxu0 %v4662
    %7284 = vmatpush1.bf16.msra.mxu0 %v4661
    %7285 = vmatprep.subr.bf16.mxu0 %v4658
    %7286 = vmatpush1.bf16.msra.mxu0 %v4657
    %7287 = vmatprep.subr.bf16.mxu0 %v4654
    %7288 = vmatpush1.bf16.msra.mxu0 %v4653
    %7289 = vmatprep.subr.bf16.mxu0 %v4650
    %7290 = vmatpush1.bf16.msra.mxu0 %v4649
    %7291 = vmatprep.subr.bf16.mxu0 %v4646
    %7292 = vmatpush1.bf16.msra.mxu0 %v4645
    %7293 = vmatprep.subr.bf16.mxu0 %v4642
    %7294 = vmatpush1.bf16.msra.mxu0 %v4641
    %7295 = vmatprep.subr.bf16.mxu0 %v4638
    %7296 = vmatpush1.bf16.msra.mxu0 %v4637
    %7297 = vmatprep.subr.bf16.mxu0 %v4634
    %7298 = vmatpush1.bf16.msra.mxu0 %v4633
    %7299 = vmatprep.subr.bf16.mxu0 %v4694
    %7300 = vmatpush2.bf16.msra.mxu0 %v4693
    %7301 = vmatprep.subr.bf16.mxu0 %v4690
    %7302 = vmatpush2.bf16.msra.mxu0 %v4689
    %7303 = vmatprep.subr.bf16.mxu0 %v4686
    %7304 = vmatpush2.bf16.msra.mxu0 %v4685
    %7305 = vmatprep.subr.bf16.mxu0 %v4682
    %7306 = vmatpush2.bf16.msra.mxu0 %v4681
    %7307 = vmatprep.subr.bf16.mxu0 %v4678
    %7308 = vmatpush2.bf16.msra.mxu0 %v4677
    %7309 = vmatprep.subr.bf16.mxu0 %v4674
    %7310 = vmatpush2.bf16.msra.mxu0 %v4673
    %7311 = vmatprep.subr.bf16.mxu0 %v4670
    %7312 = vmatpush2.bf16.msra.mxu0 %v4669
    %7313 = vmatprep.subr.bf16.mxu0 %v4666
    %7314 = vmatpush2.bf16.msra.mxu0 %v4665
    %7315 = vmatprep.mubr.bf16.mxu0 %v1248
    %7316 = vmatmul.mubr.bf16.gmra.mxu0 %v1247
    %v7317 = vpop.f32.mrf.mxu0
    %v7318 = vadd.f32 %v7275, %v7317
    %v7319 = vpop.f32.mrf.mxu0
    %v7320 = vadd.f32 %v7277, %v7319
    %v7321 = vpop.f32.mrf.mxu0
    %v7322 = vadd.f32 %v7279, %v7321
    %v7323 = vpop.f32.mrf.mxu0
    %v7324 = vadd.f32 %v7281, %v7323
    %7325 = vdwg.mxu0
    %7326 = vmatprep.subr.bf16.mxu0 %v4726
    %7327 = vmatpush1.bf16.msra.mxu0 %v4725
    %7328 = vmatprep.subr.bf16.mxu0 %v4722
    %7329 = vmatpush1.bf16.msra.mxu0 %v4721
    %7330 = vmatprep.subr.bf16.mxu0 %v4718
    %7331 = vmatpush1.bf16.msra.mxu0 %v4717
    %7332 = vmatprep.subr.bf16.mxu0 %v4714
    %7333 = vmatpush1.bf16.msra.mxu0 %v4713
    %7334 = vmatprep.subr.bf16.mxu0 %v4710
    %7335 = vmatpush1.bf16.msra.mxu0 %v4709
    %7336 = vmatprep.subr.bf16.mxu0 %v4706
    %7337 = vmatpush1.bf16.msra.mxu0 %v4705
    %7338 = vmatprep.subr.bf16.mxu0 %v4702
    %7339 = vmatpush1.bf16.msra.mxu0 %v4701
    %7340 = vmatprep.subr.bf16.mxu0 %v4698
    %7341 = vmatpush1.bf16.msra.mxu0 %v4697
    %7342 = vmatprep.subr.bf16.mxu0 %v4758
    %7343 = vmatpush2.bf16.msra.mxu0 %v4757
    %7344 = vmatprep.subr.bf16.mxu0 %v4754
    %7345 = vmatpush2.bf16.msra.mxu0 %v4753
    %7346 = vmatprep.subr.bf16.mxu0 %v4750
    %7347 = vmatpush2.bf16.msra.mxu0 %v4749
    %7348 = vmatprep.subr.bf16.mxu0 %v4746
    %7349 = vmatpush2.bf16.msra.mxu0 %v4745
    %7350 = vmatprep.subr.bf16.mxu0 %v4742
    %7351 = vmatpush2.bf16.msra.mxu0 %v4741
    %7352 = vmatprep.subr.bf16.mxu0 %v4738
    %7353 = vmatpush2.bf16.msra.mxu0 %v4737
    %7354 = vmatprep.subr.bf16.mxu0 %v4734
    %7355 = vmatpush2.bf16.msra.mxu0 %v4733
    %7356 = vmatprep.subr.bf16.mxu0 %v4730
    %7357 = vmatpush2.bf16.msra.mxu0 %v4729
    %7358 = vmatprep.mubr.bf16.mxu0 %v1250
    %7359 = vmatmul.mubr.bf16.gmra.mxu0 %v1249
    %v7360 = vpop.f32.mrf.mxu0
    %v7361 = vadd.f32 %v7318, %v7360
    %v7362 = vpop.f32.mrf.mxu0
    %v7363 = vadd.f32 %v7320, %v7362
    %v7364 = vpop.f32.mrf.mxu0
    %v7365 = vadd.f32 %v7322, %v7364
    %v7366 = vpop.f32.mrf.mxu0
    %v7367 = vadd.f32 %v7324, %v7366
    %7368 = vdwg.mxu0
    %7369 = vmatprep.subr.bf16.mxu0 %v4790
    %7370 = vmatpush1.bf16.msra.mxu0 %v4789
    %7371 = vmatprep.subr.bf16.mxu0 %v4786
    %7372 = vmatpush1.bf16.msra.mxu0 %v4785
    %7373 = vmatprep.subr.bf16.mxu0 %v4782
    %7374 = vmatpush1.bf16.msra.mxu0 %v4781
    %7375 = vmatprep.subr.bf16.mxu0 %v4778
    %7376 = vmatpush1.bf16.msra.mxu0 %v4777
    %7377 = vmatprep.subr.bf16.mxu0 %v4774
    %7378 = vmatpush1.bf16.msra.mxu0 %v4773
    %7379 = vmatprep.subr.bf16.mxu0 %v4770
    %7380 = vmatpush1.bf16.msra.mxu0 %v4769
    %7381 = vmatprep.subr.bf16.mxu0 %v4766
    %7382 = vmatpush1.bf16.msra.mxu0 %v4765
    %7383 = vmatprep.subr.bf16.mxu0 %v4762
    %7384 = vmatpush1.bf16.msra.mxu0 %v4761
    %7385 = vmatprep.subr.bf16.mxu0 %v4822
    %7386 = vmatpush2.bf16.msra.mxu0 %v4821
    %7387 = vmatprep.subr.bf16.mxu0 %v4818
    %7388 = vmatpush2.bf16.msra.mxu0 %v4817
    %7389 = vmatprep.subr.bf16.mxu0 %v4814
    %7390 = vmatpush2.bf16.msra.mxu0 %v4813
    %7391 = vmatprep.subr.bf16.mxu0 %v4810
    %7392 = vmatpush2.bf16.msra.mxu0 %v4809
    %7393 = vmatprep.subr.bf16.mxu0 %v4806
    %7394 = vmatpush2.bf16.msra.mxu0 %v4805
    %7395 = vmatprep.subr.bf16.mxu0 %v4802
    %7396 = vmatpush2.bf16.msra.mxu0 %v4801
    %7397 = vmatprep.subr.bf16.mxu0 %v4798
    %7398 = vmatpush2.bf16.msra.mxu0 %v4797
    %7399 = vmatprep.subr.bf16.mxu0 %v4794
    %7400 = vmatpush2.bf16.msra.mxu0 %v4793
    %7401 = vmatprep.mubr.bf16.mxu0 %v1252
    %7402 = vmatmul.mubr.bf16.gmra.mxu0 %v1251
    %v7403 = vpop.f32.mrf.mxu0
    %v7404 = vadd.f32 %v7361, %v7403
    %v7405 = vpop.f32.mrf.mxu0
    %v7406 = vadd.f32 %v7363, %v7405
    %v7407 = vpop.f32.mrf.mxu0
    %v7408 = vadd.f32 %v7365, %v7407
    %v7409 = vpop.f32.mrf.mxu0
    %v7410 = vadd.f32 %v7367, %v7409
    %7411 = vdwg.mxu0
    %7412 = vmatprep.subr.bf16.mxu0 %v4854
    %7413 = vmatpush1.bf16.msra.mxu0 %v4853
    %7414 = vmatprep.subr.bf16.mxu0 %v4850
    %7415 = vmatpush1.bf16.msra.mxu0 %v4849
    %7416 = vmatprep.subr.bf16.mxu0 %v4846
    %7417 = vmatpush1.bf16.msra.mxu0 %v4845
    %7418 = vmatprep.subr.bf16.mxu0 %v4842
    %7419 = vmatpush1.bf16.msra.mxu0 %v4841
    %7420 = vmatprep.subr.bf16.mxu0 %v4838
    %7421 = vmatpush1.bf16.msra.mxu0 %v4837
    %7422 = vmatprep.subr.bf16.mxu0 %v4834
    %7423 = vmatpush1.bf16.msra.mxu0 %v4833
    %7424 = vmatprep.subr.bf16.mxu0 %v4830
    %7425 = vmatpush1.bf16.msra.mxu0 %v4829
    %7426 = vmatprep.subr.bf16.mxu0 %v4826
    %7427 = vmatpush1.bf16.msra.mxu0 %v4825
    %7428 = vmatprep.subr.bf16.mxu0 %v4886
    %7429 = vmatpush2.bf16.msra.mxu0 %v4885
    %7430 = vmatprep.subr.bf16.mxu0 %v4882
    %7431 = vmatpush2.bf16.msra.mxu0 %v4881
    %7432 = vmatprep.subr.bf16.mxu0 %v4878
    %7433 = vmatpush2.bf16.msra.mxu0 %v4877
    %7434 = vmatprep.subr.bf16.mxu0 %v4874
    %7435 = vmatpush2.bf16.msra.mxu0 %v4873
    %7436 = vmatprep.subr.bf16.mxu0 %v4870
    %7437 = vmatpush2.bf16.msra.mxu0 %v4869
    %7438 = vmatprep.subr.bf16.mxu0 %v4866
    %7439 = vmatpush2.bf16.msra.mxu0 %v4865
    %7440 = vmatprep.subr.bf16.mxu0 %v4862
    %7441 = vmatpush2.bf16.msra.mxu0 %v4861
    %7442 = vmatprep.subr.bf16.mxu0 %v4858
    %7443 = vmatpush2.bf16.msra.mxu0 %v4857
    %7444 = vmatprep.mubr.bf16.mxu0 %v1254
    %7445 = vmatmul.mubr.bf16.gmra.mxu0 %v1253
    %v7446 = vpop.f32.mrf.mxu0
    %v7447 = vadd.f32 %v7404, %v7446
    %v7448 = vpop.f32.mrf.mxu0
    %v7449 = vadd.f32 %v7406, %v7448
    %v7450 = vpop.f32.mrf.mxu0
    %v7451 = vadd.f32 %v7408, %v7450
    %v7452 = vpop.f32.mrf.mxu0
    %v7453 = vadd.f32 %v7410, %v7452
    %7454 = vdwg.mxu0
    %7455 = vmatprep.subr.bf16.mxu0 %v4918
    %7456 = vmatpush1.bf16.msra.mxu0 %v4917
    %7457 = vmatprep.subr.bf16.mxu0 %v4914
    %7458 = vmatpush1.bf16.msra.mxu0 %v4913
    %7459 = vmatprep.subr.bf16.mxu0 %v4910
    %7460 = vmatpush1.bf16.msra.mxu0 %v4909
    %7461 = vmatprep.subr.bf16.mxu0 %v4906
    %7462 = vmatpush1.bf16.msra.mxu0 %v4905
    %7463 = vmatprep.subr.bf16.mxu0 %v4902
    %7464 = vmatpush1.bf16.msra.mxu0 %v4901
    %7465 = vmatprep.subr.bf16.mxu0 %v4898
    %7466 = vmatpush1.bf16.msra.mxu0 %v4897
    %7467 = vmatprep.subr.bf16.mxu0 %v4894
    %7468 = vmatpush1.bf16.msra.mxu0 %v4893
    %7469 = vmatprep.subr.bf16.mxu0 %v4890
    %7470 = vmatpush1.bf16.msra.mxu0 %v4889
    %7471 = vmatprep.subr.bf16.mxu0 %v4950
    %7472 = vmatpush2.bf16.msra.mxu0 %v4949
    %7473 = vmatprep.subr.bf16.mxu0 %v4946
    %7474 = vmatpush2.bf16.msra.mxu0 %v4945
    %7475 = vmatprep.subr.bf16.mxu0 %v4942
    %7476 = vmatpush2.bf16.msra.mxu0 %v4941
    %7477 = vmatprep.subr.bf16.mxu0 %v4938
    %7478 = vmatpush2.bf16.msra.mxu0 %v4937
    %7479 = vmatprep.subr.bf16.mxu0 %v4934
    %7480 = vmatpush2.bf16.msra.mxu0 %v4933
    %7481 = vmatprep.subr.bf16.mxu0 %v4930
    %7482 = vmatpush2.bf16.msra.mxu0 %v4929
    %7483 = vmatprep.subr.bf16.mxu0 %v4926
    %7484 = vmatpush2.bf16.msra.mxu0 %v4925
    %7485 = vmatprep.subr.bf16.mxu0 %v4922
    %7486 = vmatpush2.bf16.msra.mxu0 %v4921
    %7487 = vmatprep.mubr.bf16.mxu0 %v1256
    %7488 = vmatmul.mubr.bf16.gmra.mxu0 %v1255
    %v7489 = vpop.f32.mrf.mxu0
    %v7490 = vadd.f32 %v7447, %v7489
    %v7491 = vpop.f32.mrf.mxu0
    %v7492 = vadd.f32 %v7449, %v7491
    %v7493 = vpop.f32.mrf.mxu0
    %v7494 = vadd.f32 %v7451, %v7493
    %v7495 = vpop.f32.mrf.mxu0
    %v7496 = vadd.f32 %v7453, %v7495
    %7497 = vdwg.mxu0
    %7498 = vmatprep.subr.bf16.mxu0 %v4982
    %7499 = vmatpush1.bf16.msra.mxu0 %v4981
    %7500 = vmatprep.subr.bf16.mxu0 %v4978
    %7501 = vmatpush1.bf16.msra.mxu0 %v4977
    %7502 = vmatprep.subr.bf16.mxu0 %v4974
    %7503 = vmatpush1.bf16.msra.mxu0 %v4973
    %7504 = vmatprep.subr.bf16.mxu0 %v4970
    %7505 = vmatpush1.bf16.msra.mxu0 %v4969
    %7506 = vmatprep.subr.bf16.mxu0 %v4966
    %7507 = vmatpush1.bf16.msra.mxu0 %v4965
    %7508 = vmatprep.subr.bf16.mxu0 %v4962
    %7509 = vmatpush1.bf16.msra.mxu0 %v4961
    %7510 = vmatprep.subr.bf16.mxu0 %v4958
    %7511 = vmatpush1.bf16.msra.mxu0 %v4957
    %7512 = vmatprep.subr.bf16.mxu0 %v4954
    %7513 = vmatpush1.bf16.msra.mxu0 %v4953
    %7514 = vmatprep.subr.bf16.mxu0 %v5014
    %7515 = vmatpush2.bf16.msra.mxu0 %v5013
    %7516 = vmatprep.subr.bf16.mxu0 %v5010
    %7517 = vmatpush2.bf16.msra.mxu0 %v5009
    %7518 = vmatprep.subr.bf16.mxu0 %v5006
    %7519 = vmatpush2.bf16.msra.mxu0 %v5005
    %7520 = vmatprep.subr.bf16.mxu0 %v5002
    %7521 = vmatpush2.bf16.msra.mxu0 %v5001
    %7522 = vmatprep.subr.bf16.mxu0 %v4998
    %7523 = vmatpush2.bf16.msra.mxu0 %v4997
    %7524 = vmatprep.subr.bf16.mxu0 %v4994
    %7525 = vmatpush2.bf16.msra.mxu0 %v4993
    %7526 = vmatprep.subr.bf16.mxu0 %v4990
    %7527 = vmatpush2.bf16.msra.mxu0 %v4989
    %7528 = vmatprep.subr.bf16.mxu0 %v4986
    %7529 = vmatpush2.bf16.msra.mxu0 %v4985
    %7530 = vmatprep.mubr.bf16.mxu0 %v1258
    %7531 = vmatmul.mubr.bf16.gmra.mxu0 %v1257
    %v7532 = vpop.f32.mrf.mxu0
    %v7533 = vadd.f32 %v7490, %v7532
    %v7534 = vpop.f32.mrf.mxu0
    %v7535 = vadd.f32 %v7492, %v7534
    %v7536 = vpop.f32.mrf.mxu0
    %v7537 = vadd.f32 %v7494, %v7536
    %v7538 = vpop.f32.mrf.mxu0
    %v7539 = vadd.f32 %v7496, %v7538
    %7540 = vdwg.mxu0
    %7541 = vmatprep.subr.bf16.mxu0 %v5046
    %7542 = vmatpush1.bf16.msra.mxu0 %v5045
    %7543 = vmatprep.subr.bf16.mxu0 %v5042
    %7544 = vmatpush1.bf16.msra.mxu0 %v5041
    %7545 = vmatprep.subr.bf16.mxu0 %v5038
    %7546 = vmatpush1.bf16.msra.mxu0 %v5037
    %7547 = vmatprep.subr.bf16.mxu0 %v5034
    %7548 = vmatpush1.bf16.msra.mxu0 %v5033
    %7549 = vmatprep.subr.bf16.mxu0 %v5030
    %7550 = vmatpush1.bf16.msra.mxu0 %v5029
    %7551 = vmatprep.subr.bf16.mxu0 %v5026
    %7552 = vmatpush1.bf16.msra.mxu0 %v5025
    %7553 = vmatprep.subr.bf16.mxu0 %v5022
    %7554 = vmatpush1.bf16.msra.mxu0 %v5021
    %7555 = vmatprep.subr.bf16.mxu0 %v5018
    %7556 = vmatpush1.bf16.msra.mxu0 %v5017
    %7557 = vmatprep.subr.bf16.mxu0 %v5078
    %7558 = vmatpush2.bf16.msra.mxu0 %v5077
    %7559 = vmatprep.subr.bf16.mxu0 %v5074
    %7560 = vmatpush2.bf16.msra.mxu0 %v5073
    %7561 = vmatprep.subr.bf16.mxu0 %v5070
    %7562 = vmatpush2.bf16.msra.mxu0 %v5069
    %7563 = vmatprep.subr.bf16.mxu0 %v5066
    %7564 = vmatpush2.bf16.msra.mxu0 %v5065
    %7565 = vmatprep.subr.bf16.mxu0 %v5062
    %7566 = vmatpush2.bf16.msra.mxu0 %v5061
    %7567 = vmatprep.subr.bf16.mxu0 %v5058
    %7568 = vmatpush2.bf16.msra.mxu0 %v5057
    %7569 = vmatprep.subr.bf16.mxu0 %v5054
    %7570 = vmatpush2.bf16.msra.mxu0 %v5053
    %7571 = vmatprep.subr.bf16.mxu0 %v5050
    %7572 = vmatpush2.bf16.msra.mxu0 %v5049
    %7573 = vmatprep.mubr.bf16.mxu0 %v1260
    %7574 = vmatmul.mubr.bf16.gmra.mxu0 %v1259
    %v7575 = vpop.f32.mrf.mxu0
    %v7576 = vadd.f32 %v7533, %v7575
    %v7577 = vpop.f32.mrf.mxu0
    %v7578 = vadd.f32 %v7535, %v7577
    %v7579 = vpop.f32.mrf.mxu0
    %v7580 = vadd.f32 %v7537, %v7579
    %v7581 = vpop.f32.mrf.mxu0
    %v7582 = vadd.f32 %v7539, %v7581
    %7583 = vdwg.mxu0
    %7584 = vmatprep.subr.bf16.mxu0 %v5110
    %7585 = vmatpush1.bf16.msra.mxu0 %v5109
    %7586 = vmatprep.subr.bf16.mxu0 %v5106
    %7587 = vmatpush1.bf16.msra.mxu0 %v5105
    %7588 = vmatprep.subr.bf16.mxu0 %v5102
    %7589 = vmatpush1.bf16.msra.mxu0 %v5101
    %7590 = vmatprep.subr.bf16.mxu0 %v5098
    %7591 = vmatpush1.bf16.msra.mxu0 %v5097
    %7592 = vmatprep.subr.bf16.mxu0 %v5094
    %7593 = vmatpush1.bf16.msra.mxu0 %v5093
    %7594 = vmatprep.subr.bf16.mxu0 %v5090
    %7595 = vmatpush1.bf16.msra.mxu0 %v5089
    %7596 = vmatprep.subr.bf16.mxu0 %v5086
    %7597 = vmatpush1.bf16.msra.mxu0 %v5085
    %7598 = vmatprep.subr.bf16.mxu0 %v5082
    %7599 = vmatpush1.bf16.msra.mxu0 %v5081
    %7600 = vmatprep.subr.bf16.mxu0 %v5142
    %7601 = vmatpush2.bf16.msra.mxu0 %v5141
    %7602 = vmatprep.subr.bf16.mxu0 %v5138
    %7603 = vmatpush2.bf16.msra.mxu0 %v5137
    %7604 = vmatprep.subr.bf16.mxu0 %v5134
    %7605 = vmatpush2.bf16.msra.mxu0 %v5133
    %7606 = vmatprep.subr.bf16.mxu0 %v5130
    %7607 = vmatpush2.bf16.msra.mxu0 %v5129
    %7608 = vmatprep.subr.bf16.mxu0 %v5126
    %7609 = vmatpush2.bf16.msra.mxu0 %v5125
    %7610 = vmatprep.subr.bf16.mxu0 %v5122
    %7611 = vmatpush2.bf16.msra.mxu0 %v5121
    %7612 = vmatprep.subr.bf16.mxu0 %v5118
    %7613 = vmatpush2.bf16.msra.mxu0 %v5117
    %7614 = vmatprep.subr.bf16.mxu0 %v5114
    %7615 = vmatpush2.bf16.msra.mxu0 %v5113
    %7616 = vmatprep.mubr.bf16.mxu0 %v1262
    %7617 = vmatmul.mubr.bf16.gmra.mxu0 %v1261
    %v7618 = vpop.f32.mrf.mxu0
    %v7619 = vadd.f32 %v7576, %v7618
    %v7620 = vpop.f32.mrf.mxu0
    %v7621 = vadd.f32 %v7578, %v7620
    %v7622 = vpop.f32.mrf.mxu0
    %v7623 = vadd.f32 %v7580, %v7622
    %v7624 = vpop.f32.mrf.mxu0
    %v7625 = vadd.f32 %v7582, %v7624
    %7626 = vdwg.mxu0
    %7627 = vmatprep.subr.bf16.mxu0 %v5174
    %7628 = vmatpush1.bf16.msra.mxu0 %v5173
    %7629 = vmatprep.subr.bf16.mxu0 %v5170
    %7630 = vmatpush1.bf16.msra.mxu0 %v5169
    %7631 = vmatprep.subr.bf16.mxu0 %v5166
    %7632 = vmatpush1.bf16.msra.mxu0 %v5165
    %7633 = vmatprep.subr.bf16.mxu0 %v5162
    %7634 = vmatpush1.bf16.msra.mxu0 %v5161
    %7635 = vmatprep.subr.bf16.mxu0 %v5158
    %7636 = vmatpush1.bf16.msra.mxu0 %v5157
    %7637 = vmatprep.subr.bf16.mxu0 %v5154
    %7638 = vmatpush1.bf16.msra.mxu0 %v5153
    %7639 = vmatprep.subr.bf16.mxu0 %v5150
    %7640 = vmatpush1.bf16.msra.mxu0 %v5149
    %7641 = vmatprep.subr.bf16.mxu0 %v5146
    %7642 = vmatpush1.bf16.msra.mxu0 %v5145
    %7643 = vmatprep.subr.bf16.mxu0 %v5206
    %7644 = vmatpush2.bf16.msra.mxu0 %v5205
    %7645 = vmatprep.subr.bf16.mxu0 %v5202
    %7646 = vmatpush2.bf16.msra.mxu0 %v5201
    %7647 = vmatprep.subr.bf16.mxu0 %v5198
    %7648 = vmatpush2.bf16.msra.mxu0 %v5197
    %7649 = vmatprep.subr.bf16.mxu0 %v5194
    %7650 = vmatpush2.bf16.msra.mxu0 %v5193
    %7651 = vmatprep.subr.bf16.mxu0 %v5190
    %7652 = vmatpush2.bf16.msra.mxu0 %v5189
    %7653 = vmatprep.subr.bf16.mxu0 %v5186
    %7654 = vmatpush2.bf16.msra.mxu0 %v5185
    %7655 = vmatprep.subr.bf16.mxu0 %v5182
    %7656 = vmatpush2.bf16.msra.mxu0 %v5181
    %7657 = vmatprep.subr.bf16.mxu0 %v5178
    %7658 = vmatpush2.bf16.msra.mxu0 %v5177
    %7659 = vmatprep.mubr.bf16.mxu0 %v1264
    %7660 = vmatmul.mubr.bf16.gmra.mxu0 %v1263
    %v7661 = vpop.f32.mrf.mxu0
    %v7662 = vadd.f32 %v7619, %v7661
    %v7663 = vpop.f32.mrf.mxu0
    %v7664 = vadd.f32 %v7621, %v7663
    %v7665 = vpop.f32.mrf.mxu0
    %v7666 = vadd.f32 %v7623, %v7665
    %v7667 = vpop.f32.mrf.mxu0
    %v7668 = vadd.f32 %v7625, %v7667
    %7669 = vdwg.mxu0
    %7670 = vmatprep.subr.bf16.mxu0 %v5238
    %7671 = vmatpush1.bf16.msra.mxu0 %v5237
    %7672 = vmatprep.subr.bf16.mxu0 %v5234
    %7673 = vmatpush1.bf16.msra.mxu0 %v5233
    %7674 = vmatprep.subr.bf16.mxu0 %v5230
    %7675 = vmatpush1.bf16.msra.mxu0 %v5229
    %7676 = vmatprep.subr.bf16.mxu0 %v5226
    %7677 = vmatpush1.bf16.msra.mxu0 %v5225
    %7678 = vmatprep.subr.bf16.mxu0 %v5222
    %7679 = vmatpush1.bf16.msra.mxu0 %v5221
    %7680 = vmatprep.subr.bf16.mxu0 %v5218
    %7681 = vmatpush1.bf16.msra.mxu0 %v5217
    %7682 = vmatprep.subr.bf16.mxu0 %v5214
    %7683 = vmatpush1.bf16.msra.mxu0 %v5213
    %7684 = vmatprep.subr.bf16.mxu0 %v5210
    %7685 = vmatpush1.bf16.msra.mxu0 %v5209
    %7686 = vmatprep.subr.bf16.mxu0 %v5270
    %7687 = vmatpush2.bf16.msra.mxu0 %v5269
    %7688 = vmatprep.subr.bf16.mxu0 %v5266
    %7689 = vmatpush2.bf16.msra.mxu0 %v5265
    %7690 = vmatprep.subr.bf16.mxu0 %v5262
    %7691 = vmatpush2.bf16.msra.mxu0 %v5261
    %7692 = vmatprep.subr.bf16.mxu0 %v5258
    %7693 = vmatpush2.bf16.msra.mxu0 %v5257
    %7694 = vmatprep.subr.bf16.mxu0 %v5254
    %7695 = vmatpush2.bf16.msra.mxu0 %v5253
    %7696 = vmatprep.subr.bf16.mxu0 %v5250
    %7697 = vmatpush2.bf16.msra.mxu0 %v5249
    %7698 = vmatprep.subr.bf16.mxu0 %v5246
    %7699 = vmatpush2.bf16.msra.mxu0 %v5245
    %7700 = vmatprep.subr.bf16.mxu0 %v5242
    %7701 = vmatpush2.bf16.msra.mxu0 %v5241
    %7702 = vmatprep.mubr.bf16.mxu0 %v1266
    %7703 = vmatmul.mubr.bf16.gmra.mxu0 %v1265
    %v7704 = vpop.f32.mrf.mxu0
    %v7705 = vadd.f32 %v7662, %v7704
    %v7706 = vpop.f32.mrf.mxu0
    %v7707 = vadd.f32 %v7664, %v7706
    %v7708 = vpop.f32.mrf.mxu0
    %v7709 = vadd.f32 %v7666, %v7708
    %v7710 = vpop.f32.mrf.mxu0
    %v7711 = vadd.f32 %v7668, %v7710
    %7712 = vdwg.mxu0
    %7713 = vmatprep.subr.bf16.mxu0 %v5302
    %7714 = vmatpush1.bf16.msra.mxu0 %v5301
    %7715 = vmatprep.subr.bf16.mxu0 %v5298
    %7716 = vmatpush1.bf16.msra.mxu0 %v5297
    %7717 = vmatprep.subr.bf16.mxu0 %v5294
    %7718 = vmatpush1.bf16.msra.mxu0 %v5293
    %7719 = vmatprep.subr.bf16.mxu0 %v5290
    %7720 = vmatpush1.bf16.msra.mxu0 %v5289
    %7721 = vmatprep.subr.bf16.mxu0 %v5286
    %7722 = vmatpush1.bf16.msra.mxu0 %v5285
    %7723 = vmatprep.subr.bf16.mxu0 %v5282
    %7724 = vmatpush1.bf16.msra.mxu0 %v5281
    %7725 = vmatprep.subr.bf16.mxu0 %v5278
    %7726 = vmatpush1.bf16.msra.mxu0 %v5277
    %7727 = vmatprep.subr.bf16.mxu0 %v5274
    %7728 = vmatpush1.bf16.msra.mxu0 %v5273
    %7729 = vmatprep.subr.bf16.mxu0 %v5334
    %7730 = vmatpush2.bf16.msra.mxu0 %v5333
    %7731 = vmatprep.subr.bf16.mxu0 %v5330
    %7732 = vmatpush2.bf16.msra.mxu0 %v5329
    %7733 = vmatprep.subr.bf16.mxu0 %v5326
    %7734 = vmatpush2.bf16.msra.mxu0 %v5325
    %7735 = vmatprep.subr.bf16.mxu0 %v5322
    %7736 = vmatpush2.bf16.msra.mxu0 %v5321
    %7737 = vmatprep.subr.bf16.mxu0 %v5318
    %7738 = vmatpush2.bf16.msra.mxu0 %v5317
    %7739 = vmatprep.subr.bf16.mxu0 %v5314
    %7740 = vmatpush2.bf16.msra.mxu0 %v5313
    %7741 = vmatprep.subr.bf16.mxu0 %v5310
    %7742 = vmatpush2.bf16.msra.mxu0 %v5309
    %7743 = vmatprep.subr.bf16.mxu0 %v5306
    %7744 = vmatpush2.bf16.msra.mxu0 %v5305
    %7745 = vmatprep.mubr.bf16.mxu0 %v1268
    %7746 = vmatmul.mubr.bf16.gmra.mxu0 %v1267
    %v7747 = vpop.f32.mrf.mxu0
    %v7748 = vadd.f32 %v7705, %v7747
    %v7749 = vpop.f32.mrf.mxu0
    %v7750 = vadd.f32 %v7707, %v7749
    %v7751 = vpop.f32.mrf.mxu0
    %v7752 = vadd.f32 %v7709, %v7751
    %v7753 = vpop.f32.mrf.mxu0
    %v7754 = vadd.f32 %v7711, %v7753
    %7755 = vdwg.mxu0
    %7756 = vmatprep.subr.bf16.mxu0 %v5366
    %7757 = vmatpush1.bf16.msra.mxu0 %v5365
    %7758 = vmatprep.subr.bf16.mxu0 %v5362
    %7759 = vmatpush1.bf16.msra.mxu0 %v5361
    %7760 = vmatprep.subr.bf16.mxu0 %v5358
    %7761 = vmatpush1.bf16.msra.mxu0 %v5357
    %7762 = vmatprep.subr.bf16.mxu0 %v5354
    %7763 = vmatpush1.bf16.msra.mxu0 %v5353
    %7764 = vmatprep.subr.bf16.mxu0 %v5350
    %7765 = vmatpush1.bf16.msra.mxu0 %v5349
    %7766 = vmatprep.subr.bf16.mxu0 %v5346
    %7767 = vmatpush1.bf16.msra.mxu0 %v5345
    %7768 = vmatprep.subr.bf16.mxu0 %v5342
    %7769 = vmatpush1.bf16.msra.mxu0 %v5341
    %7770 = vmatprep.subr.bf16.mxu0 %v5338
    %7771 = vmatpush1.bf16.msra.mxu0 %v5337
    %7772 = vmatprep.subr.bf16.mxu0 %v5398
    %7773 = vmatpush2.bf16.msra.mxu0 %v5397
    %7774 = vmatprep.subr.bf16.mxu0 %v5394
    %7775 = vmatpush2.bf16.msra.mxu0 %v5393
    %7776 = vmatprep.subr.bf16.mxu0 %v5390
    %7777 = vmatpush2.bf16.msra.mxu0 %v5389
    %7778 = vmatprep.subr.bf16.mxu0 %v5386
    %7779 = vmatpush2.bf16.msra.mxu0 %v5385
    %7780 = vmatprep.subr.bf16.mxu0 %v5382
    %7781 = vmatpush2.bf16.msra.mxu0 %v5381
    %7782 = vmatprep.subr.bf16.mxu0 %v5378
    %7783 = vmatpush2.bf16.msra.mxu0 %v5377
    %7784 = vmatprep.subr.bf16.mxu0 %v5374
    %7785 = vmatpush2.bf16.msra.mxu0 %v5373
    %7786 = vmatprep.subr.bf16.mxu0 %v5370
    %7787 = vmatpush2.bf16.msra.mxu0 %v5369
    %7788 = vmatprep.mubr.bf16.mxu0 %v1270
    %7789 = vmatmul.mubr.bf16.gmra.mxu0 %v1269
    %v7790 = vpop.f32.mrf.mxu0
    %v7791 = vadd.f32 %v7748, %v7790
    %v7792 = vpop.f32.mrf.mxu0
    %v7793 = vadd.f32 %v7750, %v7792
    %v7794 = vpop.f32.mrf.mxu0
    %v7795 = vadd.f32 %v7752, %v7794
    %v7796 = vpop.f32.mrf.mxu0
    %v7797 = vadd.f32 %v7754, %v7796
    %7798 = vdwg.mxu0
    %s7799 = scalar_lea.vmem %s5, 1
    %v7800 = vld [vmem:[%s7799] ss:$8 sm:$0xf]
    %s7801 = scalar_lea.vmem %s5, 2
    %v7802 = vld [vmem:[%s7801] ss:$8 sm:$0xf]
    %v7803 = vadd.f32 %v7103, %v7105
    %v7804 = vadd.f32 %v7803, %v7791
    %v7805 = vadd.f32 %v7804, %v7793
    %7806 = vadd.xlane.f32.xlu0 %v7805
    %v7807 = vpop.xlane.xlu0 %7806
    %v7808 = vadd.f32 %v7107, %v7109
    %v7809 = vadd.f32 %v7808, %v7795
    %v7810 = vadd.f32 %v7809, %v7797
    %7811 = vadd.xlane.f32.xlu0 %v7810
    %v7812 = vpop.xlane.xlu0 %7811
    %v7813 = vrcp.pop 512.0
    %v7814 = vmul.f32 %v7807, %v7813
    %v7815 = vmul.f32 %v7812, %v7813
    %v7816 = vsub.f32 %v7103, %v7814
    %v7817 = vsub.f32 %v7105, %v7814
    %v7818 = vsub.f32 %v7791, %v7814
    %v7819 = vsub.f32 %v7793, %v7814
    %v7820 = vsub.f32 %v7107, %v7815
    %v7821 = vsub.f32 %v7109, %v7815
    %v7822 = vsub.f32 %v7795, %v7815
    %v7823 = vsub.f32 %v7797, %v7815
    %v7824 = vmul.f32 %v7816, %v7816
    %v7825 = vmul.f32 %v7817, %v7817
    %v7826 = vmul.f32 %v7818, %v7818
    %v7827 = vmul.f32 %v7819, %v7819
    %v7828 = vmul.f32 %v7820, %v7820
    %v7829 = vmul.f32 %v7821, %v7821
    %v7830 = vmul.f32 %v7822, %v7822
    %v7831 = vmul.f32 %v7823, %v7823
    %v7832 = vadd.f32 %v7824, %v7825
    %v7833 = vadd.f32 %v7832, %v7826
    %v7834 = vadd.f32 %v7833, %v7827
    %7835 = vadd.xlane.f32.xlu0 %v7834
    %v7836 = vpop.xlane.xlu0 %7835
    %v7837 = vadd.f32 %v7828, %v7829
    %v7838 = vadd.f32 %v7837, %v7830
    %v7839 = vadd.f32 %v7838, %v7831
    %7840 = vadd.xlane.f32.xlu0 %v7839
    %v7841 = vpop.xlane.xlu0 %7840
    %v7842 = vmul.f32 %v7836, %v7813
    %v7843 = vmul.f32 %v7841, %v7813
    %v7844 = vadd.f32 %v7842, 1e-05
    %v7845 = vadd.f32 %v7843, 1e-05
    %v7846 = vrsqrt.pop %v7844
    %v7847 = vrsqrt.pop %v7845
    %v7848 = vmul.f32 %v7816, %v7846
    %v7849 = vmul.f32 %v7817, %v7846
    %v7850 = vmul.f32 %v7818, %v7846
    %v7851 = vmul.f32 %v7819, %v7846
    %v7852 = vmul.f32 %v7820, %v7847
    %v7853 = vmul.f32 %v7821, %v7847
    %v7854 = vmul.f32 %v7822, %v7847
    %v7855 = vmul.f32 %v7823, %v7847
    %v7857 = vlaneseq
    %v7858 = vshrl.u32 %v7857, 7
    %v7859 = vsub.s32 0, %v7858
    %v7860 = vrot.slane %v7800, %v7859
    %v7861 = vlaneseq
    %v7862 = vshrl.u32 %v7861, 7
    %v7863 = vsub.s32 1, %v7862
    %v7864 = vrot.slane %v7800, %v7863
    %v7865 = vlaneseq
    %v7866 = vshrl.u32 %v7865, 7
    %v7867 = vsub.s32 2, %v7866
    %v7868 = vrot.slane %v7800, %v7867
    %v7869 = vlaneseq
    %v7870 = vshrl.u32 %v7869, 7
    %v7871 = vsub.s32 3, %v7870
    %v7872 = vrot.slane %v7800, %v7871
    %v7877 = vmul.f32 %v7848, %v7860
    %v7878 = vmul.f32 %v7849, %v7864
    %v7879 = vmul.f32 %v7850, %v7868
    %v7880 = vmul.f32 %v7851, %v7872
    %v7881 = vmul.f32 %v7852, %v7860
    %v7882 = vmul.f32 %v7853, %v7864
    %v7883 = vmul.f32 %v7854, %v7868
    %v7884 = vmul.f32 %v7855, %v7872
    %v7886 = vlaneseq
    %v7887 = vshrl.u32 %v7886, 7
    %v7888 = vsub.s32 0, %v7887
    %v7889 = vrot.slane %v7802, %v7888
    %v7890 = vlaneseq
    %v7891 = vshrl.u32 %v7890, 7
    %v7892 = vsub.s32 1, %v7891
    %v7893 = vrot.slane %v7802, %v7892
    %v7894 = vlaneseq
    %v7895 = vshrl.u32 %v7894, 7
    %v7896 = vsub.s32 2, %v7895
    %v7897 = vrot.slane %v7802, %v7896
    %v7898 = vlaneseq
    %v7899 = vshrl.u32 %v7898, 7
    %v7900 = vsub.s32 3, %v7899
    %v7901 = vrot.slane %v7802, %v7900
    %v7906 = vadd.f32 %v7877, %v7889
    %v7907 = vadd.f32 %v7878, %v7893
    %v7908 = vadd.f32 %v7879, %v7897
    %v7909 = vadd.f32 %v7880, %v7901
    %v7910 = vadd.f32 %v7881, %v7889
    %v7911 = vadd.f32 %v7882, %v7893
    %v7912 = vadd.f32 %v7883, %v7897
    %v7913 = vadd.f32 %v7884, %v7901
    %vm7914 = vcmp.gt.f32.partialorder %v7906, 0.0
    %vm7915 = vcmp.gt.f32.partialorder %v7907, 0.0
    %vm7916 = vcmp.gt.f32.partialorder %v7908, 0.0
    %vm7917 = vcmp.gt.f32.partialorder %v7909, 0.0
    %vm7918 = vcmp.gt.f32.partialorder %v7910, 0.0
    %vm7919 = vcmp.gt.f32.partialorder %v7911, 0.0
    %vm7920 = vcmp.gt.f32.partialorder %v7912, 0.0
    %vm7921 = vcmp.gt.f32.partialorder %v7913, 0.0
    %v7922 = vmul.f32 %v7906, 1.442695
    %v7923 = vpow.pop %v7922
    %v7924 = vmul.f32 %v7907, 1.442695
    %v7925 = vpow.pop %v7924
    %v7926 = vmul.f32 %v7908, 1.442695
    %v7927 = vpow.pop %v7926
    %v7928 = vmul.f32 %v7909, 1.442695
    %v7929 = vpow.pop %v7928
    %v7930 = vmul.f32 %v7910, 1.442695
    %v7931 = vpow.pop %v7930
    %v7932 = vmul.f32 %v7911, 1.442695
    %v7933 = vpow.pop %v7932
    %v7934 = vmul.f32 %v7912, 1.442695
    %v7935 = vpow.pop %v7934
    %v7936 = vmul.f32 %v7913, 1.442695
    %v7937 = vpow.pop %v7936
    %v7938 = vsub.f32 %v7923, 1.0
    %v7939 = vsub.f32 %v7925, 1.0
    %v7940 = vsub.f32 %v7927, 1.0
    %v7941 = vsub.f32 %v7929, 1.0
    %v7942 = vsub.f32 %v7931, 1.0
    %v7943 = vsub.f32 %v7933, 1.0
    %v7944 = vsub.f32 %v7935, 1.0
    %v7945 = vsub.f32 %v7937, 1.0
    %v7946 = vsel %vm7914, %v7906, %v7938
    %v7947 = vsel %vm7915, %v7907, %v7939
    %v7948 = vsel %vm7916, %v7908, %v7940
    %v7949 = vsel %vm7917, %v7909, %v7941
    %v7950 = vsel %vm7918, %v7910, %v7942
    %v7951 = vsel %vm7919, %v7911, %v7943
    %v7952 = vsel %vm7920, %v7912, %v7944
    %v7953 = vsel %vm7921, %v7913, %v7945
    %v7954 = vpack.c.bf16 %v7950, %v7946
    %v7955 = vpack.c.bf16 %v7951, %v7947
    %v7956 = vpack.c.bf16 %v7952, %v7948
    %v7957 = vpack.c.bf16 %v7953, %v7949
    %v7958 = vld [vmem:[#allocation4] sm:$0xff]
    %v7959 = vld [vmem:[#allocation4 + $0x8] sm:$0xff]
    %v7960 = vld [vmem:[#allocation4 + $0x10] sm:$0xff]
    %v7961 = vld [vmem:[#allocation4 + $0x18] sm:$0xff]
    %v7962 = vld [vmem:[#allocation4 + $0x20] sm:$0xff]
    %v7963 = vld [vmem:[#allocation4 + $0x28] sm:$0xff]
    %v7964 = vld [vmem:[#allocation4 + $0x30] sm:$0xff]
    %v7965 = vld [vmem:[#allocation4 + $0x38] sm:$0xff]
    %v7966 = vld [vmem:[#allocation4 + $0x40] sm:$0xff]
    %v7967 = vld [vmem:[#allocation4 + $0x48] sm:$0xff]
    %v7968 = vld [vmem:[#allocation4 + $0x50] sm:$0xff]
    %v7969 = vld [vmem:[#allocation4 + $0x58] sm:$0xff]
    %v7970 = vld [vmem:[#allocation4 + $0x60] sm:$0xff]
    %v7971 = vld [vmem:[#allocation4 + $0x68] sm:$0xff]
    %v7972 = vld [vmem:[#allocation4 + $0x70] sm:$0xff]
    %v7973 = vld [vmem:[#allocation4 + $0x78] sm:$0xff]
    %v7974 = vld [vmem:[#allocation4 + $0x80] sm:$0xff]
    %v7975 = vld [vmem:[#allocation4 + $0x88] sm:$0xff]
    %v7976 = vld [vmem:[#allocation4 + $0x90] sm:$0xff]
    %v7977 = vld [vmem:[#allocation4 + $0x98] sm:$0xff]
    %v7978 = vld [vmem:[#allocation4 + $0xa0] sm:$0xff]
    %v7979 = vld [vmem:[#allocation4 + $0xa8] sm:$0xff]
    %v7980 = vld [vmem:[#allocation4 + $0xb0] sm:$0xff]
    %v7981 = vld [vmem:[#allocation4 + $0xb8] sm:$0xff]
    %v7982 = vld [vmem:[#allocation4 + $0xc0] sm:$0xff]
    %v7983 = vld [vmem:[#allocation4 + $0xc8] sm:$0xff]
    %v7984 = vld [vmem:[#allocation4 + $0xd0] sm:$0xff]
    %v7985 = vld [vmem:[#allocation4 + $0xd8] sm:$0xff]
    %v7986 = vld [vmem:[#allocation4 + $0xe0] sm:$0xff]
    %v7987 = vld [vmem:[#allocation4 + $0xe8] sm:$0xff]
    %v7988 = vld [vmem:[#allocation4 + $0xf0] sm:$0xff]
    %v7989 = vld [vmem:[#allocation4 + $0xf8] sm:$0xff]
    %v7990 = vld [vmem:[#allocation4 + $0x100] sm:$0xff]
    %v7991 = vld [vmem:[#allocation4 + $0x108] sm:$0xff]
    %v7992 = vld [vmem:[#allocation4 + $0x110] sm:$0xff]
    %v7993 = vld [vmem:[#allocation4 + $0x118] sm:$0xff]
    %v7994 = vld [vmem:[#allocation4 + $0x120] sm:$0xff]
    %v7995 = vld [vmem:[#allocation4 + $0x128] sm:$0xff]
    %v7996 = vld [vmem:[#allocation4 + $0x130] sm:$0xff]
    %v7997 = vld [vmem:[#allocation4 + $0x138] sm:$0xff]
    %v7998 = vld [vmem:[#allocation4 + $0x140] sm:$0xff]
    %v7999 = vld [vmem:[#allocation4 + $0x148] sm:$0xff]
    %v8000 = vld [vmem:[#allocation4 + $0x150] sm:$0xff]
    %v8001 = vld [vmem:[#allocation4 + $0x158] sm:$0xff]
    %v8002 = vld [vmem:[#allocation4 + $0x160] sm:$0xff]
    %v8003 = vld [vmem:[#allocation4 + $0x168] sm:$0xff]
    %v8004 = vld [vmem:[#allocation4 + $0x170] sm:$0xff]
    %v8005 = vld [vmem:[#allocation4 + $0x178] sm:$0xff]
    %v8006 = vld [vmem:[#allocation4 + $0x180] sm:$0xff]
    %v8007 = vld [vmem:[#allocation4 + $0x188] sm:$0xff]
    %v8008 = vld [vmem:[#allocation4 + $0x190] sm:$0xff]
    %v8009 = vld [vmem:[#allocation4 + $0x198] sm:$0xff]
    %v8010 = vld [vmem:[#allocation4 + $0x1a0] sm:$0xff]
    %v8011 = vld [vmem:[#allocation4 + $0x1a8] sm:$0xff]
    %v8012 = vld [vmem:[#allocation4 + $0x1b0] sm:$0xff]
    %v8013 = vld [vmem:[#allocation4 + $0x1b8] sm:$0xff]
    %v8014 = vld [vmem:[#allocation4 + $0x1c0] sm:$0xff]
    %v8015 = vld [vmem:[#allocation4 + $0x1c8] sm:$0xff]
    %v8016 = vld [vmem:[#allocation4 + $0x1d0] sm:$0xff]
    %v8017 = vld [vmem:[#allocation4 + $0x1d8] sm:$0xff]
    %v8018 = vld [vmem:[#allocation4 + $0x1e0] sm:$0xff]
    %v8019 = vld [vmem:[#allocation4 + $0x1e8] sm:$0xff]
    %v8020 = vld [vmem:[#allocation4 + $0x1f0] sm:$0xff]
    %v8021 = vld [vmem:[#allocation4 + $0x1f8] sm:$0xff]
    %s8022 = scalar_lea.vmem %s5, 3
    %v8023 = vld [vmem:[%s8022] ss:$8 sm:$0x3]
    %v8025 = vlaneseq
    %v8026 = vshrl.u32 %v8025, 7
    %v8027 = vsub.s32 0, %v8026
    %v8028 = vrot.slane %v8023, %v8027
    %v8029 = vlaneseq
    %v8030 = vshrl.u32 %v8029, 7
    %v8031 = vsub.s32 1, %v8030
    %v8032 = vrot.slane %v8023, %v8031
    %v8099 = vunpack.c.l.b16 %v7958
    %v8100 = vunpack.c.h.b16 %v7958
    %v8101 = vunpack.c.l.b16 %v7959
    %v8102 = vunpack.c.h.b16 %v7959
    %v8103 = vunpack.c.l.b16 %v7960
    %v8104 = vunpack.c.h.b16 %v7960
    %v8105 = vunpack.c.l.b16 %v7961
    %v8106 = vunpack.c.h.b16 %v7961
    %v8107 = vunpack.c.l.b16 %v7962
    %v8108 = vunpack.c.h.b16 %v7962
    %v8109 = vunpack.c.l.b16 %v7963
    %v8110 = vunpack.c.h.b16 %v7963
    %v8111 = vunpack.c.l.b16 %v7964
    %v8112 = vunpack.c.h.b16 %v7964
    %v8113 = vunpack.c.l.b16 %v7965
    %v8114 = vunpack.c.h.b16 %v7965
    %v8115 = vunpack.c.l.b16 %v7966
    %v8116 = vunpack.c.h.b16 %v7966
    %v8117 = vunpack.c.l.b16 %v7967
    %v8118 = vunpack.c.h.b16 %v7967
    %v8119 = vunpack.c.l.b16 %v7968
    %v8120 = vunpack.c.h.b16 %v7968
    %v8121 = vunpack.c.l.b16 %v7969
    %v8122 = vunpack.c.h.b16 %v7969
    %v8123 = vunpack.c.l.b16 %v7970
    %v8124 = vunpack.c.h.b16 %v7970
    %v8125 = vunpack.c.l.b16 %v7971
    %v8126 = vunpack.c.h.b16 %v7971
    %v8127 = vunpack.c.l.b16 %v7972
    %v8128 = vunpack.c.h.b16 %v7972
    %v8129 = vunpack.c.l.b16 %v7973
    %v8130 = vunpack.c.h.b16 %v7973
    %v8131 = vunpack.c.l.b16 %v7974
    %v8132 = vunpack.c.h.b16 %v7974
    %v8133 = vunpack.c.l.b16 %v7975
    %v8134 = vunpack.c.h.b16 %v7975
    %v8135 = vunpack.c.l.b16 %v7976
    %v8136 = vunpack.c.h.b16 %v7976
    %v8137 = vunpack.c.l.b16 %v7977
    %v8138 = vunpack.c.h.b16 %v7977
    %v8139 = vunpack.c.l.b16 %v7978
    %v8140 = vunpack.c.h.b16 %v7978
    %v8141 = vunpack.c.l.b16 %v7979
    %v8142 = vunpack.c.h.b16 %v7979
    %v8143 = vunpack.c.l.b16 %v7980
    %v8144 = vunpack.c.h.b16 %v7980
    %v8145 = vunpack.c.l.b16 %v7981
    %v8146 = vunpack.c.h.b16 %v7981
    %v8147 = vunpack.c.l.b16 %v7982
    %v8148 = vunpack.c.h.b16 %v7982
    %v8149 = vunpack.c.l.b16 %v7983
    %v8150 = vunpack.c.h.b16 %v7983
    %v8151 = vunpack.c.l.b16 %v7984
    %v8152 = vunpack.c.h.b16 %v7984
    %v8153 = vunpack.c.l.b16 %v7985
    %v8154 = vunpack.c.h.b16 %v7985
    %v8155 = vunpack.c.l.b16 %v7986
    %v8156 = vunpack.c.h.b16 %v7986
    %v8157 = vunpack.c.l.b16 %v7987
    %v8158 = vunpack.c.h.b16 %v7987
    %v8159 = vunpack.c.l.b16 %v7988
    %v8160 = vunpack.c.h.b16 %v7988
    %v8161 = vunpack.c.l.b16 %v7989
    %v8162 = vunpack.c.h.b16 %v7989
    %v8163 = vunpack.c.l.b16 %v7990
    %v8164 = vunpack.c.h.b16 %v7990
    %v8165 = vunpack.c.l.b16 %v7991
    %v8166 = vunpack.c.h.b16 %v7991
    %v8167 = vunpack.c.l.b16 %v7992
    %v8168 = vunpack.c.h.b16 %v7992
    %v8169 = vunpack.c.l.b16 %v7993
    %v8170 = vunpack.c.h.b16 %v7993
    %v8171 = vunpack.c.l.b16 %v7994
    %v8172 = vunpack.c.h.b16 %v7994
    %v8173 = vunpack.c.l.b16 %v7995
    %v8174 = vunpack.c.h.b16 %v7995
    %v8175 = vunpack.c.l.b16 %v7996
    %v8176 = vunpack.c.h.b16 %v7996
    %v8177 = vunpack.c.l.b16 %v7997
    %v8178 = vunpack.c.h.b16 %v7997
    %v8179 = vunpack.c.l.b16 %v7998
    %v8180 = vunpack.c.h.b16 %v7998
    %v8181 = vunpack.c.l.b16 %v7999
    %v8182 = vunpack.c.h.b16 %v7999
    %v8183 = vunpack.c.l.b16 %v8000
    %v8184 = vunpack.c.h.b16 %v8000
    %v8185 = vunpack.c.l.b16 %v8001
    %v8186 = vunpack.c.h.b16 %v8001
    %v8187 = vunpack.c.l.b16 %v8002
    %v8188 = vunpack.c.h.b16 %v8002
    %v8189 = vunpack.c.l.b16 %v8003
    %v8190 = vunpack.c.h.b16 %v8003
    %v8191 = vunpack.c.l.b16 %v8004
    %v8192 = vunpack.c.h.b16 %v8004
    %v8193 = vunpack.c.l.b16 %v8005
    %v8194 = vunpack.c.h.b16 %v8005
    %v8195 = vunpack.c.l.b16 %v8006
    %v8196 = vunpack.c.h.b16 %v8006
    %v8197 = vunpack.c.l.b16 %v8007
    %v8198 = vunpack.c.h.b16 %v8007
    %v8199 = vunpack.c.l.b16 %v8008
    %v8200 = vunpack.c.h.b16 %v8008
    %v8201 = vunpack.c.l.b16 %v8009
    %v8202 = vunpack.c.h.b16 %v8009
    %v8203 = vunpack.c.l.b16 %v8010
    %v8204 = vunpack.c.h.b16 %v8010
    %v8205 = vunpack.c.l.b16 %v8011
    %v8206 = vunpack.c.h.b16 %v8011
    %v8207 = vunpack.c.l.b16 %v8012
    %v8208 = vunpack.c.h.b16 %v8012
    %v8209 = vunpack.c.l.b16 %v8013
    %v8210 = vunpack.c.h.b16 %v8013
    %v8211 = vunpack.c.l.b16 %v8014
    %v8212 = vunpack.c.h.b16 %v8014
    %v8213 = vunpack.c.l.b16 %v8015
    %v8214 = vunpack.c.h.b16 %v8015
    %v8215 = vunpack.c.l.b16 %v8016
    %v8216 = vunpack.c.h.b16 %v8016
    %v8217 = vunpack.c.l.b16 %v8017
    %v8218 = vunpack.c.h.b16 %v8017
    %v8219 = vunpack.c.l.b16 %v8018
    %v8220 = vunpack.c.h.b16 %v8018
    %v8221 = vunpack.c.l.b16 %v8019
    %v8222 = vunpack.c.h.b16 %v8019
    %v8223 = vunpack.c.l.b16 %v8020
    %v8224 = vunpack.c.h.b16 %v8020
    %v8225 = vunpack.c.l.b16 %v8021
    %v8226 = vunpack.c.h.b16 %v8021
    %v8227 = vpack.c.b16 %v8101, %v8099
    %v8228 = vpack.c.b16 %v8102, %v8100
    %v8229 = vpack.c.b16 %v8105, %v8103
    %v8230 = vpack.c.b16 %v8106, %v8104
    %v8231 = vpack.c.b16 %v8109, %v8107
    %v8232 = vpack.c.b16 %v8110, %v8108
    %v8233 = vpack.c.b16 %v8113, %v8111
    %v8234 = vpack.c.b16 %v8114, %v8112
    %v8235 = vpack.c.b16 %v8117, %v8115
    %v8236 = vpack.c.b16 %v8118, %v8116
    %v8237 = vpack.c.b16 %v8121, %v8119
    %v8238 = vpack.c.b16 %v8122, %v8120
    %v8239 = vpack.c.b16 %v8125, %v8123
    %v8240 = vpack.c.b16 %v8126, %v8124
    %v8241 = vpack.c.b16 %v8129, %v8127
    %v8242 = vpack.c.b16 %v8130, %v8128
    %v8243 = vpack.c.b16 %v8133, %v8131
    %v8244 = vpack.c.b16 %v8134, %v8132
    %v8245 = vpack.c.b16 %v8137, %v8135
    %v8246 = vpack.c.b16 %v8138, %v8136
    %v8247 = vpack.c.b16 %v8141, %v8139
    %v8248 = vpack.c.b16 %v8142, %v8140
    %v8249 = vpack.c.b16 %v8145, %v8143
    %v8250 = vpack.c.b16 %v8146, %v8144
    %v8251 = vpack.c.b16 %v8149, %v8147
    %v8252 = vpack.c.b16 %v8150, %v8148
    %v8253 = vpack.c.b16 %v8153, %v8151
    %v8254 = vpack.c.b16 %v8154, %v8152
    %v8255 = vpack.c.b16 %v8157, %v8155
    %v8256 = vpack.c.b16 %v8158, %v8156
    %v8257 = vpack.c.b16 %v8161, %v8159
    %v8258 = vpack.c.b16 %v8162, %v8160
    %v8259 = vpack.c.b16 %v8165, %v8163
    %v8260 = vpack.c.b16 %v8166, %v8164
    %v8261 = vpack.c.b16 %v8169, %v8167
    %v8262 = vpack.c.b16 %v8170, %v8168
    %v8263 = vpack.c.b16 %v8173, %v8171
    %v8264 = vpack.c.b16 %v8174, %v8172
    %v8265 = vpack.c.b16 %v8177, %v8175
    %v8266 = vpack.c.b16 %v8178, %v8176
    %v8267 = vpack.c.b16 %v8181, %v8179
    %v8268 = vpack.c.b16 %v8182, %v8180
    %v8269 = vpack.c.b16 %v8185, %v8183
    %v8270 = vpack.c.b16 %v8186, %v8184
    %v8271 = vpack.c.b16 %v8189, %v8187
    %v8272 = vpack.c.b16 %v8190, %v8188
    %v8273 = vpack.c.b16 %v8193, %v8191
    %v8274 = vpack.c.b16 %v8194, %v8192
    %v8275 = vpack.c.b16 %v8197, %v8195
    %v8276 = vpack.c.b16 %v8198, %v8196
    %v8277 = vpack.c.b16 %v8201, %v8199
    %v8278 = vpack.c.b16 %v8202, %v8200
    %v8279 = vpack.c.b16 %v8205, %v8203
    %v8280 = vpack.c.b16 %v8206, %v8204
    %v8281 = vpack.c.b16 %v8209, %v8207
    %v8282 = vpack.c.b16 %v8210, %v8208
    %v8283 = vpack.c.b16 %v8213, %v8211
    %v8284 = vpack.c.b16 %v8214, %v8212
    %v8285 = vpack.c.b16 %v8217, %v8215
    %v8286 = vpack.c.b16 %v8218, %v8216
    %v8287 = vpack.c.b16 %v8221, %v8219
    %v8288 = vpack.c.b16 %v8222, %v8220
    %v8289 = vpack.c.b16 %v8225, %v8223
    %v8290 = vpack.c.b16 %v8226, %v8224
    %8355 = vmatprep.subr.bf16.mxu0 %v8242
    %8356 = vmatpush1.bf16.msra.mxu0 %v8241
    %8357 = vmatprep.subr.bf16.mxu0 %v8240
    %8358 = vmatpush1.bf16.msra.mxu0 %v8239
    %8359 = vmatprep.subr.bf16.mxu0 %v8238
    %8360 = vmatpush1.bf16.msra.mxu0 %v8237
    %8361 = vmatprep.subr.bf16.mxu0 %v8236
    %8362 = vmatpush1.bf16.msra.mxu0 %v8235
    %8363 = vmatprep.subr.bf16.mxu0 %v8234
    %8364 = vmatpush1.bf16.msra.mxu0 %v8233
    %8365 = vmatprep.subr.bf16.mxu0 %v8232
    %8366 = vmatpush1.bf16.msra.mxu0 %v8231
    %8367 = vmatprep.subr.bf16.mxu0 %v8230
    %8368 = vmatpush1.bf16.msra.mxu0 %v8229
    %8369 = vmatprep.subr.bf16.mxu0 %v8228
    %8370 = vmatpush1.bf16.msra.mxu0 %v8227
    %8371 = vmatprep.subr.bf16.mxu0 %v8258
    %8372 = vmatpush2.bf16.msra.mxu0 %v8257
    %8373 = vmatprep.subr.bf16.mxu0 %v8256
    %8374 = vmatpush2.bf16.msra.mxu0 %v8255
    %8375 = vmatprep.subr.bf16.mxu0 %v8254
    %8376 = vmatpush2.bf16.msra.mxu0 %v8253
    %8377 = vmatprep.subr.bf16.mxu0 %v8252
    %8378 = vmatpush2.bf16.msra.mxu0 %v8251
    %8379 = vmatprep.subr.bf16.mxu0 %v8250
    %8380 = vmatpush2.bf16.msra.mxu0 %v8249
    %8381 = vmatprep.subr.bf16.mxu0 %v8248
    %8382 = vmatpush2.bf16.msra.mxu0 %v8247
    %8383 = vmatprep.subr.bf16.mxu0 %v8246
    %8384 = vmatpush2.bf16.msra.mxu0 %v8245
    %8385 = vmatprep.subr.bf16.mxu0 %v8244
    %8386 = vmatpush2.bf16.msra.mxu0 %v8243
    %8387 = vmatprep.mubr.bf16.mxu0 %v7955
    %8388 = vmatmul.mubr.bf16.gmra.mxu0 %v7954
    %v8389 = vpop.f32.mrf.mxu0
    %v8390 = vadd.f32 %v8028, %v8389
    %v8391 = vpop.f32.mrf.mxu0
    %v8392 = vadd.f32 %v8032, %v8391
    %v8393 = vpop.f32.mrf.mxu0
    %v8394 = vadd.f32 %v8028, %v8393
    %v8395 = vpop.f32.mrf.mxu0
    %v8396 = vadd.f32 %v8032, %v8395
    %8397 = vdwg.mxu0
    %8398 = vmatprep.subr.bf16.mxu0 %v8274
    %8399 = vmatpush1.bf16.msra.mxu0 %v8273
    %8400 = vmatprep.subr.bf16.mxu0 %v8272
    %8401 = vmatpush1.bf16.msra.mxu0 %v8271
    %8402 = vmatprep.subr.bf16.mxu0 %v8270
    %8403 = vmatpush1.bf16.msra.mxu0 %v8269
    %8404 = vmatprep.subr.bf16.mxu0 %v8268
    %8405 = vmatpush1.bf16.msra.mxu0 %v8267
    %8406 = vmatprep.subr.bf16.mxu0 %v8266
    %8407 = vmatpush1.bf16.msra.mxu0 %v8265
    %8408 = vmatprep.subr.bf16.mxu0 %v8264
    %8409 = vmatpush1.bf16.msra.mxu0 %v8263
    %8410 = vmatprep.subr.bf16.mxu0 %v8262
    %8411 = vmatpush1.bf16.msra.mxu0 %v8261
    %8412 = vmatprep.subr.bf16.mxu0 %v8260
    %8413 = vmatpush1.bf16.msra.mxu0 %v8259
    %8414 = vmatprep.subr.bf16.mxu0 %v8290
    %8415 = vmatpush2.bf16.msra.mxu0 %v8289
    %8416 = vmatprep.subr.bf16.mxu0 %v8288
    %8417 = vmatpush2.bf16.msra.mxu0 %v8287
    %8418 = vmatprep.subr.bf16.mxu0 %v8286
    %8419 = vmatpush2.bf16.msra.mxu0 %v8285
    %8420 = vmatprep.subr.bf16.mxu0 %v8284
    %8421 = vmatpush2.bf16.msra.mxu0 %v8283
    %8422 = vmatprep.subr.bf16.mxu0 %v8282
    %8423 = vmatpush2.bf16.msra.mxu0 %v8281
    %8424 = vmatprep.subr.bf16.mxu0 %v8280
    %8425 = vmatpush2.bf16.msra.mxu0 %v8279
    %8426 = vmatprep.subr.bf16.mxu0 %v8278
    %8427 = vmatpush2.bf16.msra.mxu0 %v8277
    %8428 = vmatprep.subr.bf16.mxu0 %v8276
    %8429 = vmatpush2.bf16.msra.mxu0 %v8275
    %8430 = vmatprep.mubr.bf16.mxu0 %v7957
    %8431 = vmatmul.mubr.bf16.gmra.mxu0 %v7956
    %v8432 = vpop.f32.mrf.mxu0
    %v8433 = vadd.f32 %v8390, %v8432
    %v8434 = vpop.f32.mrf.mxu0
    %v8435 = vadd.f32 %v8392, %v8434
    %v8436 = vpop.f32.mrf.mxu0
    %v8437 = vadd.f32 %v8394, %v8436
    %v8438 = vpop.f32.mrf.mxu0
    %v8439 = vadd.f32 %v8396, %v8438
    %8440 = vdwg.mxu0
    %s8441 = scalar_lea.vmem %s5, 4
    %v8442 = vld [vmem:[%s8441] ss:$8 sm:$0x3]
    %s8443 = scalar_lea.vmem %s5, 5
    %v8444 = vld [vmem:[%s8443] ss:$8 sm:$0x3]
    %v8445 = vadd.f32 %v8433, %v8435
    %8446 = vadd.xlane.f32.xlu0 %v8445
    %v8447 = vpop.xlane.xlu0 %8446
    %v8448 = vadd.f32 %v8437, %v8439
    %8449 = vadd.xlane.f32.xlu0 %v8448
    %v8450 = vpop.xlane.xlu0 %8449
    %v8451 = vrcp.pop 256.0
    %v8452 = vmul.f32 %v8447, %v8451
    %v8453 = vmul.f32 %v8450, %v8451
    %v8454 = vsub.f32 %v8433, %v8452
    %v8455 = vsub.f32 %v8435, %v8452
    %v8456 = vsub.f32 %v8437, %v8453
    %v8457 = vsub.f32 %v8439, %v8453
    %v8458 = vmul.f32 %v8454, %v8454
    %v8459 = vmul.f32 %v8455, %v8455
    %v8460 = vmul.f32 %v8456, %v8456
    %v8461 = vmul.f32 %v8457, %v8457
    %v8462 = vadd.f32 %v8458, %v8459
    %8463 = vadd.xlane.f32.xlu0 %v8462
    %v8464 = vpop.xlane.xlu0 %8463
    %v8465 = vadd.f32 %v8460, %v8461
    %8466 = vadd.xlane.f32.xlu0 %v8465
    %v8467 = vpop.xlane.xlu0 %8466
    %v8468 = vmul.f32 %v8464, %v8451
    %v8469 = vmul.f32 %v8467, %v8451
    %v8470 = vadd.f32 %v8468, 1e-05
    %v8471 = vadd.f32 %v8469, 1e-05
    %v8472 = vrsqrt.pop %v8470
    %v8473 = vrsqrt.pop %v8471
    %v8474 = vmul.f32 %v8454, %v8472
    %v8475 = vmul.f32 %v8455, %v8472
    %v8476 = vmul.f32 %v8456, %v8473
    %v8477 = vmul.f32 %v8457, %v8473
    %v8479 = vlaneseq
    %v8480 = vshrl.u32 %v8479, 7
    %v8481 = vsub.s32 0, %v8480
    %v8482 = vrot.slane %v8442, %v8481
    %v8483 = vlaneseq
    %v8484 = vshrl.u32 %v8483, 7
    %v8485 = vsub.s32 1, %v8484
    %v8486 = vrot.slane %v8442, %v8485
    %v8489 = vmul.f32 %v8474, %v8482
    %v8490 = vmul.f32 %v8475, %v8486
    %v8491 = vmul.f32 %v8476, %v8482
    %v8492 = vmul.f32 %v8477, %v8486
    %v8494 = vlaneseq
    %v8495 = vshrl.u32 %v8494, 7
    %v8496 = vsub.s32 0, %v8495
    %v8497 = vrot.slane %v8444, %v8496
    %v8498 = vlaneseq
    %v8499 = vshrl.u32 %v8498, 7
    %v8500 = vsub.s32 1, %v8499
    %v8501 = vrot.slane %v8444, %v8500
    %v8504 = vadd.f32 %v8489, %v8497
    %v8505 = vadd.f32 %v8490, %v8501
    %v8506 = vadd.f32 %v8491, %v8497
    %v8507 = vadd.f32 %v8492, %v8501
    %vm8508 = vcmp.gt.f32.partialorder %v8504, 0.0
    %vm8509 = vcmp.gt.f32.partialorder %v8505, 0.0
    %vm8510 = vcmp.gt.f32.partialorder %v8506, 0.0
    %vm8511 = vcmp.gt.f32.partialorder %v8507, 0.0
    %v8512 = vmul.f32 %v8504, 1.442695
    %v8513 = vpow.pop %v8512
    %v8514 = vmul.f32 %v8505, 1.442695
    %v8515 = vpow.pop %v8514
    %v8516 = vmul.f32 %v8506, 1.442695
    %v8517 = vpow.pop %v8516
    %v8518 = vmul.f32 %v8507, 1.442695
    %v8519 = vpow.pop %v8518
    %v8520 = vsub.f32 %v8513, 1.0
    %v8521 = vsub.f32 %v8515, 1.0
    %v8522 = vsub.f32 %v8517, 1.0
    %v8523 = vsub.f32 %v8519, 1.0
    %v8524 = vsel %vm8508, %v8504, %v8520
    %v8525 = vsel %vm8509, %v8505, %v8521
    %v8526 = vsel %vm8510, %v8506, %v8522
    %v8527 = vsel %vm8511, %v8507, %v8523
    %v8528 = vpack.c.bf16 %v8526, %v8524
    %v8529 = vpack.c.bf16 %v8527, %v8525
    %v8530 = vld [vmem:[#allocation6] sm:$0xf]
    %v8531 = vld [vmem:[#allocation6 + $0x4] sm:$0xf]
    %v8532 = vld [vmem:[#allocation6 + $0x8] sm:$0xf]
    %v8533 = vld [vmem:[#allocation6 + $0xc] sm:$0xf]
    %v8534 = vld [vmem:[#allocation6 + $0x10] sm:$0xf]
    %v8535 = vld [vmem:[#allocation6 + $0x14] sm:$0xf]
    %v8536 = vld [vmem:[#allocation6 + $0x18] sm:$0xf]
    %v8537 = vld [vmem:[#allocation6 + $0x1c] sm:$0xf]
    %v8538 = vld [vmem:[#allocation6 + $0x20] sm:$0xf]
    %v8539 = vld [vmem:[#allocation6 + $0x24] sm:$0xf]
    %v8540 = vld [vmem:[#allocation6 + $0x28] sm:$0xf]
    %v8541 = vld [vmem:[#allocation6 + $0x2c] sm:$0xf]
    %v8542 = vld [vmem:[#allocation6 + $0x30] sm:$0xf]
    %v8543 = vld [vmem:[#allocation6 + $0x34] sm:$0xf]
    %v8544 = vld [vmem:[#allocation6 + $0x38] sm:$0xf]
    %v8545 = vld [vmem:[#allocation6 + $0x3c] sm:$0xf]
    %v8546 = vld [vmem:[#allocation6 + $0x40] sm:$0xf]
    %v8547 = vld [vmem:[#allocation6 + $0x44] sm:$0xf]
    %v8548 = vld [vmem:[#allocation6 + $0x48] sm:$0xf]
    %v8549 = vld [vmem:[#allocation6 + $0x4c] sm:$0xf]
    %v8550 = vld [vmem:[#allocation6 + $0x50] sm:$0xf]
    %v8551 = vld [vmem:[#allocation6 + $0x54] sm:$0xf]
    %v8552 = vld [vmem:[#allocation6 + $0x58] sm:$0xf]
    %v8553 = vld [vmem:[#allocation6 + $0x5c] sm:$0xf]
    %v8554 = vld [vmem:[#allocation6 + $0x60] sm:$0xf]
    %v8555 = vld [vmem:[#allocation6 + $0x64] sm:$0xf]
    %v8556 = vld [vmem:[#allocation6 + $0x68] sm:$0xf]
    %v8557 = vld [vmem:[#allocation6 + $0x6c] sm:$0xf]
    %v8558 = vld [vmem:[#allocation6 + $0x70] sm:$0xf]
    %v8559 = vld [vmem:[#allocation6 + $0x74] sm:$0xf]
    %v8560 = vld [vmem:[#allocation6 + $0x78] sm:$0xf]
    %v8561 = vld [vmem:[#allocation6 + $0x7c] sm:$0xf]
    %v8562 = vld [vmem:[%s5 + $0x6] ss:$0 sm:$0xff]
    %v8595 = vunpack.c.l.b16 %v8530
    %v8596 = vunpack.c.l.b16 %v8531
    %v8597 = vunpack.c.l.b16 %v8532
    %v8598 = vunpack.c.l.b16 %v8533
    %v8599 = vunpack.c.l.b16 %v8534
    %v8600 = vunpack.c.l.b16 %v8535
    %v8601 = vunpack.c.l.b16 %v8536
    %v8602 = vunpack.c.l.b16 %v8537
    %v8603 = vunpack.c.l.b16 %v8538
    %v8604 = vunpack.c.l.b16 %v8539
    %v8605 = vunpack.c.l.b16 %v8540
    %v8606 = vunpack.c.l.b16 %v8541
    %v8607 = vunpack.c.l.b16 %v8542
    %v8608 = vunpack.c.l.b16 %v8543
    %v8609 = vunpack.c.l.b16 %v8544
    %v8610 = vunpack.c.l.b16 %v8545
    %v8611 = vunpack.c.l.b16 %v8546
    %v8612 = vunpack.c.l.b16 %v8547
    %v8613 = vunpack.c.l.b16 %v8548
    %v8614 = vunpack.c.l.b16 %v8549
    %v8615 = vunpack.c.l.b16 %v8550
    %v8616 = vunpack.c.l.b16 %v8551
    %v8617 = vunpack.c.l.b16 %v8552
    %v8618 = vunpack.c.l.b16 %v8553
    %v8619 = vunpack.c.l.b16 %v8554
    %v8620 = vunpack.c.l.b16 %v8555
    %v8621 = vunpack.c.l.b16 %v8556
    %v8622 = vunpack.c.l.b16 %v8557
    %v8623 = vunpack.c.l.b16 %v8558
    %v8624 = vunpack.c.l.b16 %v8559
    %v8625 = vunpack.c.l.b16 %v8560
    %v8626 = vunpack.c.l.b16 %v8561
    %v8627 = vpack.c.b16 %v8596, %v8595
    %v8628 = vpack.c.b16 %v8598, %v8597
    %v8629 = vpack.c.b16 %v8600, %v8599
    %v8630 = vpack.c.b16 %v8602, %v8601
    %v8631 = vpack.c.b16 %v8604, %v8603
    %v8632 = vpack.c.b16 %v8606, %v8605
    %v8633 = vpack.c.b16 %v8608, %v8607
    %v8634 = vpack.c.b16 %v8610, %v8609
    %v8635 = vpack.c.b16 %v8612, %v8611
    %v8636 = vpack.c.b16 %v8614, %v8613
    %v8637 = vpack.c.b16 %v8616, %v8615
    %v8638 = vpack.c.b16 %v8618, %v8617
    %v8639 = vpack.c.b16 %v8620, %v8619
    %v8640 = vpack.c.b16 %v8622, %v8621
    %v8641 = vpack.c.b16 %v8624, %v8623
    %v8642 = vpack.c.b16 %v8626, %v8625
    %8659 = vmatprep.subr.bf16.mxu0 0
    %8660 = vmatpush1.bf16.msra.mxu0 %v8634
    %8661 = vmatprep.subr.bf16.mxu0 0
    %8662 = vmatpush1.bf16.msra.mxu0 %v8633
    %8663 = vmatprep.subr.bf16.mxu0 0
    %8664 = vmatpush1.bf16.msra.mxu0 %v8632
    %8665 = vmatprep.subr.bf16.mxu0 0
    %8666 = vmatpush1.bf16.msra.mxu0 %v8631
    %8667 = vmatprep.subr.bf16.mxu0 0
    %8668 = vmatpush1.bf16.msra.mxu0 %v8630
    %8669 = vmatprep.subr.bf16.mxu0 0
    %8670 = vmatpush1.bf16.msra.mxu0 %v8629
    %8671 = vmatprep.subr.bf16.mxu0 0
    %8672 = vmatpush1.bf16.msra.mxu0 %v8628
    %8673 = vmatprep.subr.bf16.mxu0 0
    %8674 = vmatpush1.bf16.msra.mxu0 %v8627
    %8675 = vmatprep.subr.bf16.mxu0 0
    %8676 = vmatpush2.bf16.msra.mxu0 %v8642
    %8677 = vmatprep.subr.bf16.mxu0 0
    %8678 = vmatpush2.bf16.msra.mxu0 %v8641
    %8679 = vmatprep.subr.bf16.mxu0 0
    %8680 = vmatpush2.bf16.msra.mxu0 %v8640
    %8681 = vmatprep.subr.bf16.mxu0 0
    %8682 = vmatpush2.bf16.msra.mxu0 %v8639
    %8683 = vmatprep.subr.bf16.mxu0 0
    %8684 = vmatpush2.bf16.msra.mxu0 %v8638
    %8685 = vmatprep.subr.bf16.mxu0 0
    %8686 = vmatpush2.bf16.msra.mxu0 %v8637
    %8687 = vmatprep.subr.bf16.mxu0 0
    %8688 = vmatpush2.bf16.msra.mxu0 %v8636
    %8689 = vmatprep.subr.bf16.mxu0 0
    %8690 = vmatpush2.bf16.msra.mxu0 %v8635
    %8691 = vmatprep.mubr.bf16.mxu0 %v8529
    %8692 = vmatmul.mubr.bf16.gmra.mxu0 %v8528
    %v8693 = vpop.f32.mrf.mxu0
    %v8694 = vadd.f32 %v8562, %v8693
    %v8695 = vpop.f32.mrf.mxu0
    %v8696 = vpop.f32.mrf.mxu0
    %v8697 = vadd.f32 %v8562, %v8696
    %v8698 = vpop.f32.mrf.mxu0
    %8699 = vdwg.mxu0
    %v8700 = vld [vmem:[%s5 + $0x7] ss:$0 sm:$0xff]
    %v8701 = vld [vmem:[%s5 + $0x20] ss:$0 sm:$0xff]
    %8702 = vadd.xlane.f32.xlu0 %v8694
    %v8703 = vpop.xlane.xlu0 %8702
    %8704 = vadd.xlane.f32.xlu0 %v8697
    %v8705 = vpop.xlane.xlu0 %8704
    %v8706 = vrcp.pop 128.0
    %v8707 = vmul.f32 %v8703, %v8706
    %v8708 = vmul.f32 %v8705, %v8706
    %v8709 = vsub.f32 %v8694, %v8707
    %v8710 = vsub.f32 %v8697, %v8708
    %v8711 = vmul.f32 %v8709, %v8709
    %v8712 = vmul.f32 %v8710, %v8710
    %8713 = vadd.xlane.f32.xlu0 %v8711
    %v8714 = vpop.xlane.xlu0 %8713
    %8715 = vadd.xlane.f32.xlu0 %v8712
    %v8716 = vpop.xlane.xlu0 %8715
    %v8717 = vmul.f32 %v8714, %v8706
    %v8718 = vmul.f32 %v8716, %v8706
    %v8719 = vadd.f32 %v8717, 1e-05
    %v8720 = vadd.f32 %v8718, 1e-05
    %v8721 = vrsqrt.pop %v8719
    %v8722 = vrsqrt.pop %v8720
    %v8723 = vmul.f32 %v8709, %v8721
    %v8724 = vmul.f32 %v8710, %v8722
    %v8725 = vmul.f32 %v8723, %v8700
    %v8726 = vmul.f32 %v8724, %v8700
    %v8727 = vadd.f32 %v8725, %v8701
    %v8728 = vadd.f32 %v8726, %v8701
    %vm8729 = vcmp.gt.f32.partialorder %v8727, 0.0
    %vm8730 = vcmp.gt.f32.partialorder %v8728, 0.0
    %v8731 = vmul.f32 %v8727, 1.442695
    %v8732 = vpow.pop %v8731
    %v8733 = vmul.f32 %v8728, 1.442695
    %v8734 = vpow.pop %v8733
    %v8735 = vsub.f32 %v8732, 1.0
    %v8736 = vsub.f32 %v8734, 1.0
    %v8737 = vsel %vm8729, %v8727, %v8735
    %v8738 = vsel %vm8730, %v8728, %v8736
    %v8739 = vpack.c.bf16 %v8738, %v8737
    %v8740 = vld [vmem:[%s4] sm:$0xf]
    %v8741 = vld [vmem:[%s4 + $0x4] sm:$0xf]
    %v8742 = vld [vmem:[%s4 + $0x8] sm:$0xf]
    %v8743 = vld [vmem:[%s4 + $0xc] sm:$0xf]
    %v8744 = vld [vmem:[%s4 + $0x10] sm:$0xf]
    %v8745 = vld [vmem:[%s4 + $0x14] sm:$0xf]
    %v8746 = vld [vmem:[%s4 + $0x18] sm:$0xf]
    %v8747 = vld [vmem:[%s4 + $0x1c] sm:$0xf]
    %v8748 = vld [vmem:[%s4 + $0x20] sm:$0xf]
    %v8749 = vld [vmem:[%s4 + $0x24] sm:$0xf]
    %v8750 = vld [vmem:[%s4 + $0x28] sm:$0xf]
    %v8751 = vld [vmem:[%s4 + $0x2c] sm:$0xf]
    %v8752 = vld [vmem:[%s4 + $0x30] sm:$0xf]
    %v8753 = vld [vmem:[%s4 + $0x34] sm:$0xf]
    %v8754 = vld [vmem:[%s4 + $0x38] sm:$0xf]
    %v8755 = vld [vmem:[%s4 + $0x3c] sm:$0xf]
    %v8756 = vld [vmem:[%s5 + $0x21] ss:$0 sm:$0xff]
    %v8773 = vunpack.c.l.b16 %v8740
    %v8774 = vunpack.c.l.b16 %v8741
    %v8775 = vunpack.c.l.b16 %v8742
    %v8776 = vunpack.c.l.b16 %v8743
    %v8777 = vunpack.c.l.b16 %v8744
    %v8778 = vunpack.c.l.b16 %v8745
    %v8779 = vunpack.c.l.b16 %v8746
    %v8780 = vunpack.c.l.b16 %v8747
    %v8781 = vunpack.c.l.b16 %v8748
    %v8782 = vunpack.c.l.b16 %v8749
    %v8783 = vunpack.c.l.b16 %v8750
    %v8784 = vunpack.c.l.b16 %v8751
    %v8785 = vunpack.c.l.b16 %v8752
    %v8786 = vunpack.c.l.b16 %v8753
    %v8787 = vunpack.c.l.b16 %v8754
    %v8788 = vunpack.c.l.b16 %v8755
    %v8789 = vpack.c.b16 %v8774, %v8773
    %v8790 = vpack.c.b16 %v8776, %v8775
    %v8791 = vpack.c.b16 %v8778, %v8777
    %v8792 = vpack.c.b16 %v8780, %v8779
    %v8793 = vpack.c.b16 %v8782, %v8781
    %v8794 = vpack.c.b16 %v8784, %v8783
    %v8795 = vpack.c.b16 %v8786, %v8785
    %v8796 = vpack.c.b16 %v8788, %v8787
    %8805 = vmatprep.subr.bf16.mxu0 0
    %8806 = vmatpush1.bf16.msra.mxu0 %v8796
    %8807 = vmatprep.subr.bf16.mxu0 0
    %8808 = vmatpush1.bf16.msra.mxu0 %v8795
    %8809 = vmatprep.subr.bf16.mxu0 0
    %8810 = vmatpush1.bf16.msra.mxu0 %v8794
    %8811 = vmatprep.subr.bf16.mxu0 0
    %8812 = vmatpush1.bf16.msra.mxu0 %v8793
    %8813 = vmatprep.subr.bf16.mxu0 0
    %8814 = vmatpush1.bf16.msra.mxu0 %v8792
    %8815 = vmatprep.subr.bf16.mxu0 0
    %8816 = vmatpush1.bf16.msra.mxu0 %v8791
    %8817 = vmatprep.subr.bf16.mxu0 0
    %8818 = vmatpush1.bf16.msra.mxu0 %v8790
    %8819 = vmatprep.subr.bf16.mxu0 0
    %8820 = vmatpush1.bf16.msra.mxu0 %v8789
    %8821 = vmatprep.subr.bf16.mxu0 0
    %8822 = vmatpush2.bf16.msra.mxu0 0
    %8823 = vmatprep.subr.bf16.mxu0 0
    %8824 = vmatpush2.bf16.msra.mxu0 0
    %8825 = vmatprep.subr.bf16.mxu0 0
    %8826 = vmatpush2.bf16.msra.mxu0 0
    %8827 = vmatprep.subr.bf16.mxu0 0
    %8828 = vmatpush2.bf16.msra.mxu0 0
    %8829 = vmatprep.subr.bf16.mxu0 0
    %8830 = vmatpush2.bf16.msra.mxu0 0
    %8831 = vmatprep.subr.bf16.mxu0 0
    %8832 = vmatpush2.bf16.msra.mxu0 0
    %8833 = vmatprep.subr.bf16.mxu0 0
    %8834 = vmatpush2.bf16.msra.mxu0 0
    %8835 = vmatprep.subr.bf16.mxu0 0
    %8836 = vmatpush2.bf16.msra.mxu0 0
    %8837 = vmatprep.mubr.bf16.mxu0 0
    %8838 = vmatmul.mubr.bf16.gmra.mxu0 %v8739
    %v8839 = vpop.f32.mrf.mxu0
    %v8840 = vadd.f32 %v8756, %v8839
    %v8841 = vpop.f32.mrf.mxu0
    %v8842 = vpop.f32.mrf.mxu0
    %v8843 = vadd.f32 %v8756, %v8842
    %v8844 = vpop.f32.mrf.mxu0
    %8845 = vdwg.mxu0
    %8846 = vmax.xlane.f32.xlu0 %v8840
    %v8847 = vpop.xlane.xlu0 %8846
    %8848 = vmax.xlane.f32.xlu0 %v8843
    %v8849 = vpop.xlane.xlu0 %8848
    %v8850 = vsub.f32 %v8840, %v8847
    %v8851 = vsub.f32 %v8843, %v8849
    %v8852 = vmul.f32 %v8850, 1.442695
    %v8853 = vpow.pop %v8852
    %v8854 = vmul.f32 %v8851, 1.442695
    %v8855 = vpow.pop %v8854
    %8856 = vadd.xlane.f32.xlu0 %v8853
    %v8857 = vpop.xlane.xlu0 %8856
    %8858 = vadd.xlane.f32.xlu0 %v8855
    %v8859 = vpop.xlane.xlu0 %8858
    %v8860 = vrcp.pop %v8857
    %v8861 = vrcp.pop %v8859
    %v8862 = vmul.f32 %v8853, %v8860
    %v8863 = vmul.f32 %v8855, %v8861
    %8864 = vst [vmem:[%s6] sm:$0xff] %v8862
    %8865 = vst [vmem:[%s6 + $0x8] sm:$0xff] %v8863
    // Predicated region
    $region38: #{actor_forward.1} parent=1 // pred_check
      _
    $region39: #{actor_forward.1} parent=1 // pred_check_branch
      %8867 = sbr.rel (0) target = $region41
    $region40: #{actor_forward.1} parent=1 // pred_region
      _
    $region41: #{actor_forward.1} parent=1 // pred_fallthru
      _
    // Predicated region
    $region42: #{actor_forward.1} parent=1 // pred_check
      _
    $region43: #{actor_forward.1} parent=1 // pred_check_branch
      %8869 = sbr.rel (0) target = $region45
    $region44: #{actor_forward.1} parent=1 // pred_region
      _
    $region45: #{actor_forward.1} parent=1 // pred_fallthru
      _
    %8870 = vsyncpa [#allocation3], 1
    %8871 = vsyncpa [#allocation5], 1

</llo_original>
